<compile_context>
chip_gen: v5e
topology: v5e:2x2
jax: 0.10.0
libtpu: 0.0.40
codegen_flags: <defaults>
</compile_context>

<pallas_src>
import math

import numpy as np
import jax
import jax.numpy as jnp
from jax.experimental import pallas as pl
from jax.experimental.pallas import tpu as pltpu


def _round_up(x, m):
    return ((x + m - 1) // m) * m


def _silu(v):
    # explicit sigmoid (exp + reciprocal lower cleanly on Mosaic)
    return v * (1.0 / (1.0 + jnp.exp(-v)))


def _fused_kernel(x_ref, w0_ref, b0_ref, w1_ref, b1_ref, g_ref, fill_ref,
                  w2_ref, b2_ref, o_ref):
    # ---- Layer 0 (1x1x1, stride 1): plain dense + SiLU ----
    y0 = jnp.dot(x_ref[...], w0_ref[...], preferred_element_type=jnp.float32)
    y0 = _silu(y0 + b0_ref[...])

    # ---- Layer 1: per-kernel-offset dense + SiLU, interleaved into this
    # block's layer-1 output rows via a 0/1 selection matmul (k <= stride =>
    # each output voxel has at most one tap; untapped voxels are pre-filled
    # with silu(b1) via fill_ref). ----
    z1 = fill_ref[...]
    for k in range(w1_ref.shape[0]):            # K1^3 = 8, static unroll
        y1k = jnp.dot(y0, w1_ref[k], preferred_element_type=jnp.float32)
        y1k = _silu(y1k + b1_ref[...])
        z1 = z1 + jnp.dot(g_ref[k], y1k, preferred_element_type=jnp.float32)

    # ---- Layer 2: all K2^3 offsets fused into one lane-dense matmul + SiLU ----
    y2 = jnp.dot(z1, w2_ref[...], preferred_element_type=jnp.float32)
    o_ref[...] = _silu(y2 + b2_ref[...])


def _build_selection(N, in_dims, out_dims, K, S, P, m_in_pad, m_out_pad):
    """G[koff, out_row, in_row] = 1 iff layer-1 output voxel `out_row` takes its
    single tap from input voxel `in_row` with kernel offset `koff`.
    covered[out_row] = 1 iff the voxel has a tap at all."""
    Dv, Hv, Wv = in_dims
    Od, Oh, Ow = out_dims
    K3 = K * K * K
    G = np.zeros((K3, m_out_pad, m_in_pad), np.float32)
    covered = np.zeros((m_out_pad,), np.float32)
    r1 = 0
    for n in range(N):
        for od in range(Od):
            for oh in range(Oh):
                for ow in range(Ow):
                    q = (od + P, oh + P, ow + P)
                    ks = (q[0] % S, q[1] % S, q[2] % S)
                    iv = (q[0] // S, q[1] // S, q[2] // S)
                    if (ks[0] < K and ks[1] < K and ks[2] < K
                            and iv[0] < Dv and iv[1] < Hv and iv[2] < Wv):
                        koff = (ks[0] * K + ks[1]) * K + ks[2]
                        r0 = ((n * Dv + iv[0]) * Hv + iv[1]) * Wv + iv[2]
                        G[koff, r1, r0] = 1.0
                        covered[r1] = 1.0
                    r1 += 1
    return G, covered


def make_forward(params, x_shape, strides=(1, 3, 4), paddings=(0, 1, 2)):
    """Pre-pack weights / biases / selection matrices ONCE and return a jitted
    forward(x) for the fixed input shape.

    params: ((w0,b0),(w1,b1),(w2,b2)) in PyTorch ConvTranspose3d layout,
            w_i: (Cin, Cout, K, K, K), b_i: (Cout,).
    x_shape: (N, D, H, W, Cin)  -- NDHWC.
    """
    (w0, b0), (w1, b1), (w2, b2) = params
    N, D0, H0, W0s, C0 = x_shape

    Ci0, C1, K0, _, _ = w0.shape
    Ci1, C2, K1, _, _ = w1.shape
    Ci2, C3, K2, _, _ = w2.shape
    S0, S1, S2 = strides
    P0, P1, P2 = paddings
    assert Ci0 == C0 and Ci1 == C1 and Ci2 == C2
    assert K0 == 1 and S0 == 1 and P0 == 0, "layer 0 must be 1x1x1 / s1 / p0"
    assert K1 <= S1, "layer-1 decomposition requires kernel <= stride"
    assert K2 == S2, "layer-2 fast path requires kernel == stride"

    O1 = tuple((d - 1) * S1 - 2 * P1 + K1 for d in (D0, H0, W0s))   # layer-1 out dims
    O2 = tuple((d - 1) * S2 - 2 * P2 + K2 for d in O1)              # final out dims

    M0 = N * D0 * H0 * W0s
    M0p = _round_up(M0, 8)
    M1 = N * O1[0] * O1[1] * O1[2]
    M1p = _round_up(M1, 8)
    K3_1 = K1 ** 3
    K3_2 = K2 ** 3
    C3tot = K3_2 * C3
    C3p = _round_up(C3tot, 128)          # lane-dense kernel output

    # 2 row blocks so v7x megacore can shard layer 2; negligible cost elsewhere.
    tm1 = M1p // 2 if (M1p % 16 == 0 and M1p >= 16) else M1p
    nblk = M1p // tm1

    f32 = jnp.float32
    # ---- one-time packed operands (device constants reused every call) ----
    w0p = jnp.asarray(w0, f32)[:, :, 0, 0, 0]                                  # (C0, C1)
    b0p = jnp.asarray(b0, f32).reshape(1, C1)
    w1p = jnp.transpose(jnp.asarray(w1, f32), (2, 3, 4, 0, 1)).reshape(K3_1, C1, C2)
    b1p = jnp.asarray(b1, f32).reshape(1, C2)
    w2p = jnp.transpose(jnp.asarray(w2, f32), (0, 2, 3, 4, 1)).reshape(C2, C3tot)
    w2p = jnp.pad(w2p, ((0, 0), (0, C3p - C3tot)))                             # (C2, C3p)
    b2p = jnp.pad(jnp.tile(jnp.asarray(b2, f32), K3_2),
                  (0, C3p - C3tot)).reshape(1, C3p)

    # TODO(synk): the dense 0/1 selection matrices are sized for small inputs;
    # for large spatial extents this interleave should instead be a scalar-
    # prefetched row gather (PrefetchScalarGridSpec) over the layer-1 rows.
    g_np, covered_np = _build_selection(N, (D0, H0, W0s), O1, K1, S1, P1, M0p, M1p)
    b1_np = np.asarray(b1, np.float32)
    fill_np = (1.0 - covered_np)[:, None] * (b1_np / (1.0 + np.exp(-b1_np)))
    g = jnp.asarray(g_np)                              # (K3_1, M1p, M0p)
    fill = jnp.asarray(fill_np, f32)                   # (M1p, C2)

    cost = pl.CostEstimate(
        flops=2 * (nblk * (M0p * C0 * C1 + K3_1 * M0p * C1 * C2)
                   + K3_1 * M1p * M0p * C2 + M1p * C2 * C3p),
        transcendentals=nblk * (M0p * C1 + K3_1 * M0p * C2) + M1p * C3p,
        bytes_accessed=4 * (M0p * C0 + C0 * C1 + K3_1 * C1 * C2
                            + K3_1 * M1p * M0p + M1p * C2 + C2 * C3p
                            + M1p * C3p),
    )

    call = pl.pallas_call(
        _fused_kernel,
        out_shape=jax.ShapeDtypeStruct((M1p, C3p), f32),
        grid=(nblk,),
        in_specs=[
            pl.BlockSpec((M0p, C0), lambda i: (0, 0)),            # x rows (resident)
            pl.BlockSpec((C0, C1), lambda i: (0, 0)),             # W0
            pl.BlockSpec((1, C1), lambda i: (0, 0)),              # b0
            pl.BlockSpec((K3_1, C1, C2), lambda i: (0, 0, 0)),    # W1 per offset
            pl.BlockSpec((1, C2), lambda i: (0, 0)),              # b1
            pl.BlockSpec((K3_1, tm1, M0p), lambda i: (0, i, 0)),  # selection rows
            pl.BlockSpec((tm1, C2), lambda i: (i, 0)),            # silu(b1) fill rows
            pl.BlockSpec((C2, C3p), lambda i: (0, 0)),            # W2 (all offsets)
            pl.BlockSpec((1, C3p), lambda i: (0, 0)),             # b2 (tiled)
        ],
        out_specs=pl.BlockSpec((tm1, C3p), lambda i: (i, 0)),     # lane-dense store
        compiler_params=pltpu.CompilerParams(
            dimension_semantics=("parallel",)),
        cost_estimate=cost,
    )

    def forward(x):
        assert x.shape == x_shape, (x.shape, x_shape)
        x2 = x.reshape(M0, C0).astype(f32)
        if M0p > M0:
            x2 = jnp.pad(x2, ((0, M0p - M0), (0, 0)))
        y2 = call(x2, w0p, b0p, w1p, b1p, g, fill, w2p, b2p)      # (M1p, C3p)

        # Final interleave (layer 2 has kernel == stride => a pure transpose)
        # and crop of the output padding.  This is the only remaining XLA glue;
        # it is the final output materialization.
        # TODO(synk): could be folded into the kernel with strided VMEM stores;
        # kept in XLA for lowering robustness.
        y2 = y2[:M1, :C3tot].reshape(N, O1[0], O1[1], O1[2], K2, K2, K2, C3)
        y2 = jnp.transpose(y2, (0, 1, 4, 2, 5, 3, 6, 7))
        full = y2.reshape(N, O1[0] * K2, O1[1] * K2, O1[2] * K2, C3)
        return full[:, P2:P2 + O2[0], P2:P2 + O2[1], P2:P2 + O2[2], :]

    return jax.jit(forward)


def _init_convt(key, cin, cout, k):
    kw, kb = jax.random.split(key)
    bound = 1.0 / math.sqrt(cin * k * k * k)
    w = jax.random.uniform(kw, (cin, cout, k, k, k), jnp.float32, -bound, bound)
    b = jax.random.uniform(kb, (cout,), jnp.float32, -bound, bound)
    return w, b


# ---------------- numpy reference (PyTorch ConvTranspose3d + SiLU) ----------------
def _np_conv_transpose3d_silu(x, w, b, s, p):
    # x: (N, D, H, W, Ci) f64, w: (Ci, Co, K, K, K), b: (Co,)
    N, D, H, W, Ci = x.shape
    _, Co, K, _, _ = w.shape
    Df, Hf, Wf = (D - 1) * s + K, (H - 1) * s + K, (W - 1) * s + K
    full = np.zeros((N, Df, Hf, Wf, Co), np.float64)
    for kd in range(K):
        for kh in range(K):
            for kw_ in range(K):
                tap = np.tensordot(x, w[:, :, kd, kh, kw_], axes=([4], [0]))
                full[:, kd:kd + (D - 1) * s + 1:s,
                        kh:kh + (H - 1) * s + 1:s,
                        kw_:kw_ + (W - 1) * s + 1:s, :] += tap
    full += b.reshape(1, 1, 1, 1, Co)
    out = full[:, p:Df - p, p:Hf - p, p:Wf - p, :]
    return out / (1.0 + np.exp(-out))          # silu = x * sigmoid(x)


if __name__ == "__main__":
    key = jax.random.PRNGKey(0)
    kx, k0, k1, k2 = jax.random.split(key, 4)

    # Small input consistent with the module: PyTorch (1, 20, 4, 4, 4) NCDHW -> NDHWC.
    x = jax.random.normal(kx, (1, 4, 4, 4, 20), jnp.float32)

    params = (
        _init_convt(k0, 20, 50, 1),
        _init_convt(k1, 50, 10, 2),
        _init_convt(k2, 10, 5, 4),
    )

    fwd = make_forward(params, x.shape)
    out = fwd(x)
    jax.block_until_ready(out)
    # (1,4,4,4,20) -> (1,4,4,4,50) -> (1,9,9,9,10) -> (1,32,32,32,5)
    assert out.shape == (1, 32, 32, 32, 5), out.shape

    # Sanity check against a direct numpy ConvTranspose3d+SiLU reference.
    ref = np.asarray(x, np.float64)
    for (w, b), (s, p) in zip(params, ((1, 0), (3, 1), (4, 2))):
        ref = _np_conv_transpose3d_silu(
            ref, np.asarray(w, np.float64), np.asarray(b, np.float64), s, p)
    np.testing.assert_allclose(np.asarray(out), ref, rtol=2e-2, atol=5e-4)
    print("KERNEL_OK")
</pallas_src>

<mosaic_0001>
module attributes {stable_mosaic.version = 11 : i64} {
  func.func @_fused_kernel(%arg0: i32, %arg1: memref<64x20xf32, #tpu.memory_space<vmem>>, %arg2: memref<20x50xf32, #tpu.memory_space<vmem>>, %arg3: memref<1x50xf32, #tpu.memory_space<vmem>>, %arg4: memref<8x50x10xf32, #tpu.memory_space<vmem>>, %arg5: memref<1x10xf32, #tpu.memory_space<vmem>>, %arg6: memref<8x368x64xf32, #tpu.memory_space<vmem>>, %arg7: memref<368x10xf32, #tpu.memory_space<vmem>>, %arg8: memref<10x384xf32, #tpu.memory_space<vmem>>, %arg9: memref<1x384xf32, #tpu.memory_space<vmem>>, %arg10: memref<368x384xf32, #tpu.memory_space<vmem>>) attributes {dimension_semantics = [#tpu.dimension_semantics<parallel>], iteration_bounds = array<i64: 2>, scalar_prefetch = 0 : i64, scratch_operands = 0 : i64, tpu.core_type = #tpu.core_type<tc>, window_params = [{pipeline_mode = #tpu.pipeline_mode<synchronous>, transform_indices = @transform_0, window_bounds = array<i64: 64, 20>}, {pipeline_mode = #tpu.pipeline_mode<synchronous>, transform_indices = @transform_1, window_bounds = array<i64: 20, 50>}, {pipeline_mode = #tpu.pipeline_mode<synchronous>, transform_indices = @transform_2, window_bounds = array<i64: 1, 50>}, {pipeline_mode = #tpu.pipeline_mode<synchronous>, transform_indices = @transform_3, window_bounds = array<i64: 8, 50, 10>}, {pipeline_mode = #tpu.pipeline_mode<synchronous>, transform_indices = @transform_4, window_bounds = array<i64: 1, 10>}, {transform_indices = @transform_5, window_bounds = array<i64: 8, 368, 64>}, {transform_indices = @transform_6, window_bounds = array<i64: 368, 10>}, {pipeline_mode = #tpu.pipeline_mode<synchronous>, transform_indices = @transform_7, window_bounds = array<i64: 10, 384>}, {pipeline_mode = #tpu.pipeline_mode<synchronous>, transform_indices = @transform_8, window_bounds = array<i64: 1, 384>}, {transform_indices = @transform_9, window_bounds = array<i64: 368, 384>}]} {
    %c0 = arith.constant 0 : index
    %c0_0 = arith.constant 0 : index
    %0 = vector.load %arg1[%c0, %c0_0] : memref<64x20xf32, #tpu.memory_space<vmem>>, vector<64x20xf32>
    %c0_1 = arith.constant 0 : index
    %c0_2 = arith.constant 0 : index
    %1 = vector.load %arg2[%c0_1, %c0_2] : memref<20x50xf32, #tpu.memory_space<vmem>>, vector<20x50xf32>
    %cst = arith.constant dense<0.000000e+00> : vector<64x50xf32>
    %2 = tpu.matmul %0, %1, %cst {dimension_numbers = #tpu.dot_dimension_numbers<[1], [0], [0], [1], [0, 0, 1, 1], [], []>} : vector<64x20xf32>, vector<20x50xf32>, vector<64x50xf32> -> vector<64x50xf32>
    %c0_3 = arith.constant 0 : index
    %c0_4 = arith.constant 0 : index
    %3 = vector.load %arg3[%c0_3, %c0_4] : memref<1x50xf32, #tpu.memory_space<vmem>>, vector<1x50xf32>
    %4 = vector.broadcast %3 : vector<1x50xf32> to vector<64x50xf32>
    %5 = arith.addf %2, %4 : vector<64x50xf32>
    %cst_5 = arith.constant 0.000000e+00 : f32
    %6 = vector.broadcast %cst_5 : f32 to vector<64x50xf32>
    %7 = arith.subf %6, %5 : vector<64x50xf32>
    %8 = math.exp %7 : vector<64x50xf32>
    %cst_6 = arith.constant 1.000000e+00 : f32
    %9 = vector.broadcast %cst_6 : f32 to vector<64x50xf32>
    %10 = arith.addf %9, %8 : vector<64x50xf32>
    %cst_7 = arith.constant 1.000000e+00 : f32
    %11 = vector.broadcast %cst_7 : f32 to vector<64x50xf32>
    %12 = arith.divf %11, %10 : vector<64x50xf32>
    %13 = arith.mulf %5, %12 : vector<64x50xf32>
    %c0_8 = arith.constant 0 : index
    %c0_9 = arith.constant 0 : index
    %14 = vector.load %arg7[%c0_8, %c0_9] : memref<368x10xf32, #tpu.memory_space<vmem>>, vector<368x10xf32>
    %c0_10 = arith.constant 0 : index
    %c0_11 = arith.constant 0 : index
    %c0_12 = arith.constant 0 : index
    %15 = vector.load %arg4[%c0_10, %c0_11, %c0_12] : memref<8x50x10xf32, #tpu.memory_space<vmem>>, vector<1x50x10xf32>
    %16 = vector.shape_cast %15 : vector<1x50x10xf32> to vector<50x10xf32>
    %cst_13 = arith.constant dense<0.000000e+00> : vector<64x10xf32>
    %17 = tpu.matmul %13, %16, %cst_13 {dimension_numbers = #tpu.dot_dimension_numbers<[1], [0], [0], [1], [0, 0, 1, 1], [], []>} : vector<64x50xf32>, vector<50x10xf32>, vector<64x10xf32> -> vector<64x10xf32>
    %c0_14 = arith.constant 0 : index
    %c0_15 = arith.constant 0 : index
    %18 = vector.load %arg5[%c0_14, %c0_15] : memref<1x10xf32, #tpu.memory_space<vmem>>, vector<1x10xf32>
    %19 = vector.broadcast %18 : vector<1x10xf32> to vector<64x10xf32>
    %20 = arith.addf %17, %19 : vector<64x10xf32>
    %cst_16 = arith.constant 0.000000e+00 : f32
    %21 = vector.broadcast %cst_16 : f32 to vector<64x10xf32>
    %22 = arith.subf %21, %20 : vector<64x10xf32>
    %23 = math.exp %22 : vector<64x10xf32>
    %cst_17 = arith.constant 1.000000e+00 : f32
    %24 = vector.broadcast %cst_17 : f32 to vector<64x10xf32>
    %25 = arith.addf %24, %23 : vector<64x10xf32>
    %cst_18 = arith.constant 1.000000e+00 : f32
    %26 = vector.broadcast %cst_18 : f32 to vector<64x10xf32>
    %27 = arith.divf %26, %25 : vector<64x10xf32>
    %28 = arith.mulf %20, %27 : vector<64x10xf32>
    %c0_19 = arith.constant 0 : index
    %c0_20 = arith.constant 0 : index
    %c0_21 = arith.constant 0 : index
    %29 = vector.load %arg6[%c0_19, %c0_20, %c0_21] : memref<8x368x64xf32, #tpu.memory_space<vmem>>, vector<1x368x64xf32>
    %30 = vector.shape_cast %29 : vector<1x368x64xf32> to vector<368x64xf32>
    %cst_22 = arith.constant dense<0.000000e+00> : vector<368x10xf32>
    %31 = tpu.matmul %30, %28, %cst_22 {dimension_numbers = #tpu.dot_dimension_numbers<[1], [0], [0], [1], [0, 0, 1, 1], [], []>} : vector<368x64xf32>, vector<64x10xf32>, vector<368x10xf32> -> vector<368x10xf32>
    %32 = arith.addf %14, %31 : vector<368x10xf32>
    %c1 = arith.constant 1 : index
    %c0_23 = arith.constant 0 : index
    %c0_24 = arith.constant 0 : index
    %33 = vector.load %arg4[%c1, %c0_23, %c0_24] : memref<8x50x10xf32, #tpu.memory_space<vmem>>, vector<1x50x10xf32>
    %34 = vector.shape_cast %33 : vector<1x50x10xf32> to vector<50x10xf32>
    %cst_25 = arith.constant dense<0.000000e+00> : vector<64x10xf32>
    %35 = tpu.matmul %13, %34, %cst_25 {dimension_numbers = #tpu.dot_dimension_numbers<[1], [0], [0], [1], [0, 0, 1, 1], [], []>} : vector<64x50xf32>, vector<50x10xf32>, vector<64x10xf32> -> vector<64x10xf32>
    %c0_26 = arith.constant 0 : index
    %c0_27 = arith.constant 0 : index
    %36 = vector.load %arg5[%c0_26, %c0_27] : memref<1x10xf32, #tpu.memory_space<vmem>>, vector<1x10xf32>
    %37 = vector.broadcast %36 : vector<1x10xf32> to vector<64x10xf32>
    %38 = arith.addf %35, %37 : vector<64x10xf32>
    %cst_28 = arith.constant 0.000000e+00 : f32
    %39 = vector.broadcast %cst_28 : f32 to vector<64x10xf32>
    %40 = arith.subf %39, %38 : vector<64x10xf32>
    %41 = math.exp %40 : vector<64x10xf32>
    %cst_29 = arith.constant 1.000000e+00 : f32
    %42 = vector.broadcast %cst_29 : f32 to vector<64x10xf32>
    %43 = arith.addf %42, %41 : vector<64x10xf32>
    %cst_30 = arith.constant 1.000000e+00 : f32
    %44 = vector.broadcast %cst_30 : f32 to vector<64x10xf32>
    %45 = arith.divf %44, %43 : vector<64x10xf32>
    %46 = arith.mulf %38, %45 : vector<64x10xf32>
    %c1_31 = arith.constant 1 : index
    %c0_32 = arith.constant 0 : index
    %c0_33 = arith.constant 0 : index
    %47 = vector.load %arg6[%c1_31, %c0_32, %c0_33] : memref<8x368x64xf32, #tpu.memory_space<vmem>>, vector<1x368x64xf32>
    %48 = vector.shape_cast %47 : vector<1x368x64xf32> to vector<368x64xf32>
    %cst_34 = arith.constant dense<0.000000e+00> : vector<368x10xf32>
    %49 = tpu.matmul %48, %46, %cst_34 {dimension_numbers = #tpu.dot_dimension_numbers<[1], [0], [0], [1], [0, 0, 1, 1], [], []>} : vector<368x64xf32>, vector<64x10xf32>, vector<368x10xf32> -> vector<368x10xf32>
    %50 = arith.addf %32, %49 : vector<368x10xf32>
    %c2 = arith.constant 2 : index
    %c0_35 = arith.constant 0 : index
    %c0_36 = arith.constant 0 : index
    %51 = vector.load %arg4[%c2, %c0_35, %c0_36] : memref<8x50x10xf32, #tpu.memory_space<vmem>>, vector<1x50x10xf32>
    %52 = vector.shape_cast %51 : vector<1x50x10xf32> to vector<50x10xf32>
    %cst_37 = arith.constant dense<0.000000e+00> : vector<64x10xf32>
    %53 = tpu.matmul %13, %52, %cst_37 {dimension_numbers = #tpu.dot_dimension_numbers<[1], [0], [0], [1], [0, 0, 1, 1], [], []>} : vector<64x50xf32>, vector<50x10xf32>, vector<64x10xf32> -> vector<64x10xf32>
    %c0_38 = arith.constant 0 : index
    %c0_39 = arith.constant 0 : index
    %54 = vector.load %arg5[%c0_38, %c0_39] : memref<1x10xf32, #tpu.memory_space<vmem>>, vector<1x10xf32>
    %55 = vector.broadcast %54 : vector<1x10xf32> to vector<64x10xf32>
    %56 = arith.addf %53, %55 : vector<64x10xf32>
    %cst_40 = arith.constant 0.000000e+00 : f32
    %57 = vector.broadcast %cst_40 : f32 to vector<64x10xf32>
    %58 = arith.subf %57, %56 : vector<64x10xf32>
    %59 = math.exp %58 : vector<64x10xf32>
    %cst_41 = arith.constant 1.000000e+00 : f32
    %60 = vector.broadcast %cst_41 : f32 to vector<64x10xf32>
    %61 = arith.addf %60, %59 : vector<64x10xf32>
    %cst_42 = arith.constant 1.000000e+00 : f32
    %62 = vector.broadcast %cst_42 : f32 to vector<64x10xf32>
    %63 = arith.divf %62, %61 : vector<64x10xf32>
    %64 = arith.mulf %56, %63 : vector<64x10xf32>
    %c2_43 = arith.constant 2 : index
    %c0_44 = arith.constant 0 : index
    %c0_45 = arith.constant 0 : index
    %65 = vector.load %arg6[%c2_43, %c0_44, %c0_45] : memref<8x368x64xf32, #tpu.memory_space<vmem>>, vector<1x368x64xf32>
    %66 = vector.shape_cast %65 : vector<1x368x64xf32> to vector<368x64xf32>
    %cst_46 = arith.constant dense<0.000000e+00> : vector<368x10xf32>
    %67 = tpu.matmul %66, %64, %cst_46 {dimension_numbers = #tpu.dot_dimension_numbers<[1], [0], [0], [1], [0, 0, 1, 1], [], []>} : vector<368x64xf32>, vector<64x10xf32>, vector<368x10xf32> -> vector<368x10xf32>
    %68 = arith.addf %50, %67 : vector<368x10xf32>
    %c3 = arith.constant 3 : index
    %c0_47 = arith.constant 0 : index
    %c0_48 = arith.constant 0 : index
    %69 = vector.load %arg4[%c3, %c0_47, %c0_48] : memref<8x50x10xf32, #tpu.memory_space<vmem>>, vector<1x50x10xf32>
    %70 = vector.shape_cast %69 : vector<1x50x10xf32> to vector<50x10xf32>
    %cst_49 = arith.constant dense<0.000000e+00> : vector<64x10xf32>
    %71 = tpu.matmul %13, %70, %cst_49 {dimension_numbers = #tpu.dot_dimension_numbers<[1], [0], [0], [1], [0, 0, 1, 1], [], []>} : vector<64x50xf32>, vector<50x10xf32>, vector<64x10xf32> -> vector<64x10xf32>
    %c0_50 = arith.constant 0 : index
    %c0_51 = arith.constant 0 : index
    %72 = vector.load %arg5[%c0_50, %c0_51] : memref<1x10xf32, #tpu.memory_space<vmem>>, vector<1x10xf32>
    %73 = vector.broadcast %72 : vector<1x10xf32> to vector<64x10xf32>
    %74 = arith.addf %71, %73 : vector<64x10xf32>
    %cst_52 = arith.constant 0.000000e+00 : f32
    %75 = vector.broadcast %cst_52 : f32 to vector<64x10xf32>
    %76 = arith.subf %75, %74 : vector<64x10xf32>
    %77 = math.exp %76 : vector<64x10xf32>
    %cst_53 = arith.constant 1.000000e+00 : f32
    %78 = vector.broadcast %cst_53 : f32 to vector<64x10xf32>
    %79 = arith.addf %78, %77 : vector<64x10xf32>
    %cst_54 = arith.constant 1.000000e+00 : f32
    %80 = vector.broadcast %cst_54 : f32 to vector<64x10xf32>
    %81 = arith.divf %80, %79 : vector<64x10xf32>
    %82 = arith.mulf %74, %81 : vector<64x10xf32>
    %c3_55 = arith.constant 3 : index
    %c0_56 = arith.constant 0 : index
    %c0_57 = arith.constant 0 : index
    %83 = vector.load %arg6[%c3_55, %c0_56, %c0_57] : memref<8x368x64xf32, #tpu.memory_space<vmem>>, vector<1x368x64xf32>
    %84 = vector.shape_cast %83 : vector<1x368x64xf32> to vector<368x64xf32>
    %cst_58 = arith.constant dense<0.000000e+00> : vector<368x10xf32>
    %85 = tpu.matmul %84, %82, %cst_58 {dimension_numbers = #tpu.dot_dimension_numbers<[1], [0], [0], [1], [0, 0, 1, 1], [], []>} : vector<368x64xf32>, vector<64x10xf32>, vector<368x10xf32> -> vector<368x10xf32>
    %86 = arith.addf %68, %85 : vector<368x10xf32>
    %c4 = arith.constant 4 : index
    %c0_59 = arith.constant 0 : index
    %c0_60 = arith.constant 0 : index
    %87 = vector.load %arg4[%c4, %c0_59, %c0_60] : memref<8x50x10xf32, #tpu.memory_space<vmem>>, vector<1x50x10xf32>
    %88 = vector.shape_cast %87 : vector<1x50x10xf32> to vector<50x10xf32>
    %cst_61 = arith.constant dense<0.000000e+00> : vector<64x10xf32>
    %89 = tpu.matmul %13, %88, %cst_61 {dimension_numbers = #tpu.dot_dimension_numbers<[1], [0], [0], [1], [0, 0, 1, 1], [], []>} : vector<64x50xf32>, vector<50x10xf32>, vector<64x10xf32> -> vector<64x10xf32>
    %c0_62 = arith.constant 0 : index
    %c0_63 = arith.constant 0 : index
    %90 = vector.load %arg5[%c0_62, %c0_63] : memref<1x10xf32, #tpu.memory_space<vmem>>, vector<1x10xf32>
    %91 = vector.broadcast %90 : vector<1x10xf32> to vector<64x10xf32>
    %92 = arith.addf %89, %91 : vector<64x10xf32>
    %cst_64 = arith.constant 0.000000e+00 : f32
    %93 = vector.broadcast %cst_64 : f32 to vector<64x10xf32>
    %94 = arith.subf %93, %92 : vector<64x10xf32>
    %95 = math.exp %94 : vector<64x10xf32>
    %cst_65 = arith.constant 1.000000e+00 : f32
    %96 = vector.broadcast %cst_65 : f32 to vector<64x10xf32>
    %97 = arith.addf %96, %95 : vector<64x10xf32>
    %cst_66 = arith.constant 1.000000e+00 : f32
    %98 = vector.broadcast %cst_66 : f32 to vector<64x10xf32>
    %99 = arith.divf %98, %97 : vector<64x10xf32>
    %100 = arith.mulf %92, %99 : vector<64x10xf32>
    %c4_67 = arith.constant 4 : index
    %c0_68 = arith.constant 0 : index
    %c0_69 = arith.constant 0 : index
    %101 = vector.load %arg6[%c4_67, %c0_68, %c0_69] : memref<8x368x64xf32, #tpu.memory_space<vmem>>, vector<1x368x64xf32>
    %102 = vector.shape_cast %101 : vector<1x368x64xf32> to vector<368x64xf32>
    %cst_70 = arith.constant dense<0.000000e+00> : vector<368x10xf32>
    %103 = tpu.matmul %102, %100, %cst_70 {dimension_numbers = #tpu.dot_dimension_numbers<[1], [0], [0], [1], [0, 0, 1, 1], [], []>} : vector<368x64xf32>, vector<64x10xf32>, vector<368x10xf32> -> vector<368x10xf32>
    %104 = arith.addf %86, %103 : vector<368x10xf32>
    %c5 = arith.constant 5 : index
    %c0_71 = arith.constant 0 : index
    %c0_72 = arith.constant 0 : index
    %105 = vector.load %arg4[%c5, %c0_71, %c0_72] : memref<8x50x10xf32, #tpu.memory_space<vmem>>, vector<1x50x10xf32>
    %106 = vector.shape_cast %105 : vector<1x50x10xf32> to vector<50x10xf32>
    %cst_73 = arith.constant dense<0.000000e+00> : vector<64x10xf32>
    %107 = tpu.matmul %13, %106, %cst_73 {dimension_numbers = #tpu.dot_dimension_numbers<[1], [0], [0], [1], [0, 0, 1, 1], [], []>} : vector<64x50xf32>, vector<50x10xf32>, vector<64x10xf32> -> vector<64x10xf32>
    %c0_74 = arith.constant 0 : index
    %c0_75 = arith.constant 0 : index
    %108 = vector.load %arg5[%c0_74, %c0_75] : memref<1x10xf32, #tpu.memory_space<vmem>>, vector<1x10xf32>
    %109 = vector.broadcast %108 : vector<1x10xf32> to vector<64x10xf32>
    %110 = arith.addf %107, %109 : vector<64x10xf32>
    %cst_76 = arith.constant 0.000000e+00 : f32
    %111 = vector.broadcast %cst_76 : f32 to vector<64x10xf32>
    %112 = arith.subf %111, %110 : vector<64x10xf32>
    %113 = math.exp %112 : vector<64x10xf32>
    %cst_77 = arith.constant 1.000000e+00 : f32
    %114 = vector.broadcast %cst_77 : f32 to vector<64x10xf32>
    %115 = arith.addf %114, %113 : vector<64x10xf32>
    %cst_78 = arith.constant 1.000000e+00 : f32
    %116 = vector.broadcast %cst_78 : f32 to vector<64x10xf32>
    %117 = arith.divf %116, %115 : vector<64x10xf32>
    %118 = arith.mulf %110, %117 : vector<64x10xf32>
    %c5_79 = arith.constant 5 : index
    %c0_80 = arith.constant 0 : index
    %c0_81 = arith.constant 0 : index
    %119 = vector.load %arg6[%c5_79, %c0_80, %c0_81] : memref<8x368x64xf32, #tpu.memory_space<vmem>>, vector<1x368x64xf32>
    %120 = vector.shape_cast %119 : vector<1x368x64xf32> to vector<368x64xf32>
    %cst_82 = arith.constant dense<0.000000e+00> : vector<368x10xf32>
    %121 = tpu.matmul %120, %118, %cst_82 {dimension_numbers = #tpu.dot_dimension_numbers<[1], [0], [0], [1], [0, 0, 1, 1], [], []>} : vector<368x64xf32>, vector<64x10xf32>, vector<368x10xf32> -> vector<368x10xf32>
    %122 = arith.addf %104, %121 : vector<368x10xf32>
    %c6 = arith.constant 6 : index
    %c0_83 = arith.constant 0 : index
    %c0_84 = arith.constant 0 : index
    %123 = vector.load %arg4[%c6, %c0_83, %c0_84] : memref<8x50x10xf32, #tpu.memory_space<vmem>>, vector<1x50x10xf32>
    %124 = vector.shape_cast %123 : vector<1x50x10xf32> to vector<50x10xf32>
    %cst_85 = arith.constant dense<0.000000e+00> : vector<64x10xf32>
    %125 = tpu.matmul %13, %124, %cst_85 {dimension_numbers = #tpu.dot_dimension_numbers<[1], [0], [0], [1], [0, 0, 1, 1], [], []>} : vector<64x50xf32>, vector<50x10xf32>, vector<64x10xf32> -> vector<64x10xf32>
    %c0_86 = arith.constant 0 : index
    %c0_87 = arith.constant 0 : index
    %126 = vector.load %arg5[%c0_86, %c0_87] : memref<1x10xf32, #tpu.memory_space<vmem>>, vector<1x10xf32>
    %127 = vector.broadcast %126 : vector<1x10xf32> to vector<64x10xf32>
    %128 = arith.addf %125, %127 : vector<64x10xf32>
    %cst_88 = arith.constant 0.000000e+00 : f32
    %129 = vector.broadcast %cst_88 : f32 to vector<64x10xf32>
    %130 = arith.subf %129, %128 : vector<64x10xf32>
    %131 = math.exp %130 : vector<64x10xf32>
    %cst_89 = arith.constant 1.000000e+00 : f32
    %132 = vector.broadcast %cst_89 : f32 to vector<64x10xf32>
    %133 = arith.addf %132, %131 : vector<64x10xf32>
    %cst_90 = arith.constant 1.000000e+00 : f32
    %134 = vector.broadcast %cst_90 : f32 to vector<64x10xf32>
    %135 = arith.divf %134, %133 : vector<64x10xf32>
    %136 = arith.mulf %128, %135 : vector<64x10xf32>
    %c6_91 = arith.constant 6 : index
    %c0_92 = arith.constant 0 : index
    %c0_93 = arith.constant 0 : index
    %137 = vector.load %arg6[%c6_91, %c0_92, %c0_93] : memref<8x368x64xf32, #tpu.memory_space<vmem>>, vector<1x368x64xf32>
    %138 = vector.shape_cast %137 : vector<1x368x64xf32> to vector<368x64xf32>
    %cst_94 = arith.constant dense<0.000000e+00> : vector<368x10xf32>
    %139 = tpu.matmul %138, %136, %cst_94 {dimension_numbers = #tpu.dot_dimension_numbers<[1], [0], [0], [1], [0, 0, 1, 1], [], []>} : vector<368x64xf32>, vector<64x10xf32>, vector<368x10xf32> -> vector<368x10xf32>
    %140 = arith.addf %122, %139 : vector<368x10xf32>
    %c7 = arith.constant 7 : index
    %c0_95 = arith.constant 0 : index
    %c0_96 = arith.constant 0 : index
    %141 = vector.load %arg4[%c7, %c0_95, %c0_96] : memref<8x50x10xf32, #tpu.memory_space<vmem>>, vector<1x50x10xf32>
    %142 = vector.shape_cast %141 : vector<1x50x10xf32> to vector<50x10xf32>
    %cst_97 = arith.constant dense<0.000000e+00> : vector<64x10xf32>
    %143 = tpu.matmul %13, %142, %cst_97 {dimension_numbers = #tpu.dot_dimension_numbers<[1], [0], [0], [1], [0, 0, 1, 1], [], []>} : vector<64x50xf32>, vector<50x10xf32>, vector<64x10xf32> -> vector<64x10xf32>
    %c0_98 = arith.constant 0 : index
    %c0_99 = arith.constant 0 : index
    %144 = vector.load %arg5[%c0_98, %c0_99] : memref<1x10xf32, #tpu.memory_space<vmem>>, vector<1x10xf32>
    %145 = vector.broadcast %144 : vector<1x10xf32> to vector<64x10xf32>
    %146 = arith.addf %143, %145 : vector<64x10xf32>
    %cst_100 = arith.constant 0.000000e+00 : f32
    %147 = vector.broadcast %cst_100 : f32 to vector<64x10xf32>
    %148 = arith.subf %147, %146 : vector<64x10xf32>
    %149 = math.exp %148 : vector<64x10xf32>
    %cst_101 = arith.constant 1.000000e+00 : f32
    %150 = vector.broadcast %cst_101 : f32 to vector<64x10xf32>
    %151 = arith.addf %150, %149 : vector<64x10xf32>
    %cst_102 = arith.constant 1.000000e+00 : f32
    %152 = vector.broadcast %cst_102 : f32 to vector<64x10xf32>
    %153 = arith.divf %152, %151 : vector<64x10xf32>
    %154 = arith.mulf %146, %153 : vector<64x10xf32>
    %c7_103 = arith.constant 7 : index
    %c0_104 = arith.constant 0 : index
    %c0_105 = arith.constant 0 : index
    %155 = vector.load %arg6[%c7_103, %c0_104, %c0_105] : memref<8x368x64xf32, #tpu.memory_space<vmem>>, vector<1x368x64xf32>
    %156 = vector.shape_cast %155 : vector<1x368x64xf32> to vector<368x64xf32>
    %cst_106 = arith.constant dense<0.000000e+00> : vector<368x10xf32>
    %157 = tpu.matmul %156, %154, %cst_106 {dimension_numbers = #tpu.dot_dimension_numbers<[1], [0], [0], [1], [0, 0, 1, 1], [], []>} : vector<368x64xf32>, vector<64x10xf32>, vector<368x10xf32> -> vector<368x10xf32>
    %158 = arith.addf %140, %157 : vector<368x10xf32>
    %c0_107 = arith.constant 0 : index
    %c0_108 = arith.constant 0 : index
    %159 = vector.load %arg8[%c0_107, %c0_108] : memref<10x384xf32, #tpu.memory_space<vmem>>, vector<10x384xf32>
    %cst_109 = arith.constant dense<0.000000e+00> : vector<368x384xf32>
    %160 = tpu.matmul %158, %159, %cst_109 {dimension_numbers = #tpu.dot_dimension_numbers<[1], [0], [0], [1], [0, 0, 1, 1], [], []>} : vector<368x10xf32>, vector<10x384xf32>, vector<368x384xf32> -> vector<368x384xf32>
    %c0_110 = arith.constant 0 : index
    %c0_111 = arith.constant 0 : index
    %161 = vector.load %arg9[%c0_110, %c0_111] : memref<1x384xf32, #tpu.memory_space<vmem>>, vector<1x384xf32>
    %162 = vector.broadcast %161 : vector<1x384xf32> to vector<368x384xf32>
    %163 = arith.addf %160, %162 : vector<368x384xf32>
    %cst_112 = arith.constant 0.000000e+00 : f32
    %164 = vector.broadcast %cst_112 : f32 to vector<368x384xf32>
    %165 = arith.subf %164, %163 : vector<368x384xf32>
    %166 = math.exp %165 : vector<368x384xf32>
    %cst_113 = arith.constant 1.000000e+00 : f32
    %167 = vector.broadcast %cst_113 : f32 to vector<368x384xf32>
    %168 = arith.addf %167, %166 : vector<368x384xf32>
    %cst_114 = arith.constant 1.000000e+00 : f32
    %169 = vector.broadcast %cst_114 : f32 to vector<368x384xf32>
    %170 = arith.divf %169, %168 : vector<368x384xf32>
    %171 = arith.mulf %163, %170 : vector<368x384xf32>
    %c0_115 = arith.constant 0 : index
    %c0_116 = arith.constant 0 : index
    %172 = vector.load %arg10[%c0_115, %c0_116] : memref<368x384xf32, #tpu.memory_space<vmem>>, vector<368x384xf32>
    tpu.vector_store %arg10[%c0_115, %c0_116], %171 {strides = array<i32>} : memref<368x384xf32, #tpu.memory_space<vmem>>, vector<368x384xf32>,
    return
  }
  func.func @transform_0(%arg0: i32) -> (i32, i32) {
    %c0_i32 = arith.constant 0 : i32
    %c0_i32_0 = arith.constant 0 : i32
    %c0_i32_1 = arith.constant 0 : i32
    return %c0_i32, %c0_i32_0 : i32, i32
  }
  func.func @transform_1(%arg0: i32) -> (i32, i32) {
    %c0_i32 = arith.constant 0 : i32
    %c0_i32_0 = arith.constant 0 : i32
    %c0_i32_1 = arith.constant 0 : i32
    return %c0_i32, %c0_i32_0 : i32, i32
  }
  func.func @transform_2(%arg0: i32) -> (i32, i32) {
    %c0_i32 = arith.constant 0 : i32
    %c0_i32_0 = arith.constant 0 : i32
    %c0_i32_1 = arith.constant 0 : i32
    return %c0_i32, %c0_i32_0 : i32, i32
  }
  func.func @transform_3(%arg0: i32) -> (i32, i32, i32) {
    %c0_i32 = arith.constant 0 : i32
    %c0_i32_0 = arith.constant 0 : i32
    %c0_i32_1 = arith.constant 0 : i32
    %c0_i32_2 = arith.constant 0 : i32
    return %c0_i32, %c0_i32_0, %c0_i32_1 : i32, i32, i32
  }
  func.func @transform_4(%arg0: i32) -> (i32, i32) {
    %c0_i32 = arith.constant 0 : i32
    %c0_i32_0 = arith.constant 0 : i32
    %c0_i32_1 = arith.constant 0 : i32
    return %c0_i32, %c0_i32_0 : i32, i32
  }
  func.func @transform_5(%arg0: i32) -> (i32, i32, i32) {
    %c0_i32 = arith.constant 0 : i32
    %c0_i32_0 = arith.constant 0 : i32
    %c0_i32_1 = arith.constant 0 : i32
    return %c0_i32, %arg0, %c0_i32_0 : i32, i32, i32
  }
  func.func @transform_6(%arg0: i32) -> (i32, i32) {
    %c0_i32 = arith.constant 0 : i32
    %c0_i32_0 = arith.constant 0 : i32
    return %arg0, %c0_i32 : i32, i32
  }
  func.func @transform_7(%arg0: i32) -> (i32, i32) {
    %c0_i32 = arith.constant 0 : i32
    %c0_i32_0 = arith.constant 0 : i32
    %c0_i32_1 = arith.constant 0 : i32
    return %c0_i32, %c0_i32_0 : i32, i32
  }
  func.func @transform_8(%arg0: i32) -> (i32, i32) {
    %c0_i32 = arith.constant 0 : i32
    %c0_i32_0 = arith.constant 0 : i32
    %c0_i32_1 = arith.constant 0 : i32
    return %c0_i32, %c0_i32_0 : i32, i32
  }
  func.func @transform_9(%arg0: i32) -> (i32, i32) {
    %c0_i32 = arith.constant 0 : i32
    %c0_i32_0 = arith.constant 0 : i32
    return %arg0, %c0_i32 : i32, i32
  }
}

</mosaic_0001>

<llo_original>
// kernel: forward.1
$region0: #{forward.1}
  #allocation0 [shape = 'u32[]', space=smem, size = 0x4, offset = 0x4, fixed_abs, tag = 'smem constant byte address 0x4 - core index']
  #allocation1 [shape = 'u32[72,128]{1,0:T(1,128)}', space=vmem, size = 0x9000, scoped, tag = 'internal scratch']
  #allocation16 [shape = 's32[]', space=sflag, size = 0x4, offset = 0, fixed_abs, tag = 'sflag constant byte address 0x0 - dummy sync flag']
  %s0 = inlined_call_operand.hbm [shape: f32[64,20], index: 0, kind: input, shape index: {}]
  %s1 = inlined_call_operand.hbm [shape: f32[20,50], index: 1, kind: input, shape index: {}]
  %s2 = inlined_call_operand.hbm [shape: f32[1,50], index: 2, kind: input, shape index: {}]
  %s3 = inlined_call_operand.hbm [shape: f32[8,50,10], index: 3, kind: input, shape index: {}]
  %s4 = inlined_call_operand.hbm [shape: f32[1,10], index: 4, kind: input, shape index: {}]
  %s5 = inlined_call_operand.hbm [shape: f32[8,736,64], index: 5, kind: input, shape index: {}]
  %s6 = inlined_call_operand.hbm [shape: f32[736,10], index: 6, kind: input, shape index: {}]
  %s7 = inlined_call_operand.hbm [shape: f32[10,384], index: 7, kind: input, shape index: {}]
  %s8 = inlined_call_operand.hbm [shape: f32[1,384], index: 8, kind: input, shape index: {}]
  %s9 = inlined_call_operand.vmem [shape: f32[736,384], index: 9, kind: output, shape index: {}]
  %s10 = sld [smem:[#allocation0]]
  $region105: #{forward.1} parent=0
    _
  %s12 = ssub.s32 1, %s10
  %s13 = scalar_select 0, %s12, %s10
  $region1: #{forward.1} parent=0
    #allocation2 [shape = 'u8[32768]{0}', space=vmem, size = 0x8000, scoped, tag = 'input window, operand 0, single buffered']
    #allocation3 [shape = 's32[2]{0}', space=sflag, size = 0x8, scoped, tag = 'scoped memory for forward.1']
    #allocation4 [shape = 'u8[12288]{0}', space=vmem, size = 0x3000, scoped, tag = 'input window, operand 1, single buffered']
    #allocation5 [shape = 's32[1]{0}', space=sflag, size = 0x4, scoped, tag = 'scoped memory for forward.1']
    #allocation6 [shape = 'u8[512]{0}', space=vmem, size = 0x400, scoped, tag = 'input window, operand 2, single buffered']
    #allocation7 [shape = 'u8[229376]{0}', space=vmem, size = 0x38000, scoped, tag = 'input window, operand 3, single buffered']
    #allocation8 [shape = 's32[1]{0}', space=sflag, size = 0x4, scoped, tag = 'scoped memory for forward.1']
    #allocation9 [shape = 'u8[512]{0}', space=vmem, size = 0x400, scoped, tag = 'input window, operand 4, single buffered']
    #allocation10 [shape = 'u8[3014656]{0}', space=vmem, size = 0x2e0000, scoped, tag = 'input window, operand 5']
    #allocation11 [shape = 's32[2]{0}', space=sflag, size = 0x8, scoped, tag = 'scoped memory for forward.1']
    #allocation12 [shape = 'u8[376832]{0}', space=vmem, size = 0x5c000, scoped, tag = 'input window, operand 6']
    #allocation13 [shape = 'u8[24576]{0}', space=vmem, size = 0x6000, scoped, tag = 'input window, operand 7, single buffered']
    #allocation14 [shape = 's32[1]{0}', space=sflag, size = 0x4, scoped, tag = 'scoped memory for forward.1']
    #allocation15 [shape = 'u8[1536]{0}', space=vmem, size = 0x800, scoped, tag = 'input window, operand 8, single buffered']
    %14 = vsyncpa [#allocation3], 0
    %15 = vsyncpa [#allocation5], 0
    %16 = vsyncpa [#allocation8], 0
    %17 = vsyncpa [#allocation11], 0
    %s18 = scalar_lea.sflag [#allocation11], 1
    %19 = vsyncpa %s18, 0
    %20 = vsyncpa [#allocation14], 0
    loop: start=0, step=1, limit=4
    $region2: #{forward.1} parent=1 // loop_pre_header
      _
    $region3: #{forward.1} parent=1 // loop_header
      %s22 = sphi 0, %s26
      %p23 = scmp.ge.s32.totalorder %s22, 4
      %s30 = sphi 0, %s30
      %s32 = sphi 0, %s30
      %s33 = sphi 0, %s32
      %s47 = sphi 0, %s33
      %s51 = sphi 0, %s51
      %s53 = sphi 0, %s51
      %s54 = sphi 0, %s53
      %s68 = sphi 0, %s54
      %s72 = sphi 0, %s72
      %s74 = sphi 0, %s72
      %s75 = sphi 0, %s74
      %s89 = sphi 0, %s75
      %s93 = sphi 0, %s93
      %s95 = sphi 0, %s93
      %s96 = sphi 0, %s95
      %s110 = sphi 0, %s96
      %s114 = sphi 0, %s114
      %s116 = sphi 0, %s114
      %s117 = sphi 0, %s116
      %s131 = sphi 0, %s117
      %s137 = sphi 0, %s139
      %s140 = sphi 0, %s137
      %s141 = sphi 0, %s140
      %s157 = sphi 0, %s141
      %s163 = sphi 0, %s165
      %s166 = sphi 0, %s163
      %s167 = sphi 0, %s166
      %s183 = sphi 0, %s167
      %s187 = sphi 0, %s187
      %s189 = sphi 0, %s187
      %s190 = sphi 0, %s189
      %s204 = sphi 0, %s190
      %s208 = sphi 0, %s208
      %s210 = sphi 0, %s208
      %s211 = sphi 0, %s210
      %s225 = sphi 0, %s211
      %s231 = sphi 0, %s233
      %s234 = sphi 0, %s231
      %s235 = sphi 0, %s234
      %s251 = sphi 0, %s235
    $region4: #{forward.1} parent=1 // loop_header_branch
      %25 = sbr.rel (%p23) target = $region8
    $region5: #{forward.1} parent=1 // loop_body
      %s27 = ssub.s32 %s22, 1
      %s28 = ssub.s32 %s22, 2
      %s29 = sadd.s32 %s22, 1
      %s31 = sadd.s32 %s30, 1
      %p34 = scmp.eq.s32.totalorder %s22, 1
      %p35 = scmp.ne.s32.totalorder %s30, %s32
      %p36 = scmp.eq.s32.totalorder %s22, 0
      %p37 = por %p35, %p36
      %p38 = scmp.ne.s32.totalorder %s30, %s32
      %p39 = scmp.eq.s32.totalorder %s27, 1
      %p40 = por %p38, %p39
      %p41 = scmp.ne.s32.totalorder %s32, %s33
      %p42 = scmp.eq.s32.totalorder %s27, 0
      %p43 = por %p41, %p42
      %p44 = scmp.ne.s32.totalorder %s32, %s33
      %p45 = scmp.eq.s32.totalorder %s28, 1
      %p46 = por %p44, %p45
      %p48 = scmp.ne.s32.totalorder %s33, %s47
      %p49 = scmp.eq.s32.totalorder %s28, 0
      %p50 = por %p48, %p49
      %s52 = sadd.s32 %s51, 1
      %p55 = scmp.eq.s32.totalorder %s22, 1
      %p56 = scmp.ne.s32.totalorder %s51, %s53
      %p57 = scmp.eq.s32.totalorder %s22, 0
      %p58 = por %p56, %p57
      %p59 = scmp.ne.s32.totalorder %s51, %s53
      %p60 = scmp.eq.s32.totalorder %s27, 1
      %p61 = por %p59, %p60
      %p62 = scmp.ne.s32.totalorder %s53, %s54
      %p63 = scmp.eq.s32.totalorder %s27, 0
      %p64 = por %p62, %p63
      %p65 = scmp.ne.s32.totalorder %s53, %s54
      %p66 = scmp.eq.s32.totalorder %s28, 1
      %p67 = por %p65, %p66
      %p69 = scmp.ne.s32.totalorder %s54, %s68
      %p70 = scmp.eq.s32.totalorder %s28, 0
      %p71 = por %p69, %p70
      %s73 = sadd.s32 %s72, 1
      %p76 = scmp.eq.s32.totalorder %s22, 1
      %p77 = scmp.ne.s32.totalorder %s72, %s74
      %p78 = scmp.eq.s32.totalorder %s22, 0
      %p79 = por %p77, %p78
      %p80 = scmp.ne.s32.totalorder %s72, %s74
      %p81 = scmp.eq.s32.totalorder %s27, 1
      %p82 = por %p80, %p81
      %p83 = scmp.ne.s32.totalorder %s74, %s75
      %p84 = scmp.eq.s32.totalorder %s27, 0
      %p85 = por %p83, %p84
      %p86 = scmp.ne.s32.totalorder %s74, %s75
      %p87 = scmp.eq.s32.totalorder %s28, 1
      %p88 = por %p86, %p87
      %p90 = scmp.ne.s32.totalorder %s75, %s89
      %p91 = scmp.eq.s32.totalorder %s28, 0
      %p92 = por %p90, %p91
      %s94 = sadd.s32 %s93, 1
      %p97 = scmp.eq.s32.totalorder %s22, 1
      %p98 = scmp.ne.s32.totalorder %s93, %s95
      %p99 = scmp.eq.s32.totalorder %s22, 0
      %p100 = por %p98, %p99
      %p101 = scmp.ne.s32.totalorder %s93, %s95
      %p102 = scmp.eq.s32.totalorder %s27, 1
      %p103 = por %p101, %p102
      %p104 = scmp.ne.s32.totalorder %s95, %s96
      %p105 = scmp.eq.s32.totalorder %s27, 0
      %p106 = por %p104, %p105
      %p107 = scmp.ne.s32.totalorder %s95, %s96
      %p108 = scmp.eq.s32.totalorder %s28, 1
      %p109 = por %p107, %p108
      %p111 = scmp.ne.s32.totalorder %s96, %s110
      %p112 = scmp.eq.s32.totalorder %s28, 0
      %p113 = por %p111, %p112
      %s115 = sadd.s32 %s114, 1
      %p118 = scmp.eq.s32.totalorder %s22, 1
      %p119 = scmp.ne.s32.totalorder %s114, %s116
      %p120 = scmp.eq.s32.totalorder %s22, 0
      %p121 = por %p119, %p120
      %p122 = scmp.ne.s32.totalorder %s114, %s116
      %p123 = scmp.eq.s32.totalorder %s27, 1
      %p124 = por %p122, %p123
      %p125 = scmp.ne.s32.totalorder %s116, %s117
      %p126 = scmp.eq.s32.totalorder %s27, 0
      %p127 = por %p125, %p126
      %p128 = scmp.ne.s32.totalorder %s116, %s117
      %p129 = scmp.eq.s32.totalorder %s28, 1
      %p130 = por %p128, %p129
      %p132 = scmp.ne.s32.totalorder %s117, %s131
      %p133 = scmp.eq.s32.totalorder %s28, 0
      %p134 = por %p132, %p133
      %s135 = ssub.s32 %s22, %s29
      %p136 = scmp.eq.s32.totalorder %s135, 0
      %s138 = sadd.s32 %s137, 1
      %s139 = scalar_select %p136, %s137, %s138
      %p142 = pneg %p136
      %p143 = scmp.eq.s32.totalorder %s22, 1
      %p144 = por %p142, %p143
      %p145 = scmp.ne.s32.totalorder %s137, %s140
      %p146 = scmp.eq.s32.totalorder %s22, 0
      %p147 = por %p145, %p146
      %p148 = scmp.ne.s32.totalorder %s137, %s140
      %p149 = scmp.eq.s32.totalorder %s27, 1
      %p150 = por %p148, %p149
      %p151 = scmp.ne.s32.totalorder %s140, %s141
      %p152 = scmp.eq.s32.totalorder %s27, 0
      %p153 = por %p151, %p152
      %p154 = scmp.ne.s32.totalorder %s140, %s141
      %p155 = scmp.eq.s32.totalorder %s28, 1
      %p156 = por %p154, %p155
      %p158 = scmp.ne.s32.totalorder %s141, %s157
      %p159 = scmp.eq.s32.totalorder %s28, 0
      %p160 = por %p158, %p159
      %s161 = ssub.s32 %s22, %s29
      %p162 = scmp.eq.s32.totalorder %s161, 0
      %s164 = sadd.s32 %s163, 1
      %s165 = scalar_select %p162, %s163, %s164
      %p168 = pneg %p162
      %p169 = scmp.eq.s32.totalorder %s22, 1
      %p170 = por %p168, %p169
      %p171 = scmp.ne.s32.totalorder %s163, %s166
      %p172 = scmp.eq.s32.totalorder %s22, 0
      %p173 = por %p171, %p172
      %p174 = scmp.ne.s32.totalorder %s163, %s166
      %p175 = scmp.eq.s32.totalorder %s27, 1
      %p176 = por %p174, %p175
      %p177 = scmp.ne.s32.totalorder %s166, %s167
      %p178 = scmp.eq.s32.totalorder %s27, 0
      %p179 = por %p177, %p178
      %p180 = scmp.ne.s32.totalorder %s166, %s167
      %p181 = scmp.eq.s32.totalorder %s28, 1
      %p182 = por %p180, %p181
      %p184 = scmp.ne.s32.totalorder %s167, %s183
      %p185 = scmp.eq.s32.totalorder %s28, 0
      %p186 = por %p184, %p185
      %s188 = sadd.s32 %s187, 1
      %p191 = scmp.eq.s32.totalorder %s22, 1
      %p192 = scmp.ne.s32.totalorder %s187, %s189
      %p193 = scmp.eq.s32.totalorder %s22, 0
      %p194 = por %p192, %p193
      %p195 = scmp.ne.s32.totalorder %s187, %s189
      %p196 = scmp.eq.s32.totalorder %s27, 1
      %p197 = por %p195, %p196
      %p198 = scmp.ne.s32.totalorder %s189, %s190
      %p199 = scmp.eq.s32.totalorder %s27, 0
      %p200 = por %p198, %p199
      %p201 = scmp.ne.s32.totalorder %s189, %s190
      %p202 = scmp.eq.s32.totalorder %s28, 1
      %p203 = por %p201, %p202
      %p205 = scmp.ne.s32.totalorder %s190, %s204
      %p206 = scmp.eq.s32.totalorder %s28, 0
      %p207 = por %p205, %p206
      %s209 = sadd.s32 %s208, 1
      %p212 = scmp.eq.s32.totalorder %s22, 1
      %p213 = scmp.ne.s32.totalorder %s208, %s210
      %p214 = scmp.eq.s32.totalorder %s22, 0
      %p215 = por %p213, %p214
      %p216 = scmp.ne.s32.totalorder %s208, %s210
      %p217 = scmp.eq.s32.totalorder %s27, 1
      %p218 = por %p216, %p217
      %p219 = scmp.ne.s32.totalorder %s210, %s211
      %p220 = scmp.eq.s32.totalorder %s27, 0
      %p221 = por %p219, %p220
      %p222 = scmp.ne.s32.totalorder %s210, %s211
      %p223 = scmp.eq.s32.totalorder %s28, 1
      %p224 = por %p222, %p223
      %p226 = scmp.ne.s32.totalorder %s211, %s225
      %p227 = scmp.eq.s32.totalorder %s28, 0
      %p228 = por %p226, %p227
      %s229 = ssub.s32 %s22, %s29
      %p230 = scmp.eq.s32.totalorder %s229, 0
      %s232 = sadd.s32 %s231, 1
      %s233 = scalar_select %p230, %s231, %s232
      %p236 = pneg %p230
      %p237 = scmp.eq.s32.totalorder %s22, 1
      %p238 = por %p236, %p237
      %p239 = scmp.ne.s32.totalorder %s231, %s234
      %p240 = scmp.eq.s32.totalorder %s22, 0
      %p241 = por %p239, %p240
      %p242 = scmp.ne.s32.totalorder %s231, %s234
      %p243 = scmp.eq.s32.totalorder %s27, 1
      %p244 = por %p242, %p243
      %p245 = scmp.ne.s32.totalorder %s234, %s235
      %p246 = scmp.eq.s32.totalorder %s27, 0
      %p247 = por %p245, %p246
      %p248 = scmp.ne.s32.totalorder %s234, %s235
      %p249 = scmp.eq.s32.totalorder %s28, 1
      %p250 = por %p248, %p249
      %p252 = scmp.ne.s32.totalorder %s235, %s251
      %p253 = scmp.eq.s32.totalorder %s28, 0
      %p254 = por %p252, %p253
      %p255 = scmp.le.s32.totalorder 1, %s22
      %p256 = scmp.lt.s32.totalorder %s22, 3
      %p257 = pnand %p255, %p256
      %p258 = pneg %p257
      // Predicated region
      $region9: #{forward.1} parent=5 // pred_check
        _
      $region10: #{forward.1} parent=5 // pred_check_branch
        %260 = sbr.rel (%p257) target = $region12
      $region11: #{forward.1} parent=5 // pred_region
        %s261 = ssub.s32 %s22, 1
        // Predicated region
        $region13: #{forward.1} parent=11 // pred_check
          %p262 = pneg %p43
        $region14: #{forward.1} parent=11 // pred_check_branch
          %264 = sbr.rel (%p262) target = $region16
        $region15: #{forward.1} parent=11 // pred_region
          %266 = vsyncadd [#allocation3], 0
          %s267 = sshll.u32 %s0, 4
          %s268 = int_to_ptr.hbm [resolvable:$true] %s267
          %s269 = sshll.u32 [#allocation2], 4
          %s270 = int_to_ptr.vmem [resolvable:$true] %s269
          %275 = dma.hbm_to_vmem [thread:$0]  %s268, 1024, %s270, [#allocation3], 128, 128, 8
        $region16: #{forward.1} parent=11 // pred_fallthru
          _
        // Predicated region
        $region17: #{forward.1} parent=11 // pred_check
          %p276 = pneg %p64
        $region18: #{forward.1} parent=11 // pred_check_branch
          %278 = sbr.rel (%p276) target = $region20
        $region19: #{forward.1} parent=11 // pred_region
          %280 = vsyncadd [#allocation5], 0
          %s281 = sshll.u32 %s1, 4
          %s282 = int_to_ptr.hbm [resolvable:$true] %s281
          %s283 = sshll.u32 [#allocation4], 4
          %s284 = int_to_ptr.vmem [resolvable:$true] %s283
          %289 = dma.hbm_to_vmem [thread:$0]  %s282, 384, %s284, [#allocation5], 128, 128, 8
        $region20: #{forward.1} parent=11 // pred_fallthru
          _
        // Predicated region
        $region21: #{forward.1} parent=11 // pred_check
          %p290 = pneg %p85
        $region22: #{forward.1} parent=11 // pred_check_branch
          %292 = sbr.rel (%p290) target = $region24
        $region23: #{forward.1} parent=11 // pred_region
          %294 = vsyncadd [#allocation5], 0
          %s296 = sshll.u32 %s2, 4
          %s297 = int_to_ptr.hbm [resolvable:$true] %s296
          %s298 = sshll.u32 [#allocation6], 4
          %s299 = int_to_ptr.vmem [resolvable:$true] %s298
          %301 = dma.hbm_to_vmem [thread:$0]  %s297, 16, %s299, [#allocation5]
        $region24: #{forward.1} parent=11 // pred_fallthru
          _
        // Predicated region
        $region25: #{forward.1} parent=11 // pred_check
          %p302 = pneg %p106
        $region26: #{forward.1} parent=11 // pred_check_branch
          %304 = sbr.rel (%p302) target = $region28
        $region27: #{forward.1} parent=11 // pred_region
          %306 = vsyncadd [#allocation8], 0
          %s307 = sshll.u32 %s3, 4
          %s308 = int_to_ptr.hbm [resolvable:$true] %s307
          %s309 = sshll.u32 [#allocation7], 4
          %s310 = int_to_ptr.vmem [resolvable:$true] %s309
          %315 = dma.hbm_to_vmem [thread:$0]  %s308, 7168, %s310, [#allocation8], 128, 128, 8
        $region28: #{forward.1} parent=11 // pred_fallthru
          _
        // Predicated region
        $region29: #{forward.1} parent=11 // pred_check
          %p316 = pneg %p127
        $region30: #{forward.1} parent=11 // pred_check_branch
          %318 = sbr.rel (%p316) target = $region32
        $region31: #{forward.1} parent=11 // pred_region
          %320 = vsyncadd [#allocation8], 0
          %s322 = sshll.u32 %s4, 4
          %s323 = int_to_ptr.hbm [resolvable:$true] %s322
          %s324 = sshll.u32 [#allocation9], 4
          %s325 = int_to_ptr.vmem [resolvable:$true] %s324
          %327 = dma.hbm_to_vmem [thread:$0]  %s323, 16, %s325, [#allocation8]
        $region32: #{forward.1} parent=11 // pred_fallthru
          _
        // Predicated region
        $region33: #{forward.1} parent=11 // pred_check
          %p328 = pneg %p200
        $region34: #{forward.1} parent=11 // pred_check_branch
          %330 = sbr.rel (%p328) target = $region36
        $region35: #{forward.1} parent=11 // pred_region
          %332 = vsyncadd [#allocation14], 0
          %s333 = sshll.u32 %s7, 4
          %s334 = int_to_ptr.hbm [resolvable:$true] %s333
          %s335 = sshll.u32 [#allocation13], 4
          %s336 = int_to_ptr.vmem [resolvable:$true] %s335
          %341 = dma.hbm_to_vmem [thread:$0]  %s334, 768, %s336, [#allocation14], 384, 384, 24
        $region36: #{forward.1} parent=11 // pred_fallthru
          _
        // Predicated region
        $region37: #{forward.1} parent=11 // pred_check
          %p342 = pneg %p221
        $region38: #{forward.1} parent=11 // pred_check_branch
          %344 = sbr.rel (%p342) target = $region40
        $region39: #{forward.1} parent=11 // pred_region
          %346 = vsyncadd [#allocation14], 0
          %s348 = sshll.u32 %s8, 4
          %s349 = int_to_ptr.hbm [resolvable:$true] %s348
          %s350 = sshll.u32 [#allocation15], 4
          %s351 = int_to_ptr.vmem [resolvable:$true] %s350
          %353 = dma.hbm_to_vmem [thread:$0]  %s349, 48, %s351, [#allocation14]
        $region40: #{forward.1} parent=11 // pred_fallthru
          _
      $region12: #{forward.1} parent=5 // pred_fallthru
        _
      %p354 = scmp.lt.s32.totalorder %s22, 2
      // Predicated region
      $region41: #{forward.1} parent=5 // pred_check
        %p355 = pneg %p354
      $region42: #{forward.1} parent=5 // pred_check_branch
        %357 = sbr.rel (%p355) target = $region44
      $region43: #{forward.1} parent=5 // pred_region
        // Predicated region
        $region45: #{forward.1} parent=43 // pred_check
          %p358 = pneg %p147
        $region46: #{forward.1} parent=43 // pred_check_branch
          %360 = sbr.rel (%p358) target = $region48
        $region47: #{forward.1} parent=43 // pred_region
          #allocation17 [shape = 'u32[6]{0}', space=smem, size = 0x18, scoped, tag = 'DMA stride descriptor']
          %s361 = sand.u32 %s22, 1
          %s362 = scalar_lea.sflag [#allocation11], %s361
          %s363 = sand.u32 %s137, 1
          %s364 = smul.addr %s363, 2944
          %s365 = scalar_lea.vmem [#allocation10], %s364
          %s366 = smul.u32 46, %s22
          %368 = vsyncadd %s362, 0
          %s369 = smul.addr %s366, 8
          %s370 = scalar_lea.hbm %s5, %s369
          %s372 = sshll.u32 1, 14
          %s373 = sxor.u32 4294967295, %s372
          %s375 = sld [smem:[#allocation0]]
          %s376 = sadd.s32 2, %s375
          %s378 = sshll.u32 7, 26
          %s379 = sxor.u32 4294967295, %s378
          %s380 = sand.u32 0, %s379
          %s381 = sshll.u32 %s376, 26
          %s382 = sor.u32 %s380, %s381
          %s383 = sshll.u32 %s370, 4
          %s384 = int_to_ptr.hbm [resolvable:$true] %s383
          %s385 = sshll.u32 %s365, 4
          %s386 = int_to_ptr.vmem [resolvable:$true] %s385
          %392 = sst [smem:[#allocation17]] 11776
          %s393 = scalar_lea.smem [#allocation17], 1
          %394 = sst [smem:[%s393]] 5888
          %s395 = scalar_lea.smem [#allocation17], 2
          %396 = sst [smem:[%s395]] 46
          %s397 = scalar_lea.smem [#allocation17], 3
          %398 = sst [smem:[%s397]] 128
          %s399 = scalar_lea.smem [#allocation17], 4
          %400 = sst [smem:[%s399]] 128
          %s401 = scalar_lea.smem [#allocation17], 5
          %402 = sst [smem:[%s401]] 8
          %404 = dma.general %s384, 47104, %s386, %s362, [#allocation16], [#allocation17], %s382, 0
        $region48: #{forward.1} parent=43 // pred_fallthru
          _
        // Predicated region
        $region49: #{forward.1} parent=43 // pred_check
          %p405 = pneg %p173
        $region50: #{forward.1} parent=43 // pred_check_branch
          %407 = sbr.rel (%p405) target = $region52
        $region51: #{forward.1} parent=43 // pred_region
          %s408 = sand.u32 %s22, 1
          %s409 = scalar_lea.sflag [#allocation11], %s408
          %s410 = sand.u32 %s163, 1
          %s411 = smul.addr %s410, 368
          %s412 = scalar_lea.vmem [#allocation12], %s411
          %s413 = smul.u32 46, %s22
          %415 = vsyncadd %s409, 0
          %s416 = smul.addr %s413, 8
          %s417 = scalar_lea.hbm %s6, %s416
          %s418 = sshll.u32 %s417, 4
          %s419 = int_to_ptr.hbm [resolvable:$true] %s418
          %s420 = sshll.u32 %s412, 4
          %s421 = int_to_ptr.vmem [resolvable:$true] %s420
          %426 = dma.hbm_to_vmem [thread:$0]  %s419, 5888, %s421, %s409, 128, 128, 8
        $region52: #{forward.1} parent=43 // pred_fallthru
          _
      $region44: #{forward.1} parent=5 // pred_fallthru
        _
      %p427 = scmp.le.s32.totalorder 1, %s22
      %p428 = scmp.lt.s32.totalorder %s22, 3
      %p429 = pnand %p427, %p428
      %p430 = pneg %p429
      // Predicated region
      $region53: #{forward.1} parent=5 // pred_check
        _
      $region54: #{forward.1} parent=5 // pred_check_branch
        %432 = sbr.rel (%p429) target = $region56
      $region55: #{forward.1} parent=5 // pred_region
        %s433 = ssub.s32 %s22, 1
        // Predicated region
        $region57: #{forward.1} parent=55 // pred_check
          %p434 = pneg %p43
        $region58: #{forward.1} parent=55 // pred_check_branch
          %436 = sbr.rel (%p434) target = $region60
        $region59: #{forward.1} parent=55 // pred_region
          %438 = dma.done [#allocation3], 1024
        $region60: #{forward.1} parent=55 // pred_fallthru
          _
        // Predicated region
        $region61: #{forward.1} parent=55 // pred_check
          %p439 = pneg %p64
        $region62: #{forward.1} parent=55 // pred_check_branch
          %441 = sbr.rel (%p439) target = $region64
        $region63: #{forward.1} parent=55 // pred_region
          %443 = dma.done [#allocation5], 384
        $region64: #{forward.1} parent=55 // pred_fallthru
          _
        // Predicated region
        $region65: #{forward.1} parent=55 // pred_check
          %p444 = pneg %p85
        $region66: #{forward.1} parent=55 // pred_check_branch
          %446 = sbr.rel (%p444) target = $region68
        $region67: #{forward.1} parent=55 // pred_region
          %448 = dma.done [#allocation5], 16
        $region68: #{forward.1} parent=55 // pred_fallthru
          _
        // Predicated region
        $region69: #{forward.1} parent=55 // pred_check
          %p449 = pneg %p106
        $region70: #{forward.1} parent=55 // pred_check_branch
          %451 = sbr.rel (%p449) target = $region72
        $region71: #{forward.1} parent=55 // pred_region
          %453 = dma.done [#allocation8], 7168
        $region72: #{forward.1} parent=55 // pred_fallthru
          _
        // Predicated region
        $region73: #{forward.1} parent=55 // pred_check
          %p454 = pneg %p127
        $region74: #{forward.1} parent=55 // pred_check_branch
          %456 = sbr.rel (%p454) target = $region76
        $region75: #{forward.1} parent=55 // pred_region
          %458 = dma.done [#allocation8], 16
        $region76: #{forward.1} parent=55 // pred_fallthru
          _
        %s459 = sand.u32 %s27, 1
        %s460 = scalar_lea.sflag [#allocation11], %s459
        %s461 = sand.u32 %s140, 1
        %s462 = smul.addr %s461, 2944
        %s463 = scalar_lea.vmem [#allocation10], %s462
        // Predicated region
        $region77: #{forward.1} parent=55 // pred_check
          %p464 = pneg %p153
        $region78: #{forward.1} parent=55 // pred_check_branch
          %466 = sbr.rel (%p464) target = $region80
        $region79: #{forward.1} parent=55 // pred_region
          %468 = dma.done %s460, 47104
        $region80: #{forward.1} parent=55 // pred_fallthru
          _
        %s469 = sand.u32 %s27, 1
        %s470 = scalar_lea.sflag [#allocation11], %s469
        %s471 = sand.u32 %s166, 1
        %s472 = smul.addr %s471, 368
        %s473 = scalar_lea.vmem [#allocation12], %s472
        // Predicated region
        $region81: #{forward.1} parent=55 // pred_check
          %p474 = pneg %p179
        $region82: #{forward.1} parent=55 // pred_check_branch
          %476 = sbr.rel (%p474) target = $region84
        $region83: #{forward.1} parent=55 // pred_region
          %478 = dma.done %s470, 5888
        $region84: #{forward.1} parent=55 // pred_fallthru
          _
        // Predicated region
        $region85: #{forward.1} parent=55 // pred_check
          %p479 = pneg %p200
        $region86: #{forward.1} parent=55 // pred_check_branch
          %481 = sbr.rel (%p479) target = $region88
        $region87: #{forward.1} parent=55 // pred_region
          %483 = dma.done [#allocation14], 768
        $region88: #{forward.1} parent=55 // pred_fallthru
          _
        // Predicated region
        $region89: #{forward.1} parent=55 // pred_check
          %p484 = pneg %p221
        $region90: #{forward.1} parent=55 // pred_check_branch
          %486 = sbr.rel (%p484) target = $region92
        $region91: #{forward.1} parent=55 // pred_region
          %488 = dma.done [#allocation14], 48
        $region92: #{forward.1} parent=55 // pred_fallthru
          _
        %p489 = pneg %p43
        %p490 = pneg %p40
        %p491 = pneg %p64
        %p492 = pneg %p61
        %p493 = pneg %p85
        %p494 = pneg %p82
        %p495 = pneg %p106
        %p496 = pneg %p103
        %p497 = pneg %p127
        %p498 = pneg %p124
        %s499 = sand.u32 %s27, 1
        %s500 = scalar_lea.sflag [#allocation11], %s499
        %s501 = sand.u32 %s140, 1
        %s502 = smul.addr %s501, 2944
        %s503 = scalar_lea.vmem [#allocation10], %s502
        %p504 = pneg %p153
        %p505 = pneg %p150
        %s506 = sand.u32 %s27, 1
        %s507 = scalar_lea.sflag [#allocation11], %s506
        %s508 = sand.u32 %s166, 1
        %s509 = smul.addr %s508, 368
        %s510 = scalar_lea.vmem [#allocation12], %s509
        %p511 = pneg %p179
        %p512 = pneg %p176
        %p513 = pneg %p200
        %p514 = pneg %p197
        %p515 = pneg %p221
        %p516 = pneg %p218
        %p517 = pneg %p247
        %p518 = pneg %p244
        %s519 = smul.u32 46, %s27
        %p520 = scmp.lt.s32.totalorder %s519, 91
        %s521 = scalar_select %p520, %s519, 91
        %s522 = smul.addr %s521, 3
        %s523 = smul.addr %s522, 8
        %s524 = scalar_lea.vmem %s9, %s523
        %s525 = smul.u32 46, %s27
        %s526 = smul.u32 46, %s27
        %s527 = smul.u32 46, %s27
        %p528 = scmp.lt.s32.totalorder %s527, 91
        %s529 = scalar_select %p528, %s527, 91
        %s530 = smul.addr %s529, 3
        %s531 = smul.addr %s530, 8
        %s532 = scalar_lea.vmem %s9, %s531
        %s533 = smul.u32 46, %s27
        %v534 = vld [vmem:[#allocation2] sm:$0xff]
        %v535 = vld [vmem:[#allocation2 + $0x8] sm:$0xff]
        %v536 = vld [vmem:[#allocation2 + $0x10] sm:$0xff]
        %v537 = vld [vmem:[#allocation2 + $0x18] sm:$0xff]
        %v538 = vld [vmem:[#allocation2 + $0x20] sm:$0xff]
        %v539 = vld [vmem:[#allocation2 + $0x28] sm:$0xff]
        %v540 = vld [vmem:[#allocation2 + $0x30] sm:$0xff]
        %v541 = vld [vmem:[#allocation2 + $0x38] sm:$0xff]
        %v542 = vld [vmem:[#allocation4] sm:$0xff]
        %v543 = vld [vmem:[#allocation4 + $0x8] sm:$0xff]
        %v544 = vld [vmem:[#allocation4 + $0x10] sm:$0xf]
        %v545 = vld [vmem:[#allocation6] sm:$0x1]
        %v547 = vperm.slane %v545, 0
        %vm549 = vcmask 162816
        %v551 = vsel %vm549, %v534, 0
        %v554 = vsel %vm549, %v535, 0
        %v557 = vsel %vm549, %v536, 0
        %v560 = vsel %vm549, %v537, 0
        %v563 = vsel %vm549, %v538, 0
        %v566 = vsel %vm549, %v539, 0
        %v569 = vsel %vm549, %v540, 0
        %v572 = vsel %vm549, %v541, 0
        %vm574 = vcmask 1043456
        %v576 = vsel %vm574, %v544, 0
        %578 = vmatpush.msra.mxu0 0.0
        %579 = vmatpush.msra.mxu0 0.0
        %580 = vmatpush.msra.mxu0 0.0
        %581 = vmatpush.msra.mxu0 0.0
        %582 = vmatpush.msra.mxu0 0.0
        %583 = vmatpush.msra.mxu0 0.0
        %584 = vmatpush.msra.mxu0 0.0
        %585 = vmatpush.msra.mxu0 0.0
        %586 = vmatpush.msra.mxu0 0.0
        %587 = vmatpush.msra.mxu0 0.0
        %588 = vmatpush.msra.mxu0 0.0
        %589 = vmatpush.msra.mxu0 0.0
        %590 = vmatpush.msra.mxu0 0.0
        %591 = vmatpush.msra.mxu0 %v576
        %592 = vmatpush.msra.mxu0 %v543
        %593 = vmatpush.msra.mxu0 %v542
        %594 = vmatmul.f32.gmra.mxu0 %v551
        %v595 = vpop.f32.mrf.mxu0
        %v596 = vadd.f32 %v547, %v595
        %597 = vmatmul.f32.gmra.mxu0 %v554
        %v598 = vpop.f32.mrf.mxu0
        %v599 = vadd.f32 %v547, %v598
        %600 = vmatmul.f32.gmra.mxu0 %v557
        %v601 = vpop.f32.mrf.mxu0
        %v602 = vadd.f32 %v547, %v601
        %603 = vmatmul.f32.gmra.mxu0 %v560
        %v604 = vpop.f32.mrf.mxu0
        %v605 = vadd.f32 %v547, %v604
        %606 = vmatmul.f32.gmra.mxu0 %v563
        %v607 = vpop.f32.mrf.mxu0
        %v608 = vadd.f32 %v547, %v607
        %609 = vmatmul.f32.gmra.mxu0 %v566
        %v610 = vpop.f32.mrf.mxu0
        %v611 = vadd.f32 %v547, %v610
        %612 = vmatmul.f32.gmra.mxu0 %v569
        %v613 = vpop.f32.mrf.mxu0
        %v614 = vadd.f32 %v547, %v613
        %615 = vmatmul.f32.gmra.mxu0 %v572
        %v616 = vpop.f32.mrf.mxu0
        %v617 = vadd.f32 %v547, %v616
        %618 = vdwg.mxu0
        %v619 = vsub.f32 0.0, %v596
        %v620 = vsub.f32 0.0, %v599
        %v621 = vsub.f32 0.0, %v602
        %v622 = vsub.f32 0.0, %v605
        %v623 = vsub.f32 0.0, %v608
        %v624 = vsub.f32 0.0, %v611
        %v625 = vsub.f32 0.0, %v614
        %v626 = vsub.f32 0.0, %v617
        %v627 = vmul.f32 %v619, 1.442695
        %v628 = vpow.pop %v627
        %v629 = vmul.f32 %v620, 1.442695
        %v630 = vpow.pop %v629
        %v631 = vmul.f32 %v621, 1.442695
        %v632 = vpow.pop %v631
        %v633 = vmul.f32 %v622, 1.442695
        %v634 = vpow.pop %v633
        %v635 = vmul.f32 %v623, 1.442695
        %v636 = vpow.pop %v635
        %v637 = vmul.f32 %v624, 1.442695
        %v638 = vpow.pop %v637
        %v639 = vmul.f32 %v625, 1.442695
        %v640 = vpow.pop %v639
        %v641 = vmul.f32 %v626, 1.442695
        %v642 = vpow.pop %v641
        %v643 = vadd.f32 %v628, 1.0
        %v644 = vadd.f32 %v630, 1.0
        %v645 = vadd.f32 %v632, 1.0
        %v646 = vadd.f32 %v634, 1.0
        %v647 = vadd.f32 %v636, 1.0
        %v648 = vadd.f32 %v638, 1.0
        %v649 = vadd.f32 %v640, 1.0
        %v650 = vadd.f32 %v642, 1.0
        %v651 = vrcp.pop %v643
        %v652 = vmul.f32 %v643, %v651
        %v653 = vsub.f32 1.0, %v652
        %v654 = vmul.f32 %v651, %v653
        %v655 = vadd.f32 %v651, %v654
        %vm656 = vweird.f32 %v643
        %vm657 = vweird.f32 %v651
        %vm658 = vmor %vm656, %vm657
        %v659 = vsel %vm658, %v651, %v655
        %v660 = vand.u32 2147483647, %v643
        %vm661 = vcmp.eq.f32.partialorder %v660, 8.507059e+37
        %v662 = vand.u32 %v643, 2147483648
        %v663 = vor.u32 1.1754944e-38, %v662
        %v664 = vsel %vm661, %v663, %v659
        %v665 = vmul.f32 1.0, %v664
        %v666 = vrcp.pop %v644
        %v667 = vmul.f32 %v644, %v666
        %v668 = vsub.f32 1.0, %v667
        %v669 = vmul.f32 %v666, %v668
        %v670 = vadd.f32 %v666, %v669
        %vm671 = vweird.f32 %v644
        %vm672 = vweird.f32 %v666
        %vm673 = vmor %vm671, %vm672
        %v674 = vsel %vm673, %v666, %v670
        %v675 = vand.u32 2147483647, %v644
        %vm676 = vcmp.eq.f32.partialorder %v675, 8.507059e+37
        %v677 = vand.u32 %v644, 2147483648
        %v678 = vor.u32 1.1754944e-38, %v677
        %v679 = vsel %vm676, %v678, %v674
        %v680 = vmul.f32 1.0, %v679
        %v681 = vrcp.pop %v645
        %v682 = vmul.f32 %v645, %v681
        %v683 = vsub.f32 1.0, %v682
        %v684 = vmul.f32 %v681, %v683
        %v685 = vadd.f32 %v681, %v684
        %vm686 = vweird.f32 %v645
        %vm687 = vweird.f32 %v681
        %vm688 = vmor %vm686, %vm687
        %v689 = vsel %vm688, %v681, %v685
        %v690 = vand.u32 2147483647, %v645
        %vm691 = vcmp.eq.f32.partialorder %v690, 8.507059e+37
        %v692 = vand.u32 %v645, 2147483648
        %v693 = vor.u32 1.1754944e-38, %v692
        %v694 = vsel %vm691, %v693, %v689
        %v695 = vmul.f32 1.0, %v694
        %v696 = vrcp.pop %v646
        %v697 = vmul.f32 %v646, %v696
        %v698 = vsub.f32 1.0, %v697
        %v699 = vmul.f32 %v696, %v698
        %v700 = vadd.f32 %v696, %v699
        %vm701 = vweird.f32 %v646
        %vm702 = vweird.f32 %v696
        %vm703 = vmor %vm701, %vm702
        %v704 = vsel %vm703, %v696, %v700
        %v705 = vand.u32 2147483647, %v646
        %vm706 = vcmp.eq.f32.partialorder %v705, 8.507059e+37
        %v707 = vand.u32 %v646, 2147483648
        %v708 = vor.u32 1.1754944e-38, %v707
        %v709 = vsel %vm706, %v708, %v704
        %v710 = vmul.f32 1.0, %v709
        %v711 = vrcp.pop %v647
        %v712 = vmul.f32 %v647, %v711
        %v713 = vsub.f32 1.0, %v712
        %v714 = vmul.f32 %v711, %v713
        %v715 = vadd.f32 %v711, %v714
        %vm716 = vweird.f32 %v647
        %vm717 = vweird.f32 %v711
        %vm718 = vmor %vm716, %vm717
        %v719 = vsel %vm718, %v711, %v715
        %v720 = vand.u32 2147483647, %v647
        %vm721 = vcmp.eq.f32.partialorder %v720, 8.507059e+37
        %v722 = vand.u32 %v647, 2147483648
        %v723 = vor.u32 1.1754944e-38, %v722
        %v724 = vsel %vm721, %v723, %v719
        %v725 = vmul.f32 1.0, %v724
        %v726 = vrcp.pop %v648
        %v727 = vmul.f32 %v648, %v726
        %v728 = vsub.f32 1.0, %v727
        %v729 = vmul.f32 %v726, %v728
        %v730 = vadd.f32 %v726, %v729
        %vm731 = vweird.f32 %v648
        %vm732 = vweird.f32 %v726
        %vm733 = vmor %vm731, %vm732
        %v734 = vsel %vm733, %v726, %v730
        %v735 = vand.u32 2147483647, %v648
        %vm736 = vcmp.eq.f32.partialorder %v735, 8.507059e+37
        %v737 = vand.u32 %v648, 2147483648
        %v738 = vor.u32 1.1754944e-38, %v737
        %v739 = vsel %vm736, %v738, %v734
        %v740 = vmul.f32 1.0, %v739
        %v741 = vrcp.pop %v649
        %v742 = vmul.f32 %v649, %v741
        %v743 = vsub.f32 1.0, %v742
        %v744 = vmul.f32 %v741, %v743
        %v745 = vadd.f32 %v741, %v744
        %vm746 = vweird.f32 %v649
        %vm747 = vweird.f32 %v741
        %vm748 = vmor %vm746, %vm747
        %v749 = vsel %vm748, %v741, %v745
        %v750 = vand.u32 2147483647, %v649
        %vm751 = vcmp.eq.f32.partialorder %v750, 8.507059e+37
        %v752 = vand.u32 %v649, 2147483648
        %v753 = vor.u32 1.1754944e-38, %v752
        %v754 = vsel %vm751, %v753, %v749
        %v755 = vmul.f32 1.0, %v754
        %v756 = vrcp.pop %v650
        %v757 = vmul.f32 %v650, %v756
        %v758 = vsub.f32 1.0, %v757
        %v759 = vmul.f32 %v756, %v758
        %v760 = vadd.f32 %v756, %v759
        %vm761 = vweird.f32 %v650
        %vm762 = vweird.f32 %v756
        %vm763 = vmor %vm761, %vm762
        %v764 = vsel %vm763, %v756, %v760
        %v765 = vand.u32 2147483647, %v650
        %vm766 = vcmp.eq.f32.partialorder %v765, 8.507059e+37
        %v767 = vand.u32 %v650, 2147483648
        %v768 = vor.u32 1.1754944e-38, %v767
        %v769 = vsel %vm766, %v768, %v764
        %v770 = vmul.f32 1.0, %v769
        %v771 = vmul.f32 %v596, %v665
        %v772 = vmul.f32 %v599, %v680
        %v773 = vmul.f32 %v602, %v695
        %v774 = vmul.f32 %v605, %v710
        %v775 = vmul.f32 %v608, %v725
        %v776 = vmul.f32 %v611, %v740
        %v777 = vmul.f32 %v614, %v755
        %v778 = vmul.f32 %v617, %v770
        %v779 = vld [vmem:[%s473] sm:$0xff]
        %v780 = vld [vmem:[%s473 + $0x8] sm:$0xff]
        %v781 = vld [vmem:[%s473 + $0x10] sm:$0xff]
        %v782 = vld [vmem:[%s473 + $0x18] sm:$0xff]
        %v783 = vld [vmem:[%s473 + $0x20] sm:$0xff]
        %v784 = vld [vmem:[%s473 + $0x28] sm:$0xff]
        %v785 = vld [vmem:[%s473 + $0x30] sm:$0xff]
        %v786 = vld [vmem:[%s473 + $0x38] sm:$0xff]
        %v787 = vld [vmem:[%s473 + $0x40] sm:$0xff]
        %v788 = vld [vmem:[%s473 + $0x48] sm:$0xff]
        %v789 = vld [vmem:[%s473 + $0x50] sm:$0xff]
        %v790 = vld [vmem:[%s473 + $0x58] sm:$0xff]
        %v791 = vld [vmem:[%s473 + $0x60] sm:$0xff]
        %v792 = vld [vmem:[%s473 + $0x68] sm:$0xff]
        %v793 = vld [vmem:[%s473 + $0x70] sm:$0xff]
        %v794 = vld [vmem:[%s473 + $0x78] sm:$0xff]
        %v795 = vld [vmem:[%s473 + $0x80] sm:$0xff]
        %v796 = vld [vmem:[%s473 + $0x88] sm:$0xff]
        %v797 = vld [vmem:[%s473 + $0x90] sm:$0xff]
        %v798 = vld [vmem:[%s473 + $0x98] sm:$0xff]
        %v799 = vld [vmem:[%s473 + $0xa0] sm:$0xff]
        %v800 = vld [vmem:[%s473 + $0xa8] sm:$0xff]
        %v801 = vld [vmem:[%s473 + $0xb0] sm:$0xff]
        %v802 = vld [vmem:[%s473 + $0xb8] sm:$0xff]
        %v803 = vld [vmem:[%s473 + $0xc0] sm:$0xff]
        %v804 = vld [vmem:[%s473 + $0xc8] sm:$0xff]
        %v805 = vld [vmem:[%s473 + $0xd0] sm:$0xff]
        %v806 = vld [vmem:[%s473 + $0xd8] sm:$0xff]
        %v807 = vld [vmem:[%s473 + $0xe0] sm:$0xff]
        %v808 = vld [vmem:[%s473 + $0xe8] sm:$0xff]
        %v809 = vld [vmem:[%s473 + $0xf0] sm:$0xff]
        %v810 = vld [vmem:[%s473 + $0xf8] sm:$0xff]
        %v811 = vld [vmem:[%s473 + $0x100] sm:$0xff]
        %v812 = vld [vmem:[%s473 + $0x108] sm:$0xff]
        %v813 = vld [vmem:[%s473 + $0x110] sm:$0xff]
        %v814 = vld [vmem:[%s473 + $0x118] sm:$0xff]
        %v815 = vld [vmem:[%s473 + $0x120] sm:$0xff]
        %v816 = vld [vmem:[%s473 + $0x128] sm:$0xff]
        %v817 = vld [vmem:[%s473 + $0x130] sm:$0xff]
        %v818 = vld [vmem:[%s473 + $0x138] sm:$0xff]
        %v819 = vld [vmem:[%s473 + $0x140] sm:$0xff]
        %v820 = vld [vmem:[%s473 + $0x148] sm:$0xff]
        %v821 = vld [vmem:[%s473 + $0x150] sm:$0xff]
        %v822 = vld [vmem:[%s473 + $0x158] sm:$0xff]
        %v823 = vld [vmem:[%s473 + $0x160] sm:$0xff]
        %v824 = vld [vmem:[%s473 + $0x168] sm:$0xff]
        %v825 = vld [vmem:[#allocation7] sm:$0xff]
        %v826 = vld [vmem:[#allocation7 + $0x8] sm:$0xff]
        %v827 = vld [vmem:[#allocation7 + $0x10] sm:$0xff]
        %v828 = vld [vmem:[#allocation7 + $0x18] sm:$0xff]
        %v829 = vld [vmem:[#allocation7 + $0x20] sm:$0xff]
        %v830 = vld [vmem:[#allocation7 + $0x28] sm:$0xff]
        %v831 = vld [vmem:[#allocation7 + $0x30] sm:$0x3]
        %v832 = vld [vmem:[#allocation9] sm:$0x1]
        %v834 = vperm.slane %v832, 0
        %vm836 = vcmask 408576
        %v838 = vsel %vm836, %v771, 0
        %v841 = vsel %vm836, %v772, 0
        %v844 = vsel %vm836, %v773, 0
        %v847 = vsel %vm836, %v774, 0
        %v850 = vsel %vm836, %v775, 0
        %v853 = vsel %vm836, %v776, 0
        %v856 = vsel %vm836, %v777, 0
        %v859 = vsel %vm836, %v778, 0
        %vm861 = vcmask 1041408
        %v863 = vsel %vm861, %v831, 0
        %865 = vmatpush.msra.mxu0 0.0
        %866 = vmatpush.msra.mxu0 0.0
        %867 = vmatpush.msra.mxu0 0.0
        %868 = vmatpush.msra.mxu0 0.0
        %869 = vmatpush.msra.mxu0 0.0
        %870 = vmatpush.msra.mxu0 0.0
        %871 = vmatpush.msra.mxu0 0.0
        %872 = vmatpush.msra.mxu0 0.0
        %873 = vmatpush.msra.mxu0 0.0
        %874 = vmatpush.msra.mxu0 %v863
        %875 = vmatpush.msra.mxu0 %v830
        %876 = vmatpush.msra.mxu0 %v829
        %877 = vmatpush.msra.mxu0 %v828
        %878 = vmatpush.msra.mxu0 %v827
        %879 = vmatpush.msra.mxu0 %v826
        %880 = vmatpush.msra.mxu0 %v825
        %881 = vmatmul.f32.gmra.mxu0 %v838
        %v882 = vpop.f32.mrf.mxu0
        %v883 = vadd.f32 %v834, %v882
        %884 = vmatmul.f32.gmra.mxu0 %v841
        %v885 = vpop.f32.mrf.mxu0
        %v886 = vadd.f32 %v834, %v885
        %887 = vmatmul.f32.gmra.mxu0 %v844
        %v888 = vpop.f32.mrf.mxu0
        %v889 = vadd.f32 %v834, %v888
        %890 = vmatmul.f32.gmra.mxu0 %v847
        %v891 = vpop.f32.mrf.mxu0
        %v892 = vadd.f32 %v834, %v891
        %893 = vmatmul.f32.gmra.mxu0 %v850
        %v894 = vpop.f32.mrf.mxu0
        %v895 = vadd.f32 %v834, %v894
        %896 = vmatmul.f32.gmra.mxu0 %v853
        %v897 = vpop.f32.mrf.mxu0
        %v898 = vadd.f32 %v834, %v897
        %899 = vmatmul.f32.gmra.mxu0 %v856
        %v900 = vpop.f32.mrf.mxu0
        %v901 = vadd.f32 %v834, %v900
        %902 = vmatmul.f32.gmra.mxu0 %v859
        %v903 = vpop.f32.mrf.mxu0
        %v904 = vadd.f32 %v834, %v903
        %905 = vdwg.mxu0
        %v906 = vsub.f32 0.0, %v883
        %v907 = vsub.f32 0.0, %v886
        %v908 = vsub.f32 0.0, %v889
        %v909 = vsub.f32 0.0, %v892
        %v910 = vsub.f32 0.0, %v895
        %v911 = vsub.f32 0.0, %v898
        %v912 = vsub.f32 0.0, %v901
        %v913 = vsub.f32 0.0, %v904
        %v914 = vmul.f32 %v906, 1.442695
        %v915 = vpow.pop %v914
        %v916 = vmul.f32 %v907, 1.442695
        %v917 = vpow.pop %v916
        %v918 = vmul.f32 %v908, 1.442695
        %v919 = vpow.pop %v918
        %v920 = vmul.f32 %v909, 1.442695
        %v921 = vpow.pop %v920
        %v922 = vmul.f32 %v910, 1.442695
        %v923 = vpow.pop %v922
        %v924 = vmul.f32 %v911, 1.442695
        %v925 = vpow.pop %v924
        %v926 = vmul.f32 %v912, 1.442695
        %v927 = vpow.pop %v926
        %v928 = vmul.f32 %v913, 1.442695
        %v929 = vpow.pop %v928
        %v930 = vadd.f32 %v915, 1.0
        %v931 = vadd.f32 %v917, 1.0
        %v932 = vadd.f32 %v919, 1.0
        %v933 = vadd.f32 %v921, 1.0
        %v934 = vadd.f32 %v923, 1.0
        %v935 = vadd.f32 %v925, 1.0
        %v936 = vadd.f32 %v927, 1.0
        %v937 = vadd.f32 %v929, 1.0
        %v938 = vrcp.pop %v930
        %v939 = vmul.f32 %v930, %v938
        %v940 = vsub.f32 1.0, %v939
        %v941 = vmul.f32 %v938, %v940
        %v942 = vadd.f32 %v938, %v941
        %vm943 = vweird.f32 %v930
        %vm944 = vweird.f32 %v938
        %vm945 = vmor %vm943, %vm944
        %v946 = vsel %vm945, %v938, %v942
        %v947 = vand.u32 2147483647, %v930
        %vm948 = vcmp.eq.f32.partialorder %v947, 8.507059e+37
        %v949 = vand.u32 %v930, 2147483648
        %v950 = vor.u32 1.1754944e-38, %v949
        %v951 = vsel %vm948, %v950, %v946
        %v952 = vmul.f32 1.0, %v951
        %v953 = vrcp.pop %v931
        %v954 = vmul.f32 %v931, %v953
        %v955 = vsub.f32 1.0, %v954
        %v956 = vmul.f32 %v953, %v955
        %v957 = vadd.f32 %v953, %v956
        %vm958 = vweird.f32 %v931
        %vm959 = vweird.f32 %v953
        %vm960 = vmor %vm958, %vm959
        %v961 = vsel %vm960, %v953, %v957
        %v962 = vand.u32 2147483647, %v931
        %vm963 = vcmp.eq.f32.partialorder %v962, 8.507059e+37
        %v964 = vand.u32 %v931, 2147483648
        %v965 = vor.u32 1.1754944e-38, %v964
        %v966 = vsel %vm963, %v965, %v961
        %v967 = vmul.f32 1.0, %v966
        %v968 = vrcp.pop %v932
        %v969 = vmul.f32 %v932, %v968
        %v970 = vsub.f32 1.0, %v969
        %v971 = vmul.f32 %v968, %v970
        %v972 = vadd.f32 %v968, %v971
        %vm973 = vweird.f32 %v932
        %vm974 = vweird.f32 %v968
        %vm975 = vmor %vm973, %vm974
        %v976 = vsel %vm975, %v968, %v972
        %v977 = vand.u32 2147483647, %v932
        %vm978 = vcmp.eq.f32.partialorder %v977, 8.507059e+37
        %v979 = vand.u32 %v932, 2147483648
        %v980 = vor.u32 1.1754944e-38, %v979
        %v981 = vsel %vm978, %v980, %v976
        %v982 = vmul.f32 1.0, %v981
        %v983 = vrcp.pop %v933
        %v984 = vmul.f32 %v933, %v983
        %v985 = vsub.f32 1.0, %v984
        %v986 = vmul.f32 %v983, %v985
        %v987 = vadd.f32 %v983, %v986
        %vm988 = vweird.f32 %v933
        %vm989 = vweird.f32 %v983
        %vm990 = vmor %vm988, %vm989
        %v991 = vsel %vm990, %v983, %v987
        %v992 = vand.u32 2147483647, %v933
        %vm993 = vcmp.eq.f32.partialorder %v992, 8.507059e+37
        %v994 = vand.u32 %v933, 2147483648
        %v995 = vor.u32 1.1754944e-38, %v994
        %v996 = vsel %vm993, %v995, %v991
        %v997 = vmul.f32 1.0, %v996
        %v998 = vrcp.pop %v934
        %v999 = vmul.f32 %v934, %v998
        %v1000 = vsub.f32 1.0, %v999
        %v1001 = vmul.f32 %v998, %v1000
        %v1002 = vadd.f32 %v998, %v1001
        %vm1003 = vweird.f32 %v934
        %vm1004 = vweird.f32 %v998
        %vm1005 = vmor %vm1003, %vm1004
        %v1006 = vsel %vm1005, %v998, %v1002
        %v1007 = vand.u32 2147483647, %v934
        %vm1008 = vcmp.eq.f32.partialorder %v1007, 8.507059e+37
        %v1009 = vand.u32 %v934, 2147483648
        %v1010 = vor.u32 1.1754944e-38, %v1009
        %v1011 = vsel %vm1008, %v1010, %v1006
        %v1012 = vmul.f32 1.0, %v1011
        %v1013 = vrcp.pop %v935
        %v1014 = vmul.f32 %v935, %v1013
        %v1015 = vsub.f32 1.0, %v1014
        %v1016 = vmul.f32 %v1013, %v1015
        %v1017 = vadd.f32 %v1013, %v1016
        %vm1018 = vweird.f32 %v935
        %vm1019 = vweird.f32 %v1013
        %vm1020 = vmor %vm1018, %vm1019
        %v1021 = vsel %vm1020, %v1013, %v1017
        %v1022 = vand.u32 2147483647, %v935
        %vm1023 = vcmp.eq.f32.partialorder %v1022, 8.507059e+37
        %v1024 = vand.u32 %v935, 2147483648
        %v1025 = vor.u32 1.1754944e-38, %v1024
        %v1026 = vsel %vm1023, %v1025, %v1021
        %v1027 = vmul.f32 1.0, %v1026
        %v1028 = vrcp.pop %v936
        %v1029 = vmul.f32 %v936, %v1028
        %v1030 = vsub.f32 1.0, %v1029
        %v1031 = vmul.f32 %v1028, %v1030
        %v1032 = vadd.f32 %v1028, %v1031
        %vm1033 = vweird.f32 %v936
        %vm1034 = vweird.f32 %v1028
        %vm1035 = vmor %vm1033, %vm1034
        %v1036 = vsel %vm1035, %v1028, %v1032
        %v1037 = vand.u32 2147483647, %v936
        %vm1038 = vcmp.eq.f32.partialorder %v1037, 8.507059e+37
        %v1039 = vand.u32 %v936, 2147483648
        %v1040 = vor.u32 1.1754944e-38, %v1039
        %v1041 = vsel %vm1038, %v1040, %v1036
        %v1042 = vmul.f32 1.0, %v1041
        %v1043 = vrcp.pop %v937
        %v1044 = vmul.f32 %v937, %v1043
        %v1045 = vsub.f32 1.0, %v1044
        %v1046 = vmul.f32 %v1043, %v1045
        %v1047 = vadd.f32 %v1043, %v1046
        %vm1048 = vweird.f32 %v937
        %vm1049 = vweird.f32 %v1043
        %vm1050 = vmor %vm1048, %vm1049
        %v1051 = vsel %vm1050, %v1043, %v1047
        %v1052 = vand.u32 2147483647, %v937
        %vm1053 = vcmp.eq.f32.partialorder %v1052, 8.507059e+37
        %v1054 = vand.u32 %v937, 2147483648
        %v1055 = vor.u32 1.1754944e-38, %v1054
        %v1056 = vsel %vm1053, %v1055, %v1051
        %v1057 = vmul.f32 1.0, %v1056
        %v1058 = vmul.f32 %v883, %v952
        %v1059 = vmul.f32 %v886, %v967
        %v1060 = vmul.f32 %v889, %v982
        %v1061 = vmul.f32 %v892, %v997
        %v1062 = vmul.f32 %v895, %v1012
        %v1063 = vmul.f32 %v898, %v1027
        %v1064 = vmul.f32 %v901, %v1042
        %v1065 = vmul.f32 %v904, %v1057
        %v1066 = vld [vmem:[%s463] sm:$0xff]
        %v1067 = vld [vmem:[%s463 + $0x8] sm:$0xff]
        %v1068 = vld [vmem:[%s463 + $0x10] sm:$0xff]
        %v1069 = vld [vmem:[%s463 + $0x18] sm:$0xff]
        %v1070 = vld [vmem:[%s463 + $0x20] sm:$0xff]
        %v1071 = vld [vmem:[%s463 + $0x28] sm:$0xff]
        %v1072 = vld [vmem:[%s463 + $0x30] sm:$0xff]
        %v1073 = vld [vmem:[%s463 + $0x38] sm:$0xff]
        %v1074 = vld [vmem:[%s463 + $0x40] sm:$0xff]
        %v1075 = vld [vmem:[%s463 + $0x48] sm:$0xff]
        %v1076 = vld [vmem:[%s463 + $0x50] sm:$0xff]
        %v1077 = vld [vmem:[%s463 + $0x58] sm:$0xff]
        %v1078 = vld [vmem:[%s463 + $0x60] sm:$0xff]
        %v1079 = vld [vmem:[%s463 + $0x68] sm:$0xff]
        %v1080 = vld [vmem:[%s463 + $0x70] sm:$0xff]
        %v1081 = vld [vmem:[%s463 + $0x78] sm:$0xff]
        %v1082 = vld [vmem:[%s463 + $0x80] sm:$0xff]
        %v1083 = vld [vmem:[%s463 + $0x88] sm:$0xff]
        %v1084 = vld [vmem:[%s463 + $0x90] sm:$0xff]
        %v1085 = vld [vmem:[%s463 + $0x98] sm:$0xff]
        %v1086 = vld [vmem:[%s463 + $0xa0] sm:$0xff]
        %v1087 = vld [vmem:[%s463 + $0xa8] sm:$0xff]
        %v1088 = vld [vmem:[%s463 + $0xb0] sm:$0xff]
        %v1089 = vld [vmem:[%s463 + $0xb8] sm:$0xff]
        %v1090 = vld [vmem:[%s463 + $0xc0] sm:$0xff]
        %v1091 = vld [vmem:[%s463 + $0xc8] sm:$0xff]
        %v1092 = vld [vmem:[%s463 + $0xd0] sm:$0xff]
        %v1093 = vld [vmem:[%s463 + $0xd8] sm:$0xff]
        %v1094 = vld [vmem:[%s463 + $0xe0] sm:$0xff]
        %v1095 = vld [vmem:[%s463 + $0xe8] sm:$0xff]
        %v1096 = vld [vmem:[%s463 + $0xf0] sm:$0xff]
        %v1097 = vld [vmem:[%s463 + $0xf8] sm:$0xff]
        %v1098 = vld [vmem:[%s463 + $0x100] sm:$0xff]
        %v1099 = vld [vmem:[%s463 + $0x108] sm:$0xff]
        %v1100 = vld [vmem:[%s463 + $0x110] sm:$0xff]
        %v1101 = vld [vmem:[%s463 + $0x118] sm:$0xff]
        %v1102 = vld [vmem:[%s463 + $0x120] sm:$0xff]
        %v1103 = vld [vmem:[%s463 + $0x128] sm:$0xff]
        %v1104 = vld [vmem:[%s463 + $0x130] sm:$0xff]
        %v1105 = vld [vmem:[%s463 + $0x138] sm:$0xff]
        %v1106 = vld [vmem:[%s463 + $0x140] sm:$0xff]
        %v1107 = vld [vmem:[%s463 + $0x148] sm:$0xff]
        %v1108 = vld [vmem:[%s463 + $0x150] sm:$0xff]
        %v1109 = vld [vmem:[%s463 + $0x158] sm:$0xff]
        %v1110 = vld [vmem:[%s463 + $0x160] sm:$0xff]
        %v1111 = vld [vmem:[%s463 + $0x168] sm:$0xff]
        %vm1112 = vcmask 523264
        %v1114 = vsel %vm1112, %v1066, 0
        %v1117 = vsel %vm1112, %v1067, 0
        %v1120 = vsel %vm1112, %v1068, 0
        %v1123 = vsel %vm1112, %v1069, 0
        %v1126 = vsel %vm1112, %v1070, 0
        %v1129 = vsel %vm1112, %v1071, 0
        %v1132 = vsel %vm1112, %v1072, 0
        %v1135 = vsel %vm1112, %v1073, 0
        %v1138 = vsel %vm1112, %v1074, 0
        %v1141 = vsel %vm1112, %v1075, 0
        %v1144 = vsel %vm1112, %v1076, 0
        %v1147 = vsel %vm1112, %v1077, 0
        %v1150 = vsel %vm1112, %v1078, 0
        %v1153 = vsel %vm1112, %v1079, 0
        %v1156 = vsel %vm1112, %v1080, 0
        %v1159 = vsel %vm1112, %v1081, 0
        %v1162 = vsel %vm1112, %v1082, 0
        %v1165 = vsel %vm1112, %v1083, 0
        %v1168 = vsel %vm1112, %v1084, 0
        %v1171 = vsel %vm1112, %v1085, 0
        %v1174 = vsel %vm1112, %v1086, 0
        %v1177 = vsel %vm1112, %v1087, 0
        %v1180 = vsel %vm1112, %v1088, 0
        %v1183 = vsel %vm1112, %v1089, 0
        %v1186 = vsel %vm1112, %v1090, 0
        %v1189 = vsel %vm1112, %v1091, 0
        %v1192 = vsel %vm1112, %v1092, 0
        %v1195 = vsel %vm1112, %v1093, 0
        %v1198 = vsel %vm1112, %v1094, 0
        %v1201 = vsel %vm1112, %v1095, 0
        %v1204 = vsel %vm1112, %v1096, 0
        %v1207 = vsel %vm1112, %v1097, 0
        %v1210 = vsel %vm1112, %v1098, 0
        %v1213 = vsel %vm1112, %v1099, 0
        %v1216 = vsel %vm1112, %v1100, 0
        %v1219 = vsel %vm1112, %v1101, 0
        %v1222 = vsel %vm1112, %v1102, 0
        %v1225 = vsel %vm1112, %v1103, 0
        %v1228 = vsel %vm1112, %v1104, 0
        %v1231 = vsel %vm1112, %v1105, 0
        %v1234 = vsel %vm1112, %v1106, 0
        %v1237 = vsel %vm1112, %v1107, 0
        %v1240 = vsel %vm1112, %v1108, 0
        %v1243 = vsel %vm1112, %v1109, 0
        %v1246 = vsel %vm1112, %v1110, 0
        %v1249 = vsel %vm1112, %v1111, 0
        %1251 = vmatpush.msra.mxu0 0.0
        %1252 = vmatpush.msra.mxu0 0.0
        %1253 = vmatpush.msra.mxu0 0.0
        %1254 = vmatpush.msra.mxu0 0.0
        %1255 = vmatpush.msra.mxu0 0.0
        %1256 = vmatpush.msra.mxu0 0.0
        %1257 = vmatpush.msra.mxu0 0.0
        %1258 = vmatpush.msra.mxu0 0.0
        %1259 = vmatpush.msra.mxu0 %v1065
        %1260 = vmatpush.msra.mxu0 %v1064
        %1261 = vmatpush.msra.mxu0 %v1063
        %1262 = vmatpush.msra.mxu0 %v1062
        %1263 = vmatpush.msra.mxu0 %v1061
        %1264 = vmatpush.msra.mxu0 %v1060
        %1265 = vmatpush.msra.mxu0 %v1059
        %1266 = vmatpush.msra.mxu0 %v1058
        %1267 = vmatmul.f32.gmra.mxu0 %v1114
        %v1268 = vpop.f32.mrf.mxu0
        %v1269 = vadd.f32 0.0, %v1268
        %1270 = vmatmul.f32.gmra.mxu0 %v1117
        %v1271 = vpop.f32.mrf.mxu0
        %v1272 = vadd.f32 0.0, %v1271
        %1273 = vmatmul.f32.gmra.mxu0 %v1120
        %v1274 = vpop.f32.mrf.mxu0
        %v1275 = vadd.f32 0.0, %v1274
        %1276 = vmatmul.f32.gmra.mxu0 %v1123
        %v1277 = vpop.f32.mrf.mxu0
        %v1278 = vadd.f32 0.0, %v1277
        %1279 = vmatmul.f32.gmra.mxu0 %v1126
        %v1280 = vpop.f32.mrf.mxu0
        %v1281 = vadd.f32 0.0, %v1280
        %1282 = vmatmul.f32.gmra.mxu0 %v1129
        %v1283 = vpop.f32.mrf.mxu0
        %v1284 = vadd.f32 0.0, %v1283
        %1285 = vmatmul.f32.gmra.mxu0 %v1132
        %v1286 = vpop.f32.mrf.mxu0
        %v1287 = vadd.f32 0.0, %v1286
        %1288 = vmatmul.f32.gmra.mxu0 %v1135
        %v1289 = vpop.f32.mrf.mxu0
        %v1290 = vadd.f32 0.0, %v1289
        %1291 = vmatmul.f32.gmra.mxu0 %v1138
        %v1292 = vpop.f32.mrf.mxu0
        %v1293 = vadd.f32 0.0, %v1292
        %1294 = vmatmul.f32.gmra.mxu0 %v1141
        %v1295 = vpop.f32.mrf.mxu0
        %v1296 = vadd.f32 0.0, %v1295
        %1297 = vmatmul.f32.gmra.mxu0 %v1144
        %v1298 = vpop.f32.mrf.mxu0
        %v1299 = vadd.f32 0.0, %v1298
        %1300 = vmatmul.f32.gmra.mxu0 %v1147
        %v1301 = vpop.f32.mrf.mxu0
        %v1302 = vadd.f32 0.0, %v1301
        %1303 = vmatmul.f32.gmra.mxu0 %v1150
        %v1304 = vpop.f32.mrf.mxu0
        %v1305 = vadd.f32 0.0, %v1304
        %1306 = vmatmul.f32.gmra.mxu0 %v1153
        %v1307 = vpop.f32.mrf.mxu0
        %v1308 = vadd.f32 0.0, %v1307
        %1309 = vmatmul.f32.gmra.mxu0 %v1156
        %v1310 = vpop.f32.mrf.mxu0
        %v1311 = vadd.f32 0.0, %v1310
        %1312 = vmatmul.f32.gmra.mxu0 %v1159
        %v1313 = vpop.f32.mrf.mxu0
        %v1314 = vadd.f32 0.0, %v1313
        %1315 = vmatmul.f32.gmra.mxu0 %v1162
        %v1316 = vpop.f32.mrf.mxu0
        %v1317 = vadd.f32 0.0, %v1316
        %1318 = vmatmul.f32.gmra.mxu0 %v1165
        %v1319 = vpop.f32.mrf.mxu0
        %v1320 = vadd.f32 0.0, %v1319
        %1321 = vmatmul.f32.gmra.mxu0 %v1168
        %v1322 = vpop.f32.mrf.mxu0
        %v1323 = vadd.f32 0.0, %v1322
        %1324 = vmatmul.f32.gmra.mxu0 %v1171
        %v1325 = vpop.f32.mrf.mxu0
        %v1326 = vadd.f32 0.0, %v1325
        %1327 = vmatmul.f32.gmra.mxu0 %v1174
        %v1328 = vpop.f32.mrf.mxu0
        %v1329 = vadd.f32 0.0, %v1328
        %1330 = vmatmul.f32.gmra.mxu0 %v1177
        %v1331 = vpop.f32.mrf.mxu0
        %v1332 = vadd.f32 0.0, %v1331
        %1333 = vmatmul.f32.gmra.mxu0 %v1180
        %v1334 = vpop.f32.mrf.mxu0
        %v1335 = vadd.f32 0.0, %v1334
        %1336 = vmatmul.f32.gmra.mxu0 %v1183
        %v1337 = vpop.f32.mrf.mxu0
        %v1338 = vadd.f32 0.0, %v1337
        %1339 = vmatmul.f32.gmra.mxu0 %v1186
        %v1340 = vpop.f32.mrf.mxu0
        %v1341 = vadd.f32 0.0, %v1340
        %1342 = vmatmul.f32.gmra.mxu0 %v1189
        %v1343 = vpop.f32.mrf.mxu0
        %v1344 = vadd.f32 0.0, %v1343
        %1345 = vmatmul.f32.gmra.mxu0 %v1192
        %v1346 = vpop.f32.mrf.mxu0
        %v1347 = vadd.f32 0.0, %v1346
        %1348 = vmatmul.f32.gmra.mxu0 %v1195
        %v1349 = vpop.f32.mrf.mxu0
        %v1350 = vadd.f32 0.0, %v1349
        %1351 = vmatmul.f32.gmra.mxu0 %v1198
        %v1352 = vpop.f32.mrf.mxu0
        %v1353 = vadd.f32 0.0, %v1352
        %1354 = vmatmul.f32.gmra.mxu0 %v1201
        %v1355 = vpop.f32.mrf.mxu0
        %v1356 = vadd.f32 0.0, %v1355
        %1357 = vmatmul.f32.gmra.mxu0 %v1204
        %v1358 = vpop.f32.mrf.mxu0
        %v1359 = vadd.f32 0.0, %v1358
        %1360 = vmatmul.f32.gmra.mxu0 %v1207
        %v1361 = vpop.f32.mrf.mxu0
        %v1362 = vadd.f32 0.0, %v1361
        %1363 = vmatmul.f32.gmra.mxu0 %v1210
        %v1364 = vpop.f32.mrf.mxu0
        %v1365 = vadd.f32 0.0, %v1364
        %1366 = vmatmul.f32.gmra.mxu0 %v1213
        %v1367 = vpop.f32.mrf.mxu0
        %v1368 = vadd.f32 0.0, %v1367
        %1369 = vmatmul.f32.gmra.mxu0 %v1216
        %v1370 = vpop.f32.mrf.mxu0
        %v1371 = vadd.f32 0.0, %v1370
        %1372 = vmatmul.f32.gmra.mxu0 %v1219
        %v1373 = vpop.f32.mrf.mxu0
        %v1374 = vadd.f32 0.0, %v1373
        %1375 = vmatmul.f32.gmra.mxu0 %v1222
        %v1376 = vpop.f32.mrf.mxu0
        %v1377 = vadd.f32 0.0, %v1376
        %1378 = vmatmul.f32.gmra.mxu0 %v1225
        %v1379 = vpop.f32.mrf.mxu0
        %v1380 = vadd.f32 0.0, %v1379
        %1381 = vmatmul.f32.gmra.mxu0 %v1228
        %v1382 = vpop.f32.mrf.mxu0
        %v1383 = vadd.f32 0.0, %v1382
        %1384 = vmatmul.f32.gmra.mxu0 %v1231
        %v1385 = vpop.f32.mrf.mxu0
        %v1386 = vadd.f32 0.0, %v1385
        %1387 = vmatmul.f32.gmra.mxu0 %v1234
        %v1388 = vpop.f32.mrf.mxu0
        %v1389 = vadd.f32 0.0, %v1388
        %1390 = vmatmul.f32.gmra.mxu0 %v1237
        %v1391 = vpop.f32.mrf.mxu0
        %v1392 = vadd.f32 0.0, %v1391
        %1393 = vmatmul.f32.gmra.mxu0 %v1240
        %v1394 = vpop.f32.mrf.mxu0
        %v1395 = vadd.f32 0.0, %v1394
        %1396 = vmatmul.f32.gmra.mxu0 %v1243
        %v1397 = vpop.f32.mrf.mxu0
        %v1398 = vadd.f32 0.0, %v1397
        %1399 = vmatmul.f32.gmra.mxu0 %v1246
        %v1400 = vpop.f32.mrf.mxu0
        %v1401 = vadd.f32 0.0, %v1400
        %1402 = vmatmul.f32.gmra.mxu0 %v1249
        %v1403 = vpop.f32.mrf.mxu0
        %v1404 = vadd.f32 0.0, %v1403
        %1405 = vdwg.mxu0
        %v1406 = vadd.f32 %v779, %v1269
        %v1407 = vadd.f32 %v780, %v1272
        %v1408 = vadd.f32 %v781, %v1275
        %v1409 = vadd.f32 %v782, %v1278
        %v1410 = vadd.f32 %v783, %v1281
        %v1411 = vadd.f32 %v784, %v1284
        %v1412 = vadd.f32 %v785, %v1287
        %v1413 = vadd.f32 %v786, %v1290
        %v1414 = vadd.f32 %v787, %v1293
        %v1415 = vadd.f32 %v788, %v1296
        %v1416 = vadd.f32 %v789, %v1299
        %v1417 = vadd.f32 %v790, %v1302
        %v1418 = vadd.f32 %v791, %v1305
        %v1419 = vadd.f32 %v792, %v1308
        %v1420 = vadd.f32 %v793, %v1311
        %v1421 = vadd.f32 %v794, %v1314
        %v1422 = vadd.f32 %v795, %v1317
        %v1423 = vadd.f32 %v796, %v1320
        %v1424 = vadd.f32 %v797, %v1323
        %v1425 = vadd.f32 %v798, %v1326
        %v1426 = vadd.f32 %v799, %v1329
        %v1427 = vadd.f32 %v800, %v1332
        %v1428 = vadd.f32 %v801, %v1335
        %v1429 = vadd.f32 %v802, %v1338
        %v1430 = vadd.f32 %v803, %v1341
        %v1431 = vadd.f32 %v804, %v1344
        %v1432 = vadd.f32 %v805, %v1347
        %v1433 = vadd.f32 %v806, %v1350
        %v1434 = vadd.f32 %v807, %v1353
        %v1435 = vadd.f32 %v808, %v1356
        %v1436 = vadd.f32 %v809, %v1359
        %v1437 = vadd.f32 %v810, %v1362
        %v1438 = vadd.f32 %v811, %v1365
        %v1439 = vadd.f32 %v812, %v1368
        %v1440 = vadd.f32 %v813, %v1371
        %v1441 = vadd.f32 %v814, %v1374
        %v1442 = vadd.f32 %v815, %v1377
        %v1443 = vadd.f32 %v816, %v1380
        %v1444 = vadd.f32 %v817, %v1383
        %v1445 = vadd.f32 %v818, %v1386
        %v1446 = vadd.f32 %v819, %v1389
        %v1447 = vadd.f32 %v820, %v1392
        %v1448 = vadd.f32 %v821, %v1395
        %v1449 = vadd.f32 %v822, %v1398
        %v1450 = vadd.f32 %v823, %v1401
        %v1451 = vadd.f32 %v824, %v1404
        %s1452 = scalar_lea.vmem [#allocation7], 56
        %v1453 = vld [vmem:[%s1452] sm:$0xff]
        %v1454 = vld [vmem:[%s1452 + $0x8] sm:$0xff]
        %v1455 = vld [vmem:[%s1452 + $0x10] sm:$0xff]
        %v1456 = vld [vmem:[%s1452 + $0x18] sm:$0xff]
        %v1457 = vld [vmem:[%s1452 + $0x20] sm:$0xff]
        %v1458 = vld [vmem:[%s1452 + $0x28] sm:$0xff]
        %v1459 = vld [vmem:[%s1452 + $0x30] sm:$0x3]
        %v1461 = vsel %vm861, %v1459, 0
        %1463 = vmatpush.msra.mxu0 0.0
        %1464 = vmatpush.msra.mxu0 0.0
        %1465 = vmatpush.msra.mxu0 0.0
        %1466 = vmatpush.msra.mxu0 0.0
        %1467 = vmatpush.msra.mxu0 0.0
        %1468 = vmatpush.msra.mxu0 0.0
        %1469 = vmatpush.msra.mxu0 0.0
        %1470 = vmatpush.msra.mxu0 0.0
        %1471 = vmatpush.msra.mxu0 0.0
        %1472 = vmatpush.msra.mxu0 %v1461
        %1473 = vmatpush.msra.mxu0 %v1458
        %1474 = vmatpush.msra.mxu0 %v1457
        %1475 = vmatpush.msra.mxu0 %v1456
        %1476 = vmatpush.msra.mxu0 %v1455
        %1477 = vmatpush.msra.mxu0 %v1454
        %1478 = vmatpush.msra.mxu0 %v1453
        %1479 = vmatmul.f32.gmra.mxu0 %v838
        %v1480 = vpop.f32.mrf.mxu0
        %v1481 = vadd.f32 %v834, %v1480
        %1482 = vmatmul.f32.gmra.mxu0 %v841
        %v1483 = vpop.f32.mrf.mxu0
        %v1484 = vadd.f32 %v834, %v1483
        %1485 = vmatmul.f32.gmra.mxu0 %v844
        %v1486 = vpop.f32.mrf.mxu0
        %v1487 = vadd.f32 %v834, %v1486
        %1488 = vmatmul.f32.gmra.mxu0 %v847
        %v1489 = vpop.f32.mrf.mxu0
        %v1490 = vadd.f32 %v834, %v1489
        %1491 = vmatmul.f32.gmra.mxu0 %v850
        %v1492 = vpop.f32.mrf.mxu0
        %v1493 = vadd.f32 %v834, %v1492
        %1494 = vmatmul.f32.gmra.mxu0 %v853
        %v1495 = vpop.f32.mrf.mxu0
        %v1496 = vadd.f32 %v834, %v1495
        %1497 = vmatmul.f32.gmra.mxu0 %v856
        %v1498 = vpop.f32.mrf.mxu0
        %v1499 = vadd.f32 %v834, %v1498
        %1500 = vmatmul.f32.gmra.mxu0 %v859
        %v1501 = vpop.f32.mrf.mxu0
        %v1502 = vadd.f32 %v834, %v1501
        %1503 = vdwg.mxu0
        %v1504 = vsub.f32 0.0, %v1481
        %v1505 = vsub.f32 0.0, %v1484
        %v1506 = vsub.f32 0.0, %v1487
        %v1507 = vsub.f32 0.0, %v1490
        %v1508 = vsub.f32 0.0, %v1493
        %v1509 = vsub.f32 0.0, %v1496
        %v1510 = vsub.f32 0.0, %v1499
        %v1511 = vsub.f32 0.0, %v1502
        %v1512 = vmul.f32 %v1504, 1.442695
        %v1513 = vpow.pop %v1512
        %v1514 = vmul.f32 %v1505, 1.442695
        %v1515 = vpow.pop %v1514
        %v1516 = vmul.f32 %v1506, 1.442695
        %v1517 = vpow.pop %v1516
        %v1518 = vmul.f32 %v1507, 1.442695
        %v1519 = vpow.pop %v1518
        %v1520 = vmul.f32 %v1508, 1.442695
        %v1521 = vpow.pop %v1520
        %v1522 = vmul.f32 %v1509, 1.442695
        %v1523 = vpow.pop %v1522
        %v1524 = vmul.f32 %v1510, 1.442695
        %v1525 = vpow.pop %v1524
        %v1526 = vmul.f32 %v1511, 1.442695
        %v1527 = vpow.pop %v1526
        %v1528 = vadd.f32 %v1513, 1.0
        %v1529 = vadd.f32 %v1515, 1.0
        %v1530 = vadd.f32 %v1517, 1.0
        %v1531 = vadd.f32 %v1519, 1.0
        %v1532 = vadd.f32 %v1521, 1.0
        %v1533 = vadd.f32 %v1523, 1.0
        %v1534 = vadd.f32 %v1525, 1.0
        %v1535 = vadd.f32 %v1527, 1.0
        %v1536 = vrcp.pop %v1528
        %v1537 = vmul.f32 %v1528, %v1536
        %v1538 = vsub.f32 1.0, %v1537
        %v1539 = vmul.f32 %v1536, %v1538
        %v1540 = vadd.f32 %v1536, %v1539
        %vm1541 = vweird.f32 %v1528
        %vm1542 = vweird.f32 %v1536
        %vm1543 = vmor %vm1541, %vm1542
        %v1544 = vsel %vm1543, %v1536, %v1540
        %v1545 = vand.u32 2147483647, %v1528
        %vm1546 = vcmp.eq.f32.partialorder %v1545, 8.507059e+37
        %v1547 = vand.u32 %v1528, 2147483648
        %v1548 = vor.u32 1.1754944e-38, %v1547
        %v1549 = vsel %vm1546, %v1548, %v1544
        %v1550 = vmul.f32 1.0, %v1549
        %v1551 = vrcp.pop %v1529
        %v1552 = vmul.f32 %v1529, %v1551
        %v1553 = vsub.f32 1.0, %v1552
        %v1554 = vmul.f32 %v1551, %v1553
        %v1555 = vadd.f32 %v1551, %v1554
        %vm1556 = vweird.f32 %v1529
        %vm1557 = vweird.f32 %v1551
        %vm1558 = vmor %vm1556, %vm1557
        %v1559 = vsel %vm1558, %v1551, %v1555
        %v1560 = vand.u32 2147483647, %v1529
        %vm1561 = vcmp.eq.f32.partialorder %v1560, 8.507059e+37
        %v1562 = vand.u32 %v1529, 2147483648
        %v1563 = vor.u32 1.1754944e-38, %v1562
        %v1564 = vsel %vm1561, %v1563, %v1559
        %v1565 = vmul.f32 1.0, %v1564
        %v1566 = vrcp.pop %v1530
        %v1567 = vmul.f32 %v1530, %v1566
        %v1568 = vsub.f32 1.0, %v1567
        %v1569 = vmul.f32 %v1566, %v1568
        %v1570 = vadd.f32 %v1566, %v1569
        %vm1571 = vweird.f32 %v1530
        %vm1572 = vweird.f32 %v1566
        %vm1573 = vmor %vm1571, %vm1572
        %v1574 = vsel %vm1573, %v1566, %v1570
        %v1575 = vand.u32 2147483647, %v1530
        %vm1576 = vcmp.eq.f32.partialorder %v1575, 8.507059e+37
        %v1577 = vand.u32 %v1530, 2147483648
        %v1578 = vor.u32 1.1754944e-38, %v1577
        %v1579 = vsel %vm1576, %v1578, %v1574
        %v1580 = vmul.f32 1.0, %v1579
        %v1581 = vrcp.pop %v1531
        %v1582 = vmul.f32 %v1531, %v1581
        %v1583 = vsub.f32 1.0, %v1582
        %v1584 = vmul.f32 %v1581, %v1583
        %v1585 = vadd.f32 %v1581, %v1584
        %vm1586 = vweird.f32 %v1531
        %vm1587 = vweird.f32 %v1581
        %vm1588 = vmor %vm1586, %vm1587
        %v1589 = vsel %vm1588, %v1581, %v1585
        %v1590 = vand.u32 2147483647, %v1531
        %vm1591 = vcmp.eq.f32.partialorder %v1590, 8.507059e+37
        %v1592 = vand.u32 %v1531, 2147483648
        %v1593 = vor.u32 1.1754944e-38, %v1592
        %v1594 = vsel %vm1591, %v1593, %v1589
        %v1595 = vmul.f32 1.0, %v1594
        %v1596 = vrcp.pop %v1532
        %v1597 = vmul.f32 %v1532, %v1596
        %v1598 = vsub.f32 1.0, %v1597
        %v1599 = vmul.f32 %v1596, %v1598
        %v1600 = vadd.f32 %v1596, %v1599
        %vm1601 = vweird.f32 %v1532
        %vm1602 = vweird.f32 %v1596
        %vm1603 = vmor %vm1601, %vm1602
        %v1604 = vsel %vm1603, %v1596, %v1600
        %v1605 = vand.u32 2147483647, %v1532
        %vm1606 = vcmp.eq.f32.partialorder %v1605, 8.507059e+37
        %v1607 = vand.u32 %v1532, 2147483648
        %v1608 = vor.u32 1.1754944e-38, %v1607
        %v1609 = vsel %vm1606, %v1608, %v1604
        %v1610 = vmul.f32 1.0, %v1609
        %v1611 = vrcp.pop %v1533
        %v1612 = vmul.f32 %v1533, %v1611
        %v1613 = vsub.f32 1.0, %v1612
        %v1614 = vmul.f32 %v1611, %v1613
        %v1615 = vadd.f32 %v1611, %v1614
        %vm1616 = vweird.f32 %v1533
        %vm1617 = vweird.f32 %v1611
        %vm1618 = vmor %vm1616, %vm1617
        %v1619 = vsel %vm1618, %v1611, %v1615
        %v1620 = vand.u32 2147483647, %v1533
        %vm1621 = vcmp.eq.f32.partialorder %v1620, 8.507059e+37
        %v1622 = vand.u32 %v1533, 2147483648
        %v1623 = vor.u32 1.1754944e-38, %v1622
        %v1624 = vsel %vm1621, %v1623, %v1619
        %v1625 = vmul.f32 1.0, %v1624
        %v1626 = vrcp.pop %v1534
        %v1627 = vmul.f32 %v1534, %v1626
        %v1628 = vsub.f32 1.0, %v1627
        %v1629 = vmul.f32 %v1626, %v1628
        %v1630 = vadd.f32 %v1626, %v1629
        %vm1631 = vweird.f32 %v1534
        %vm1632 = vweird.f32 %v1626
        %vm1633 = vmor %vm1631, %vm1632
        %v1634 = vsel %vm1633, %v1626, %v1630
        %v1635 = vand.u32 2147483647, %v1534
        %vm1636 = vcmp.eq.f32.partialorder %v1635, 8.507059e+37
        %v1637 = vand.u32 %v1534, 2147483648
        %v1638 = vor.u32 1.1754944e-38, %v1637
        %v1639 = vsel %vm1636, %v1638, %v1634
        %v1640 = vmul.f32 1.0, %v1639
        %v1641 = vrcp.pop %v1535
        %v1642 = vmul.f32 %v1535, %v1641
        %v1643 = vsub.f32 1.0, %v1642
        %v1644 = vmul.f32 %v1641, %v1643
        %v1645 = vadd.f32 %v1641, %v1644
        %vm1646 = vweird.f32 %v1535
        %vm1647 = vweird.f32 %v1641
        %vm1648 = vmor %vm1646, %vm1647
        %v1649 = vsel %vm1648, %v1641, %v1645
        %v1650 = vand.u32 2147483647, %v1535
        %vm1651 = vcmp.eq.f32.partialorder %v1650, 8.507059e+37
        %v1652 = vand.u32 %v1535, 2147483648
        %v1653 = vor.u32 1.1754944e-38, %v1652
        %v1654 = vsel %vm1651, %v1653, %v1649
        %v1655 = vmul.f32 1.0, %v1654
        %v1656 = vmul.f32 %v1481, %v1550
        %v1657 = vmul.f32 %v1484, %v1565
        %v1658 = vmul.f32 %v1487, %v1580
        %v1659 = vmul.f32 %v1490, %v1595
        %v1660 = vmul.f32 %v1493, %v1610
        %v1661 = vmul.f32 %v1496, %v1625
        %v1662 = vmul.f32 %v1499, %v1640
        %v1663 = vmul.f32 %v1502, %v1655
        %s1664 = scalar_lea.vmem %s463, 368 [#allocation10]
        %v1665 = vld [vmem:[%s1664] sm:$0xff]
        %v1666 = vld [vmem:[%s1664 + $0x8] sm:$0xff]
        %v1667 = vld [vmem:[%s1664 + $0x10] sm:$0xff]
        %v1668 = vld [vmem:[%s1664 + $0x18] sm:$0xff]
        %v1669 = vld [vmem:[%s1664 + $0x20] sm:$0xff]
        %v1670 = vld [vmem:[%s1664 + $0x28] sm:$0xff]
        %v1671 = vld [vmem:[%s1664 + $0x30] sm:$0xff]
        %v1672 = vld [vmem:[%s1664 + $0x38] sm:$0xff]
        %v1673 = vld [vmem:[%s1664 + $0x40] sm:$0xff]
        %v1674 = vld [vmem:[%s1664 + $0x48] sm:$0xff]
        %v1675 = vld [vmem:[%s1664 + $0x50] sm:$0xff]
        %v1676 = vld [vmem:[%s1664 + $0x58] sm:$0xff]
        %v1677 = vld [vmem:[%s1664 + $0x60] sm:$0xff]
        %v1678 = vld [vmem:[%s1664 + $0x68] sm:$0xff]
        %v1679 = vld [vmem:[%s1664 + $0x70] sm:$0xff]
        %v1680 = vld [vmem:[%s1664 + $0x78] sm:$0xff]
        %v1681 = vld [vmem:[%s1664 + $0x80] sm:$0xff]
        %v1682 = vld [vmem:[%s1664 + $0x88] sm:$0xff]
        %v1683 = vld [vmem:[%s1664 + $0x90] sm:$0xff]
        %v1684 = vld [vmem:[%s1664 + $0x98] sm:$0xff]
        %v1685 = vld [vmem:[%s1664 + $0xa0] sm:$0xff]
        %v1686 = vld [vmem:[%s1664 + $0xa8] sm:$0xff]
        %v1687 = vld [vmem:[%s1664 + $0xb0] sm:$0xff]
        %v1688 = vld [vmem:[%s1664 + $0xb8] sm:$0xff]
        %v1689 = vld [vmem:[%s1664 + $0xc0] sm:$0xff]
        %v1690 = vld [vmem:[%s1664 + $0xc8] sm:$0xff]
        %v1691 = vld [vmem:[%s1664 + $0xd0] sm:$0xff]
        %v1692 = vld [vmem:[%s1664 + $0xd8] sm:$0xff]
        %v1693 = vld [vmem:[%s1664 + $0xe0] sm:$0xff]
        %v1694 = vld [vmem:[%s1664 + $0xe8] sm:$0xff]
        %v1695 = vld [vmem:[%s1664 + $0xf0] sm:$0xff]
        %v1696 = vld [vmem:[%s1664 + $0xf8] sm:$0xff]
        %v1697 = vld [vmem:[%s1664 + $0x100] sm:$0xff]
        %v1698 = vld [vmem:[%s1664 + $0x108] sm:$0xff]
        %v1699 = vld [vmem:[%s1664 + $0x110] sm:$0xff]
        %v1700 = vld [vmem:[%s1664 + $0x118] sm:$0xff]
        %v1701 = vld [vmem:[%s1664 + $0x120] sm:$0xff]
        %v1702 = vld [vmem:[%s1664 + $0x128] sm:$0xff]
        %v1703 = vld [vmem:[%s1664 + $0x130] sm:$0xff]
        %v1704 = vld [vmem:[%s1664 + $0x138] sm:$0xff]
        %v1705 = vld [vmem:[%s1664 + $0x140] sm:$0xff]
        %v1706 = vld [vmem:[%s1664 + $0x148] sm:$0xff]
        %v1707 = vld [vmem:[%s1664 + $0x150] sm:$0xff]
        %v1708 = vld [vmem:[%s1664 + $0x158] sm:$0xff]
        %v1709 = vld [vmem:[%s1664 + $0x160] sm:$0xff]
        %v1710 = vld [vmem:[%s1664 + $0x168] sm:$0xff]
        %v1712 = vsel %vm1112, %v1665, 0
        %v1715 = vsel %vm1112, %v1666, 0
        %v1718 = vsel %vm1112, %v1667, 0
        %v1721 = vsel %vm1112, %v1668, 0
        %v1724 = vsel %vm1112, %v1669, 0
        %v1727 = vsel %vm1112, %v1670, 0
        %v1730 = vsel %vm1112, %v1671, 0
        %v1733 = vsel %vm1112, %v1672, 0
        %v1736 = vsel %vm1112, %v1673, 0
        %v1739 = vsel %vm1112, %v1674, 0
        %v1742 = vsel %vm1112, %v1675, 0
        %v1745 = vsel %vm1112, %v1676, 0
        %v1748 = vsel %vm1112, %v1677, 0
        %v1751 = vsel %vm1112, %v1678, 0
        %v1754 = vsel %vm1112, %v1679, 0
        %v1757 = vsel %vm1112, %v1680, 0
        %v1760 = vsel %vm1112, %v1681, 0
        %v1763 = vsel %vm1112, %v1682, 0
        %v1766 = vsel %vm1112, %v1683, 0
        %v1769 = vsel %vm1112, %v1684, 0
        %v1772 = vsel %vm1112, %v1685, 0
        %v1775 = vsel %vm1112, %v1686, 0
        %v1778 = vsel %vm1112, %v1687, 0
        %v1781 = vsel %vm1112, %v1688, 0
        %v1784 = vsel %vm1112, %v1689, 0
        %v1787 = vsel %vm1112, %v1690, 0
        %v1790 = vsel %vm1112, %v1691, 0
        %v1793 = vsel %vm1112, %v1692, 0
        %v1796 = vsel %vm1112, %v1693, 0
        %v1799 = vsel %vm1112, %v1694, 0
        %v1802 = vsel %vm1112, %v1695, 0
        %v1805 = vsel %vm1112, %v1696, 0
        %v1808 = vsel %vm1112, %v1697, 0
        %v1811 = vsel %vm1112, %v1698, 0
        %v1814 = vsel %vm1112, %v1699, 0
        %v1817 = vsel %vm1112, %v1700, 0
        %v1820 = vsel %vm1112, %v1701, 0
        %v1823 = vsel %vm1112, %v1702, 0
        %v1826 = vsel %vm1112, %v1703, 0
        %v1829 = vsel %vm1112, %v1704, 0
        %v1832 = vsel %vm1112, %v1705, 0
        %v1835 = vsel %vm1112, %v1706, 0
        %v1838 = vsel %vm1112, %v1707, 0
        %v1841 = vsel %vm1112, %v1708, 0
        %v1844 = vsel %vm1112, %v1709, 0
        %v1847 = vsel %vm1112, %v1710, 0
        %1849 = vmatpush.msra.mxu0 0.0
        %1850 = vmatpush.msra.mxu0 0.0
        %1851 = vmatpush.msra.mxu0 0.0
        %1852 = vmatpush.msra.mxu0 0.0
        %1853 = vmatpush.msra.mxu0 0.0
        %1854 = vmatpush.msra.mxu0 0.0
        %1855 = vmatpush.msra.mxu0 0.0
        %1856 = vmatpush.msra.mxu0 0.0
        %1857 = vmatpush.msra.mxu0 %v1663
        %1858 = vmatpush.msra.mxu0 %v1662
        %1859 = vmatpush.msra.mxu0 %v1661
        %1860 = vmatpush.msra.mxu0 %v1660
        %1861 = vmatpush.msra.mxu0 %v1659
        %1862 = vmatpush.msra.mxu0 %v1658
        %1863 = vmatpush.msra.mxu0 %v1657
        %1864 = vmatpush.msra.mxu0 %v1656
        %1865 = vmatmul.f32.gmra.mxu0 %v1712
        %v1866 = vpop.f32.mrf.mxu0
        %v1867 = vadd.f32 0.0, %v1866
        %1868 = vmatmul.f32.gmra.mxu0 %v1715
        %v1869 = vpop.f32.mrf.mxu0
        %v1870 = vadd.f32 0.0, %v1869
        %1871 = vmatmul.f32.gmra.mxu0 %v1718
        %v1872 = vpop.f32.mrf.mxu0
        %v1873 = vadd.f32 0.0, %v1872
        %1874 = vmatmul.f32.gmra.mxu0 %v1721
        %v1875 = vpop.f32.mrf.mxu0
        %v1876 = vadd.f32 0.0, %v1875
        %1877 = vmatmul.f32.gmra.mxu0 %v1724
        %v1878 = vpop.f32.mrf.mxu0
        %v1879 = vadd.f32 0.0, %v1878
        %1880 = vmatmul.f32.gmra.mxu0 %v1727
        %v1881 = vpop.f32.mrf.mxu0
        %v1882 = vadd.f32 0.0, %v1881
        %1883 = vmatmul.f32.gmra.mxu0 %v1730
        %v1884 = vpop.f32.mrf.mxu0
        %v1885 = vadd.f32 0.0, %v1884
        %1886 = vmatmul.f32.gmra.mxu0 %v1733
        %v1887 = vpop.f32.mrf.mxu0
        %v1888 = vadd.f32 0.0, %v1887
        %1889 = vmatmul.f32.gmra.mxu0 %v1736
        %v1890 = vpop.f32.mrf.mxu0
        %v1891 = vadd.f32 0.0, %v1890
        %1892 = vmatmul.f32.gmra.mxu0 %v1739
        %v1893 = vpop.f32.mrf.mxu0
        %v1894 = vadd.f32 0.0, %v1893
        %1895 = vmatmul.f32.gmra.mxu0 %v1742
        %v1896 = vpop.f32.mrf.mxu0
        %v1897 = vadd.f32 0.0, %v1896
        %1898 = vmatmul.f32.gmra.mxu0 %v1745
        %v1899 = vpop.f32.mrf.mxu0
        %v1900 = vadd.f32 0.0, %v1899
        %1901 = vmatmul.f32.gmra.mxu0 %v1748
        %v1902 = vpop.f32.mrf.mxu0
        %v1903 = vadd.f32 0.0, %v1902
        %1904 = vmatmul.f32.gmra.mxu0 %v1751
        %v1905 = vpop.f32.mrf.mxu0
        %v1906 = vadd.f32 0.0, %v1905
        %1907 = vmatmul.f32.gmra.mxu0 %v1754
        %v1908 = vpop.f32.mrf.mxu0
        %v1909 = vadd.f32 0.0, %v1908
        %1910 = vmatmul.f32.gmra.mxu0 %v1757
        %v1911 = vpop.f32.mrf.mxu0
        %v1912 = vadd.f32 0.0, %v1911
        %1913 = vmatmul.f32.gmra.mxu0 %v1760
        %v1914 = vpop.f32.mrf.mxu0
        %v1915 = vadd.f32 0.0, %v1914
        %1916 = vmatmul.f32.gmra.mxu0 %v1763
        %v1917 = vpop.f32.mrf.mxu0
        %v1918 = vadd.f32 0.0, %v1917
        %1919 = vmatmul.f32.gmra.mxu0 %v1766
        %v1920 = vpop.f32.mrf.mxu0
        %v1921 = vadd.f32 0.0, %v1920
        %1922 = vmatmul.f32.gmra.mxu0 %v1769
        %v1923 = vpop.f32.mrf.mxu0
        %v1924 = vadd.f32 0.0, %v1923
        %1925 = vmatmul.f32.gmra.mxu0 %v1772
        %v1926 = vpop.f32.mrf.mxu0
        %v1927 = vadd.f32 0.0, %v1926
        %1928 = vmatmul.f32.gmra.mxu0 %v1775
        %v1929 = vpop.f32.mrf.mxu0
        %v1930 = vadd.f32 0.0, %v1929
        %1931 = vmatmul.f32.gmra.mxu0 %v1778
        %v1932 = vpop.f32.mrf.mxu0
        %v1933 = vadd.f32 0.0, %v1932
        %1934 = vmatmul.f32.gmra.mxu0 %v1781
        %v1935 = vpop.f32.mrf.mxu0
        %v1936 = vadd.f32 0.0, %v1935
        %1937 = vmatmul.f32.gmra.mxu0 %v1784
        %v1938 = vpop.f32.mrf.mxu0
        %v1939 = vadd.f32 0.0, %v1938
        %1940 = vmatmul.f32.gmra.mxu0 %v1787
        %v1941 = vpop.f32.mrf.mxu0
        %v1942 = vadd.f32 0.0, %v1941
        %1943 = vmatmul.f32.gmra.mxu0 %v1790
        %v1944 = vpop.f32.mrf.mxu0
        %v1945 = vadd.f32 0.0, %v1944
        %1946 = vmatmul.f32.gmra.mxu0 %v1793
        %v1947 = vpop.f32.mrf.mxu0
        %v1948 = vadd.f32 0.0, %v1947
        %1949 = vmatmul.f32.gmra.mxu0 %v1796
        %v1950 = vpop.f32.mrf.mxu0
        %v1951 = vadd.f32 0.0, %v1950
        %1952 = vmatmul.f32.gmra.mxu0 %v1799
        %v1953 = vpop.f32.mrf.mxu0
        %v1954 = vadd.f32 0.0, %v1953
        %1955 = vmatmul.f32.gmra.mxu0 %v1802
        %v1956 = vpop.f32.mrf.mxu0
        %v1957 = vadd.f32 0.0, %v1956
        %1958 = vmatmul.f32.gmra.mxu0 %v1805
        %v1959 = vpop.f32.mrf.mxu0
        %v1960 = vadd.f32 0.0, %v1959
        %1961 = vmatmul.f32.gmra.mxu0 %v1808
        %v1962 = vpop.f32.mrf.mxu0
        %v1963 = vadd.f32 0.0, %v1962
        %1964 = vmatmul.f32.gmra.mxu0 %v1811
        %v1965 = vpop.f32.mrf.mxu0
        %v1966 = vadd.f32 0.0, %v1965
        %1967 = vmatmul.f32.gmra.mxu0 %v1814
        %v1968 = vpop.f32.mrf.mxu0
        %v1969 = vadd.f32 0.0, %v1968
        %1970 = vmatmul.f32.gmra.mxu0 %v1817
        %v1971 = vpop.f32.mrf.mxu0
        %v1972 = vadd.f32 0.0, %v1971
        %1973 = vmatmul.f32.gmra.mxu0 %v1820
        %v1974 = vpop.f32.mrf.mxu0
        %v1975 = vadd.f32 0.0, %v1974
        %1976 = vmatmul.f32.gmra.mxu0 %v1823
        %v1977 = vpop.f32.mrf.mxu0
        %v1978 = vadd.f32 0.0, %v1977
        %1979 = vmatmul.f32.gmra.mxu0 %v1826
        %v1980 = vpop.f32.mrf.mxu0
        %v1981 = vadd.f32 0.0, %v1980
        %1982 = vmatmul.f32.gmra.mxu0 %v1829
        %v1983 = vpop.f32.mrf.mxu0
        %v1984 = vadd.f32 0.0, %v1983
        %1985 = vmatmul.f32.gmra.mxu0 %v1832
        %v1986 = vpop.f32.mrf.mxu0
        %v1987 = vadd.f32 0.0, %v1986
        %1988 = vmatmul.f32.gmra.mxu0 %v1835
        %v1989 = vpop.f32.mrf.mxu0
        %v1990 = vadd.f32 0.0, %v1989
        %1991 = vmatmul.f32.gmra.mxu0 %v1838
        %v1992 = vpop.f32.mrf.mxu0
        %v1993 = vadd.f32 0.0, %v1992
        %1994 = vmatmul.f32.gmra.mxu0 %v1841
        %v1995 = vpop.f32.mrf.mxu0
        %v1996 = vadd.f32 0.0, %v1995
        %1997 = vmatmul.f32.gmra.mxu0 %v1844
        %v1998 = vpop.f32.mrf.mxu0
        %v1999 = vadd.f32 0.0, %v1998
        %2000 = vmatmul.f32.gmra.mxu0 %v1847
        %v2001 = vpop.f32.mrf.mxu0
        %v2002 = vadd.f32 0.0, %v2001
        %2003 = vdwg.mxu0
        %v2004 = vadd.f32 %v1406, %v1867
        %v2005 = vadd.f32 %v1407, %v1870
        %v2006 = vadd.f32 %v1408, %v1873
        %v2007 = vadd.f32 %v1409, %v1876
        %v2008 = vadd.f32 %v1410, %v1879
        %v2009 = vadd.f32 %v1411, %v1882
        %v2010 = vadd.f32 %v1412, %v1885
        %v2011 = vadd.f32 %v1413, %v1888
        %v2012 = vadd.f32 %v1414, %v1891
        %v2013 = vadd.f32 %v1415, %v1894
        %v2014 = vadd.f32 %v1416, %v1897
        %v2015 = vadd.f32 %v1417, %v1900
        %v2016 = vadd.f32 %v1418, %v1903
        %v2017 = vadd.f32 %v1419, %v1906
        %v2018 = vadd.f32 %v1420, %v1909
        %v2019 = vadd.f32 %v1421, %v1912
        %v2020 = vadd.f32 %v1422, %v1915
        %v2021 = vadd.f32 %v1423, %v1918
        %v2022 = vadd.f32 %v1424, %v1921
        %v2023 = vadd.f32 %v1425, %v1924
        %v2024 = vadd.f32 %v1426, %v1927
        %v2025 = vadd.f32 %v1427, %v1930
        %v2026 = vadd.f32 %v1428, %v1933
        %v2027 = vadd.f32 %v1429, %v1936
        %v2028 = vadd.f32 %v1430, %v1939
        %v2029 = vadd.f32 %v1431, %v1942
        %v2030 = vadd.f32 %v1432, %v1945
        %v2031 = vadd.f32 %v1433, %v1948
        %v2032 = vadd.f32 %v1434, %v1951
        %v2033 = vadd.f32 %v1435, %v1954
        %v2034 = vadd.f32 %v1436, %v1957
        %v2035 = vadd.f32 %v1437, %v1960
        %v2036 = vadd.f32 %v1438, %v1963
        %v2037 = vadd.f32 %v1439, %v1966
        %v2038 = vadd.f32 %v1440, %v1969
        %v2039 = vadd.f32 %v1441, %v1972
        %v2040 = vadd.f32 %v1442, %v1975
        %v2041 = vadd.f32 %v1443, %v1978
        %v2042 = vadd.f32 %v1444, %v1981
        %v2043 = vadd.f32 %v1445, %v1984
        %v2044 = vadd.f32 %v1446, %v1987
        %v2045 = vadd.f32 %v1447, %v1990
        %v2046 = vadd.f32 %v1448, %v1993
        %v2047 = vadd.f32 %v1449, %v1996
        %v2048 = vadd.f32 %v1450, %v1999
        %v2049 = vadd.f32 %v1451, %v2002
        %s2050 = scalar_lea.vmem [#allocation7], 112
        %v2051 = vld [vmem:[%s2050] sm:$0xff]
        %v2052 = vld [vmem:[%s2050 + $0x8] sm:$0xff]
        %v2053 = vld [vmem:[%s2050 + $0x10] sm:$0xff]
        %v2054 = vld [vmem:[%s2050 + $0x18] sm:$0xff]
        %v2055 = vld [vmem:[%s2050 + $0x20] sm:$0xff]
        %v2056 = vld [vmem:[%s2050 + $0x28] sm:$0xff]
        %v2057 = vld [vmem:[%s2050 + $0x30] sm:$0x3]
        %v2059 = vsel %vm861, %v2057, 0
        %2061 = vmatpush.msra.mxu0 0.0
        %2062 = vmatpush.msra.mxu0 0.0
        %2063 = vmatpush.msra.mxu0 0.0
        %2064 = vmatpush.msra.mxu0 0.0
        %2065 = vmatpush.msra.mxu0 0.0
        %2066 = vmatpush.msra.mxu0 0.0
        %2067 = vmatpush.msra.mxu0 0.0
        %2068 = vmatpush.msra.mxu0 0.0
        %2069 = vmatpush.msra.mxu0 0.0
        %2070 = vmatpush.msra.mxu0 %v2059
        %2071 = vmatpush.msra.mxu0 %v2056
        %2072 = vmatpush.msra.mxu0 %v2055
        %2073 = vmatpush.msra.mxu0 %v2054
        %2074 = vmatpush.msra.mxu0 %v2053
        %2075 = vmatpush.msra.mxu0 %v2052
        %2076 = vmatpush.msra.mxu0 %v2051
        %2077 = vmatmul.f32.gmra.mxu0 %v838
        %v2078 = vpop.f32.mrf.mxu0
        %v2079 = vadd.f32 %v834, %v2078
        %2080 = vmatmul.f32.gmra.mxu0 %v841
        %v2081 = vpop.f32.mrf.mxu0
        %v2082 = vadd.f32 %v834, %v2081
        %2083 = vmatmul.f32.gmra.mxu0 %v844
        %v2084 = vpop.f32.mrf.mxu0
        %v2085 = vadd.f32 %v834, %v2084
        %2086 = vmatmul.f32.gmra.mxu0 %v847
        %v2087 = vpop.f32.mrf.mxu0
        %v2088 = vadd.f32 %v834, %v2087
        %2089 = vmatmul.f32.gmra.mxu0 %v850
        %v2090 = vpop.f32.mrf.mxu0
        %v2091 = vadd.f32 %v834, %v2090
        %2092 = vmatmul.f32.gmra.mxu0 %v853
        %v2093 = vpop.f32.mrf.mxu0
        %v2094 = vadd.f32 %v834, %v2093
        %2095 = vmatmul.f32.gmra.mxu0 %v856
        %v2096 = vpop.f32.mrf.mxu0
        %v2097 = vadd.f32 %v834, %v2096
        %2098 = vmatmul.f32.gmra.mxu0 %v859
        %v2099 = vpop.f32.mrf.mxu0
        %v2100 = vadd.f32 %v834, %v2099
        %2101 = vdwg.mxu0
        %v2102 = vsub.f32 0.0, %v2079
        %v2103 = vsub.f32 0.0, %v2082
        %v2104 = vsub.f32 0.0, %v2085
        %v2105 = vsub.f32 0.0, %v2088
        %v2106 = vsub.f32 0.0, %v2091
        %v2107 = vsub.f32 0.0, %v2094
        %v2108 = vsub.f32 0.0, %v2097
        %v2109 = vsub.f32 0.0, %v2100
        %v2110 = vmul.f32 %v2102, 1.442695
        %v2111 = vpow.pop %v2110
        %v2112 = vmul.f32 %v2103, 1.442695
        %v2113 = vpow.pop %v2112
        %v2114 = vmul.f32 %v2104, 1.442695
        %v2115 = vpow.pop %v2114
        %v2116 = vmul.f32 %v2105, 1.442695
        %v2117 = vpow.pop %v2116
        %v2118 = vmul.f32 %v2106, 1.442695
        %v2119 = vpow.pop %v2118
        %v2120 = vmul.f32 %v2107, 1.442695
        %v2121 = vpow.pop %v2120
        %v2122 = vmul.f32 %v2108, 1.442695
        %v2123 = vpow.pop %v2122
        %v2124 = vmul.f32 %v2109, 1.442695
        %v2125 = vpow.pop %v2124
        %v2126 = vadd.f32 %v2111, 1.0
        %v2127 = vadd.f32 %v2113, 1.0
        %v2128 = vadd.f32 %v2115, 1.0
        %v2129 = vadd.f32 %v2117, 1.0
        %v2130 = vadd.f32 %v2119, 1.0
        %v2131 = vadd.f32 %v2121, 1.0
        %v2132 = vadd.f32 %v2123, 1.0
        %v2133 = vadd.f32 %v2125, 1.0
        %v2134 = vrcp.pop %v2126
        %v2135 = vmul.f32 %v2126, %v2134
        %v2136 = vsub.f32 1.0, %v2135
        %v2137 = vmul.f32 %v2134, %v2136
        %v2138 = vadd.f32 %v2134, %v2137
        %vm2139 = vweird.f32 %v2126
        %vm2140 = vweird.f32 %v2134
        %vm2141 = vmor %vm2139, %vm2140
        %v2142 = vsel %vm2141, %v2134, %v2138
        %v2143 = vand.u32 2147483647, %v2126
        %vm2144 = vcmp.eq.f32.partialorder %v2143, 8.507059e+37
        %v2145 = vand.u32 %v2126, 2147483648
        %v2146 = vor.u32 1.1754944e-38, %v2145
        %v2147 = vsel %vm2144, %v2146, %v2142
        %v2148 = vmul.f32 1.0, %v2147
        %v2149 = vrcp.pop %v2127
        %v2150 = vmul.f32 %v2127, %v2149
        %v2151 = vsub.f32 1.0, %v2150
        %v2152 = vmul.f32 %v2149, %v2151
        %v2153 = vadd.f32 %v2149, %v2152
        %vm2154 = vweird.f32 %v2127
        %vm2155 = vweird.f32 %v2149
        %vm2156 = vmor %vm2154, %vm2155
        %v2157 = vsel %vm2156, %v2149, %v2153
        %v2158 = vand.u32 2147483647, %v2127
        %vm2159 = vcmp.eq.f32.partialorder %v2158, 8.507059e+37
        %v2160 = vand.u32 %v2127, 2147483648
        %v2161 = vor.u32 1.1754944e-38, %v2160
        %v2162 = vsel %vm2159, %v2161, %v2157
        %v2163 = vmul.f32 1.0, %v2162
        %v2164 = vrcp.pop %v2128
        %v2165 = vmul.f32 %v2128, %v2164
        %v2166 = vsub.f32 1.0, %v2165
        %v2167 = vmul.f32 %v2164, %v2166
        %v2168 = vadd.f32 %v2164, %v2167
        %vm2169 = vweird.f32 %v2128
        %vm2170 = vweird.f32 %v2164
        %vm2171 = vmor %vm2169, %vm2170
        %v2172 = vsel %vm2171, %v2164, %v2168
        %v2173 = vand.u32 2147483647, %v2128
        %vm2174 = vcmp.eq.f32.partialorder %v2173, 8.507059e+37
        %v2175 = vand.u32 %v2128, 2147483648
        %v2176 = vor.u32 1.1754944e-38, %v2175
        %v2177 = vsel %vm2174, %v2176, %v2172
        %v2178 = vmul.f32 1.0, %v2177
        %v2179 = vrcp.pop %v2129
        %v2180 = vmul.f32 %v2129, %v2179
        %v2181 = vsub.f32 1.0, %v2180
        %v2182 = vmul.f32 %v2179, %v2181
        %v2183 = vadd.f32 %v2179, %v2182
        %vm2184 = vweird.f32 %v2129
        %vm2185 = vweird.f32 %v2179
        %vm2186 = vmor %vm2184, %vm2185
        %v2187 = vsel %vm2186, %v2179, %v2183
        %v2188 = vand.u32 2147483647, %v2129
        %vm2189 = vcmp.eq.f32.partialorder %v2188, 8.507059e+37
        %v2190 = vand.u32 %v2129, 2147483648
        %v2191 = vor.u32 1.1754944e-38, %v2190
        %v2192 = vsel %vm2189, %v2191, %v2187
        %v2193 = vmul.f32 1.0, %v2192
        %v2194 = vrcp.pop %v2130
        %v2195 = vmul.f32 %v2130, %v2194
        %v2196 = vsub.f32 1.0, %v2195
        %v2197 = vmul.f32 %v2194, %v2196
        %v2198 = vadd.f32 %v2194, %v2197
        %vm2199 = vweird.f32 %v2130
        %vm2200 = vweird.f32 %v2194
        %vm2201 = vmor %vm2199, %vm2200
        %v2202 = vsel %vm2201, %v2194, %v2198
        %v2203 = vand.u32 2147483647, %v2130
        %vm2204 = vcmp.eq.f32.partialorder %v2203, 8.507059e+37
        %v2205 = vand.u32 %v2130, 2147483648
        %v2206 = vor.u32 1.1754944e-38, %v2205
        %v2207 = vsel %vm2204, %v2206, %v2202
        %v2208 = vmul.f32 1.0, %v2207
        %v2209 = vrcp.pop %v2131
        %v2210 = vmul.f32 %v2131, %v2209
        %v2211 = vsub.f32 1.0, %v2210
        %v2212 = vmul.f32 %v2209, %v2211
        %v2213 = vadd.f32 %v2209, %v2212
        %vm2214 = vweird.f32 %v2131
        %vm2215 = vweird.f32 %v2209
        %vm2216 = vmor %vm2214, %vm2215
        %v2217 = vsel %vm2216, %v2209, %v2213
        %v2218 = vand.u32 2147483647, %v2131
        %vm2219 = vcmp.eq.f32.partialorder %v2218, 8.507059e+37
        %v2220 = vand.u32 %v2131, 2147483648
        %v2221 = vor.u32 1.1754944e-38, %v2220
        %v2222 = vsel %vm2219, %v2221, %v2217
        %v2223 = vmul.f32 1.0, %v2222
        %v2224 = vrcp.pop %v2132
        %v2225 = vmul.f32 %v2132, %v2224
        %v2226 = vsub.f32 1.0, %v2225
        %v2227 = vmul.f32 %v2224, %v2226
        %v2228 = vadd.f32 %v2224, %v2227
        %vm2229 = vweird.f32 %v2132
        %vm2230 = vweird.f32 %v2224
        %vm2231 = vmor %vm2229, %vm2230
        %v2232 = vsel %vm2231, %v2224, %v2228
        %v2233 = vand.u32 2147483647, %v2132
        %vm2234 = vcmp.eq.f32.partialorder %v2233, 8.507059e+37
        %v2235 = vand.u32 %v2132, 2147483648
        %v2236 = vor.u32 1.1754944e-38, %v2235
        %v2237 = vsel %vm2234, %v2236, %v2232
        %v2238 = vmul.f32 1.0, %v2237
        %v2239 = vrcp.pop %v2133
        %v2240 = vmul.f32 %v2133, %v2239
        %v2241 = vsub.f32 1.0, %v2240
        %v2242 = vmul.f32 %v2239, %v2241
        %v2243 = vadd.f32 %v2239, %v2242
        %vm2244 = vweird.f32 %v2133
        %vm2245 = vweird.f32 %v2239
        %vm2246 = vmor %vm2244, %vm2245
        %v2247 = vsel %vm2246, %v2239, %v2243
        %v2248 = vand.u32 2147483647, %v2133
        %vm2249 = vcmp.eq.f32.partialorder %v2248, 8.507059e+37
        %v2250 = vand.u32 %v2133, 2147483648
        %v2251 = vor.u32 1.1754944e-38, %v2250
        %v2252 = vsel %vm2249, %v2251, %v2247
        %v2253 = vmul.f32 1.0, %v2252
        %v2254 = vmul.f32 %v2079, %v2148
        %v2255 = vmul.f32 %v2082, %v2163
        %v2256 = vmul.f32 %v2085, %v2178
        %v2257 = vmul.f32 %v2088, %v2193
        %v2258 = vmul.f32 %v2091, %v2208
        %v2259 = vmul.f32 %v2094, %v2223
        %v2260 = vmul.f32 %v2097, %v2238
        %v2261 = vmul.f32 %v2100, %v2253
        %s2262 = scalar_lea.vmem %s463, 736 [#allocation10]
        %v2263 = vld [vmem:[%s2262] sm:$0xff]
        %v2264 = vld [vmem:[%s2262 + $0x8] sm:$0xff]
        %v2265 = vld [vmem:[%s2262 + $0x10] sm:$0xff]
        %v2266 = vld [vmem:[%s2262 + $0x18] sm:$0xff]
        %v2267 = vld [vmem:[%s2262 + $0x20] sm:$0xff]
        %v2268 = vld [vmem:[%s2262 + $0x28] sm:$0xff]
        %v2269 = vld [vmem:[%s2262 + $0x30] sm:$0xff]
        %v2270 = vld [vmem:[%s2262 + $0x38] sm:$0xff]
        %v2271 = vld [vmem:[%s2262 + $0x40] sm:$0xff]
        %v2272 = vld [vmem:[%s2262 + $0x48] sm:$0xff]
        %v2273 = vld [vmem:[%s2262 + $0x50] sm:$0xff]
        %v2274 = vld [vmem:[%s2262 + $0x58] sm:$0xff]
        %v2275 = vld [vmem:[%s2262 + $0x60] sm:$0xff]
        %v2276 = vld [vmem:[%s2262 + $0x68] sm:$0xff]
        %v2277 = vld [vmem:[%s2262 + $0x70] sm:$0xff]
        %v2278 = vld [vmem:[%s2262 + $0x78] sm:$0xff]
        %v2279 = vld [vmem:[%s2262 + $0x80] sm:$0xff]
        %v2280 = vld [vmem:[%s2262 + $0x88] sm:$0xff]
        %v2281 = vld [vmem:[%s2262 + $0x90] sm:$0xff]
        %v2282 = vld [vmem:[%s2262 + $0x98] sm:$0xff]
        %v2283 = vld [vmem:[%s2262 + $0xa0] sm:$0xff]
        %v2284 = vld [vmem:[%s2262 + $0xa8] sm:$0xff]
        %v2285 = vld [vmem:[%s2262 + $0xb0] sm:$0xff]
        %v2286 = vld [vmem:[%s2262 + $0xb8] sm:$0xff]
        %v2287 = vld [vmem:[%s2262 + $0xc0] sm:$0xff]
        %v2288 = vld [vmem:[%s2262 + $0xc8] sm:$0xff]
        %v2289 = vld [vmem:[%s2262 + $0xd0] sm:$0xff]
        %v2290 = vld [vmem:[%s2262 + $0xd8] sm:$0xff]
        %v2291 = vld [vmem:[%s2262 + $0xe0] sm:$0xff]
        %v2292 = vld [vmem:[%s2262 + $0xe8] sm:$0xff]
        %v2293 = vld [vmem:[%s2262 + $0xf0] sm:$0xff]
        %v2294 = vld [vmem:[%s2262 + $0xf8] sm:$0xff]
        %v2295 = vld [vmem:[%s2262 + $0x100] sm:$0xff]
        %v2296 = vld [vmem:[%s2262 + $0x108] sm:$0xff]
        %v2297 = vld [vmem:[%s2262 + $0x110] sm:$0xff]
        %v2298 = vld [vmem:[%s2262 + $0x118] sm:$0xff]
        %v2299 = vld [vmem:[%s2262 + $0x120] sm:$0xff]
        %v2300 = vld [vmem:[%s2262 + $0x128] sm:$0xff]
        %v2301 = vld [vmem:[%s2262 + $0x130] sm:$0xff]
        %v2302 = vld [vmem:[%s2262 + $0x138] sm:$0xff]
        %v2303 = vld [vmem:[%s2262 + $0x140] sm:$0xff]
        %v2304 = vld [vmem:[%s2262 + $0x148] sm:$0xff]
        %v2305 = vld [vmem:[%s2262 + $0x150] sm:$0xff]
        %v2306 = vld [vmem:[%s2262 + $0x158] sm:$0xff]
        %v2307 = vld [vmem:[%s2262 + $0x160] sm:$0xff]
        %v2308 = vld [vmem:[%s2262 + $0x168] sm:$0xff]
        %v2310 = vsel %vm1112, %v2263, 0
        %v2313 = vsel %vm1112, %v2264, 0
        %v2316 = vsel %vm1112, %v2265, 0
        %v2319 = vsel %vm1112, %v2266, 0
        %v2322 = vsel %vm1112, %v2267, 0
        %v2325 = vsel %vm1112, %v2268, 0
        %v2328 = vsel %vm1112, %v2269, 0
        %v2331 = vsel %vm1112, %v2270, 0
        %v2334 = vsel %vm1112, %v2271, 0
        %v2337 = vsel %vm1112, %v2272, 0
        %v2340 = vsel %vm1112, %v2273, 0
        %v2343 = vsel %vm1112, %v2274, 0
        %v2346 = vsel %vm1112, %v2275, 0
        %v2349 = vsel %vm1112, %v2276, 0
        %v2352 = vsel %vm1112, %v2277, 0
        %v2355 = vsel %vm1112, %v2278, 0
        %v2358 = vsel %vm1112, %v2279, 0
        %v2361 = vsel %vm1112, %v2280, 0
        %v2364 = vsel %vm1112, %v2281, 0
        %v2367 = vsel %vm1112, %v2282, 0
        %v2370 = vsel %vm1112, %v2283, 0
        %v2373 = vsel %vm1112, %v2284, 0
        %v2376 = vsel %vm1112, %v2285, 0
        %v2379 = vsel %vm1112, %v2286, 0
        %v2382 = vsel %vm1112, %v2287, 0
        %v2385 = vsel %vm1112, %v2288, 0
        %v2388 = vsel %vm1112, %v2289, 0
        %v2391 = vsel %vm1112, %v2290, 0
        %v2394 = vsel %vm1112, %v2291, 0
        %v2397 = vsel %vm1112, %v2292, 0
        %v2400 = vsel %vm1112, %v2293, 0
        %v2403 = vsel %vm1112, %v2294, 0
        %v2406 = vsel %vm1112, %v2295, 0
        %v2409 = vsel %vm1112, %v2296, 0
        %v2412 = vsel %vm1112, %v2297, 0
        %v2415 = vsel %vm1112, %v2298, 0
        %v2418 = vsel %vm1112, %v2299, 0
        %v2421 = vsel %vm1112, %v2300, 0
        %v2424 = vsel %vm1112, %v2301, 0
        %v2427 = vsel %vm1112, %v2302, 0
        %v2430 = vsel %vm1112, %v2303, 0
        %v2433 = vsel %vm1112, %v2304, 0
        %v2436 = vsel %vm1112, %v2305, 0
        %v2439 = vsel %vm1112, %v2306, 0
        %v2442 = vsel %vm1112, %v2307, 0
        %v2445 = vsel %vm1112, %v2308, 0
        %2447 = vmatpush.msra.mxu0 0.0
        %2448 = vmatpush.msra.mxu0 0.0
        %2449 = vmatpush.msra.mxu0 0.0
        %2450 = vmatpush.msra.mxu0 0.0
        %2451 = vmatpush.msra.mxu0 0.0
        %2452 = vmatpush.msra.mxu0 0.0
        %2453 = vmatpush.msra.mxu0 0.0
        %2454 = vmatpush.msra.mxu0 0.0
        %2455 = vmatpush.msra.mxu0 %v2261
        %2456 = vmatpush.msra.mxu0 %v2260
        %2457 = vmatpush.msra.mxu0 %v2259
        %2458 = vmatpush.msra.mxu0 %v2258
        %2459 = vmatpush.msra.mxu0 %v2257
        %2460 = vmatpush.msra.mxu0 %v2256
        %2461 = vmatpush.msra.mxu0 %v2255
        %2462 = vmatpush.msra.mxu0 %v2254
        %2463 = vmatmul.f32.gmra.mxu0 %v2310
        %v2464 = vpop.f32.mrf.mxu0
        %v2465 = vadd.f32 0.0, %v2464
        %2466 = vmatmul.f32.gmra.mxu0 %v2313
        %v2467 = vpop.f32.mrf.mxu0
        %v2468 = vadd.f32 0.0, %v2467
        %2469 = vmatmul.f32.gmra.mxu0 %v2316
        %v2470 = vpop.f32.mrf.mxu0
        %v2471 = vadd.f32 0.0, %v2470
        %2472 = vmatmul.f32.gmra.mxu0 %v2319
        %v2473 = vpop.f32.mrf.mxu0
        %v2474 = vadd.f32 0.0, %v2473
        %2475 = vmatmul.f32.gmra.mxu0 %v2322
        %v2476 = vpop.f32.mrf.mxu0
        %v2477 = vadd.f32 0.0, %v2476
        %2478 = vmatmul.f32.gmra.mxu0 %v2325
        %v2479 = vpop.f32.mrf.mxu0
        %v2480 = vadd.f32 0.0, %v2479
        %2481 = vmatmul.f32.gmra.mxu0 %v2328
        %v2482 = vpop.f32.mrf.mxu0
        %v2483 = vadd.f32 0.0, %v2482
        %2484 = vmatmul.f32.gmra.mxu0 %v2331
        %v2485 = vpop.f32.mrf.mxu0
        %v2486 = vadd.f32 0.0, %v2485
        %2487 = vmatmul.f32.gmra.mxu0 %v2334
        %v2488 = vpop.f32.mrf.mxu0
        %v2489 = vadd.f32 0.0, %v2488
        %2490 = vmatmul.f32.gmra.mxu0 %v2337
        %v2491 = vpop.f32.mrf.mxu0
        %v2492 = vadd.f32 0.0, %v2491
        %2493 = vmatmul.f32.gmra.mxu0 %v2340
        %v2494 = vpop.f32.mrf.mxu0
        %v2495 = vadd.f32 0.0, %v2494
        %2496 = vmatmul.f32.gmra.mxu0 %v2343
        %v2497 = vpop.f32.mrf.mxu0
        %v2498 = vadd.f32 0.0, %v2497
        %2499 = vmatmul.f32.gmra.mxu0 %v2346
        %v2500 = vpop.f32.mrf.mxu0
        %v2501 = vadd.f32 0.0, %v2500
        %2502 = vmatmul.f32.gmra.mxu0 %v2349
        %v2503 = vpop.f32.mrf.mxu0
        %v2504 = vadd.f32 0.0, %v2503
        %2505 = vmatmul.f32.gmra.mxu0 %v2352
        %v2506 = vpop.f32.mrf.mxu0
        %v2507 = vadd.f32 0.0, %v2506
        %2508 = vmatmul.f32.gmra.mxu0 %v2355
        %v2509 = vpop.f32.mrf.mxu0
        %v2510 = vadd.f32 0.0, %v2509
        %2511 = vmatmul.f32.gmra.mxu0 %v2358
        %v2512 = vpop.f32.mrf.mxu0
        %v2513 = vadd.f32 0.0, %v2512
        %2514 = vmatmul.f32.gmra.mxu0 %v2361
        %v2515 = vpop.f32.mrf.mxu0
        %v2516 = vadd.f32 0.0, %v2515
        %2517 = vmatmul.f32.gmra.mxu0 %v2364
        %v2518 = vpop.f32.mrf.mxu0
        %v2519 = vadd.f32 0.0, %v2518
        %2520 = vmatmul.f32.gmra.mxu0 %v2367
        %v2521 = vpop.f32.mrf.mxu0
        %v2522 = vadd.f32 0.0, %v2521
        %2523 = vmatmul.f32.gmra.mxu0 %v2370
        %v2524 = vpop.f32.mrf.mxu0
        %v2525 = vadd.f32 0.0, %v2524
        %2526 = vmatmul.f32.gmra.mxu0 %v2373
        %v2527 = vpop.f32.mrf.mxu0
        %v2528 = vadd.f32 0.0, %v2527
        %2529 = vmatmul.f32.gmra.mxu0 %v2376
        %v2530 = vpop.f32.mrf.mxu0
        %v2531 = vadd.f32 0.0, %v2530
        %2532 = vmatmul.f32.gmra.mxu0 %v2379
        %v2533 = vpop.f32.mrf.mxu0
        %v2534 = vadd.f32 0.0, %v2533
        %2535 = vmatmul.f32.gmra.mxu0 %v2382
        %v2536 = vpop.f32.mrf.mxu0
        %v2537 = vadd.f32 0.0, %v2536
        %2538 = vmatmul.f32.gmra.mxu0 %v2385
        %v2539 = vpop.f32.mrf.mxu0
        %v2540 = vadd.f32 0.0, %v2539
        %2541 = vmatmul.f32.gmra.mxu0 %v2388
        %v2542 = vpop.f32.mrf.mxu0
        %v2543 = vadd.f32 0.0, %v2542
        %2544 = vmatmul.f32.gmra.mxu0 %v2391
        %v2545 = vpop.f32.mrf.mxu0
        %v2546 = vadd.f32 0.0, %v2545
        %2547 = vmatmul.f32.gmra.mxu0 %v2394
        %v2548 = vpop.f32.mrf.mxu0
        %v2549 = vadd.f32 0.0, %v2548
        %2550 = vmatmul.f32.gmra.mxu0 %v2397
        %v2551 = vpop.f32.mrf.mxu0
        %v2552 = vadd.f32 0.0, %v2551
        %2553 = vmatmul.f32.gmra.mxu0 %v2400
        %v2554 = vpop.f32.mrf.mxu0
        %v2555 = vadd.f32 0.0, %v2554
        %2556 = vmatmul.f32.gmra.mxu0 %v2403
        %v2557 = vpop.f32.mrf.mxu0
        %v2558 = vadd.f32 0.0, %v2557
        %2559 = vmatmul.f32.gmra.mxu0 %v2406
        %v2560 = vpop.f32.mrf.mxu0
        %v2561 = vadd.f32 0.0, %v2560
        %2562 = vmatmul.f32.gmra.mxu0 %v2409
        %v2563 = vpop.f32.mrf.mxu0
        %v2564 = vadd.f32 0.0, %v2563
        %2565 = vmatmul.f32.gmra.mxu0 %v2412
        %v2566 = vpop.f32.mrf.mxu0
        %v2567 = vadd.f32 0.0, %v2566
        %2568 = vmatmul.f32.gmra.mxu0 %v2415
        %v2569 = vpop.f32.mrf.mxu0
        %v2570 = vadd.f32 0.0, %v2569
        %2571 = vmatmul.f32.gmra.mxu0 %v2418
        %v2572 = vpop.f32.mrf.mxu0
        %v2573 = vadd.f32 0.0, %v2572
        %2574 = vmatmul.f32.gmra.mxu0 %v2421
        %v2575 = vpop.f32.mrf.mxu0
        %v2576 = vadd.f32 0.0, %v2575
        %2577 = vmatmul.f32.gmra.mxu0 %v2424
        %v2578 = vpop.f32.mrf.mxu0
        %v2579 = vadd.f32 0.0, %v2578
        %2580 = vmatmul.f32.gmra.mxu0 %v2427
        %v2581 = vpop.f32.mrf.mxu0
        %v2582 = vadd.f32 0.0, %v2581
        %2583 = vmatmul.f32.gmra.mxu0 %v2430
        %v2584 = vpop.f32.mrf.mxu0
        %v2585 = vadd.f32 0.0, %v2584
        %2586 = vmatmul.f32.gmra.mxu0 %v2433
        %v2587 = vpop.f32.mrf.mxu0
        %v2588 = vadd.f32 0.0, %v2587
        %2589 = vmatmul.f32.gmra.mxu0 %v2436
        %v2590 = vpop.f32.mrf.mxu0
        %v2591 = vadd.f32 0.0, %v2590
        %2592 = vmatmul.f32.gmra.mxu0 %v2439
        %v2593 = vpop.f32.mrf.mxu0
        %v2594 = vadd.f32 0.0, %v2593
        %2595 = vmatmul.f32.gmra.mxu0 %v2442
        %v2596 = vpop.f32.mrf.mxu0
        %v2597 = vadd.f32 0.0, %v2596
        %2598 = vmatmul.f32.gmra.mxu0 %v2445
        %v2599 = vpop.f32.mrf.mxu0
        %v2600 = vadd.f32 0.0, %v2599
        %2601 = vdwg.mxu0
        %v2602 = vadd.f32 %v2004, %v2465
        %v2603 = vadd.f32 %v2005, %v2468
        %v2604 = vadd.f32 %v2006, %v2471
        %v2605 = vadd.f32 %v2007, %v2474
        %v2606 = vadd.f32 %v2008, %v2477
        %v2607 = vadd.f32 %v2009, %v2480
        %v2608 = vadd.f32 %v2010, %v2483
        %v2609 = vadd.f32 %v2011, %v2486
        %v2610 = vadd.f32 %v2012, %v2489
        %v2611 = vadd.f32 %v2013, %v2492
        %v2612 = vadd.f32 %v2014, %v2495
        %v2613 = vadd.f32 %v2015, %v2498
        %v2614 = vadd.f32 %v2016, %v2501
        %v2615 = vadd.f32 %v2017, %v2504
        %v2616 = vadd.f32 %v2018, %v2507
        %v2617 = vadd.f32 %v2019, %v2510
        %v2618 = vadd.f32 %v2020, %v2513
        %v2619 = vadd.f32 %v2021, %v2516
        %v2620 = vadd.f32 %v2022, %v2519
        %v2621 = vadd.f32 %v2023, %v2522
        %v2622 = vadd.f32 %v2024, %v2525
        %v2623 = vadd.f32 %v2025, %v2528
        %v2624 = vadd.f32 %v2026, %v2531
        %v2625 = vadd.f32 %v2027, %v2534
        %v2626 = vadd.f32 %v2028, %v2537
        %v2627 = vadd.f32 %v2029, %v2540
        %v2628 = vadd.f32 %v2030, %v2543
        %v2629 = vadd.f32 %v2031, %v2546
        %v2630 = vadd.f32 %v2032, %v2549
        %v2631 = vadd.f32 %v2033, %v2552
        %v2632 = vadd.f32 %v2034, %v2555
        %v2633 = vadd.f32 %v2035, %v2558
        %v2634 = vadd.f32 %v2036, %v2561
        %v2635 = vadd.f32 %v2037, %v2564
        %v2636 = vadd.f32 %v2038, %v2567
        %v2637 = vadd.f32 %v2039, %v2570
        %v2638 = vadd.f32 %v2040, %v2573
        %v2639 = vadd.f32 %v2041, %v2576
        %v2640 = vadd.f32 %v2042, %v2579
        %v2641 = vadd.f32 %v2043, %v2582
        %v2642 = vadd.f32 %v2044, %v2585
        %v2643 = vadd.f32 %v2045, %v2588
        %v2644 = vadd.f32 %v2046, %v2591
        %v2645 = vadd.f32 %v2047, %v2594
        %v2646 = vadd.f32 %v2048, %v2597
        %v2647 = vadd.f32 %v2049, %v2600
        %s2648 = scalar_lea.vmem [#allocation7], 168
        %v2649 = vld [vmem:[%s2648] sm:$0xff]
        %v2650 = vld [vmem:[%s2648 + $0x8] sm:$0xff]
        %v2651 = vld [vmem:[%s2648 + $0x10] sm:$0xff]
        %v2652 = vld [vmem:[%s2648 + $0x18] sm:$0xff]
        %v2653 = vld [vmem:[%s2648 + $0x20] sm:$0xff]
        %v2654 = vld [vmem:[%s2648 + $0x28] sm:$0xff]
        %v2655 = vld [vmem:[%s2648 + $0x30] sm:$0x3]
        %v2657 = vsel %vm861, %v2655, 0
        %2659 = vmatpush.msra.mxu0 0.0
        %2660 = vmatpush.msra.mxu0 0.0
        %2661 = vmatpush.msra.mxu0 0.0
        %2662 = vmatpush.msra.mxu0 0.0
        %2663 = vmatpush.msra.mxu0 0.0
        %2664 = vmatpush.msra.mxu0 0.0
        %2665 = vmatpush.msra.mxu0 0.0
        %2666 = vmatpush.msra.mxu0 0.0
        %2667 = vmatpush.msra.mxu0 0.0
        %2668 = vmatpush.msra.mxu0 %v2657
        %2669 = vmatpush.msra.mxu0 %v2654
        %2670 = vmatpush.msra.mxu0 %v2653
        %2671 = vmatpush.msra.mxu0 %v2652
        %2672 = vmatpush.msra.mxu0 %v2651
        %2673 = vmatpush.msra.mxu0 %v2650
        %2674 = vmatpush.msra.mxu0 %v2649
        %2675 = vmatmul.f32.gmra.mxu0 %v838
        %v2676 = vpop.f32.mrf.mxu0
        %v2677 = vadd.f32 %v834, %v2676
        %2678 = vmatmul.f32.gmra.mxu0 %v841
        %v2679 = vpop.f32.mrf.mxu0
        %v2680 = vadd.f32 %v834, %v2679
        %2681 = vmatmul.f32.gmra.mxu0 %v844
        %v2682 = vpop.f32.mrf.mxu0
        %v2683 = vadd.f32 %v834, %v2682
        %2684 = vmatmul.f32.gmra.mxu0 %v847
        %v2685 = vpop.f32.mrf.mxu0
        %v2686 = vadd.f32 %v834, %v2685
        %2687 = vmatmul.f32.gmra.mxu0 %v850
        %v2688 = vpop.f32.mrf.mxu0
        %v2689 = vadd.f32 %v834, %v2688
        %2690 = vmatmul.f32.gmra.mxu0 %v853
        %v2691 = vpop.f32.mrf.mxu0
        %v2692 = vadd.f32 %v834, %v2691
        %2693 = vmatmul.f32.gmra.mxu0 %v856
        %v2694 = vpop.f32.mrf.mxu0
        %v2695 = vadd.f32 %v834, %v2694
        %2696 = vmatmul.f32.gmra.mxu0 %v859
        %v2697 = vpop.f32.mrf.mxu0
        %v2698 = vadd.f32 %v834, %v2697
        %2699 = vdwg.mxu0
        %v2700 = vsub.f32 0.0, %v2677
        %v2701 = vsub.f32 0.0, %v2680
        %v2702 = vsub.f32 0.0, %v2683
        %v2703 = vsub.f32 0.0, %v2686
        %v2704 = vsub.f32 0.0, %v2689
        %v2705 = vsub.f32 0.0, %v2692
        %v2706 = vsub.f32 0.0, %v2695
        %v2707 = vsub.f32 0.0, %v2698
        %v2708 = vmul.f32 %v2700, 1.442695
        %v2709 = vpow.pop %v2708
        %v2710 = vmul.f32 %v2701, 1.442695
        %v2711 = vpow.pop %v2710
        %v2712 = vmul.f32 %v2702, 1.442695
        %v2713 = vpow.pop %v2712
        %v2714 = vmul.f32 %v2703, 1.442695
        %v2715 = vpow.pop %v2714
        %v2716 = vmul.f32 %v2704, 1.442695
        %v2717 = vpow.pop %v2716
        %v2718 = vmul.f32 %v2705, 1.442695
        %v2719 = vpow.pop %v2718
        %v2720 = vmul.f32 %v2706, 1.442695
        %v2721 = vpow.pop %v2720
        %v2722 = vmul.f32 %v2707, 1.442695
        %v2723 = vpow.pop %v2722
        %v2724 = vadd.f32 %v2709, 1.0
        %v2725 = vadd.f32 %v2711, 1.0
        %v2726 = vadd.f32 %v2713, 1.0
        %v2727 = vadd.f32 %v2715, 1.0
        %v2728 = vadd.f32 %v2717, 1.0
        %v2729 = vadd.f32 %v2719, 1.0
        %v2730 = vadd.f32 %v2721, 1.0
        %v2731 = vadd.f32 %v2723, 1.0
        %v2732 = vrcp.pop %v2724
        %v2733 = vmul.f32 %v2724, %v2732
        %v2734 = vsub.f32 1.0, %v2733
        %v2735 = vmul.f32 %v2732, %v2734
        %v2736 = vadd.f32 %v2732, %v2735
        %vm2737 = vweird.f32 %v2724
        %vm2738 = vweird.f32 %v2732
        %vm2739 = vmor %vm2737, %vm2738
        %v2740 = vsel %vm2739, %v2732, %v2736
        %v2741 = vand.u32 2147483647, %v2724
        %vm2742 = vcmp.eq.f32.partialorder %v2741, 8.507059e+37
        %v2743 = vand.u32 %v2724, 2147483648
        %v2744 = vor.u32 1.1754944e-38, %v2743
        %v2745 = vsel %vm2742, %v2744, %v2740
        %v2746 = vmul.f32 1.0, %v2745
        %v2747 = vrcp.pop %v2725
        %v2748 = vmul.f32 %v2725, %v2747
        %v2749 = vsub.f32 1.0, %v2748
        %v2750 = vmul.f32 %v2747, %v2749
        %v2751 = vadd.f32 %v2747, %v2750
        %vm2752 = vweird.f32 %v2725
        %vm2753 = vweird.f32 %v2747
        %vm2754 = vmor %vm2752, %vm2753
        %v2755 = vsel %vm2754, %v2747, %v2751
        %v2756 = vand.u32 2147483647, %v2725
        %vm2757 = vcmp.eq.f32.partialorder %v2756, 8.507059e+37
        %v2758 = vand.u32 %v2725, 2147483648
        %v2759 = vor.u32 1.1754944e-38, %v2758
        %v2760 = vsel %vm2757, %v2759, %v2755
        %v2761 = vmul.f32 1.0, %v2760
        %v2762 = vrcp.pop %v2726
        %v2763 = vmul.f32 %v2726, %v2762
        %v2764 = vsub.f32 1.0, %v2763
        %v2765 = vmul.f32 %v2762, %v2764
        %v2766 = vadd.f32 %v2762, %v2765
        %vm2767 = vweird.f32 %v2726
        %vm2768 = vweird.f32 %v2762
        %vm2769 = vmor %vm2767, %vm2768
        %v2770 = vsel %vm2769, %v2762, %v2766
        %v2771 = vand.u32 2147483647, %v2726
        %vm2772 = vcmp.eq.f32.partialorder %v2771, 8.507059e+37
        %v2773 = vand.u32 %v2726, 2147483648
        %v2774 = vor.u32 1.1754944e-38, %v2773
        %v2775 = vsel %vm2772, %v2774, %v2770
        %v2776 = vmul.f32 1.0, %v2775
        %v2777 = vrcp.pop %v2727
        %v2778 = vmul.f32 %v2727, %v2777
        %v2779 = vsub.f32 1.0, %v2778
        %v2780 = vmul.f32 %v2777, %v2779
        %v2781 = vadd.f32 %v2777, %v2780
        %vm2782 = vweird.f32 %v2727
        %vm2783 = vweird.f32 %v2777
        %vm2784 = vmor %vm2782, %vm2783
        %v2785 = vsel %vm2784, %v2777, %v2781
        %v2786 = vand.u32 2147483647, %v2727
        %vm2787 = vcmp.eq.f32.partialorder %v2786, 8.507059e+37
        %v2788 = vand.u32 %v2727, 2147483648
        %v2789 = vor.u32 1.1754944e-38, %v2788
        %v2790 = vsel %vm2787, %v2789, %v2785
        %v2791 = vmul.f32 1.0, %v2790
        %v2792 = vrcp.pop %v2728
        %v2793 = vmul.f32 %v2728, %v2792
        %v2794 = vsub.f32 1.0, %v2793
        %v2795 = vmul.f32 %v2792, %v2794
        %v2796 = vadd.f32 %v2792, %v2795
        %vm2797 = vweird.f32 %v2728
        %vm2798 = vweird.f32 %v2792
        %vm2799 = vmor %vm2797, %vm2798
        %v2800 = vsel %vm2799, %v2792, %v2796
        %v2801 = vand.u32 2147483647, %v2728
        %vm2802 = vcmp.eq.f32.partialorder %v2801, 8.507059e+37
        %v2803 = vand.u32 %v2728, 2147483648
        %v2804 = vor.u32 1.1754944e-38, %v2803
        %v2805 = vsel %vm2802, %v2804, %v2800
        %v2806 = vmul.f32 1.0, %v2805
        %v2807 = vrcp.pop %v2729
        %v2808 = vmul.f32 %v2729, %v2807
        %v2809 = vsub.f32 1.0, %v2808
        %v2810 = vmul.f32 %v2807, %v2809
        %v2811 = vadd.f32 %v2807, %v2810
        %vm2812 = vweird.f32 %v2729
        %vm2813 = vweird.f32 %v2807
        %vm2814 = vmor %vm2812, %vm2813
        %v2815 = vsel %vm2814, %v2807, %v2811
        %v2816 = vand.u32 2147483647, %v2729
        %vm2817 = vcmp.eq.f32.partialorder %v2816, 8.507059e+37
        %v2818 = vand.u32 %v2729, 2147483648
        %v2819 = vor.u32 1.1754944e-38, %v2818
        %v2820 = vsel %vm2817, %v2819, %v2815
        %v2821 = vmul.f32 1.0, %v2820
        %v2822 = vrcp.pop %v2730
        %v2823 = vmul.f32 %v2730, %v2822
        %v2824 = vsub.f32 1.0, %v2823
        %v2825 = vmul.f32 %v2822, %v2824
        %v2826 = vadd.f32 %v2822, %v2825
        %vm2827 = vweird.f32 %v2730
        %vm2828 = vweird.f32 %v2822
        %vm2829 = vmor %vm2827, %vm2828
        %v2830 = vsel %vm2829, %v2822, %v2826
        %v2831 = vand.u32 2147483647, %v2730
        %vm2832 = vcmp.eq.f32.partialorder %v2831, 8.507059e+37
        %v2833 = vand.u32 %v2730, 2147483648
        %v2834 = vor.u32 1.1754944e-38, %v2833
        %v2835 = vsel %vm2832, %v2834, %v2830
        %v2836 = vmul.f32 1.0, %v2835
        %v2837 = vrcp.pop %v2731
        %v2838 = vmul.f32 %v2731, %v2837
        %v2839 = vsub.f32 1.0, %v2838
        %v2840 = vmul.f32 %v2837, %v2839
        %v2841 = vadd.f32 %v2837, %v2840
        %vm2842 = vweird.f32 %v2731
        %vm2843 = vweird.f32 %v2837
        %vm2844 = vmor %vm2842, %vm2843
        %v2845 = vsel %vm2844, %v2837, %v2841
        %v2846 = vand.u32 2147483647, %v2731
        %vm2847 = vcmp.eq.f32.partialorder %v2846, 8.507059e+37
        %v2848 = vand.u32 %v2731, 2147483648
        %v2849 = vor.u32 1.1754944e-38, %v2848
        %v2850 = vsel %vm2847, %v2849, %v2845
        %v2851 = vmul.f32 1.0, %v2850
        %v2852 = vmul.f32 %v2677, %v2746
        %v2853 = vmul.f32 %v2680, %v2761
        %v2854 = vmul.f32 %v2683, %v2776
        %v2855 = vmul.f32 %v2686, %v2791
        %v2856 = vmul.f32 %v2689, %v2806
        %v2857 = vmul.f32 %v2692, %v2821
        %v2858 = vmul.f32 %v2695, %v2836
        %v2859 = vmul.f32 %v2698, %v2851
        %s2860 = scalar_lea.vmem %s463, 1104 [#allocation10]
        %v2861 = vld [vmem:[%s2860] sm:$0xff]
        %v2862 = vld [vmem:[%s2860 + $0x8] sm:$0xff]
        %v2863 = vld [vmem:[%s2860 + $0x10] sm:$0xff]
        %v2864 = vld [vmem:[%s2860 + $0x18] sm:$0xff]
        %v2865 = vld [vmem:[%s2860 + $0x20] sm:$0xff]
        %v2866 = vld [vmem:[%s2860 + $0x28] sm:$0xff]
        %v2867 = vld [vmem:[%s2860 + $0x30] sm:$0xff]
        %v2868 = vld [vmem:[%s2860 + $0x38] sm:$0xff]
        %v2869 = vld [vmem:[%s2860 + $0x40] sm:$0xff]
        %v2870 = vld [vmem:[%s2860 + $0x48] sm:$0xff]
        %v2871 = vld [vmem:[%s2860 + $0x50] sm:$0xff]
        %v2872 = vld [vmem:[%s2860 + $0x58] sm:$0xff]
        %v2873 = vld [vmem:[%s2860 + $0x60] sm:$0xff]
        %v2874 = vld [vmem:[%s2860 + $0x68] sm:$0xff]
        %v2875 = vld [vmem:[%s2860 + $0x70] sm:$0xff]
        %v2876 = vld [vmem:[%s2860 + $0x78] sm:$0xff]
        %v2877 = vld [vmem:[%s2860 + $0x80] sm:$0xff]
        %v2878 = vld [vmem:[%s2860 + $0x88] sm:$0xff]
        %v2879 = vld [vmem:[%s2860 + $0x90] sm:$0xff]
        %v2880 = vld [vmem:[%s2860 + $0x98] sm:$0xff]
        %v2881 = vld [vmem:[%s2860 + $0xa0] sm:$0xff]
        %v2882 = vld [vmem:[%s2860 + $0xa8] sm:$0xff]
        %v2883 = vld [vmem:[%s2860 + $0xb0] sm:$0xff]
        %v2884 = vld [vmem:[%s2860 + $0xb8] sm:$0xff]
        %v2885 = vld [vmem:[%s2860 + $0xc0] sm:$0xff]
        %v2886 = vld [vmem:[%s2860 + $0xc8] sm:$0xff]
        %v2887 = vld [vmem:[%s2860 + $0xd0] sm:$0xff]
        %v2888 = vld [vmem:[%s2860 + $0xd8] sm:$0xff]
        %v2889 = vld [vmem:[%s2860 + $0xe0] sm:$0xff]
        %v2890 = vld [vmem:[%s2860 + $0xe8] sm:$0xff]
        %v2891 = vld [vmem:[%s2860 + $0xf0] sm:$0xff]
        %v2892 = vld [vmem:[%s2860 + $0xf8] sm:$0xff]
        %v2893 = vld [vmem:[%s2860 + $0x100] sm:$0xff]
        %v2894 = vld [vmem:[%s2860 + $0x108] sm:$0xff]
        %v2895 = vld [vmem:[%s2860 + $0x110] sm:$0xff]
        %v2896 = vld [vmem:[%s2860 + $0x118] sm:$0xff]
        %v2897 = vld [vmem:[%s2860 + $0x120] sm:$0xff]
        %v2898 = vld [vmem:[%s2860 + $0x128] sm:$0xff]
        %v2899 = vld [vmem:[%s2860 + $0x130] sm:$0xff]
        %v2900 = vld [vmem:[%s2860 + $0x138] sm:$0xff]
        %v2901 = vld [vmem:[%s2860 + $0x140] sm:$0xff]
        %v2902 = vld [vmem:[%s2860 + $0x148] sm:$0xff]
        %v2903 = vld [vmem:[%s2860 + $0x150] sm:$0xff]
        %v2904 = vld [vmem:[%s2860 + $0x158] sm:$0xff]
        %v2905 = vld [vmem:[%s2860 + $0x160] sm:$0xff]
        %v2906 = vld [vmem:[%s2860 + $0x168] sm:$0xff]
        %v2908 = vsel %vm1112, %v2861, 0
        %v2911 = vsel %vm1112, %v2862, 0
        %v2914 = vsel %vm1112, %v2863, 0
        %v2917 = vsel %vm1112, %v2864, 0
        %v2920 = vsel %vm1112, %v2865, 0
        %v2923 = vsel %vm1112, %v2866, 0
        %v2926 = vsel %vm1112, %v2867, 0
        %v2929 = vsel %vm1112, %v2868, 0
        %v2932 = vsel %vm1112, %v2869, 0
        %v2935 = vsel %vm1112, %v2870, 0
        %v2938 = vsel %vm1112, %v2871, 0
        %v2941 = vsel %vm1112, %v2872, 0
        %v2944 = vsel %vm1112, %v2873, 0
        %v2947 = vsel %vm1112, %v2874, 0
        %v2950 = vsel %vm1112, %v2875, 0
        %v2953 = vsel %vm1112, %v2876, 0
        %v2956 = vsel %vm1112, %v2877, 0
        %v2959 = vsel %vm1112, %v2878, 0
        %v2962 = vsel %vm1112, %v2879, 0
        %v2965 = vsel %vm1112, %v2880, 0
        %v2968 = vsel %vm1112, %v2881, 0
        %v2971 = vsel %vm1112, %v2882, 0
        %v2974 = vsel %vm1112, %v2883, 0
        %v2977 = vsel %vm1112, %v2884, 0
        %v2980 = vsel %vm1112, %v2885, 0
        %v2983 = vsel %vm1112, %v2886, 0
        %v2986 = vsel %vm1112, %v2887, 0
        %v2989 = vsel %vm1112, %v2888, 0
        %v2992 = vsel %vm1112, %v2889, 0
        %v2995 = vsel %vm1112, %v2890, 0
        %v2998 = vsel %vm1112, %v2891, 0
        %v3001 = vsel %vm1112, %v2892, 0
        %v3004 = vsel %vm1112, %v2893, 0
        %v3007 = vsel %vm1112, %v2894, 0
        %v3010 = vsel %vm1112, %v2895, 0
        %v3013 = vsel %vm1112, %v2896, 0
        %v3016 = vsel %vm1112, %v2897, 0
        %v3019 = vsel %vm1112, %v2898, 0
        %v3022 = vsel %vm1112, %v2899, 0
        %v3025 = vsel %vm1112, %v2900, 0
        %v3028 = vsel %vm1112, %v2901, 0
        %v3031 = vsel %vm1112, %v2902, 0
        %v3034 = vsel %vm1112, %v2903, 0
        %v3037 = vsel %vm1112, %v2904, 0
        %v3040 = vsel %vm1112, %v2905, 0
        %v3043 = vsel %vm1112, %v2906, 0
        %3045 = vmatpush.msra.mxu0 0.0
        %3046 = vmatpush.msra.mxu0 0.0
        %3047 = vmatpush.msra.mxu0 0.0
        %3048 = vmatpush.msra.mxu0 0.0
        %3049 = vmatpush.msra.mxu0 0.0
        %3050 = vmatpush.msra.mxu0 0.0
        %3051 = vmatpush.msra.mxu0 0.0
        %3052 = vmatpush.msra.mxu0 0.0
        %3053 = vmatpush.msra.mxu0 %v2859
        %3054 = vmatpush.msra.mxu0 %v2858
        %3055 = vmatpush.msra.mxu0 %v2857
        %3056 = vmatpush.msra.mxu0 %v2856
        %3057 = vmatpush.msra.mxu0 %v2855
        %3058 = vmatpush.msra.mxu0 %v2854
        %3059 = vmatpush.msra.mxu0 %v2853
        %3060 = vmatpush.msra.mxu0 %v2852
        %3061 = vmatmul.f32.gmra.mxu0 %v2908
        %v3062 = vpop.f32.mrf.mxu0
        %v3063 = vadd.f32 0.0, %v3062
        %3064 = vmatmul.f32.gmra.mxu0 %v2911
        %v3065 = vpop.f32.mrf.mxu0
        %v3066 = vadd.f32 0.0, %v3065
        %3067 = vmatmul.f32.gmra.mxu0 %v2914
        %v3068 = vpop.f32.mrf.mxu0
        %v3069 = vadd.f32 0.0, %v3068
        %3070 = vmatmul.f32.gmra.mxu0 %v2917
        %v3071 = vpop.f32.mrf.mxu0
        %v3072 = vadd.f32 0.0, %v3071
        %3073 = vmatmul.f32.gmra.mxu0 %v2920
        %v3074 = vpop.f32.mrf.mxu0
        %v3075 = vadd.f32 0.0, %v3074
        %3076 = vmatmul.f32.gmra.mxu0 %v2923
        %v3077 = vpop.f32.mrf.mxu0
        %v3078 = vadd.f32 0.0, %v3077
        %3079 = vmatmul.f32.gmra.mxu0 %v2926
        %v3080 = vpop.f32.mrf.mxu0
        %v3081 = vadd.f32 0.0, %v3080
        %3082 = vmatmul.f32.gmra.mxu0 %v2929
        %v3083 = vpop.f32.mrf.mxu0
        %v3084 = vadd.f32 0.0, %v3083
        %3085 = vmatmul.f32.gmra.mxu0 %v2932
        %v3086 = vpop.f32.mrf.mxu0
        %v3087 = vadd.f32 0.0, %v3086
        %3088 = vmatmul.f32.gmra.mxu0 %v2935
        %v3089 = vpop.f32.mrf.mxu0
        %v3090 = vadd.f32 0.0, %v3089
        %3091 = vmatmul.f32.gmra.mxu0 %v2938
        %v3092 = vpop.f32.mrf.mxu0
        %v3093 = vadd.f32 0.0, %v3092
        %3094 = vmatmul.f32.gmra.mxu0 %v2941
        %v3095 = vpop.f32.mrf.mxu0
        %v3096 = vadd.f32 0.0, %v3095
        %3097 = vmatmul.f32.gmra.mxu0 %v2944
        %v3098 = vpop.f32.mrf.mxu0
        %v3099 = vadd.f32 0.0, %v3098
        %3100 = vmatmul.f32.gmra.mxu0 %v2947
        %v3101 = vpop.f32.mrf.mxu0
        %v3102 = vadd.f32 0.0, %v3101
        %3103 = vmatmul.f32.gmra.mxu0 %v2950
        %v3104 = vpop.f32.mrf.mxu0
        %v3105 = vadd.f32 0.0, %v3104
        %3106 = vmatmul.f32.gmra.mxu0 %v2953
        %v3107 = vpop.f32.mrf.mxu0
        %v3108 = vadd.f32 0.0, %v3107
        %3109 = vmatmul.f32.gmra.mxu0 %v2956
        %v3110 = vpop.f32.mrf.mxu0
        %v3111 = vadd.f32 0.0, %v3110
        %3112 = vmatmul.f32.gmra.mxu0 %v2959
        %v3113 = vpop.f32.mrf.mxu0
        %v3114 = vadd.f32 0.0, %v3113
        %3115 = vmatmul.f32.gmra.mxu0 %v2962
        %v3116 = vpop.f32.mrf.mxu0
        %v3117 = vadd.f32 0.0, %v3116
        %3118 = vmatmul.f32.gmra.mxu0 %v2965
        %v3119 = vpop.f32.mrf.mxu0
        %v3120 = vadd.f32 0.0, %v3119
        %3121 = vmatmul.f32.gmra.mxu0 %v2968
        %v3122 = vpop.f32.mrf.mxu0
        %v3123 = vadd.f32 0.0, %v3122
        %3124 = vmatmul.f32.gmra.mxu0 %v2971
        %v3125 = vpop.f32.mrf.mxu0
        %v3126 = vadd.f32 0.0, %v3125
        %3127 = vmatmul.f32.gmra.mxu0 %v2974
        %v3128 = vpop.f32.mrf.mxu0
        %v3129 = vadd.f32 0.0, %v3128
        %3130 = vmatmul.f32.gmra.mxu0 %v2977
        %v3131 = vpop.f32.mrf.mxu0
        %v3132 = vadd.f32 0.0, %v3131
        %3133 = vmatmul.f32.gmra.mxu0 %v2980
        %v3134 = vpop.f32.mrf.mxu0
        %v3135 = vadd.f32 0.0, %v3134
        %3136 = vmatmul.f32.gmra.mxu0 %v2983
        %v3137 = vpop.f32.mrf.mxu0
        %v3138 = vadd.f32 0.0, %v3137
        %3139 = vmatmul.f32.gmra.mxu0 %v2986
        %v3140 = vpop.f32.mrf.mxu0
        %v3141 = vadd.f32 0.0, %v3140
        %3142 = vmatmul.f32.gmra.mxu0 %v2989
        %v3143 = vpop.f32.mrf.mxu0
        %v3144 = vadd.f32 0.0, %v3143
        %3145 = vmatmul.f32.gmra.mxu0 %v2992
        %v3146 = vpop.f32.mrf.mxu0
        %v3147 = vadd.f32 0.0, %v3146
        %3148 = vmatmul.f32.gmra.mxu0 %v2995
        %v3149 = vpop.f32.mrf.mxu0
        %v3150 = vadd.f32 0.0, %v3149
        %3151 = vmatmul.f32.gmra.mxu0 %v2998
        %v3152 = vpop.f32.mrf.mxu0
        %v3153 = vadd.f32 0.0, %v3152
        %3154 = vmatmul.f32.gmra.mxu0 %v3001
        %v3155 = vpop.f32.mrf.mxu0
        %v3156 = vadd.f32 0.0, %v3155
        %3157 = vmatmul.f32.gmra.mxu0 %v3004
        %v3158 = vpop.f32.mrf.mxu0
        %v3159 = vadd.f32 0.0, %v3158
        %3160 = vmatmul.f32.gmra.mxu0 %v3007
        %v3161 = vpop.f32.mrf.mxu0
        %v3162 = vadd.f32 0.0, %v3161
        %3163 = vmatmul.f32.gmra.mxu0 %v3010
        %v3164 = vpop.f32.mrf.mxu0
        %v3165 = vadd.f32 0.0, %v3164
        %3166 = vmatmul.f32.gmra.mxu0 %v3013
        %v3167 = vpop.f32.mrf.mxu0
        %v3168 = vadd.f32 0.0, %v3167
        %3169 = vmatmul.f32.gmra.mxu0 %v3016
        %v3170 = vpop.f32.mrf.mxu0
        %v3171 = vadd.f32 0.0, %v3170
        %3172 = vmatmul.f32.gmra.mxu0 %v3019
        %v3173 = vpop.f32.mrf.mxu0
        %v3174 = vadd.f32 0.0, %v3173
        %3175 = vmatmul.f32.gmra.mxu0 %v3022
        %v3176 = vpop.f32.mrf.mxu0
        %v3177 = vadd.f32 0.0, %v3176
        %3178 = vmatmul.f32.gmra.mxu0 %v3025
        %v3179 = vpop.f32.mrf.mxu0
        %v3180 = vadd.f32 0.0, %v3179
        %3181 = vmatmul.f32.gmra.mxu0 %v3028
        %v3182 = vpop.f32.mrf.mxu0
        %v3183 = vadd.f32 0.0, %v3182
        %3184 = vmatmul.f32.gmra.mxu0 %v3031
        %v3185 = vpop.f32.mrf.mxu0
        %v3186 = vadd.f32 0.0, %v3185
        %3187 = vmatmul.f32.gmra.mxu0 %v3034
        %v3188 = vpop.f32.mrf.mxu0
        %v3189 = vadd.f32 0.0, %v3188
        %3190 = vmatmul.f32.gmra.mxu0 %v3037
        %v3191 = vpop.f32.mrf.mxu0
        %v3192 = vadd.f32 0.0, %v3191
        %3193 = vmatmul.f32.gmra.mxu0 %v3040
        %v3194 = vpop.f32.mrf.mxu0
        %v3195 = vadd.f32 0.0, %v3194
        %3196 = vmatmul.f32.gmra.mxu0 %v3043
        %v3197 = vpop.f32.mrf.mxu0
        %v3198 = vadd.f32 0.0, %v3197
        %3199 = vdwg.mxu0
        %v3200 = vadd.f32 %v2602, %v3063
        %v3201 = vadd.f32 %v2603, %v3066
        %v3202 = vadd.f32 %v2604, %v3069
        %v3203 = vadd.f32 %v2605, %v3072
        %v3204 = vadd.f32 %v2606, %v3075
        %v3205 = vadd.f32 %v2607, %v3078
        %v3206 = vadd.f32 %v2608, %v3081
        %v3207 = vadd.f32 %v2609, %v3084
        %v3208 = vadd.f32 %v2610, %v3087
        %v3209 = vadd.f32 %v2611, %v3090
        %v3210 = vadd.f32 %v2612, %v3093
        %v3211 = vadd.f32 %v2613, %v3096
        %v3212 = vadd.f32 %v2614, %v3099
        %v3213 = vadd.f32 %v2615, %v3102
        %v3214 = vadd.f32 %v2616, %v3105
        %v3215 = vadd.f32 %v2617, %v3108
        %v3216 = vadd.f32 %v2618, %v3111
        %v3217 = vadd.f32 %v2619, %v3114
        %v3218 = vadd.f32 %v2620, %v3117
        %v3219 = vadd.f32 %v2621, %v3120
        %v3220 = vadd.f32 %v2622, %v3123
        %v3221 = vadd.f32 %v2623, %v3126
        %v3222 = vadd.f32 %v2624, %v3129
        %v3223 = vadd.f32 %v2625, %v3132
        %v3224 = vadd.f32 %v2626, %v3135
        %v3225 = vadd.f32 %v2627, %v3138
        %v3226 = vadd.f32 %v2628, %v3141
        %v3227 = vadd.f32 %v2629, %v3144
        %v3228 = vadd.f32 %v2630, %v3147
        %v3229 = vadd.f32 %v2631, %v3150
        %v3230 = vadd.f32 %v2632, %v3153
        %v3231 = vadd.f32 %v2633, %v3156
        %v3232 = vadd.f32 %v2634, %v3159
        %v3233 = vadd.f32 %v2635, %v3162
        %v3234 = vadd.f32 %v2636, %v3165
        %v3235 = vadd.f32 %v2637, %v3168
        %v3236 = vadd.f32 %v2638, %v3171
        %v3237 = vadd.f32 %v2639, %v3174
        %v3238 = vadd.f32 %v2640, %v3177
        %v3239 = vadd.f32 %v2641, %v3180
        %v3240 = vadd.f32 %v2642, %v3183
        %v3241 = vadd.f32 %v2643, %v3186
        %v3242 = vadd.f32 %v2644, %v3189
        %v3243 = vadd.f32 %v2645, %v3192
        %v3244 = vadd.f32 %v2646, %v3195
        %v3245 = vadd.f32 %v2647, %v3198
        %s3246 = scalar_lea.vmem [#allocation7], 224
        %v3247 = vld [vmem:[%s3246] sm:$0xff]
        %v3248 = vld [vmem:[%s3246 + $0x8] sm:$0xff]
        %v3249 = vld [vmem:[%s3246 + $0x10] sm:$0xff]
        %v3250 = vld [vmem:[%s3246 + $0x18] sm:$0xff]
        %v3251 = vld [vmem:[%s3246 + $0x20] sm:$0xff]
        %v3252 = vld [vmem:[%s3246 + $0x28] sm:$0xff]
        %v3253 = vld [vmem:[%s3246 + $0x30] sm:$0x3]
        %v3255 = vsel %vm861, %v3253, 0
        %3257 = vmatpush.msra.mxu0 0.0
        %3258 = vmatpush.msra.mxu0 0.0
        %3259 = vmatpush.msra.mxu0 0.0
        %3260 = vmatpush.msra.mxu0 0.0
        %3261 = vmatpush.msra.mxu0 0.0
        %3262 = vmatpush.msra.mxu0 0.0
        %3263 = vmatpush.msra.mxu0 0.0
        %3264 = vmatpush.msra.mxu0 0.0
        %3265 = vmatpush.msra.mxu0 0.0
        %3266 = vmatpush.msra.mxu0 %v3255
        %3267 = vmatpush.msra.mxu0 %v3252
        %3268 = vmatpush.msra.mxu0 %v3251
        %3269 = vmatpush.msra.mxu0 %v3250
        %3270 = vmatpush.msra.mxu0 %v3249
        %3271 = vmatpush.msra.mxu0 %v3248
        %3272 = vmatpush.msra.mxu0 %v3247
        %3273 = vmatmul.f32.gmra.mxu0 %v838
        %v3274 = vpop.f32.mrf.mxu0
        %v3275 = vadd.f32 %v834, %v3274
        %3276 = vmatmul.f32.gmra.mxu0 %v841
        %v3277 = vpop.f32.mrf.mxu0
        %v3278 = vadd.f32 %v834, %v3277
        %3279 = vmatmul.f32.gmra.mxu0 %v844
        %v3280 = vpop.f32.mrf.mxu0
        %v3281 = vadd.f32 %v834, %v3280
        %3282 = vmatmul.f32.gmra.mxu0 %v847
        %v3283 = vpop.f32.mrf.mxu0
        %v3284 = vadd.f32 %v834, %v3283
        %3285 = vmatmul.f32.gmra.mxu0 %v850
        %v3286 = vpop.f32.mrf.mxu0
        %v3287 = vadd.f32 %v834, %v3286
        %3288 = vmatmul.f32.gmra.mxu0 %v853
        %v3289 = vpop.f32.mrf.mxu0
        %v3290 = vadd.f32 %v834, %v3289
        %3291 = vmatmul.f32.gmra.mxu0 %v856
        %v3292 = vpop.f32.mrf.mxu0
        %v3293 = vadd.f32 %v834, %v3292
        %3294 = vmatmul.f32.gmra.mxu0 %v859
        %v3295 = vpop.f32.mrf.mxu0
        %v3296 = vadd.f32 %v834, %v3295
        %3297 = vdwg.mxu0
        %v3298 = vsub.f32 0.0, %v3275
        %v3299 = vsub.f32 0.0, %v3278
        %v3300 = vsub.f32 0.0, %v3281
        %v3301 = vsub.f32 0.0, %v3284
        %v3302 = vsub.f32 0.0, %v3287
        %v3303 = vsub.f32 0.0, %v3290
        %v3304 = vsub.f32 0.0, %v3293
        %v3305 = vsub.f32 0.0, %v3296
        %v3306 = vmul.f32 %v3298, 1.442695
        %v3307 = vpow.pop %v3306
        %v3308 = vmul.f32 %v3299, 1.442695
        %v3309 = vpow.pop %v3308
        %v3310 = vmul.f32 %v3300, 1.442695
        %v3311 = vpow.pop %v3310
        %v3312 = vmul.f32 %v3301, 1.442695
        %v3313 = vpow.pop %v3312
        %v3314 = vmul.f32 %v3302, 1.442695
        %v3315 = vpow.pop %v3314
        %v3316 = vmul.f32 %v3303, 1.442695
        %v3317 = vpow.pop %v3316
        %v3318 = vmul.f32 %v3304, 1.442695
        %v3319 = vpow.pop %v3318
        %v3320 = vmul.f32 %v3305, 1.442695
        %v3321 = vpow.pop %v3320
        %v3322 = vadd.f32 %v3307, 1.0
        %v3323 = vadd.f32 %v3309, 1.0
        %v3324 = vadd.f32 %v3311, 1.0
        %v3325 = vadd.f32 %v3313, 1.0
        %v3326 = vadd.f32 %v3315, 1.0
        %v3327 = vadd.f32 %v3317, 1.0
        %v3328 = vadd.f32 %v3319, 1.0
        %v3329 = vadd.f32 %v3321, 1.0
        %v3330 = vrcp.pop %v3322
        %v3331 = vmul.f32 %v3322, %v3330
        %v3332 = vsub.f32 1.0, %v3331
        %v3333 = vmul.f32 %v3330, %v3332
        %v3334 = vadd.f32 %v3330, %v3333
        %vm3335 = vweird.f32 %v3322
        %vm3336 = vweird.f32 %v3330
        %vm3337 = vmor %vm3335, %vm3336
        %v3338 = vsel %vm3337, %v3330, %v3334
        %v3339 = vand.u32 2147483647, %v3322
        %vm3340 = vcmp.eq.f32.partialorder %v3339, 8.507059e+37
        %v3341 = vand.u32 %v3322, 2147483648
        %v3342 = vor.u32 1.1754944e-38, %v3341
        %v3343 = vsel %vm3340, %v3342, %v3338
        %v3344 = vmul.f32 1.0, %v3343
        %v3345 = vrcp.pop %v3323
        %v3346 = vmul.f32 %v3323, %v3345
        %v3347 = vsub.f32 1.0, %v3346
        %v3348 = vmul.f32 %v3345, %v3347
        %v3349 = vadd.f32 %v3345, %v3348
        %vm3350 = vweird.f32 %v3323
        %vm3351 = vweird.f32 %v3345
        %vm3352 = vmor %vm3350, %vm3351
        %v3353 = vsel %vm3352, %v3345, %v3349
        %v3354 = vand.u32 2147483647, %v3323
        %vm3355 = vcmp.eq.f32.partialorder %v3354, 8.507059e+37
        %v3356 = vand.u32 %v3323, 2147483648
        %v3357 = vor.u32 1.1754944e-38, %v3356
        %v3358 = vsel %vm3355, %v3357, %v3353
        %v3359 = vmul.f32 1.0, %v3358
        %v3360 = vrcp.pop %v3324
        %v3361 = vmul.f32 %v3324, %v3360
        %v3362 = vsub.f32 1.0, %v3361
        %v3363 = vmul.f32 %v3360, %v3362
        %v3364 = vadd.f32 %v3360, %v3363
        %vm3365 = vweird.f32 %v3324
        %vm3366 = vweird.f32 %v3360
        %vm3367 = vmor %vm3365, %vm3366
        %v3368 = vsel %vm3367, %v3360, %v3364
        %v3369 = vand.u32 2147483647, %v3324
        %vm3370 = vcmp.eq.f32.partialorder %v3369, 8.507059e+37
        %v3371 = vand.u32 %v3324, 2147483648
        %v3372 = vor.u32 1.1754944e-38, %v3371
        %v3373 = vsel %vm3370, %v3372, %v3368
        %v3374 = vmul.f32 1.0, %v3373
        %v3375 = vrcp.pop %v3325
        %v3376 = vmul.f32 %v3325, %v3375
        %v3377 = vsub.f32 1.0, %v3376
        %v3378 = vmul.f32 %v3375, %v3377
        %v3379 = vadd.f32 %v3375, %v3378
        %vm3380 = vweird.f32 %v3325
        %vm3381 = vweird.f32 %v3375
        %vm3382 = vmor %vm3380, %vm3381
        %v3383 = vsel %vm3382, %v3375, %v3379
        %v3384 = vand.u32 2147483647, %v3325
        %vm3385 = vcmp.eq.f32.partialorder %v3384, 8.507059e+37
        %v3386 = vand.u32 %v3325, 2147483648
        %v3387 = vor.u32 1.1754944e-38, %v3386
        %v3388 = vsel %vm3385, %v3387, %v3383
        %v3389 = vmul.f32 1.0, %v3388
        %v3390 = vrcp.pop %v3326
        %v3391 = vmul.f32 %v3326, %v3390
        %v3392 = vsub.f32 1.0, %v3391
        %v3393 = vmul.f32 %v3390, %v3392
        %v3394 = vadd.f32 %v3390, %v3393
        %vm3395 = vweird.f32 %v3326
        %vm3396 = vweird.f32 %v3390
        %vm3397 = vmor %vm3395, %vm3396
        %v3398 = vsel %vm3397, %v3390, %v3394
        %v3399 = vand.u32 2147483647, %v3326
        %vm3400 = vcmp.eq.f32.partialorder %v3399, 8.507059e+37
        %v3401 = vand.u32 %v3326, 2147483648
        %v3402 = vor.u32 1.1754944e-38, %v3401
        %v3403 = vsel %vm3400, %v3402, %v3398
        %v3404 = vmul.f32 1.0, %v3403
        %v3405 = vrcp.pop %v3327
        %v3406 = vmul.f32 %v3327, %v3405
        %v3407 = vsub.f32 1.0, %v3406
        %v3408 = vmul.f32 %v3405, %v3407
        %v3409 = vadd.f32 %v3405, %v3408
        %vm3410 = vweird.f32 %v3327
        %vm3411 = vweird.f32 %v3405
        %vm3412 = vmor %vm3410, %vm3411
        %v3413 = vsel %vm3412, %v3405, %v3409
        %v3414 = vand.u32 2147483647, %v3327
        %vm3415 = vcmp.eq.f32.partialorder %v3414, 8.507059e+37
        %v3416 = vand.u32 %v3327, 2147483648
        %v3417 = vor.u32 1.1754944e-38, %v3416
        %v3418 = vsel %vm3415, %v3417, %v3413
        %v3419 = vmul.f32 1.0, %v3418
        %v3420 = vrcp.pop %v3328
        %v3421 = vmul.f32 %v3328, %v3420
        %v3422 = vsub.f32 1.0, %v3421
        %v3423 = vmul.f32 %v3420, %v3422
        %v3424 = vadd.f32 %v3420, %v3423
        %vm3425 = vweird.f32 %v3328
        %vm3426 = vweird.f32 %v3420
        %vm3427 = vmor %vm3425, %vm3426
        %v3428 = vsel %vm3427, %v3420, %v3424
        %v3429 = vand.u32 2147483647, %v3328
        %vm3430 = vcmp.eq.f32.partialorder %v3429, 8.507059e+37
        %v3431 = vand.u32 %v3328, 2147483648
        %v3432 = vor.u32 1.1754944e-38, %v3431
        %v3433 = vsel %vm3430, %v3432, %v3428
        %v3434 = vmul.f32 1.0, %v3433
        %v3435 = vrcp.pop %v3329
        %v3436 = vmul.f32 %v3329, %v3435
        %v3437 = vsub.f32 1.0, %v3436
        %v3438 = vmul.f32 %v3435, %v3437
        %v3439 = vadd.f32 %v3435, %v3438
        %vm3440 = vweird.f32 %v3329
        %vm3441 = vweird.f32 %v3435
        %vm3442 = vmor %vm3440, %vm3441
        %v3443 = vsel %vm3442, %v3435, %v3439
        %v3444 = vand.u32 2147483647, %v3329
        %vm3445 = vcmp.eq.f32.partialorder %v3444, 8.507059e+37
        %v3446 = vand.u32 %v3329, 2147483648
        %v3447 = vor.u32 1.1754944e-38, %v3446
        %v3448 = vsel %vm3445, %v3447, %v3443
        %v3449 = vmul.f32 1.0, %v3448
        %v3450 = vmul.f32 %v3275, %v3344
        %v3451 = vmul.f32 %v3278, %v3359
        %v3452 = vmul.f32 %v3281, %v3374
        %v3453 = vmul.f32 %v3284, %v3389
        %v3454 = vmul.f32 %v3287, %v3404
        %v3455 = vmul.f32 %v3290, %v3419
        %v3456 = vmul.f32 %v3293, %v3434
        %v3457 = vmul.f32 %v3296, %v3449
        %s3458 = scalar_lea.vmem %s463, 1472 [#allocation10]
        %v3459 = vld [vmem:[%s3458] sm:$0xff]
        %v3460 = vld [vmem:[%s3458 + $0x8] sm:$0xff]
        %v3461 = vld [vmem:[%s3458 + $0x10] sm:$0xff]
        %v3462 = vld [vmem:[%s3458 + $0x18] sm:$0xff]
        %v3463 = vld [vmem:[%s3458 + $0x20] sm:$0xff]
        %v3464 = vld [vmem:[%s3458 + $0x28] sm:$0xff]
        %v3465 = vld [vmem:[%s3458 + $0x30] sm:$0xff]
        %v3466 = vld [vmem:[%s3458 + $0x38] sm:$0xff]
        %v3467 = vld [vmem:[%s3458 + $0x40] sm:$0xff]
        %v3468 = vld [vmem:[%s3458 + $0x48] sm:$0xff]
        %v3469 = vld [vmem:[%s3458 + $0x50] sm:$0xff]
        %v3470 = vld [vmem:[%s3458 + $0x58] sm:$0xff]
        %v3471 = vld [vmem:[%s3458 + $0x60] sm:$0xff]
        %v3472 = vld [vmem:[%s3458 + $0x68] sm:$0xff]
        %v3473 = vld [vmem:[%s3458 + $0x70] sm:$0xff]
        %v3474 = vld [vmem:[%s3458 + $0x78] sm:$0xff]
        %v3475 = vld [vmem:[%s3458 + $0x80] sm:$0xff]
        %v3476 = vld [vmem:[%s3458 + $0x88] sm:$0xff]
        %v3477 = vld [vmem:[%s3458 + $0x90] sm:$0xff]
        %v3478 = vld [vmem:[%s3458 + $0x98] sm:$0xff]
        %v3479 = vld [vmem:[%s3458 + $0xa0] sm:$0xff]
        %v3480 = vld [vmem:[%s3458 + $0xa8] sm:$0xff]
        %v3481 = vld [vmem:[%s3458 + $0xb0] sm:$0xff]
        %v3482 = vld [vmem:[%s3458 + $0xb8] sm:$0xff]
        %v3483 = vld [vmem:[%s3458 + $0xc0] sm:$0xff]
        %v3484 = vld [vmem:[%s3458 + $0xc8] sm:$0xff]
        %v3485 = vld [vmem:[%s3458 + $0xd0] sm:$0xff]
        %v3486 = vld [vmem:[%s3458 + $0xd8] sm:$0xff]
        %v3487 = vld [vmem:[%s3458 + $0xe0] sm:$0xff]
        %v3488 = vld [vmem:[%s3458 + $0xe8] sm:$0xff]
        %v3489 = vld [vmem:[%s3458 + $0xf0] sm:$0xff]
        %v3490 = vld [vmem:[%s3458 + $0xf8] sm:$0xff]
        %v3491 = vld [vmem:[%s3458 + $0x100] sm:$0xff]
        %v3492 = vld [vmem:[%s3458 + $0x108] sm:$0xff]
        %v3493 = vld [vmem:[%s3458 + $0x110] sm:$0xff]
        %v3494 = vld [vmem:[%s3458 + $0x118] sm:$0xff]
        %v3495 = vld [vmem:[%s3458 + $0x120] sm:$0xff]
        %v3496 = vld [vmem:[%s3458 + $0x128] sm:$0xff]
        %v3497 = vld [vmem:[%s3458 + $0x130] sm:$0xff]
        %v3498 = vld [vmem:[%s3458 + $0x138] sm:$0xff]
        %v3499 = vld [vmem:[%s3458 + $0x140] sm:$0xff]
        %v3500 = vld [vmem:[%s3458 + $0x148] sm:$0xff]
        %v3501 = vld [vmem:[%s3458 + $0x150] sm:$0xff]
        %v3502 = vld [vmem:[%s3458 + $0x158] sm:$0xff]
        %v3503 = vld [vmem:[%s3458 + $0x160] sm:$0xff]
        %v3504 = vld [vmem:[%s3458 + $0x168] sm:$0xff]
        %v3506 = vsel %vm1112, %v3459, 0
        %v3509 = vsel %vm1112, %v3460, 0
        %v3512 = vsel %vm1112, %v3461, 0
        %v3515 = vsel %vm1112, %v3462, 0
        %v3518 = vsel %vm1112, %v3463, 0
        %v3521 = vsel %vm1112, %v3464, 0
        %v3524 = vsel %vm1112, %v3465, 0
        %v3527 = vsel %vm1112, %v3466, 0
        %v3530 = vsel %vm1112, %v3467, 0
        %v3533 = vsel %vm1112, %v3468, 0
        %v3536 = vsel %vm1112, %v3469, 0
        %v3539 = vsel %vm1112, %v3470, 0
        %v3542 = vsel %vm1112, %v3471, 0
        %v3545 = vsel %vm1112, %v3472, 0
        %v3548 = vsel %vm1112, %v3473, 0
        %v3551 = vsel %vm1112, %v3474, 0
        %v3554 = vsel %vm1112, %v3475, 0
        %v3557 = vsel %vm1112, %v3476, 0
        %v3560 = vsel %vm1112, %v3477, 0
        %v3563 = vsel %vm1112, %v3478, 0
        %v3566 = vsel %vm1112, %v3479, 0
        %v3569 = vsel %vm1112, %v3480, 0
        %v3572 = vsel %vm1112, %v3481, 0
        %v3575 = vsel %vm1112, %v3482, 0
        %v3578 = vsel %vm1112, %v3483, 0
        %v3581 = vsel %vm1112, %v3484, 0
        %v3584 = vsel %vm1112, %v3485, 0
        %v3587 = vsel %vm1112, %v3486, 0
        %v3590 = vsel %vm1112, %v3487, 0
        %v3593 = vsel %vm1112, %v3488, 0
        %v3596 = vsel %vm1112, %v3489, 0
        %v3599 = vsel %vm1112, %v3490, 0
        %v3602 = vsel %vm1112, %v3491, 0
        %v3605 = vsel %vm1112, %v3492, 0
        %v3608 = vsel %vm1112, %v3493, 0
        %v3611 = vsel %vm1112, %v3494, 0
        %v3614 = vsel %vm1112, %v3495, 0
        %v3617 = vsel %vm1112, %v3496, 0
        %v3620 = vsel %vm1112, %v3497, 0
        %v3623 = vsel %vm1112, %v3498, 0
        %v3626 = vsel %vm1112, %v3499, 0
        %v3629 = vsel %vm1112, %v3500, 0
        %v3632 = vsel %vm1112, %v3501, 0
        %v3635 = vsel %vm1112, %v3502, 0
        %v3638 = vsel %vm1112, %v3503, 0
        %v3641 = vsel %vm1112, %v3504, 0
        %3643 = vmatpush.msra.mxu0 0.0
        %3644 = vmatpush.msra.mxu0 0.0
        %3645 = vmatpush.msra.mxu0 0.0
        %3646 = vmatpush.msra.mxu0 0.0
        %3647 = vmatpush.msra.mxu0 0.0
        %3648 = vmatpush.msra.mxu0 0.0
        %3649 = vmatpush.msra.mxu0 0.0
        %3650 = vmatpush.msra.mxu0 0.0
        %3651 = vmatpush.msra.mxu0 %v3457
        %3652 = vmatpush.msra.mxu0 %v3456
        %3653 = vmatpush.msra.mxu0 %v3455
        %3654 = vmatpush.msra.mxu0 %v3454
        %3655 = vmatpush.msra.mxu0 %v3453
        %3656 = vmatpush.msra.mxu0 %v3452
        %3657 = vmatpush.msra.mxu0 %v3451
        %3658 = vmatpush.msra.mxu0 %v3450
        %3659 = vmatmul.f32.gmra.mxu0 %v3506
        %v3660 = vpop.f32.mrf.mxu0
        %v3661 = vadd.f32 0.0, %v3660
        %3662 = vmatmul.f32.gmra.mxu0 %v3509
        %v3663 = vpop.f32.mrf.mxu0
        %v3664 = vadd.f32 0.0, %v3663
        %3665 = vmatmul.f32.gmra.mxu0 %v3512
        %v3666 = vpop.f32.mrf.mxu0
        %v3667 = vadd.f32 0.0, %v3666
        %3668 = vmatmul.f32.gmra.mxu0 %v3515
        %v3669 = vpop.f32.mrf.mxu0
        %v3670 = vadd.f32 0.0, %v3669
        %3671 = vmatmul.f32.gmra.mxu0 %v3518
        %v3672 = vpop.f32.mrf.mxu0
        %v3673 = vadd.f32 0.0, %v3672
        %3674 = vmatmul.f32.gmra.mxu0 %v3521
        %v3675 = vpop.f32.mrf.mxu0
        %v3676 = vadd.f32 0.0, %v3675
        %3677 = vmatmul.f32.gmra.mxu0 %v3524
        %v3678 = vpop.f32.mrf.mxu0
        %v3679 = vadd.f32 0.0, %v3678
        %3680 = vmatmul.f32.gmra.mxu0 %v3527
        %v3681 = vpop.f32.mrf.mxu0
        %v3682 = vadd.f32 0.0, %v3681
        %3683 = vmatmul.f32.gmra.mxu0 %v3530
        %v3684 = vpop.f32.mrf.mxu0
        %v3685 = vadd.f32 0.0, %v3684
        %3686 = vmatmul.f32.gmra.mxu0 %v3533
        %v3687 = vpop.f32.mrf.mxu0
        %v3688 = vadd.f32 0.0, %v3687
        %3689 = vmatmul.f32.gmra.mxu0 %v3536
        %v3690 = vpop.f32.mrf.mxu0
        %v3691 = vadd.f32 0.0, %v3690
        %3692 = vmatmul.f32.gmra.mxu0 %v3539
        %v3693 = vpop.f32.mrf.mxu0
        %v3694 = vadd.f32 0.0, %v3693
        %3695 = vmatmul.f32.gmra.mxu0 %v3542
        %v3696 = vpop.f32.mrf.mxu0
        %v3697 = vadd.f32 0.0, %v3696
        %3698 = vmatmul.f32.gmra.mxu0 %v3545
        %v3699 = vpop.f32.mrf.mxu0
        %v3700 = vadd.f32 0.0, %v3699
        %3701 = vmatmul.f32.gmra.mxu0 %v3548
        %v3702 = vpop.f32.mrf.mxu0
        %v3703 = vadd.f32 0.0, %v3702
        %3704 = vmatmul.f32.gmra.mxu0 %v3551
        %v3705 = vpop.f32.mrf.mxu0
        %v3706 = vadd.f32 0.0, %v3705
        %3707 = vmatmul.f32.gmra.mxu0 %v3554
        %v3708 = vpop.f32.mrf.mxu0
        %v3709 = vadd.f32 0.0, %v3708
        %3710 = vmatmul.f32.gmra.mxu0 %v3557
        %v3711 = vpop.f32.mrf.mxu0
        %v3712 = vadd.f32 0.0, %v3711
        %3713 = vmatmul.f32.gmra.mxu0 %v3560
        %v3714 = vpop.f32.mrf.mxu0
        %v3715 = vadd.f32 0.0, %v3714
        %3716 = vmatmul.f32.gmra.mxu0 %v3563
        %v3717 = vpop.f32.mrf.mxu0
        %v3718 = vadd.f32 0.0, %v3717
        %3719 = vmatmul.f32.gmra.mxu0 %v3566
        %v3720 = vpop.f32.mrf.mxu0
        %v3721 = vadd.f32 0.0, %v3720
        %3722 = vmatmul.f32.gmra.mxu0 %v3569
        %v3723 = vpop.f32.mrf.mxu0
        %v3724 = vadd.f32 0.0, %v3723
        %3725 = vmatmul.f32.gmra.mxu0 %v3572
        %v3726 = vpop.f32.mrf.mxu0
        %v3727 = vadd.f32 0.0, %v3726
        %3728 = vmatmul.f32.gmra.mxu0 %v3575
        %v3729 = vpop.f32.mrf.mxu0
        %v3730 = vadd.f32 0.0, %v3729
        %3731 = vmatmul.f32.gmra.mxu0 %v3578
        %v3732 = vpop.f32.mrf.mxu0
        %v3733 = vadd.f32 0.0, %v3732
        %3734 = vmatmul.f32.gmra.mxu0 %v3581
        %v3735 = vpop.f32.mrf.mxu0
        %v3736 = vadd.f32 0.0, %v3735
        %3737 = vmatmul.f32.gmra.mxu0 %v3584
        %v3738 = vpop.f32.mrf.mxu0
        %v3739 = vadd.f32 0.0, %v3738
        %3740 = vmatmul.f32.gmra.mxu0 %v3587
        %v3741 = vpop.f32.mrf.mxu0
        %v3742 = vadd.f32 0.0, %v3741
        %3743 = vmatmul.f32.gmra.mxu0 %v3590
        %v3744 = vpop.f32.mrf.mxu0
        %v3745 = vadd.f32 0.0, %v3744
        %3746 = vmatmul.f32.gmra.mxu0 %v3593
        %v3747 = vpop.f32.mrf.mxu0
        %v3748 = vadd.f32 0.0, %v3747
        %3749 = vmatmul.f32.gmra.mxu0 %v3596
        %v3750 = vpop.f32.mrf.mxu0
        %v3751 = vadd.f32 0.0, %v3750
        %3752 = vmatmul.f32.gmra.mxu0 %v3599
        %v3753 = vpop.f32.mrf.mxu0
        %v3754 = vadd.f32 0.0, %v3753
        %3755 = vmatmul.f32.gmra.mxu0 %v3602
        %v3756 = vpop.f32.mrf.mxu0
        %v3757 = vadd.f32 0.0, %v3756
        %3758 = vmatmul.f32.gmra.mxu0 %v3605
        %v3759 = vpop.f32.mrf.mxu0
        %v3760 = vadd.f32 0.0, %v3759
        %3761 = vmatmul.f32.gmra.mxu0 %v3608
        %v3762 = vpop.f32.mrf.mxu0
        %v3763 = vadd.f32 0.0, %v3762
        %3764 = vmatmul.f32.gmra.mxu0 %v3611
        %v3765 = vpop.f32.mrf.mxu0
        %v3766 = vadd.f32 0.0, %v3765
        %3767 = vmatmul.f32.gmra.mxu0 %v3614
        %v3768 = vpop.f32.mrf.mxu0
        %v3769 = vadd.f32 0.0, %v3768
        %3770 = vmatmul.f32.gmra.mxu0 %v3617
        %v3771 = vpop.f32.mrf.mxu0
        %v3772 = vadd.f32 0.0, %v3771
        %3773 = vmatmul.f32.gmra.mxu0 %v3620
        %v3774 = vpop.f32.mrf.mxu0
        %v3775 = vadd.f32 0.0, %v3774
        %3776 = vmatmul.f32.gmra.mxu0 %v3623
        %v3777 = vpop.f32.mrf.mxu0
        %v3778 = vadd.f32 0.0, %v3777
        %3779 = vmatmul.f32.gmra.mxu0 %v3626
        %v3780 = vpop.f32.mrf.mxu0
        %v3781 = vadd.f32 0.0, %v3780
        %3782 = vmatmul.f32.gmra.mxu0 %v3629
        %v3783 = vpop.f32.mrf.mxu0
        %v3784 = vadd.f32 0.0, %v3783
        %3785 = vmatmul.f32.gmra.mxu0 %v3632
        %v3786 = vpop.f32.mrf.mxu0
        %v3787 = vadd.f32 0.0, %v3786
        %3788 = vmatmul.f32.gmra.mxu0 %v3635
        %v3789 = vpop.f32.mrf.mxu0
        %v3790 = vadd.f32 0.0, %v3789
        %3791 = vmatmul.f32.gmra.mxu0 %v3638
        %v3792 = vpop.f32.mrf.mxu0
        %v3793 = vadd.f32 0.0, %v3792
        %3794 = vmatmul.f32.gmra.mxu0 %v3641
        %v3795 = vpop.f32.mrf.mxu0
        %v3796 = vadd.f32 0.0, %v3795
        %3797 = vdwg.mxu0
        %v3798 = vadd.f32 %v3200, %v3661
        %v3799 = vadd.f32 %v3201, %v3664
        %v3800 = vadd.f32 %v3202, %v3667
        %v3801 = vadd.f32 %v3203, %v3670
        %v3802 = vadd.f32 %v3204, %v3673
        %v3803 = vadd.f32 %v3205, %v3676
        %v3804 = vadd.f32 %v3206, %v3679
        %v3805 = vadd.f32 %v3207, %v3682
        %v3806 = vadd.f32 %v3208, %v3685
        %v3807 = vadd.f32 %v3209, %v3688
        %v3808 = vadd.f32 %v3210, %v3691
        %v3809 = vadd.f32 %v3211, %v3694
        %v3810 = vadd.f32 %v3212, %v3697
        %v3811 = vadd.f32 %v3213, %v3700
        %v3812 = vadd.f32 %v3214, %v3703
        %v3813 = vadd.f32 %v3215, %v3706
        %v3814 = vadd.f32 %v3216, %v3709
        %v3815 = vadd.f32 %v3217, %v3712
        %v3816 = vadd.f32 %v3218, %v3715
        %v3817 = vadd.f32 %v3219, %v3718
        %v3818 = vadd.f32 %v3220, %v3721
        %v3819 = vadd.f32 %v3221, %v3724
        %v3820 = vadd.f32 %v3222, %v3727
        %v3821 = vadd.f32 %v3223, %v3730
        %v3822 = vadd.f32 %v3224, %v3733
        %v3823 = vadd.f32 %v3225, %v3736
        %v3824 = vadd.f32 %v3226, %v3739
        %v3825 = vadd.f32 %v3227, %v3742
        %v3826 = vadd.f32 %v3228, %v3745
        %v3827 = vadd.f32 %v3229, %v3748
        %v3828 = vadd.f32 %v3230, %v3751
        %v3829 = vadd.f32 %v3231, %v3754
        %v3830 = vadd.f32 %v3232, %v3757
        %v3831 = vadd.f32 %v3233, %v3760
        %v3832 = vadd.f32 %v3234, %v3763
        %v3833 = vadd.f32 %v3235, %v3766
        %v3834 = vadd.f32 %v3236, %v3769
        %v3835 = vadd.f32 %v3237, %v3772
        %v3836 = vadd.f32 %v3238, %v3775
        %v3837 = vadd.f32 %v3239, %v3778
        %v3838 = vadd.f32 %v3240, %v3781
        %v3839 = vadd.f32 %v3241, %v3784
        %v3840 = vadd.f32 %v3242, %v3787
        %v3841 = vadd.f32 %v3243, %v3790
        %v3842 = vadd.f32 %v3244, %v3793
        %v3843 = vadd.f32 %v3245, %v3796
        %s3844 = scalar_lea.vmem [#allocation7], 280
        %v3845 = vld [vmem:[%s3844] sm:$0xff]
        %v3846 = vld [vmem:[%s3844 + $0x8] sm:$0xff]
        %v3847 = vld [vmem:[%s3844 + $0x10] sm:$0xff]
        %v3848 = vld [vmem:[%s3844 + $0x18] sm:$0xff]
        %v3849 = vld [vmem:[%s3844 + $0x20] sm:$0xff]
        %v3850 = vld [vmem:[%s3844 + $0x28] sm:$0xff]
        %v3851 = vld [vmem:[%s3844 + $0x30] sm:$0x3]
        %v3853 = vsel %vm861, %v3851, 0
        %3855 = vmatpush.msra.mxu0 0.0
        %3856 = vmatpush.msra.mxu0 0.0
        %3857 = vmatpush.msra.mxu0 0.0
        %3858 = vmatpush.msra.mxu0 0.0
        %3859 = vmatpush.msra.mxu0 0.0
        %3860 = vmatpush.msra.mxu0 0.0
        %3861 = vmatpush.msra.mxu0 0.0
        %3862 = vmatpush.msra.mxu0 0.0
        %3863 = vmatpush.msra.mxu0 0.0
        %3864 = vmatpush.msra.mxu0 %v3853
        %3865 = vmatpush.msra.mxu0 %v3850
        %3866 = vmatpush.msra.mxu0 %v3849
        %3867 = vmatpush.msra.mxu0 %v3848
        %3868 = vmatpush.msra.mxu0 %v3847
        %3869 = vmatpush.msra.mxu0 %v3846
        %3870 = vmatpush.msra.mxu0 %v3845
        %3871 = vmatmul.f32.gmra.mxu0 %v838
        %v3872 = vpop.f32.mrf.mxu0
        %v3873 = vadd.f32 %v834, %v3872
        %3874 = vmatmul.f32.gmra.mxu0 %v841
        %v3875 = vpop.f32.mrf.mxu0
        %v3876 = vadd.f32 %v834, %v3875
        %3877 = vmatmul.f32.gmra.mxu0 %v844
        %v3878 = vpop.f32.mrf.mxu0
        %v3879 = vadd.f32 %v834, %v3878
        %3880 = vmatmul.f32.gmra.mxu0 %v847
        %v3881 = vpop.f32.mrf.mxu0
        %v3882 = vadd.f32 %v834, %v3881
        %3883 = vmatmul.f32.gmra.mxu0 %v850
        %v3884 = vpop.f32.mrf.mxu0
        %v3885 = vadd.f32 %v834, %v3884
        %3886 = vmatmul.f32.gmra.mxu0 %v853
        %v3887 = vpop.f32.mrf.mxu0
        %v3888 = vadd.f32 %v834, %v3887
        %3889 = vmatmul.f32.gmra.mxu0 %v856
        %v3890 = vpop.f32.mrf.mxu0
        %v3891 = vadd.f32 %v834, %v3890
        %3892 = vmatmul.f32.gmra.mxu0 %v859
        %v3893 = vpop.f32.mrf.mxu0
        %v3894 = vadd.f32 %v834, %v3893
        %3895 = vdwg.mxu0
        %v3896 = vsub.f32 0.0, %v3873
        %v3897 = vsub.f32 0.0, %v3876
        %v3898 = vsub.f32 0.0, %v3879
        %v3899 = vsub.f32 0.0, %v3882
        %v3900 = vsub.f32 0.0, %v3885
        %v3901 = vsub.f32 0.0, %v3888
        %v3902 = vsub.f32 0.0, %v3891
        %v3903 = vsub.f32 0.0, %v3894
        %v3904 = vmul.f32 %v3896, 1.442695
        %v3905 = vpow.pop %v3904
        %v3906 = vmul.f32 %v3897, 1.442695
        %v3907 = vpow.pop %v3906
        %v3908 = vmul.f32 %v3898, 1.442695
        %v3909 = vpow.pop %v3908
        %v3910 = vmul.f32 %v3899, 1.442695
        %v3911 = vpow.pop %v3910
        %v3912 = vmul.f32 %v3900, 1.442695
        %v3913 = vpow.pop %v3912
        %v3914 = vmul.f32 %v3901, 1.442695
        %v3915 = vpow.pop %v3914
        %v3916 = vmul.f32 %v3902, 1.442695
        %v3917 = vpow.pop %v3916
        %v3918 = vmul.f32 %v3903, 1.442695
        %v3919 = vpow.pop %v3918
        %v3920 = vadd.f32 %v3905, 1.0
        %v3921 = vadd.f32 %v3907, 1.0
        %v3922 = vadd.f32 %v3909, 1.0
        %v3923 = vadd.f32 %v3911, 1.0
        %v3924 = vadd.f32 %v3913, 1.0
        %v3925 = vadd.f32 %v3915, 1.0
        %v3926 = vadd.f32 %v3917, 1.0
        %v3927 = vadd.f32 %v3919, 1.0
        %v3928 = vrcp.pop %v3920
        %v3929 = vmul.f32 %v3920, %v3928
        %v3930 = vsub.f32 1.0, %v3929
        %v3931 = vmul.f32 %v3928, %v3930
        %v3932 = vadd.f32 %v3928, %v3931
        %vm3933 = vweird.f32 %v3920
        %vm3934 = vweird.f32 %v3928
        %vm3935 = vmor %vm3933, %vm3934
        %v3936 = vsel %vm3935, %v3928, %v3932
        %v3937 = vand.u32 2147483647, %v3920
        %vm3938 = vcmp.eq.f32.partialorder %v3937, 8.507059e+37
        %v3939 = vand.u32 %v3920, 2147483648
        %v3940 = vor.u32 1.1754944e-38, %v3939
        %v3941 = vsel %vm3938, %v3940, %v3936
        %v3942 = vmul.f32 1.0, %v3941
        %v3943 = vrcp.pop %v3921
        %v3944 = vmul.f32 %v3921, %v3943
        %v3945 = vsub.f32 1.0, %v3944
        %v3946 = vmul.f32 %v3943, %v3945
        %v3947 = vadd.f32 %v3943, %v3946
        %vm3948 = vweird.f32 %v3921
        %vm3949 = vweird.f32 %v3943
        %vm3950 = vmor %vm3948, %vm3949
        %v3951 = vsel %vm3950, %v3943, %v3947
        %v3952 = vand.u32 2147483647, %v3921
        %vm3953 = vcmp.eq.f32.partialorder %v3952, 8.507059e+37
        %v3954 = vand.u32 %v3921, 2147483648
        %v3955 = vor.u32 1.1754944e-38, %v3954
        %v3956 = vsel %vm3953, %v3955, %v3951
        %v3957 = vmul.f32 1.0, %v3956
        %v3958 = vrcp.pop %v3922
        %v3959 = vmul.f32 %v3922, %v3958
        %v3960 = vsub.f32 1.0, %v3959
        %v3961 = vmul.f32 %v3958, %v3960
        %v3962 = vadd.f32 %v3958, %v3961
        %vm3963 = vweird.f32 %v3922
        %vm3964 = vweird.f32 %v3958
        %vm3965 = vmor %vm3963, %vm3964
        %v3966 = vsel %vm3965, %v3958, %v3962
        %v3967 = vand.u32 2147483647, %v3922
        %vm3968 = vcmp.eq.f32.partialorder %v3967, 8.507059e+37
        %v3969 = vand.u32 %v3922, 2147483648
        %v3970 = vor.u32 1.1754944e-38, %v3969
        %v3971 = vsel %vm3968, %v3970, %v3966
        %v3972 = vmul.f32 1.0, %v3971
        %v3973 = vrcp.pop %v3923
        %v3974 = vmul.f32 %v3923, %v3973
        %v3975 = vsub.f32 1.0, %v3974
        %v3976 = vmul.f32 %v3973, %v3975
        %v3977 = vadd.f32 %v3973, %v3976
        %vm3978 = vweird.f32 %v3923
        %vm3979 = vweird.f32 %v3973
        %vm3980 = vmor %vm3978, %vm3979
        %v3981 = vsel %vm3980, %v3973, %v3977
        %v3982 = vand.u32 2147483647, %v3923
        %vm3983 = vcmp.eq.f32.partialorder %v3982, 8.507059e+37
        %v3984 = vand.u32 %v3923, 2147483648
        %v3985 = vor.u32 1.1754944e-38, %v3984
        %v3986 = vsel %vm3983, %v3985, %v3981
        %v3987 = vmul.f32 1.0, %v3986
        %v3988 = vrcp.pop %v3924
        %v3989 = vmul.f32 %v3924, %v3988
        %v3990 = vsub.f32 1.0, %v3989
        %v3991 = vmul.f32 %v3988, %v3990
        %v3992 = vadd.f32 %v3988, %v3991
        %vm3993 = vweird.f32 %v3924
        %vm3994 = vweird.f32 %v3988
        %vm3995 = vmor %vm3993, %vm3994
        %v3996 = vsel %vm3995, %v3988, %v3992
        %v3997 = vand.u32 2147483647, %v3924
        %vm3998 = vcmp.eq.f32.partialorder %v3997, 8.507059e+37
        %v3999 = vand.u32 %v3924, 2147483648
        %v4000 = vor.u32 1.1754944e-38, %v3999
        %v4001 = vsel %vm3998, %v4000, %v3996
        %v4002 = vmul.f32 1.0, %v4001
        %v4003 = vrcp.pop %v3925
        %v4004 = vmul.f32 %v3925, %v4003
        %v4005 = vsub.f32 1.0, %v4004
        %v4006 = vmul.f32 %v4003, %v4005
        %v4007 = vadd.f32 %v4003, %v4006
        %vm4008 = vweird.f32 %v3925
        %vm4009 = vweird.f32 %v4003
        %vm4010 = vmor %vm4008, %vm4009
        %v4011 = vsel %vm4010, %v4003, %v4007
        %v4012 = vand.u32 2147483647, %v3925
        %vm4013 = vcmp.eq.f32.partialorder %v4012, 8.507059e+37
        %v4014 = vand.u32 %v3925, 2147483648
        %v4015 = vor.u32 1.1754944e-38, %v4014
        %v4016 = vsel %vm4013, %v4015, %v4011
        %v4017 = vmul.f32 1.0, %v4016
        %v4018 = vrcp.pop %v3926
        %v4019 = vmul.f32 %v3926, %v4018
        %v4020 = vsub.f32 1.0, %v4019
        %v4021 = vmul.f32 %v4018, %v4020
        %v4022 = vadd.f32 %v4018, %v4021
        %vm4023 = vweird.f32 %v3926
        %vm4024 = vweird.f32 %v4018
        %vm4025 = vmor %vm4023, %vm4024
        %v4026 = vsel %vm4025, %v4018, %v4022
        %v4027 = vand.u32 2147483647, %v3926
        %vm4028 = vcmp.eq.f32.partialorder %v4027, 8.507059e+37
        %v4029 = vand.u32 %v3926, 2147483648
        %v4030 = vor.u32 1.1754944e-38, %v4029
        %v4031 = vsel %vm4028, %v4030, %v4026
        %v4032 = vmul.f32 1.0, %v4031
        %v4033 = vrcp.pop %v3927
        %v4034 = vmul.f32 %v3927, %v4033
        %v4035 = vsub.f32 1.0, %v4034
        %v4036 = vmul.f32 %v4033, %v4035
        %v4037 = vadd.f32 %v4033, %v4036
        %vm4038 = vweird.f32 %v3927
        %vm4039 = vweird.f32 %v4033
        %vm4040 = vmor %vm4038, %vm4039
        %v4041 = vsel %vm4040, %v4033, %v4037
        %v4042 = vand.u32 2147483647, %v3927
        %vm4043 = vcmp.eq.f32.partialorder %v4042, 8.507059e+37
        %v4044 = vand.u32 %v3927, 2147483648
        %v4045 = vor.u32 1.1754944e-38, %v4044
        %v4046 = vsel %vm4043, %v4045, %v4041
        %v4047 = vmul.f32 1.0, %v4046
        %v4048 = vmul.f32 %v3873, %v3942
        %v4049 = vmul.f32 %v3876, %v3957
        %v4050 = vmul.f32 %v3879, %v3972
        %v4051 = vmul.f32 %v3882, %v3987
        %v4052 = vmul.f32 %v3885, %v4002
        %v4053 = vmul.f32 %v3888, %v4017
        %v4054 = vmul.f32 %v3891, %v4032
        %v4055 = vmul.f32 %v3894, %v4047
        %s4056 = scalar_lea.vmem %s463, 1840 [#allocation10]
        %v4057 = vld [vmem:[%s4056] sm:$0xff]
        %v4058 = vld [vmem:[%s4056 + $0x8] sm:$0xff]
        %v4059 = vld [vmem:[%s4056 + $0x10] sm:$0xff]
        %v4060 = vld [vmem:[%s4056 + $0x18] sm:$0xff]
        %v4061 = vld [vmem:[%s4056 + $0x20] sm:$0xff]
        %v4062 = vld [vmem:[%s4056 + $0x28] sm:$0xff]
        %v4063 = vld [vmem:[%s4056 + $0x30] sm:$0xff]
        %v4064 = vld [vmem:[%s4056 + $0x38] sm:$0xff]
        %v4065 = vld [vmem:[%s4056 + $0x40] sm:$0xff]
        %v4066 = vld [vmem:[%s4056 + $0x48] sm:$0xff]
        %v4067 = vld [vmem:[%s4056 + $0x50] sm:$0xff]
        %v4068 = vld [vmem:[%s4056 + $0x58] sm:$0xff]
        %v4069 = vld [vmem:[%s4056 + $0x60] sm:$0xff]
        %v4070 = vld [vmem:[%s4056 + $0x68] sm:$0xff]
        %v4071 = vld [vmem:[%s4056 + $0x70] sm:$0xff]
        %v4072 = vld [vmem:[%s4056 + $0x78] sm:$0xff]
        %v4073 = vld [vmem:[%s4056 + $0x80] sm:$0xff]
        %v4074 = vld [vmem:[%s4056 + $0x88] sm:$0xff]
        %v4075 = vld [vmem:[%s4056 + $0x90] sm:$0xff]
        %v4076 = vld [vmem:[%s4056 + $0x98] sm:$0xff]
        %v4077 = vld [vmem:[%s4056 + $0xa0] sm:$0xff]
        %v4078 = vld [vmem:[%s4056 + $0xa8] sm:$0xff]
        %v4079 = vld [vmem:[%s4056 + $0xb0] sm:$0xff]
        %v4080 = vld [vmem:[%s4056 + $0xb8] sm:$0xff]
        %v4081 = vld [vmem:[%s4056 + $0xc0] sm:$0xff]
        %v4082 = vld [vmem:[%s4056 + $0xc8] sm:$0xff]
        %v4083 = vld [vmem:[%s4056 + $0xd0] sm:$0xff]
        %v4084 = vld [vmem:[%s4056 + $0xd8] sm:$0xff]
        %v4085 = vld [vmem:[%s4056 + $0xe0] sm:$0xff]
        %v4086 = vld [vmem:[%s4056 + $0xe8] sm:$0xff]
        %v4087 = vld [vmem:[%s4056 + $0xf0] sm:$0xff]
        %v4088 = vld [vmem:[%s4056 + $0xf8] sm:$0xff]
        %v4089 = vld [vmem:[%s4056 + $0x100] sm:$0xff]
        %v4090 = vld [vmem:[%s4056 + $0x108] sm:$0xff]
        %v4091 = vld [vmem:[%s4056 + $0x110] sm:$0xff]
        %v4092 = vld [vmem:[%s4056 + $0x118] sm:$0xff]
        %v4093 = vld [vmem:[%s4056 + $0x120] sm:$0xff]
        %v4094 = vld [vmem:[%s4056 + $0x128] sm:$0xff]
        %v4095 = vld [vmem:[%s4056 + $0x130] sm:$0xff]
        %v4096 = vld [vmem:[%s4056 + $0x138] sm:$0xff]
        %v4097 = vld [vmem:[%s4056 + $0x140] sm:$0xff]
        %v4098 = vld [vmem:[%s4056 + $0x148] sm:$0xff]
        %v4099 = vld [vmem:[%s4056 + $0x150] sm:$0xff]
        %v4100 = vld [vmem:[%s4056 + $0x158] sm:$0xff]
        %v4101 = vld [vmem:[%s4056 + $0x160] sm:$0xff]
        %v4102 = vld [vmem:[%s4056 + $0x168] sm:$0xff]
        %v4104 = vsel %vm1112, %v4057, 0
        %v4107 = vsel %vm1112, %v4058, 0
        %v4110 = vsel %vm1112, %v4059, 0
        %v4113 = vsel %vm1112, %v4060, 0
        %v4116 = vsel %vm1112, %v4061, 0
        %v4119 = vsel %vm1112, %v4062, 0
        %v4122 = vsel %vm1112, %v4063, 0
        %v4125 = vsel %vm1112, %v4064, 0
        %v4128 = vsel %vm1112, %v4065, 0
        %v4131 = vsel %vm1112, %v4066, 0
        %v4134 = vsel %vm1112, %v4067, 0
        %v4137 = vsel %vm1112, %v4068, 0
        %v4140 = vsel %vm1112, %v4069, 0
        %v4143 = vsel %vm1112, %v4070, 0
        %v4146 = vsel %vm1112, %v4071, 0
        %v4149 = vsel %vm1112, %v4072, 0
        %v4152 = vsel %vm1112, %v4073, 0
        %v4155 = vsel %vm1112, %v4074, 0
        %v4158 = vsel %vm1112, %v4075, 0
        %v4161 = vsel %vm1112, %v4076, 0
        %v4164 = vsel %vm1112, %v4077, 0
        %v4167 = vsel %vm1112, %v4078, 0
        %v4170 = vsel %vm1112, %v4079, 0
        %v4173 = vsel %vm1112, %v4080, 0
        %v4176 = vsel %vm1112, %v4081, 0
        %v4179 = vsel %vm1112, %v4082, 0
        %v4182 = vsel %vm1112, %v4083, 0
        %v4185 = vsel %vm1112, %v4084, 0
        %v4188 = vsel %vm1112, %v4085, 0
        %v4191 = vsel %vm1112, %v4086, 0
        %v4194 = vsel %vm1112, %v4087, 0
        %v4197 = vsel %vm1112, %v4088, 0
        %v4200 = vsel %vm1112, %v4089, 0
        %v4203 = vsel %vm1112, %v4090, 0
        %v4206 = vsel %vm1112, %v4091, 0
        %v4209 = vsel %vm1112, %v4092, 0
        %v4212 = vsel %vm1112, %v4093, 0
        %v4215 = vsel %vm1112, %v4094, 0
        %v4218 = vsel %vm1112, %v4095, 0
        %v4221 = vsel %vm1112, %v4096, 0
        %v4224 = vsel %vm1112, %v4097, 0
        %v4227 = vsel %vm1112, %v4098, 0
        %v4230 = vsel %vm1112, %v4099, 0
        %v4233 = vsel %vm1112, %v4100, 0
        %v4236 = vsel %vm1112, %v4101, 0
        %v4239 = vsel %vm1112, %v4102, 0
        %4241 = vmatpush.msra.mxu0 0.0
        %4242 = vmatpush.msra.mxu0 0.0
        %4243 = vmatpush.msra.mxu0 0.0
        %4244 = vmatpush.msra.mxu0 0.0
        %4245 = vmatpush.msra.mxu0 0.0
        %4246 = vmatpush.msra.mxu0 0.0
        %4247 = vmatpush.msra.mxu0 0.0
        %4248 = vmatpush.msra.mxu0 0.0
        %4249 = vmatpush.msra.mxu0 %v4055
        %4250 = vmatpush.msra.mxu0 %v4054
        %4251 = vmatpush.msra.mxu0 %v4053
        %4252 = vmatpush.msra.mxu0 %v4052
        %4253 = vmatpush.msra.mxu0 %v4051
        %4254 = vmatpush.msra.mxu0 %v4050
        %4255 = vmatpush.msra.mxu0 %v4049
        %4256 = vmatpush.msra.mxu0 %v4048
        %4257 = vmatmul.f32.gmra.mxu0 %v4104
        %v4258 = vpop.f32.mrf.mxu0
        %v4259 = vadd.f32 0.0, %v4258
        %4260 = vmatmul.f32.gmra.mxu0 %v4107
        %v4261 = vpop.f32.mrf.mxu0
        %v4262 = vadd.f32 0.0, %v4261
        %4263 = vmatmul.f32.gmra.mxu0 %v4110
        %v4264 = vpop.f32.mrf.mxu0
        %v4265 = vadd.f32 0.0, %v4264
        %4266 = vmatmul.f32.gmra.mxu0 %v4113
        %v4267 = vpop.f32.mrf.mxu0
        %v4268 = vadd.f32 0.0, %v4267
        %4269 = vmatmul.f32.gmra.mxu0 %v4116
        %v4270 = vpop.f32.mrf.mxu0
        %v4271 = vadd.f32 0.0, %v4270
        %4272 = vmatmul.f32.gmra.mxu0 %v4119
        %v4273 = vpop.f32.mrf.mxu0
        %v4274 = vadd.f32 0.0, %v4273
        %4275 = vmatmul.f32.gmra.mxu0 %v4122
        %v4276 = vpop.f32.mrf.mxu0
        %v4277 = vadd.f32 0.0, %v4276
        %4278 = vmatmul.f32.gmra.mxu0 %v4125
        %v4279 = vpop.f32.mrf.mxu0
        %v4280 = vadd.f32 0.0, %v4279
        %4281 = vmatmul.f32.gmra.mxu0 %v4128
        %v4282 = vpop.f32.mrf.mxu0
        %v4283 = vadd.f32 0.0, %v4282
        %4284 = vmatmul.f32.gmra.mxu0 %v4131
        %v4285 = vpop.f32.mrf.mxu0
        %v4286 = vadd.f32 0.0, %v4285
        %4287 = vmatmul.f32.gmra.mxu0 %v4134
        %v4288 = vpop.f32.mrf.mxu0
        %v4289 = vadd.f32 0.0, %v4288
        %4290 = vmatmul.f32.gmra.mxu0 %v4137
        %v4291 = vpop.f32.mrf.mxu0
        %v4292 = vadd.f32 0.0, %v4291
        %4293 = vmatmul.f32.gmra.mxu0 %v4140
        %v4294 = vpop.f32.mrf.mxu0
        %v4295 = vadd.f32 0.0, %v4294
        %4296 = vmatmul.f32.gmra.mxu0 %v4143
        %v4297 = vpop.f32.mrf.mxu0
        %v4298 = vadd.f32 0.0, %v4297
        %4299 = vmatmul.f32.gmra.mxu0 %v4146
        %v4300 = vpop.f32.mrf.mxu0
        %v4301 = vadd.f32 0.0, %v4300
        %4302 = vmatmul.f32.gmra.mxu0 %v4149
        %v4303 = vpop.f32.mrf.mxu0
        %v4304 = vadd.f32 0.0, %v4303
        %4305 = vmatmul.f32.gmra.mxu0 %v4152
        %v4306 = vpop.f32.mrf.mxu0
        %v4307 = vadd.f32 0.0, %v4306
        %4308 = vmatmul.f32.gmra.mxu0 %v4155
        %v4309 = vpop.f32.mrf.mxu0
        %v4310 = vadd.f32 0.0, %v4309
        %4311 = vmatmul.f32.gmra.mxu0 %v4158
        %v4312 = vpop.f32.mrf.mxu0
        %v4313 = vadd.f32 0.0, %v4312
        %4314 = vmatmul.f32.gmra.mxu0 %v4161
        %v4315 = vpop.f32.mrf.mxu0
        %v4316 = vadd.f32 0.0, %v4315
        %4317 = vmatmul.f32.gmra.mxu0 %v4164
        %v4318 = vpop.f32.mrf.mxu0
        %v4319 = vadd.f32 0.0, %v4318
        %4320 = vmatmul.f32.gmra.mxu0 %v4167
        %v4321 = vpop.f32.mrf.mxu0
        %v4322 = vadd.f32 0.0, %v4321
        %4323 = vmatmul.f32.gmra.mxu0 %v4170
        %v4324 = vpop.f32.mrf.mxu0
        %v4325 = vadd.f32 0.0, %v4324
        %4326 = vmatmul.f32.gmra.mxu0 %v4173
        %v4327 = vpop.f32.mrf.mxu0
        %v4328 = vadd.f32 0.0, %v4327
        %4329 = vmatmul.f32.gmra.mxu0 %v4176
        %v4330 = vpop.f32.mrf.mxu0
        %v4331 = vadd.f32 0.0, %v4330
        %4332 = vmatmul.f32.gmra.mxu0 %v4179
        %v4333 = vpop.f32.mrf.mxu0
        %v4334 = vadd.f32 0.0, %v4333
        %4335 = vmatmul.f32.gmra.mxu0 %v4182
        %v4336 = vpop.f32.mrf.mxu0
        %v4337 = vadd.f32 0.0, %v4336
        %4338 = vmatmul.f32.gmra.mxu0 %v4185
        %v4339 = vpop.f32.mrf.mxu0
        %v4340 = vadd.f32 0.0, %v4339
        %4341 = vmatmul.f32.gmra.mxu0 %v4188
        %v4342 = vpop.f32.mrf.mxu0
        %v4343 = vadd.f32 0.0, %v4342
        %4344 = vmatmul.f32.gmra.mxu0 %v4191
        %v4345 = vpop.f32.mrf.mxu0
        %v4346 = vadd.f32 0.0, %v4345
        %4347 = vmatmul.f32.gmra.mxu0 %v4194
        %v4348 = vpop.f32.mrf.mxu0
        %v4349 = vadd.f32 0.0, %v4348
        %4350 = vmatmul.f32.gmra.mxu0 %v4197
        %v4351 = vpop.f32.mrf.mxu0
        %v4352 = vadd.f32 0.0, %v4351
        %4353 = vmatmul.f32.gmra.mxu0 %v4200
        %v4354 = vpop.f32.mrf.mxu0
        %v4355 = vadd.f32 0.0, %v4354
        %4356 = vmatmul.f32.gmra.mxu0 %v4203
        %v4357 = vpop.f32.mrf.mxu0
        %v4358 = vadd.f32 0.0, %v4357
        %4359 = vmatmul.f32.gmra.mxu0 %v4206
        %v4360 = vpop.f32.mrf.mxu0
        %v4361 = vadd.f32 0.0, %v4360
        %4362 = vmatmul.f32.gmra.mxu0 %v4209
        %v4363 = vpop.f32.mrf.mxu0
        %v4364 = vadd.f32 0.0, %v4363
        %4365 = vmatmul.f32.gmra.mxu0 %v4212
        %v4366 = vpop.f32.mrf.mxu0
        %v4367 = vadd.f32 0.0, %v4366
        %4368 = vmatmul.f32.gmra.mxu0 %v4215
        %v4369 = vpop.f32.mrf.mxu0
        %v4370 = vadd.f32 0.0, %v4369
        %4371 = vmatmul.f32.gmra.mxu0 %v4218
        %v4372 = vpop.f32.mrf.mxu0
        %v4373 = vadd.f32 0.0, %v4372
        %4374 = vmatmul.f32.gmra.mxu0 %v4221
        %v4375 = vpop.f32.mrf.mxu0
        %v4376 = vadd.f32 0.0, %v4375
        %4377 = vmatmul.f32.gmra.mxu0 %v4224
        %v4378 = vpop.f32.mrf.mxu0
        %v4379 = vadd.f32 0.0, %v4378
        %4380 = vmatmul.f32.gmra.mxu0 %v4227
        %v4381 = vpop.f32.mrf.mxu0
        %v4382 = vadd.f32 0.0, %v4381
        %4383 = vmatmul.f32.gmra.mxu0 %v4230
        %v4384 = vpop.f32.mrf.mxu0
        %v4385 = vadd.f32 0.0, %v4384
        %4386 = vmatmul.f32.gmra.mxu0 %v4233
        %v4387 = vpop.f32.mrf.mxu0
        %v4388 = vadd.f32 0.0, %v4387
        %4389 = vmatmul.f32.gmra.mxu0 %v4236
        %v4390 = vpop.f32.mrf.mxu0
        %v4391 = vadd.f32 0.0, %v4390
        %4392 = vmatmul.f32.gmra.mxu0 %v4239
        %v4393 = vpop.f32.mrf.mxu0
        %v4394 = vadd.f32 0.0, %v4393
        %4395 = vdwg.mxu0
        %v4396 = vadd.f32 %v3798, %v4259
        %v4397 = vadd.f32 %v3799, %v4262
        %v4398 = vadd.f32 %v3800, %v4265
        %v4399 = vadd.f32 %v3801, %v4268
        %v4400 = vadd.f32 %v3802, %v4271
        %v4401 = vadd.f32 %v3803, %v4274
        %v4402 = vadd.f32 %v3804, %v4277
        %v4403 = vadd.f32 %v3805, %v4280
        %v4404 = vadd.f32 %v3806, %v4283
        %v4405 = vadd.f32 %v3807, %v4286
        %v4406 = vadd.f32 %v3808, %v4289
        %v4407 = vadd.f32 %v3809, %v4292
        %v4408 = vadd.f32 %v3810, %v4295
        %v4409 = vadd.f32 %v3811, %v4298
        %v4410 = vadd.f32 %v3812, %v4301
        %v4411 = vadd.f32 %v3813, %v4304
        %v4412 = vadd.f32 %v3814, %v4307
        %v4413 = vadd.f32 %v3815, %v4310
        %v4414 = vadd.f32 %v3816, %v4313
        %v4415 = vadd.f32 %v3817, %v4316
        %v4416 = vadd.f32 %v3818, %v4319
        %v4417 = vadd.f32 %v3819, %v4322
        %v4418 = vadd.f32 %v3820, %v4325
        %v4419 = vadd.f32 %v3821, %v4328
        %v4420 = vadd.f32 %v3822, %v4331
        %v4421 = vadd.f32 %v3823, %v4334
        %v4422 = vadd.f32 %v3824, %v4337
        %v4423 = vadd.f32 %v3825, %v4340
        %v4424 = vadd.f32 %v3826, %v4343
        %v4425 = vadd.f32 %v3827, %v4346
        %v4426 = vadd.f32 %v3828, %v4349
        %v4427 = vadd.f32 %v3829, %v4352
        %v4428 = vadd.f32 %v3830, %v4355
        %v4429 = vadd.f32 %v3831, %v4358
        %v4430 = vadd.f32 %v3832, %v4361
        %v4431 = vadd.f32 %v3833, %v4364
        %v4432 = vadd.f32 %v3834, %v4367
        %v4433 = vadd.f32 %v3835, %v4370
        %v4434 = vadd.f32 %v3836, %v4373
        %v4435 = vadd.f32 %v3837, %v4376
        %v4436 = vadd.f32 %v3838, %v4379
        %v4437 = vadd.f32 %v3839, %v4382
        %v4438 = vadd.f32 %v3840, %v4385
        %v4439 = vadd.f32 %v3841, %v4388
        %v4440 = vadd.f32 %v3842, %v4391
        %v4441 = vadd.f32 %v3843, %v4394
        %s4442 = scalar_lea.vmem [#allocation7], 336
        %v4443 = vld [vmem:[%s4442] sm:$0xff]
        %v4444 = vld [vmem:[%s4442 + $0x8] sm:$0xff]
        %v4445 = vld [vmem:[%s4442 + $0x10] sm:$0xff]
        %v4446 = vld [vmem:[%s4442 + $0x18] sm:$0xff]
        %v4447 = vld [vmem:[%s4442 + $0x20] sm:$0xff]
        %v4448 = vld [vmem:[%s4442 + $0x28] sm:$0xff]
        %v4449 = vld [vmem:[%s4442 + $0x30] sm:$0x3]
        %v4451 = vsel %vm861, %v4449, 0
        %4453 = vmatpush.msra.mxu0 0.0
        %4454 = vmatpush.msra.mxu0 0.0
        %4455 = vmatpush.msra.mxu0 0.0
        %4456 = vmatpush.msra.mxu0 0.0
        %4457 = vmatpush.msra.mxu0 0.0
        %4458 = vmatpush.msra.mxu0 0.0
        %4459 = vmatpush.msra.mxu0 0.0
        %4460 = vmatpush.msra.mxu0 0.0
        %4461 = vmatpush.msra.mxu0 0.0
        %4462 = vmatpush.msra.mxu0 %v4451
        %4463 = vmatpush.msra.mxu0 %v4448
        %4464 = vmatpush.msra.mxu0 %v4447
        %4465 = vmatpush.msra.mxu0 %v4446
        %4466 = vmatpush.msra.mxu0 %v4445
        %4467 = vmatpush.msra.mxu0 %v4444
        %4468 = vmatpush.msra.mxu0 %v4443
        %4469 = vmatmul.f32.gmra.mxu0 %v838
        %v4470 = vpop.f32.mrf.mxu0
        %v4471 = vadd.f32 %v834, %v4470
        %4472 = vmatmul.f32.gmra.mxu0 %v841
        %v4473 = vpop.f32.mrf.mxu0
        %v4474 = vadd.f32 %v834, %v4473
        %4475 = vmatmul.f32.gmra.mxu0 %v844
        %v4476 = vpop.f32.mrf.mxu0
        %v4477 = vadd.f32 %v834, %v4476
        %4478 = vmatmul.f32.gmra.mxu0 %v847
        %v4479 = vpop.f32.mrf.mxu0
        %v4480 = vadd.f32 %v834, %v4479
        %4481 = vmatmul.f32.gmra.mxu0 %v850
        %v4482 = vpop.f32.mrf.mxu0
        %v4483 = vadd.f32 %v834, %v4482
        %4484 = vmatmul.f32.gmra.mxu0 %v853
        %v4485 = vpop.f32.mrf.mxu0
        %v4486 = vadd.f32 %v834, %v4485
        %4487 = vmatmul.f32.gmra.mxu0 %v856
        %v4488 = vpop.f32.mrf.mxu0
        %v4489 = vadd.f32 %v834, %v4488
        %4490 = vmatmul.f32.gmra.mxu0 %v859
        %v4491 = vpop.f32.mrf.mxu0
        %v4492 = vadd.f32 %v834, %v4491
        %4493 = vdwg.mxu0
        %v4494 = vsub.f32 0.0, %v4471
        %v4495 = vsub.f32 0.0, %v4474
        %v4496 = vsub.f32 0.0, %v4477
        %v4497 = vsub.f32 0.0, %v4480
        %v4498 = vsub.f32 0.0, %v4483
        %v4499 = vsub.f32 0.0, %v4486
        %v4500 = vsub.f32 0.0, %v4489
        %v4501 = vsub.f32 0.0, %v4492
        %v4502 = vmul.f32 %v4494, 1.442695
        %v4503 = vpow.pop %v4502
        %v4504 = vmul.f32 %v4495, 1.442695
        %v4505 = vpow.pop %v4504
        %v4506 = vmul.f32 %v4496, 1.442695
        %v4507 = vpow.pop %v4506
        %v4508 = vmul.f32 %v4497, 1.442695
        %v4509 = vpow.pop %v4508
        %v4510 = vmul.f32 %v4498, 1.442695
        %v4511 = vpow.pop %v4510
        %v4512 = vmul.f32 %v4499, 1.442695
        %v4513 = vpow.pop %v4512
        %v4514 = vmul.f32 %v4500, 1.442695
        %v4515 = vpow.pop %v4514
        %v4516 = vmul.f32 %v4501, 1.442695
        %v4517 = vpow.pop %v4516
        %v4518 = vadd.f32 %v4503, 1.0
        %v4519 = vadd.f32 %v4505, 1.0
        %v4520 = vadd.f32 %v4507, 1.0
        %v4521 = vadd.f32 %v4509, 1.0
        %v4522 = vadd.f32 %v4511, 1.0
        %v4523 = vadd.f32 %v4513, 1.0
        %v4524 = vadd.f32 %v4515, 1.0
        %v4525 = vadd.f32 %v4517, 1.0
        %v4526 = vrcp.pop %v4518
        %v4527 = vmul.f32 %v4518, %v4526
        %v4528 = vsub.f32 1.0, %v4527
        %v4529 = vmul.f32 %v4526, %v4528
        %v4530 = vadd.f32 %v4526, %v4529
        %vm4531 = vweird.f32 %v4518
        %vm4532 = vweird.f32 %v4526
        %vm4533 = vmor %vm4531, %vm4532
        %v4534 = vsel %vm4533, %v4526, %v4530
        %v4535 = vand.u32 2147483647, %v4518
        %vm4536 = vcmp.eq.f32.partialorder %v4535, 8.507059e+37
        %v4537 = vand.u32 %v4518, 2147483648
        %v4538 = vor.u32 1.1754944e-38, %v4537
        %v4539 = vsel %vm4536, %v4538, %v4534
        %v4540 = vmul.f32 1.0, %v4539
        %v4541 = vrcp.pop %v4519
        %v4542 = vmul.f32 %v4519, %v4541
        %v4543 = vsub.f32 1.0, %v4542
        %v4544 = vmul.f32 %v4541, %v4543
        %v4545 = vadd.f32 %v4541, %v4544
        %vm4546 = vweird.f32 %v4519
        %vm4547 = vweird.f32 %v4541
        %vm4548 = vmor %vm4546, %vm4547
        %v4549 = vsel %vm4548, %v4541, %v4545
        %v4550 = vand.u32 2147483647, %v4519
        %vm4551 = vcmp.eq.f32.partialorder %v4550, 8.507059e+37
        %v4552 = vand.u32 %v4519, 2147483648
        %v4553 = vor.u32 1.1754944e-38, %v4552
        %v4554 = vsel %vm4551, %v4553, %v4549
        %v4555 = vmul.f32 1.0, %v4554
        %v4556 = vrcp.pop %v4520
        %v4557 = vmul.f32 %v4520, %v4556
        %v4558 = vsub.f32 1.0, %v4557
        %v4559 = vmul.f32 %v4556, %v4558
        %v4560 = vadd.f32 %v4556, %v4559
        %vm4561 = vweird.f32 %v4520
        %vm4562 = vweird.f32 %v4556
        %vm4563 = vmor %vm4561, %vm4562
        %v4564 = vsel %vm4563, %v4556, %v4560
        %v4565 = vand.u32 2147483647, %v4520
        %vm4566 = vcmp.eq.f32.partialorder %v4565, 8.507059e+37
        %v4567 = vand.u32 %v4520, 2147483648
        %v4568 = vor.u32 1.1754944e-38, %v4567
        %v4569 = vsel %vm4566, %v4568, %v4564
        %v4570 = vmul.f32 1.0, %v4569
        %v4571 = vrcp.pop %v4521
        %v4572 = vmul.f32 %v4521, %v4571
        %v4573 = vsub.f32 1.0, %v4572
        %v4574 = vmul.f32 %v4571, %v4573
        %v4575 = vadd.f32 %v4571, %v4574
        %vm4576 = vweird.f32 %v4521
        %vm4577 = vweird.f32 %v4571
        %vm4578 = vmor %vm4576, %vm4577
        %v4579 = vsel %vm4578, %v4571, %v4575
        %v4580 = vand.u32 2147483647, %v4521
        %vm4581 = vcmp.eq.f32.partialorder %v4580, 8.507059e+37
        %v4582 = vand.u32 %v4521, 2147483648
        %v4583 = vor.u32 1.1754944e-38, %v4582
        %v4584 = vsel %vm4581, %v4583, %v4579
        %v4585 = vmul.f32 1.0, %v4584
        %v4586 = vrcp.pop %v4522
        %v4587 = vmul.f32 %v4522, %v4586
        %v4588 = vsub.f32 1.0, %v4587
        %v4589 = vmul.f32 %v4586, %v4588
        %v4590 = vadd.f32 %v4586, %v4589
        %vm4591 = vweird.f32 %v4522
        %vm4592 = vweird.f32 %v4586
        %vm4593 = vmor %vm4591, %vm4592
        %v4594 = vsel %vm4593, %v4586, %v4590
        %v4595 = vand.u32 2147483647, %v4522
        %vm4596 = vcmp.eq.f32.partialorder %v4595, 8.507059e+37
        %v4597 = vand.u32 %v4522, 2147483648
        %v4598 = vor.u32 1.1754944e-38, %v4597
        %v4599 = vsel %vm4596, %v4598, %v4594
        %v4600 = vmul.f32 1.0, %v4599
        %v4601 = vrcp.pop %v4523
        %v4602 = vmul.f32 %v4523, %v4601
        %v4603 = vsub.f32 1.0, %v4602
        %v4604 = vmul.f32 %v4601, %v4603
        %v4605 = vadd.f32 %v4601, %v4604
        %vm4606 = vweird.f32 %v4523
        %vm4607 = vweird.f32 %v4601
        %vm4608 = vmor %vm4606, %vm4607
        %v4609 = vsel %vm4608, %v4601, %v4605
        %v4610 = vand.u32 2147483647, %v4523
        %vm4611 = vcmp.eq.f32.partialorder %v4610, 8.507059e+37
        %v4612 = vand.u32 %v4523, 2147483648
        %v4613 = vor.u32 1.1754944e-38, %v4612
        %v4614 = vsel %vm4611, %v4613, %v4609
        %v4615 = vmul.f32 1.0, %v4614
        %v4616 = vrcp.pop %v4524
        %v4617 = vmul.f32 %v4524, %v4616
        %v4618 = vsub.f32 1.0, %v4617
        %v4619 = vmul.f32 %v4616, %v4618
        %v4620 = vadd.f32 %v4616, %v4619
        %vm4621 = vweird.f32 %v4524
        %vm4622 = vweird.f32 %v4616
        %vm4623 = vmor %vm4621, %vm4622
        %v4624 = vsel %vm4623, %v4616, %v4620
        %v4625 = vand.u32 2147483647, %v4524
        %vm4626 = vcmp.eq.f32.partialorder %v4625, 8.507059e+37
        %v4627 = vand.u32 %v4524, 2147483648
        %v4628 = vor.u32 1.1754944e-38, %v4627
        %v4629 = vsel %vm4626, %v4628, %v4624
        %v4630 = vmul.f32 1.0, %v4629
        %v4631 = vrcp.pop %v4525
        %v4632 = vmul.f32 %v4525, %v4631
        %v4633 = vsub.f32 1.0, %v4632
        %v4634 = vmul.f32 %v4631, %v4633
        %v4635 = vadd.f32 %v4631, %v4634
        %vm4636 = vweird.f32 %v4525
        %vm4637 = vweird.f32 %v4631
        %vm4638 = vmor %vm4636, %vm4637
        %v4639 = vsel %vm4638, %v4631, %v4635
        %v4640 = vand.u32 2147483647, %v4525
        %vm4641 = vcmp.eq.f32.partialorder %v4640, 8.507059e+37
        %v4642 = vand.u32 %v4525, 2147483648
        %v4643 = vor.u32 1.1754944e-38, %v4642
        %v4644 = vsel %vm4641, %v4643, %v4639
        %v4645 = vmul.f32 1.0, %v4644
        %v4646 = vmul.f32 %v4471, %v4540
        %v4647 = vmul.f32 %v4474, %v4555
        %v4648 = vmul.f32 %v4477, %v4570
        %v4649 = vmul.f32 %v4480, %v4585
        %v4650 = vmul.f32 %v4483, %v4600
        %v4651 = vmul.f32 %v4486, %v4615
        %v4652 = vmul.f32 %v4489, %v4630
        %v4653 = vmul.f32 %v4492, %v4645
        %s4654 = scalar_lea.vmem %s463, 2208 [#allocation10]
        %v4655 = vld [vmem:[%s4654] sm:$0xff]
        %v4656 = vld [vmem:[%s4654 + $0x8] sm:$0xff]
        %v4657 = vld [vmem:[%s4654 + $0x10] sm:$0xff]
        %v4658 = vld [vmem:[%s4654 + $0x18] sm:$0xff]
        %v4659 = vld [vmem:[%s4654 + $0x20] sm:$0xff]
        %v4660 = vld [vmem:[%s4654 + $0x28] sm:$0xff]
        %v4661 = vld [vmem:[%s4654 + $0x30] sm:$0xff]
        %v4662 = vld [vmem:[%s4654 + $0x38] sm:$0xff]
        %v4663 = vld [vmem:[%s4654 + $0x40] sm:$0xff]
        %v4664 = vld [vmem:[%s4654 + $0x48] sm:$0xff]
        %v4665 = vld [vmem:[%s4654 + $0x50] sm:$0xff]
        %v4666 = vld [vmem:[%s4654 + $0x58] sm:$0xff]
        %v4667 = vld [vmem:[%s4654 + $0x60] sm:$0xff]
        %v4668 = vld [vmem:[%s4654 + $0x68] sm:$0xff]
        %v4669 = vld [vmem:[%s4654 + $0x70] sm:$0xff]
        %v4670 = vld [vmem:[%s4654 + $0x78] sm:$0xff]
        %v4671 = vld [vmem:[%s4654 + $0x80] sm:$0xff]
        %v4672 = vld [vmem:[%s4654 + $0x88] sm:$0xff]
        %v4673 = vld [vmem:[%s4654 + $0x90] sm:$0xff]
        %v4674 = vld [vmem:[%s4654 + $0x98] sm:$0xff]
        %v4675 = vld [vmem:[%s4654 + $0xa0] sm:$0xff]
        %v4676 = vld [vmem:[%s4654 + $0xa8] sm:$0xff]
        %v4677 = vld [vmem:[%s4654 + $0xb0] sm:$0xff]
        %v4678 = vld [vmem:[%s4654 + $0xb8] sm:$0xff]
        %v4679 = vld [vmem:[%s4654 + $0xc0] sm:$0xff]
        %v4680 = vld [vmem:[%s4654 + $0xc8] sm:$0xff]
        %v4681 = vld [vmem:[%s4654 + $0xd0] sm:$0xff]
        %v4682 = vld [vmem:[%s4654 + $0xd8] sm:$0xff]
        %v4683 = vld [vmem:[%s4654 + $0xe0] sm:$0xff]
        %v4684 = vld [vmem:[%s4654 + $0xe8] sm:$0xff]
        %v4685 = vld [vmem:[%s4654 + $0xf0] sm:$0xff]
        %v4686 = vld [vmem:[%s4654 + $0xf8] sm:$0xff]
        %v4687 = vld [vmem:[%s4654 + $0x100] sm:$0xff]
        %v4688 = vld [vmem:[%s4654 + $0x108] sm:$0xff]
        %v4689 = vld [vmem:[%s4654 + $0x110] sm:$0xff]
        %v4690 = vld [vmem:[%s4654 + $0x118] sm:$0xff]
        %v4691 = vld [vmem:[%s4654 + $0x120] sm:$0xff]
        %v4692 = vld [vmem:[%s4654 + $0x128] sm:$0xff]
        %v4693 = vld [vmem:[%s4654 + $0x130] sm:$0xff]
        %v4694 = vld [vmem:[%s4654 + $0x138] sm:$0xff]
        %v4695 = vld [vmem:[%s4654 + $0x140] sm:$0xff]
        %v4696 = vld [vmem:[%s4654 + $0x148] sm:$0xff]
        %v4697 = vld [vmem:[%s4654 + $0x150] sm:$0xff]
        %v4698 = vld [vmem:[%s4654 + $0x158] sm:$0xff]
        %v4699 = vld [vmem:[%s4654 + $0x160] sm:$0xff]
        %v4700 = vld [vmem:[%s4654 + $0x168] sm:$0xff]
        %v4702 = vsel %vm1112, %v4655, 0
        %v4705 = vsel %vm1112, %v4656, 0
        %v4708 = vsel %vm1112, %v4657, 0
        %v4711 = vsel %vm1112, %v4658, 0
        %v4714 = vsel %vm1112, %v4659, 0
        %v4717 = vsel %vm1112, %v4660, 0
        %v4720 = vsel %vm1112, %v4661, 0
        %v4723 = vsel %vm1112, %v4662, 0
        %v4726 = vsel %vm1112, %v4663, 0
        %v4729 = vsel %vm1112, %v4664, 0
        %v4732 = vsel %vm1112, %v4665, 0
        %v4735 = vsel %vm1112, %v4666, 0
        %v4738 = vsel %vm1112, %v4667, 0
        %v4741 = vsel %vm1112, %v4668, 0
        %v4744 = vsel %vm1112, %v4669, 0
        %v4747 = vsel %vm1112, %v4670, 0
        %v4750 = vsel %vm1112, %v4671, 0
        %v4753 = vsel %vm1112, %v4672, 0
        %v4756 = vsel %vm1112, %v4673, 0
        %v4759 = vsel %vm1112, %v4674, 0
        %v4762 = vsel %vm1112, %v4675, 0
        %v4765 = vsel %vm1112, %v4676, 0
        %v4768 = vsel %vm1112, %v4677, 0
        %v4771 = vsel %vm1112, %v4678, 0
        %v4774 = vsel %vm1112, %v4679, 0
        %v4777 = vsel %vm1112, %v4680, 0
        %v4780 = vsel %vm1112, %v4681, 0
        %v4783 = vsel %vm1112, %v4682, 0
        %v4786 = vsel %vm1112, %v4683, 0
        %v4789 = vsel %vm1112, %v4684, 0
        %v4792 = vsel %vm1112, %v4685, 0
        %v4795 = vsel %vm1112, %v4686, 0
        %v4798 = vsel %vm1112, %v4687, 0
        %v4801 = vsel %vm1112, %v4688, 0
        %v4804 = vsel %vm1112, %v4689, 0
        %v4807 = vsel %vm1112, %v4690, 0
        %v4810 = vsel %vm1112, %v4691, 0
        %v4813 = vsel %vm1112, %v4692, 0
        %v4816 = vsel %vm1112, %v4693, 0
        %v4819 = vsel %vm1112, %v4694, 0
        %v4822 = vsel %vm1112, %v4695, 0
        %v4825 = vsel %vm1112, %v4696, 0
        %v4828 = vsel %vm1112, %v4697, 0
        %v4831 = vsel %vm1112, %v4698, 0
        %v4834 = vsel %vm1112, %v4699, 0
        %v4837 = vsel %vm1112, %v4700, 0
        %4839 = vmatpush.msra.mxu0 0.0
        %4840 = vmatpush.msra.mxu0 0.0
        %4841 = vmatpush.msra.mxu0 0.0
        %4842 = vmatpush.msra.mxu0 0.0
        %4843 = vmatpush.msra.mxu0 0.0
        %4844 = vmatpush.msra.mxu0 0.0
        %4845 = vmatpush.msra.mxu0 0.0
        %4846 = vmatpush.msra.mxu0 0.0
        %4847 = vmatpush.msra.mxu0 %v4653
        %4848 = vmatpush.msra.mxu0 %v4652
        %4849 = vmatpush.msra.mxu0 %v4651
        %4850 = vmatpush.msra.mxu0 %v4650
        %4851 = vmatpush.msra.mxu0 %v4649
        %4852 = vmatpush.msra.mxu0 %v4648
        %4853 = vmatpush.msra.mxu0 %v4647
        %4854 = vmatpush.msra.mxu0 %v4646
        %4855 = vmatmul.f32.gmra.mxu0 %v4702
        %v4856 = vpop.f32.mrf.mxu0
        %v4857 = vadd.f32 0.0, %v4856
        %4858 = vmatmul.f32.gmra.mxu0 %v4705
        %v4859 = vpop.f32.mrf.mxu0
        %v4860 = vadd.f32 0.0, %v4859
        %4861 = vmatmul.f32.gmra.mxu0 %v4708
        %v4862 = vpop.f32.mrf.mxu0
        %v4863 = vadd.f32 0.0, %v4862
        %4864 = vmatmul.f32.gmra.mxu0 %v4711
        %v4865 = vpop.f32.mrf.mxu0
        %v4866 = vadd.f32 0.0, %v4865
        %4867 = vmatmul.f32.gmra.mxu0 %v4714
        %v4868 = vpop.f32.mrf.mxu0
        %v4869 = vadd.f32 0.0, %v4868
        %4870 = vmatmul.f32.gmra.mxu0 %v4717
        %v4871 = vpop.f32.mrf.mxu0
        %v4872 = vadd.f32 0.0, %v4871
        %4873 = vmatmul.f32.gmra.mxu0 %v4720
        %v4874 = vpop.f32.mrf.mxu0
        %v4875 = vadd.f32 0.0, %v4874
        %4876 = vmatmul.f32.gmra.mxu0 %v4723
        %v4877 = vpop.f32.mrf.mxu0
        %v4878 = vadd.f32 0.0, %v4877
        %4879 = vmatmul.f32.gmra.mxu0 %v4726
        %v4880 = vpop.f32.mrf.mxu0
        %v4881 = vadd.f32 0.0, %v4880
        %4882 = vmatmul.f32.gmra.mxu0 %v4729
        %v4883 = vpop.f32.mrf.mxu0
        %v4884 = vadd.f32 0.0, %v4883
        %4885 = vmatmul.f32.gmra.mxu0 %v4732
        %v4886 = vpop.f32.mrf.mxu0
        %v4887 = vadd.f32 0.0, %v4886
        %4888 = vmatmul.f32.gmra.mxu0 %v4735
        %v4889 = vpop.f32.mrf.mxu0
        %v4890 = vadd.f32 0.0, %v4889
        %4891 = vmatmul.f32.gmra.mxu0 %v4738
        %v4892 = vpop.f32.mrf.mxu0
        %v4893 = vadd.f32 0.0, %v4892
        %4894 = vmatmul.f32.gmra.mxu0 %v4741
        %v4895 = vpop.f32.mrf.mxu0
        %v4896 = vadd.f32 0.0, %v4895
        %4897 = vmatmul.f32.gmra.mxu0 %v4744
        %v4898 = vpop.f32.mrf.mxu0
        %v4899 = vadd.f32 0.0, %v4898
        %4900 = vmatmul.f32.gmra.mxu0 %v4747
        %v4901 = vpop.f32.mrf.mxu0
        %v4902 = vadd.f32 0.0, %v4901
        %4903 = vmatmul.f32.gmra.mxu0 %v4750
        %v4904 = vpop.f32.mrf.mxu0
        %v4905 = vadd.f32 0.0, %v4904
        %4906 = vmatmul.f32.gmra.mxu0 %v4753
        %v4907 = vpop.f32.mrf.mxu0
        %v4908 = vadd.f32 0.0, %v4907
        %4909 = vmatmul.f32.gmra.mxu0 %v4756
        %v4910 = vpop.f32.mrf.mxu0
        %v4911 = vadd.f32 0.0, %v4910
        %4912 = vmatmul.f32.gmra.mxu0 %v4759
        %v4913 = vpop.f32.mrf.mxu0
        %v4914 = vadd.f32 0.0, %v4913
        %4915 = vmatmul.f32.gmra.mxu0 %v4762
        %v4916 = vpop.f32.mrf.mxu0
        %v4917 = vadd.f32 0.0, %v4916
        %4918 = vmatmul.f32.gmra.mxu0 %v4765
        %v4919 = vpop.f32.mrf.mxu0
        %v4920 = vadd.f32 0.0, %v4919
        %4921 = vmatmul.f32.gmra.mxu0 %v4768
        %v4922 = vpop.f32.mrf.mxu0
        %v4923 = vadd.f32 0.0, %v4922
        %4924 = vmatmul.f32.gmra.mxu0 %v4771
        %v4925 = vpop.f32.mrf.mxu0
        %v4926 = vadd.f32 0.0, %v4925
        %4927 = vmatmul.f32.gmra.mxu0 %v4774
        %v4928 = vpop.f32.mrf.mxu0
        %v4929 = vadd.f32 0.0, %v4928
        %4930 = vmatmul.f32.gmra.mxu0 %v4777
        %v4931 = vpop.f32.mrf.mxu0
        %v4932 = vadd.f32 0.0, %v4931
        %4933 = vmatmul.f32.gmra.mxu0 %v4780
        %v4934 = vpop.f32.mrf.mxu0
        %v4935 = vadd.f32 0.0, %v4934
        %4936 = vmatmul.f32.gmra.mxu0 %v4783
        %v4937 = vpop.f32.mrf.mxu0
        %v4938 = vadd.f32 0.0, %v4937
        %4939 = vmatmul.f32.gmra.mxu0 %v4786
        %v4940 = vpop.f32.mrf.mxu0
        %v4941 = vadd.f32 0.0, %v4940
        %4942 = vmatmul.f32.gmra.mxu0 %v4789
        %v4943 = vpop.f32.mrf.mxu0
        %v4944 = vadd.f32 0.0, %v4943
        %4945 = vmatmul.f32.gmra.mxu0 %v4792
        %v4946 = vpop.f32.mrf.mxu0
        %v4947 = vadd.f32 0.0, %v4946
        %4948 = vmatmul.f32.gmra.mxu0 %v4795
        %v4949 = vpop.f32.mrf.mxu0
        %v4950 = vadd.f32 0.0, %v4949
        %4951 = vmatmul.f32.gmra.mxu0 %v4798
        %v4952 = vpop.f32.mrf.mxu0
        %v4953 = vadd.f32 0.0, %v4952
        %4954 = vmatmul.f32.gmra.mxu0 %v4801
        %v4955 = vpop.f32.mrf.mxu0
        %v4956 = vadd.f32 0.0, %v4955
        %4957 = vmatmul.f32.gmra.mxu0 %v4804
        %v4958 = vpop.f32.mrf.mxu0
        %v4959 = vadd.f32 0.0, %v4958
        %4960 = vmatmul.f32.gmra.mxu0 %v4807
        %v4961 = vpop.f32.mrf.mxu0
        %v4962 = vadd.f32 0.0, %v4961
        %4963 = vmatmul.f32.gmra.mxu0 %v4810
        %v4964 = vpop.f32.mrf.mxu0
        %v4965 = vadd.f32 0.0, %v4964
        %4966 = vmatmul.f32.gmra.mxu0 %v4813
        %v4967 = vpop.f32.mrf.mxu0
        %v4968 = vadd.f32 0.0, %v4967
        %4969 = vmatmul.f32.gmra.mxu0 %v4816
        %v4970 = vpop.f32.mrf.mxu0
        %v4971 = vadd.f32 0.0, %v4970
        %4972 = vmatmul.f32.gmra.mxu0 %v4819
        %v4973 = vpop.f32.mrf.mxu0
        %v4974 = vadd.f32 0.0, %v4973
        %4975 = vmatmul.f32.gmra.mxu0 %v4822
        %v4976 = vpop.f32.mrf.mxu0
        %v4977 = vadd.f32 0.0, %v4976
        %4978 = vmatmul.f32.gmra.mxu0 %v4825
        %v4979 = vpop.f32.mrf.mxu0
        %v4980 = vadd.f32 0.0, %v4979
        %4981 = vmatmul.f32.gmra.mxu0 %v4828
        %v4982 = vpop.f32.mrf.mxu0
        %v4983 = vadd.f32 0.0, %v4982
        %4984 = vmatmul.f32.gmra.mxu0 %v4831
        %v4985 = vpop.f32.mrf.mxu0
        %v4986 = vadd.f32 0.0, %v4985
        %4987 = vmatmul.f32.gmra.mxu0 %v4834
        %v4988 = vpop.f32.mrf.mxu0
        %v4989 = vadd.f32 0.0, %v4988
        %4990 = vmatmul.f32.gmra.mxu0 %v4837
        %v4991 = vpop.f32.mrf.mxu0
        %v4992 = vadd.f32 0.0, %v4991
        %4993 = vdwg.mxu0
        %v4994 = vadd.f32 %v4396, %v4857
        %v4995 = vadd.f32 %v4397, %v4860
        %v4996 = vadd.f32 %v4398, %v4863
        %v4997 = vadd.f32 %v4399, %v4866
        %v4998 = vadd.f32 %v4400, %v4869
        %v4999 = vadd.f32 %v4401, %v4872
        %v5000 = vadd.f32 %v4402, %v4875
        %v5001 = vadd.f32 %v4403, %v4878
        %v5002 = vadd.f32 %v4404, %v4881
        %v5003 = vadd.f32 %v4405, %v4884
        %v5004 = vadd.f32 %v4406, %v4887
        %v5005 = vadd.f32 %v4407, %v4890
        %v5006 = vadd.f32 %v4408, %v4893
        %v5007 = vadd.f32 %v4409, %v4896
        %v5008 = vadd.f32 %v4410, %v4899
        %v5009 = vadd.f32 %v4411, %v4902
        %v5010 = vadd.f32 %v4412, %v4905
        %v5011 = vadd.f32 %v4413, %v4908
        %v5012 = vadd.f32 %v4414, %v4911
        %v5013 = vadd.f32 %v4415, %v4914
        %v5014 = vadd.f32 %v4416, %v4917
        %v5015 = vadd.f32 %v4417, %v4920
        %v5016 = vadd.f32 %v4418, %v4923
        %v5017 = vadd.f32 %v4419, %v4926
        %v5018 = vadd.f32 %v4420, %v4929
        %v5019 = vadd.f32 %v4421, %v4932
        %v5020 = vadd.f32 %v4422, %v4935
        %v5021 = vadd.f32 %v4423, %v4938
        %v5022 = vadd.f32 %v4424, %v4941
        %v5023 = vadd.f32 %v4425, %v4944
        %v5024 = vadd.f32 %v4426, %v4947
        %v5025 = vadd.f32 %v4427, %v4950
        %v5026 = vadd.f32 %v4428, %v4953
        %v5027 = vadd.f32 %v4429, %v4956
        %v5028 = vadd.f32 %v4430, %v4959
        %v5029 = vadd.f32 %v4431, %v4962
        %v5030 = vadd.f32 %v4432, %v4965
        %v5031 = vadd.f32 %v4433, %v4968
        %v5032 = vadd.f32 %v4434, %v4971
        %v5033 = vadd.f32 %v4435, %v4974
        %v5034 = vadd.f32 %v4436, %v4977
        %v5035 = vadd.f32 %v4437, %v4980
        %v5036 = vadd.f32 %v4438, %v4983
        %v5037 = vadd.f32 %v4439, %v4986
        %v5038 = vadd.f32 %v4440, %v4989
        %v5039 = vadd.f32 %v4441, %v4992
        %s5040 = scalar_lea.vmem [#allocation7], 392
        %v5041 = vld [vmem:[%s5040] sm:$0xff]
        %v5042 = vld [vmem:[%s5040 + $0x8] sm:$0xff]
        %v5043 = vld [vmem:[%s5040 + $0x10] sm:$0xff]
        %v5044 = vld [vmem:[%s5040 + $0x18] sm:$0xff]
        %v5045 = vld [vmem:[%s5040 + $0x20] sm:$0xff]
        %v5046 = vld [vmem:[%s5040 + $0x28] sm:$0xff]
        %v5047 = vld [vmem:[%s5040 + $0x30] sm:$0x3]
        %v5049 = vsel %vm861, %v5047, 0
        %5051 = vmatpush.msra.mxu0 0.0
        %5052 = vmatpush.msra.mxu0 0.0
        %5053 = vmatpush.msra.mxu0 0.0
        %5054 = vmatpush.msra.mxu0 0.0
        %5055 = vmatpush.msra.mxu0 0.0
        %5056 = vmatpush.msra.mxu0 0.0
        %5057 = vmatpush.msra.mxu0 0.0
        %5058 = vmatpush.msra.mxu0 0.0
        %5059 = vmatpush.msra.mxu0 0.0
        %5060 = vmatpush.msra.mxu0 %v5049
        %5061 = vmatpush.msra.mxu0 %v5046
        %5062 = vmatpush.msra.mxu0 %v5045
        %5063 = vmatpush.msra.mxu0 %v5044
        %5064 = vmatpush.msra.mxu0 %v5043
        %5065 = vmatpush.msra.mxu0 %v5042
        %5066 = vmatpush.msra.mxu0 %v5041
        %5067 = vmatmul.f32.gmra.mxu0 %v838
        %v5068 = vpop.f32.mrf.mxu0
        %v5069 = vadd.f32 %v834, %v5068
        %5070 = vmatmul.f32.gmra.mxu0 %v841
        %v5071 = vpop.f32.mrf.mxu0
        %v5072 = vadd.f32 %v834, %v5071
        %5073 = vmatmul.f32.gmra.mxu0 %v844
        %v5074 = vpop.f32.mrf.mxu0
        %v5075 = vadd.f32 %v834, %v5074
        %5076 = vmatmul.f32.gmra.mxu0 %v847
        %v5077 = vpop.f32.mrf.mxu0
        %v5078 = vadd.f32 %v834, %v5077
        %5079 = vmatmul.f32.gmra.mxu0 %v850
        %v5080 = vpop.f32.mrf.mxu0
        %v5081 = vadd.f32 %v834, %v5080
        %5082 = vmatmul.f32.gmra.mxu0 %v853
        %v5083 = vpop.f32.mrf.mxu0
        %v5084 = vadd.f32 %v834, %v5083
        %5085 = vmatmul.f32.gmra.mxu0 %v856
        %v5086 = vpop.f32.mrf.mxu0
        %v5087 = vadd.f32 %v834, %v5086
        %5088 = vmatmul.f32.gmra.mxu0 %v859
        %v5089 = vpop.f32.mrf.mxu0
        %v5090 = vadd.f32 %v834, %v5089
        %5091 = vdwg.mxu0
        %v5092 = vsub.f32 0.0, %v5069
        %v5093 = vsub.f32 0.0, %v5072
        %v5094 = vsub.f32 0.0, %v5075
        %v5095 = vsub.f32 0.0, %v5078
        %v5096 = vsub.f32 0.0, %v5081
        %v5097 = vsub.f32 0.0, %v5084
        %v5098 = vsub.f32 0.0, %v5087
        %v5099 = vsub.f32 0.0, %v5090
        %v5100 = vmul.f32 %v5092, 1.442695
        %v5101 = vpow.pop %v5100
        %v5102 = vmul.f32 %v5093, 1.442695
        %v5103 = vpow.pop %v5102
        %v5104 = vmul.f32 %v5094, 1.442695
        %v5105 = vpow.pop %v5104
        %v5106 = vmul.f32 %v5095, 1.442695
        %v5107 = vpow.pop %v5106
        %v5108 = vmul.f32 %v5096, 1.442695
        %v5109 = vpow.pop %v5108
        %v5110 = vmul.f32 %v5097, 1.442695
        %v5111 = vpow.pop %v5110
        %v5112 = vmul.f32 %v5098, 1.442695
        %v5113 = vpow.pop %v5112
        %v5114 = vmul.f32 %v5099, 1.442695
        %v5115 = vpow.pop %v5114
        %v5116 = vadd.f32 %v5101, 1.0
        %v5117 = vadd.f32 %v5103, 1.0
        %v5118 = vadd.f32 %v5105, 1.0
        %v5119 = vadd.f32 %v5107, 1.0
        %v5120 = vadd.f32 %v5109, 1.0
        %v5121 = vadd.f32 %v5111, 1.0
        %v5122 = vadd.f32 %v5113, 1.0
        %v5123 = vadd.f32 %v5115, 1.0
        %v5124 = vrcp.pop %v5116
        %v5125 = vmul.f32 %v5116, %v5124
        %v5126 = vsub.f32 1.0, %v5125
        %v5127 = vmul.f32 %v5124, %v5126
        %v5128 = vadd.f32 %v5124, %v5127
        %vm5129 = vweird.f32 %v5116
        %vm5130 = vweird.f32 %v5124
        %vm5131 = vmor %vm5129, %vm5130
        %v5132 = vsel %vm5131, %v5124, %v5128
        %v5133 = vand.u32 2147483647, %v5116
        %vm5134 = vcmp.eq.f32.partialorder %v5133, 8.507059e+37
        %v5135 = vand.u32 %v5116, 2147483648
        %v5136 = vor.u32 1.1754944e-38, %v5135
        %v5137 = vsel %vm5134, %v5136, %v5132
        %v5138 = vmul.f32 1.0, %v5137
        %v5139 = vrcp.pop %v5117
        %v5140 = vmul.f32 %v5117, %v5139
        %v5141 = vsub.f32 1.0, %v5140
        %v5142 = vmul.f32 %v5139, %v5141
        %v5143 = vadd.f32 %v5139, %v5142
        %vm5144 = vweird.f32 %v5117
        %vm5145 = vweird.f32 %v5139
        %vm5146 = vmor %vm5144, %vm5145
        %v5147 = vsel %vm5146, %v5139, %v5143
        %v5148 = vand.u32 2147483647, %v5117
        %vm5149 = vcmp.eq.f32.partialorder %v5148, 8.507059e+37
        %v5150 = vand.u32 %v5117, 2147483648
        %v5151 = vor.u32 1.1754944e-38, %v5150
        %v5152 = vsel %vm5149, %v5151, %v5147
        %v5153 = vmul.f32 1.0, %v5152
        %v5154 = vrcp.pop %v5118
        %v5155 = vmul.f32 %v5118, %v5154
        %v5156 = vsub.f32 1.0, %v5155
        %v5157 = vmul.f32 %v5154, %v5156
        %v5158 = vadd.f32 %v5154, %v5157
        %vm5159 = vweird.f32 %v5118
        %vm5160 = vweird.f32 %v5154
        %vm5161 = vmor %vm5159, %vm5160
        %v5162 = vsel %vm5161, %v5154, %v5158
        %v5163 = vand.u32 2147483647, %v5118
        %vm5164 = vcmp.eq.f32.partialorder %v5163, 8.507059e+37
        %v5165 = vand.u32 %v5118, 2147483648
        %v5166 = vor.u32 1.1754944e-38, %v5165
        %v5167 = vsel %vm5164, %v5166, %v5162
        %v5168 = vmul.f32 1.0, %v5167
        %v5169 = vrcp.pop %v5119
        %v5170 = vmul.f32 %v5119, %v5169
        %v5171 = vsub.f32 1.0, %v5170
        %v5172 = vmul.f32 %v5169, %v5171
        %v5173 = vadd.f32 %v5169, %v5172
        %vm5174 = vweird.f32 %v5119
        %vm5175 = vweird.f32 %v5169
        %vm5176 = vmor %vm5174, %vm5175
        %v5177 = vsel %vm5176, %v5169, %v5173
        %v5178 = vand.u32 2147483647, %v5119
        %vm5179 = vcmp.eq.f32.partialorder %v5178, 8.507059e+37
        %v5180 = vand.u32 %v5119, 2147483648
        %v5181 = vor.u32 1.1754944e-38, %v5180
        %v5182 = vsel %vm5179, %v5181, %v5177
        %v5183 = vmul.f32 1.0, %v5182
        %v5184 = vrcp.pop %v5120
        %v5185 = vmul.f32 %v5120, %v5184
        %v5186 = vsub.f32 1.0, %v5185
        %v5187 = vmul.f32 %v5184, %v5186
        %v5188 = vadd.f32 %v5184, %v5187
        %vm5189 = vweird.f32 %v5120
        %vm5190 = vweird.f32 %v5184
        %vm5191 = vmor %vm5189, %vm5190
        %v5192 = vsel %vm5191, %v5184, %v5188
        %v5193 = vand.u32 2147483647, %v5120
        %vm5194 = vcmp.eq.f32.partialorder %v5193, 8.507059e+37
        %v5195 = vand.u32 %v5120, 2147483648
        %v5196 = vor.u32 1.1754944e-38, %v5195
        %v5197 = vsel %vm5194, %v5196, %v5192
        %v5198 = vmul.f32 1.0, %v5197
        %v5199 = vrcp.pop %v5121
        %v5200 = vmul.f32 %v5121, %v5199
        %v5201 = vsub.f32 1.0, %v5200
        %v5202 = vmul.f32 %v5199, %v5201
        %v5203 = vadd.f32 %v5199, %v5202
        %vm5204 = vweird.f32 %v5121
        %vm5205 = vweird.f32 %v5199
        %vm5206 = vmor %vm5204, %vm5205
        %v5207 = vsel %vm5206, %v5199, %v5203
        %v5208 = vand.u32 2147483647, %v5121
        %vm5209 = vcmp.eq.f32.partialorder %v5208, 8.507059e+37
        %v5210 = vand.u32 %v5121, 2147483648
        %v5211 = vor.u32 1.1754944e-38, %v5210
        %v5212 = vsel %vm5209, %v5211, %v5207
        %v5213 = vmul.f32 1.0, %v5212
        %v5214 = vrcp.pop %v5122
        %v5215 = vmul.f32 %v5122, %v5214
        %v5216 = vsub.f32 1.0, %v5215
        %v5217 = vmul.f32 %v5214, %v5216
        %v5218 = vadd.f32 %v5214, %v5217
        %vm5219 = vweird.f32 %v5122
        %vm5220 = vweird.f32 %v5214
        %vm5221 = vmor %vm5219, %vm5220
        %v5222 = vsel %vm5221, %v5214, %v5218
        %v5223 = vand.u32 2147483647, %v5122
        %vm5224 = vcmp.eq.f32.partialorder %v5223, 8.507059e+37
        %v5225 = vand.u32 %v5122, 2147483648
        %v5226 = vor.u32 1.1754944e-38, %v5225
        %v5227 = vsel %vm5224, %v5226, %v5222
        %v5228 = vmul.f32 1.0, %v5227
        %v5229 = vrcp.pop %v5123
        %v5230 = vmul.f32 %v5123, %v5229
        %v5231 = vsub.f32 1.0, %v5230
        %v5232 = vmul.f32 %v5229, %v5231
        %v5233 = vadd.f32 %v5229, %v5232
        %vm5234 = vweird.f32 %v5123
        %vm5235 = vweird.f32 %v5229
        %vm5236 = vmor %vm5234, %vm5235
        %v5237 = vsel %vm5236, %v5229, %v5233
        %v5238 = vand.u32 2147483647, %v5123
        %vm5239 = vcmp.eq.f32.partialorder %v5238, 8.507059e+37
        %v5240 = vand.u32 %v5123, 2147483648
        %v5241 = vor.u32 1.1754944e-38, %v5240
        %v5242 = vsel %vm5239, %v5241, %v5237
        %v5243 = vmul.f32 1.0, %v5242
        %v5244 = vmul.f32 %v5069, %v5138
        %v5245 = vmul.f32 %v5072, %v5153
        %v5246 = vmul.f32 %v5075, %v5168
        %v5247 = vmul.f32 %v5078, %v5183
        %v5248 = vmul.f32 %v5081, %v5198
        %v5249 = vmul.f32 %v5084, %v5213
        %v5250 = vmul.f32 %v5087, %v5228
        %v5251 = vmul.f32 %v5090, %v5243
        %s5252 = scalar_lea.vmem %s463, 2576 [#allocation10]
        %v5253 = vld [vmem:[%s5252] sm:$0xff]
        %v5254 = vld [vmem:[%s5252 + $0x8] sm:$0xff]
        %v5255 = vld [vmem:[%s5252 + $0x10] sm:$0xff]
        %v5256 = vld [vmem:[%s5252 + $0x18] sm:$0xff]
        %v5257 = vld [vmem:[%s5252 + $0x20] sm:$0xff]
        %v5258 = vld [vmem:[%s5252 + $0x28] sm:$0xff]
        %v5259 = vld [vmem:[%s5252 + $0x30] sm:$0xff]
        %v5260 = vld [vmem:[%s5252 + $0x38] sm:$0xff]
        %v5261 = vld [vmem:[%s5252 + $0x40] sm:$0xff]
        %v5262 = vld [vmem:[%s5252 + $0x48] sm:$0xff]
        %v5263 = vld [vmem:[%s5252 + $0x50] sm:$0xff]
        %v5264 = vld [vmem:[%s5252 + $0x58] sm:$0xff]
        %v5265 = vld [vmem:[%s5252 + $0x60] sm:$0xff]
        %v5266 = vld [vmem:[%s5252 + $0x68] sm:$0xff]
        %v5267 = vld [vmem:[%s5252 + $0x70] sm:$0xff]
        %v5268 = vld [vmem:[%s5252 + $0x78] sm:$0xff]
        %v5269 = vld [vmem:[%s5252 + $0x80] sm:$0xff]
        %v5270 = vld [vmem:[%s5252 + $0x88] sm:$0xff]
        %v5271 = vld [vmem:[%s5252 + $0x90] sm:$0xff]
        %v5272 = vld [vmem:[%s5252 + $0x98] sm:$0xff]
        %v5273 = vld [vmem:[%s5252 + $0xa0] sm:$0xff]
        %v5274 = vld [vmem:[%s5252 + $0xa8] sm:$0xff]
        %v5275 = vld [vmem:[%s5252 + $0xb0] sm:$0xff]
        %v5276 = vld [vmem:[%s5252 + $0xb8] sm:$0xff]
        %v5277 = vld [vmem:[%s5252 + $0xc0] sm:$0xff]
        %v5278 = vld [vmem:[%s5252 + $0xc8] sm:$0xff]
        %v5279 = vld [vmem:[%s5252 + $0xd0] sm:$0xff]
        %v5280 = vld [vmem:[%s5252 + $0xd8] sm:$0xff]
        %v5281 = vld [vmem:[%s5252 + $0xe0] sm:$0xff]
        %v5282 = vld [vmem:[%s5252 + $0xe8] sm:$0xff]
        %v5283 = vld [vmem:[%s5252 + $0xf0] sm:$0xff]
        %v5284 = vld [vmem:[%s5252 + $0xf8] sm:$0xff]
        %v5285 = vld [vmem:[%s5252 + $0x100] sm:$0xff]
        %v5286 = vld [vmem:[%s5252 + $0x108] sm:$0xff]
        %v5287 = vld [vmem:[%s5252 + $0x110] sm:$0xff]
        %v5288 = vld [vmem:[%s5252 + $0x118] sm:$0xff]
        %v5289 = vld [vmem:[%s5252 + $0x120] sm:$0xff]
        %v5290 = vld [vmem:[%s5252 + $0x128] sm:$0xff]
        %v5291 = vld [vmem:[%s5252 + $0x130] sm:$0xff]
        %v5292 = vld [vmem:[%s5252 + $0x138] sm:$0xff]
        %v5293 = vld [vmem:[%s5252 + $0x140] sm:$0xff]
        %v5294 = vld [vmem:[%s5252 + $0x148] sm:$0xff]
        %v5295 = vld [vmem:[%s5252 + $0x150] sm:$0xff]
        %v5296 = vld [vmem:[%s5252 + $0x158] sm:$0xff]
        %v5297 = vld [vmem:[%s5252 + $0x160] sm:$0xff]
        %v5298 = vld [vmem:[%s5252 + $0x168] sm:$0xff]
        %v5300 = vsel %vm1112, %v5253, 0
        %v5303 = vsel %vm1112, %v5254, 0
        %v5306 = vsel %vm1112, %v5255, 0
        %v5309 = vsel %vm1112, %v5256, 0
        %v5312 = vsel %vm1112, %v5257, 0
        %v5315 = vsel %vm1112, %v5258, 0
        %v5318 = vsel %vm1112, %v5259, 0
        %v5321 = vsel %vm1112, %v5260, 0
        %v5324 = vsel %vm1112, %v5261, 0
        %v5327 = vsel %vm1112, %v5262, 0
        %v5330 = vsel %vm1112, %v5263, 0
        %v5333 = vsel %vm1112, %v5264, 0
        %v5336 = vsel %vm1112, %v5265, 0
        %v5339 = vsel %vm1112, %v5266, 0
        %v5342 = vsel %vm1112, %v5267, 0
        %v5345 = vsel %vm1112, %v5268, 0
        %v5348 = vsel %vm1112, %v5269, 0
        %v5351 = vsel %vm1112, %v5270, 0
        %v5354 = vsel %vm1112, %v5271, 0
        %v5357 = vsel %vm1112, %v5272, 0
        %v5360 = vsel %vm1112, %v5273, 0
        %v5363 = vsel %vm1112, %v5274, 0
        %v5366 = vsel %vm1112, %v5275, 0
        %v5369 = vsel %vm1112, %v5276, 0
        %v5372 = vsel %vm1112, %v5277, 0
        %v5375 = vsel %vm1112, %v5278, 0
        %v5378 = vsel %vm1112, %v5279, 0
        %v5381 = vsel %vm1112, %v5280, 0
        %v5384 = vsel %vm1112, %v5281, 0
        %v5387 = vsel %vm1112, %v5282, 0
        %v5390 = vsel %vm1112, %v5283, 0
        %v5393 = vsel %vm1112, %v5284, 0
        %v5396 = vsel %vm1112, %v5285, 0
        %v5399 = vsel %vm1112, %v5286, 0
        %v5402 = vsel %vm1112, %v5287, 0
        %v5405 = vsel %vm1112, %v5288, 0
        %v5408 = vsel %vm1112, %v5289, 0
        %v5411 = vsel %vm1112, %v5290, 0
        %v5414 = vsel %vm1112, %v5291, 0
        %v5417 = vsel %vm1112, %v5292, 0
        %v5420 = vsel %vm1112, %v5293, 0
        %v5423 = vsel %vm1112, %v5294, 0
        %v5426 = vsel %vm1112, %v5295, 0
        %v5429 = vsel %vm1112, %v5296, 0
        %v5432 = vsel %vm1112, %v5297, 0
        %v5435 = vsel %vm1112, %v5298, 0
        %5437 = vmatpush.msra.mxu0 0.0
        %5438 = vmatpush.msra.mxu0 0.0
        %5439 = vmatpush.msra.mxu0 0.0
        %5440 = vmatpush.msra.mxu0 0.0
        %5441 = vmatpush.msra.mxu0 0.0
        %5442 = vmatpush.msra.mxu0 0.0
        %5443 = vmatpush.msra.mxu0 0.0
        %5444 = vmatpush.msra.mxu0 0.0
        %5445 = vmatpush.msra.mxu0 %v5251
        %5446 = vmatpush.msra.mxu0 %v5250
        %5447 = vmatpush.msra.mxu0 %v5249
        %5448 = vmatpush.msra.mxu0 %v5248
        %5449 = vmatpush.msra.mxu0 %v5247
        %5450 = vmatpush.msra.mxu0 %v5246
        %5451 = vmatpush.msra.mxu0 %v5245
        %5452 = vmatpush.msra.mxu0 %v5244
        %5453 = vmatmul.f32.gmra.mxu0 %v5300
        %v5454 = vpop.f32.mrf.mxu0
        %v5455 = vadd.f32 0.0, %v5454
        %5456 = vmatmul.f32.gmra.mxu0 %v5303
        %v5457 = vpop.f32.mrf.mxu0
        %v5458 = vadd.f32 0.0, %v5457
        %5459 = vmatmul.f32.gmra.mxu0 %v5306
        %v5460 = vpop.f32.mrf.mxu0
        %v5461 = vadd.f32 0.0, %v5460
        %5462 = vmatmul.f32.gmra.mxu0 %v5309
        %v5463 = vpop.f32.mrf.mxu0
        %v5464 = vadd.f32 0.0, %v5463
        %5465 = vmatmul.f32.gmra.mxu0 %v5312
        %v5466 = vpop.f32.mrf.mxu0
        %v5467 = vadd.f32 0.0, %v5466
        %5468 = vmatmul.f32.gmra.mxu0 %v5315
        %v5469 = vpop.f32.mrf.mxu0
        %v5470 = vadd.f32 0.0, %v5469
        %5471 = vmatmul.f32.gmra.mxu0 %v5318
        %v5472 = vpop.f32.mrf.mxu0
        %v5473 = vadd.f32 0.0, %v5472
        %5474 = vmatmul.f32.gmra.mxu0 %v5321
        %v5475 = vpop.f32.mrf.mxu0
        %v5476 = vadd.f32 0.0, %v5475
        %5477 = vmatmul.f32.gmra.mxu0 %v5324
        %v5478 = vpop.f32.mrf.mxu0
        %v5479 = vadd.f32 0.0, %v5478
        %5480 = vmatmul.f32.gmra.mxu0 %v5327
        %v5481 = vpop.f32.mrf.mxu0
        %v5482 = vadd.f32 0.0, %v5481
        %5483 = vmatmul.f32.gmra.mxu0 %v5330
        %v5484 = vpop.f32.mrf.mxu0
        %v5485 = vadd.f32 0.0, %v5484
        %5486 = vmatmul.f32.gmra.mxu0 %v5333
        %v5487 = vpop.f32.mrf.mxu0
        %v5488 = vadd.f32 0.0, %v5487
        %5489 = vmatmul.f32.gmra.mxu0 %v5336
        %v5490 = vpop.f32.mrf.mxu0
        %v5491 = vadd.f32 0.0, %v5490
        %5492 = vmatmul.f32.gmra.mxu0 %v5339
        %v5493 = vpop.f32.mrf.mxu0
        %v5494 = vadd.f32 0.0, %v5493
        %5495 = vmatmul.f32.gmra.mxu0 %v5342
        %v5496 = vpop.f32.mrf.mxu0
        %v5497 = vadd.f32 0.0, %v5496
        %5498 = vmatmul.f32.gmra.mxu0 %v5345
        %v5499 = vpop.f32.mrf.mxu0
        %v5500 = vadd.f32 0.0, %v5499
        %5501 = vmatmul.f32.gmra.mxu0 %v5348
        %v5502 = vpop.f32.mrf.mxu0
        %v5503 = vadd.f32 0.0, %v5502
        %5504 = vmatmul.f32.gmra.mxu0 %v5351
        %v5505 = vpop.f32.mrf.mxu0
        %v5506 = vadd.f32 0.0, %v5505
        %5507 = vmatmul.f32.gmra.mxu0 %v5354
        %v5508 = vpop.f32.mrf.mxu0
        %v5509 = vadd.f32 0.0, %v5508
        %5510 = vmatmul.f32.gmra.mxu0 %v5357
        %v5511 = vpop.f32.mrf.mxu0
        %v5512 = vadd.f32 0.0, %v5511
        %5513 = vmatmul.f32.gmra.mxu0 %v5360
        %v5514 = vpop.f32.mrf.mxu0
        %v5515 = vadd.f32 0.0, %v5514
        %5516 = vmatmul.f32.gmra.mxu0 %v5363
        %v5517 = vpop.f32.mrf.mxu0
        %v5518 = vadd.f32 0.0, %v5517
        %5519 = vmatmul.f32.gmra.mxu0 %v5366
        %v5520 = vpop.f32.mrf.mxu0
        %v5521 = vadd.f32 0.0, %v5520
        %5522 = vmatmul.f32.gmra.mxu0 %v5369
        %v5523 = vpop.f32.mrf.mxu0
        %v5524 = vadd.f32 0.0, %v5523
        %5525 = vmatmul.f32.gmra.mxu0 %v5372
        %v5526 = vpop.f32.mrf.mxu0
        %v5527 = vadd.f32 0.0, %v5526
        %5528 = vmatmul.f32.gmra.mxu0 %v5375
        %v5529 = vpop.f32.mrf.mxu0
        %v5530 = vadd.f32 0.0, %v5529
        %5531 = vmatmul.f32.gmra.mxu0 %v5378
        %v5532 = vpop.f32.mrf.mxu0
        %v5533 = vadd.f32 0.0, %v5532
        %5534 = vmatmul.f32.gmra.mxu0 %v5381
        %v5535 = vpop.f32.mrf.mxu0
        %v5536 = vadd.f32 0.0, %v5535
        %5537 = vmatmul.f32.gmra.mxu0 %v5384
        %v5538 = vpop.f32.mrf.mxu0
        %v5539 = vadd.f32 0.0, %v5538
        %5540 = vmatmul.f32.gmra.mxu0 %v5387
        %v5541 = vpop.f32.mrf.mxu0
        %v5542 = vadd.f32 0.0, %v5541
        %5543 = vmatmul.f32.gmra.mxu0 %v5390
        %v5544 = vpop.f32.mrf.mxu0
        %v5545 = vadd.f32 0.0, %v5544
        %5546 = vmatmul.f32.gmra.mxu0 %v5393
        %v5547 = vpop.f32.mrf.mxu0
        %v5548 = vadd.f32 0.0, %v5547
        %5549 = vmatmul.f32.gmra.mxu0 %v5396
        %v5550 = vpop.f32.mrf.mxu0
        %v5551 = vadd.f32 0.0, %v5550
        %5552 = vmatmul.f32.gmra.mxu0 %v5399
        %v5553 = vpop.f32.mrf.mxu0
        %v5554 = vadd.f32 0.0, %v5553
        %5555 = vmatmul.f32.gmra.mxu0 %v5402
        %v5556 = vpop.f32.mrf.mxu0
        %v5557 = vadd.f32 0.0, %v5556
        %5558 = vmatmul.f32.gmra.mxu0 %v5405
        %v5559 = vpop.f32.mrf.mxu0
        %v5560 = vadd.f32 0.0, %v5559
        %5561 = vmatmul.f32.gmra.mxu0 %v5408
        %v5562 = vpop.f32.mrf.mxu0
        %v5563 = vadd.f32 0.0, %v5562
        %5564 = vmatmul.f32.gmra.mxu0 %v5411
        %v5565 = vpop.f32.mrf.mxu0
        %v5566 = vadd.f32 0.0, %v5565
        %5567 = vmatmul.f32.gmra.mxu0 %v5414
        %v5568 = vpop.f32.mrf.mxu0
        %v5569 = vadd.f32 0.0, %v5568
        %5570 = vmatmul.f32.gmra.mxu0 %v5417
        %v5571 = vpop.f32.mrf.mxu0
        %v5572 = vadd.f32 0.0, %v5571
        %5573 = vmatmul.f32.gmra.mxu0 %v5420
        %v5574 = vpop.f32.mrf.mxu0
        %v5575 = vadd.f32 0.0, %v5574
        %5576 = vmatmul.f32.gmra.mxu0 %v5423
        %v5577 = vpop.f32.mrf.mxu0
        %v5578 = vadd.f32 0.0, %v5577
        %5579 = vmatmul.f32.gmra.mxu0 %v5426
        %v5580 = vpop.f32.mrf.mxu0
        %v5581 = vadd.f32 0.0, %v5580
        %5582 = vmatmul.f32.gmra.mxu0 %v5429
        %v5583 = vpop.f32.mrf.mxu0
        %v5584 = vadd.f32 0.0, %v5583
        %5585 = vmatmul.f32.gmra.mxu0 %v5432
        %v5586 = vpop.f32.mrf.mxu0
        %v5587 = vadd.f32 0.0, %v5586
        %5588 = vmatmul.f32.gmra.mxu0 %v5435
        %v5589 = vpop.f32.mrf.mxu0
        %v5590 = vadd.f32 0.0, %v5589
        %5591 = vdwg.mxu0
        %v5592 = vadd.f32 %v4994, %v5455
        %v5593 = vadd.f32 %v4995, %v5458
        %v5594 = vadd.f32 %v4996, %v5461
        %v5595 = vadd.f32 %v4997, %v5464
        %v5596 = vadd.f32 %v4998, %v5467
        %v5597 = vadd.f32 %v4999, %v5470
        %v5598 = vadd.f32 %v5000, %v5473
        %v5599 = vadd.f32 %v5001, %v5476
        %v5600 = vadd.f32 %v5002, %v5479
        %v5601 = vadd.f32 %v5003, %v5482
        %v5602 = vadd.f32 %v5004, %v5485
        %v5603 = vadd.f32 %v5005, %v5488
        %v5604 = vadd.f32 %v5006, %v5491
        %v5605 = vadd.f32 %v5007, %v5494
        %v5606 = vadd.f32 %v5008, %v5497
        %v5607 = vadd.f32 %v5009, %v5500
        %v5608 = vadd.f32 %v5010, %v5503
        %v5609 = vadd.f32 %v5011, %v5506
        %v5610 = vadd.f32 %v5012, %v5509
        %v5611 = vadd.f32 %v5013, %v5512
        %v5612 = vadd.f32 %v5014, %v5515
        %v5613 = vadd.f32 %v5015, %v5518
        %v5614 = vadd.f32 %v5016, %v5521
        %v5615 = vadd.f32 %v5017, %v5524
        %v5616 = vadd.f32 %v5018, %v5527
        %v5617 = vadd.f32 %v5019, %v5530
        %v5618 = vadd.f32 %v5020, %v5533
        %v5619 = vadd.f32 %v5021, %v5536
        %v5620 = vadd.f32 %v5022, %v5539
        %v5621 = vadd.f32 %v5023, %v5542
        %v5622 = vadd.f32 %v5024, %v5545
        %v5623 = vadd.f32 %v5025, %v5548
        %v5624 = vadd.f32 %v5026, %v5551
        %v5625 = vadd.f32 %v5027, %v5554
        %v5626 = vadd.f32 %v5028, %v5557
        %v5627 = vadd.f32 %v5029, %v5560
        %v5628 = vadd.f32 %v5030, %v5563
        %v5629 = vadd.f32 %v5031, %v5566
        %v5630 = vadd.f32 %v5032, %v5569
        %v5631 = vadd.f32 %v5033, %v5572
        %v5632 = vadd.f32 %v5034, %v5575
        %v5633 = vadd.f32 %v5035, %v5578
        %v5634 = vadd.f32 %v5036, %v5581
        %v5635 = vadd.f32 %v5037, %v5584
        %v5636 = vadd.f32 %v5038, %v5587
        %v5637 = vadd.f32 %v5039, %v5590
        %v5638 = vld [vmem:[#allocation13] sm:$0xff]
        %v5639 = vld [vmem:[#allocation13 + $0x8] sm:$0xff]
        %v5640 = vld [vmem:[#allocation13 + $0x10] sm:$0xff]
        %v5641 = vld [vmem:[#allocation13 + $0x18] sm:$0x3]
        %v5642 = vld [vmem:[#allocation13 + $0x20] sm:$0x3]
        %v5643 = vld [vmem:[#allocation13 + $0x28] sm:$0x3]
        %v5644 = vld [vmem:[#allocation15] sm:$0x7]
        %v5646 = vperm.slane %v5644, 0
        %v5647 = vperm.slane %v5644, 1
        %v5648 = vperm.slane %v5644, 2
        %vm5652 = vcmask 80896
        %v5654 = vsel %vm5652, %v5592, 0
        %v5657 = vsel %vm5652, %v5593, 0
        %v5660 = vsel %vm5652, %v5594, 0
        %v5663 = vsel %vm5652, %v5595, 0
        %v5666 = vsel %vm5652, %v5596, 0
        %v5669 = vsel %vm5652, %v5597, 0
        %v5672 = vsel %vm5652, %v5598, 0
        %v5675 = vsel %vm5652, %v5599, 0
        %v5678 = vsel %vm5652, %v5600, 0
        %v5681 = vsel %vm5652, %v5601, 0
        %v5684 = vsel %vm5652, %v5602, 0
        %v5687 = vsel %vm5652, %v5603, 0
        %v5690 = vsel %vm5652, %v5604, 0
        %v5693 = vsel %vm5652, %v5605, 0
        %v5696 = vsel %vm5652, %v5606, 0
        %v5699 = vsel %vm5652, %v5607, 0
        %v5702 = vsel %vm5652, %v5608, 0
        %v5705 = vsel %vm5652, %v5609, 0
        %v5708 = vsel %vm5652, %v5610, 0
        %v5711 = vsel %vm5652, %v5611, 0
        %v5714 = vsel %vm5652, %v5612, 0
        %v5717 = vsel %vm5652, %v5613, 0
        %v5720 = vsel %vm5652, %v5614, 0
        %v5723 = vsel %vm5652, %v5615, 0
        %v5726 = vsel %vm5652, %v5616, 0
        %v5729 = vsel %vm5652, %v5617, 0
        %v5732 = vsel %vm5652, %v5618, 0
        %v5735 = vsel %vm5652, %v5619, 0
        %v5738 = vsel %vm5652, %v5620, 0
        %v5741 = vsel %vm5652, %v5621, 0
        %v5744 = vsel %vm5652, %v5622, 0
        %v5747 = vsel %vm5652, %v5623, 0
        %v5750 = vsel %vm5652, %v5624, 0
        %v5753 = vsel %vm5652, %v5625, 0
        %v5756 = vsel %vm5652, %v5626, 0
        %v5759 = vsel %vm5652, %v5627, 0
        %v5762 = vsel %vm5652, %v5628, 0
        %v5765 = vsel %vm5652, %v5629, 0
        %v5768 = vsel %vm5652, %v5630, 0
        %v5771 = vsel %vm5652, %v5631, 0
        %v5774 = vsel %vm5652, %v5632, 0
        %v5777 = vsel %vm5652, %v5633, 0
        %v5780 = vsel %vm5652, %v5634, 0
        %v5783 = vsel %vm5652, %v5635, 0
        %v5786 = vsel %vm5652, %v5636, 0
        %v5789 = vsel %vm5652, %v5637, 0
        %v5792 = vsel %vm861, %v5641, 0
        %v5795 = vsel %vm861, %v5642, 0
        %v5798 = vsel %vm861, %v5643, 0
        %5800 = vmatpush.msra.mxu0 0.0
        %5801 = vmatpush.msra.mxu0 0.0
        %5802 = vmatpush.msra.mxu0 0.0
        %5803 = vmatpush.msra.mxu0 0.0
        %5804 = vmatpush.msra.mxu0 0.0
        %5805 = vmatpush.msra.mxu0 0.0
        %5806 = vmatpush.msra.mxu0 0.0
        %5807 = vmatpush.msra.mxu0 0.0
        %5808 = vmatpush.msra.mxu0 0.0
        %5809 = vmatpush.msra.mxu0 0.0
        %5810 = vmatpush.msra.mxu0 0.0
        %5811 = vmatpush.msra.mxu0 0.0
        %5812 = vmatpush.msra.mxu0 0.0
        %5813 = vmatpush.msra.mxu0 0.0
        %5814 = vmatpush.msra.mxu0 %v5792
        %5815 = vmatpush.msra.mxu0 %v5638
        %5816 = vmatmul.f32.gmra.mxu0 %v5654
        %v5817 = vpop.f32.mrf.mxu0
        %v5818 = vadd.f32 %v5646, %v5817
        %5819 = vmatmul.f32.gmra.mxu0 %v5657
        %v5820 = vpop.f32.mrf.mxu0
        %v5821 = vadd.f32 %v5646, %v5820
        %5822 = vmatmul.f32.gmra.mxu0 %v5660
        %v5823 = vpop.f32.mrf.mxu0
        %v5824 = vadd.f32 %v5646, %v5823
        %5825 = vmatmul.f32.gmra.mxu0 %v5663
        %v5826 = vpop.f32.mrf.mxu0
        %v5827 = vadd.f32 %v5646, %v5826
        %5828 = vmatmul.f32.gmra.mxu0 %v5666
        %v5829 = vpop.f32.mrf.mxu0
        %v5830 = vadd.f32 %v5646, %v5829
        %5831 = vmatmul.f32.gmra.mxu0 %v5669
        %v5832 = vpop.f32.mrf.mxu0
        %v5833 = vadd.f32 %v5646, %v5832
        %5834 = vmatmul.f32.gmra.mxu0 %v5672
        %v5835 = vpop.f32.mrf.mxu0
        %v5836 = vadd.f32 %v5646, %v5835
        %5837 = vmatmul.f32.gmra.mxu0 %v5675
        %v5838 = vpop.f32.mrf.mxu0
        %v5839 = vadd.f32 %v5646, %v5838
        %5840 = vmatmul.f32.gmra.mxu0 %v5678
        %v5841 = vpop.f32.mrf.mxu0
        %v5842 = vadd.f32 %v5646, %v5841
        %5843 = vmatmul.f32.gmra.mxu0 %v5681
        %v5844 = vpop.f32.mrf.mxu0
        %v5845 = vadd.f32 %v5646, %v5844
        %5846 = vmatmul.f32.gmra.mxu0 %v5684
        %v5847 = vpop.f32.mrf.mxu0
        %v5848 = vadd.f32 %v5646, %v5847
        %5849 = vmatmul.f32.gmra.mxu0 %v5687
        %v5850 = vpop.f32.mrf.mxu0
        %v5851 = vadd.f32 %v5646, %v5850
        %5852 = vmatmul.f32.gmra.mxu0 %v5690
        %v5853 = vpop.f32.mrf.mxu0
        %v5854 = vadd.f32 %v5646, %v5853
        %5855 = vmatmul.f32.gmra.mxu0 %v5693
        %v5856 = vpop.f32.mrf.mxu0
        %v5857 = vadd.f32 %v5646, %v5856
        %5858 = vmatmul.f32.gmra.mxu0 %v5696
        %v5859 = vpop.f32.mrf.mxu0
        %v5860 = vadd.f32 %v5646, %v5859
        %5861 = vmatmul.f32.gmra.mxu0 %v5699
        %v5862 = vpop.f32.mrf.mxu0
        %v5863 = vadd.f32 %v5646, %v5862
        %5864 = vmatmul.f32.gmra.mxu0 %v5702
        %v5865 = vpop.f32.mrf.mxu0
        %v5866 = vadd.f32 %v5646, %v5865
        %5867 = vmatmul.f32.gmra.mxu0 %v5705
        %v5868 = vpop.f32.mrf.mxu0
        %v5869 = vadd.f32 %v5646, %v5868
        %5870 = vmatmul.f32.gmra.mxu0 %v5708
        %v5871 = vpop.f32.mrf.mxu0
        %v5872 = vadd.f32 %v5646, %v5871
        %5873 = vmatmul.f32.gmra.mxu0 %v5711
        %v5874 = vpop.f32.mrf.mxu0
        %v5875 = vadd.f32 %v5646, %v5874
        %5876 = vmatmul.f32.gmra.mxu0 %v5714
        %v5877 = vpop.f32.mrf.mxu0
        %v5878 = vadd.f32 %v5646, %v5877
        %5879 = vmatmul.f32.gmra.mxu0 %v5717
        %v5880 = vpop.f32.mrf.mxu0
        %v5881 = vadd.f32 %v5646, %v5880
        %5882 = vmatmul.f32.gmra.mxu0 %v5720
        %v5883 = vpop.f32.mrf.mxu0
        %v5884 = vadd.f32 %v5646, %v5883
        %5885 = vmatmul.f32.gmra.mxu0 %v5723
        %v5886 = vpop.f32.mrf.mxu0
        %v5887 = vadd.f32 %v5646, %v5886
        %5888 = vmatmul.f32.gmra.mxu0 %v5726
        %v5889 = vpop.f32.mrf.mxu0
        %v5890 = vadd.f32 %v5646, %v5889
        %5891 = vmatmul.f32.gmra.mxu0 %v5729
        %v5892 = vpop.f32.mrf.mxu0
        %v5893 = vadd.f32 %v5646, %v5892
        %5894 = vmatmul.f32.gmra.mxu0 %v5732
        %v5895 = vpop.f32.mrf.mxu0
        %v5896 = vadd.f32 %v5646, %v5895
        %5897 = vmatmul.f32.gmra.mxu0 %v5735
        %v5898 = vpop.f32.mrf.mxu0
        %v5899 = vadd.f32 %v5646, %v5898
        %5900 = vmatmul.f32.gmra.mxu0 %v5738
        %v5901 = vpop.f32.mrf.mxu0
        %v5902 = vadd.f32 %v5646, %v5901
        %5903 = vmatmul.f32.gmra.mxu0 %v5741
        %v5904 = vpop.f32.mrf.mxu0
        %v5905 = vadd.f32 %v5646, %v5904
        %5906 = vmatmul.f32.gmra.mxu0 %v5744
        %v5907 = vpop.f32.mrf.mxu0
        %v5908 = vadd.f32 %v5646, %v5907
        %5909 = vmatmul.f32.gmra.mxu0 %v5747
        %v5910 = vpop.f32.mrf.mxu0
        %v5911 = vadd.f32 %v5646, %v5910
        %5912 = vmatmul.f32.gmra.mxu0 %v5750
        %v5913 = vpop.f32.mrf.mxu0
        %v5914 = vadd.f32 %v5646, %v5913
        %5915 = vmatmul.f32.gmra.mxu0 %v5753
        %v5916 = vpop.f32.mrf.mxu0
        %v5917 = vadd.f32 %v5646, %v5916
        %5918 = vmatmul.f32.gmra.mxu0 %v5756
        %v5919 = vpop.f32.mrf.mxu0
        %v5920 = vadd.f32 %v5646, %v5919
        %5921 = vmatmul.f32.gmra.mxu0 %v5759
        %v5922 = vpop.f32.mrf.mxu0
        %v5923 = vadd.f32 %v5646, %v5922
        %5924 = vmatmul.f32.gmra.mxu0 %v5762
        %v5925 = vpop.f32.mrf.mxu0
        %v5926 = vadd.f32 %v5646, %v5925
        %5927 = vmatmul.f32.gmra.mxu0 %v5765
        %v5928 = vpop.f32.mrf.mxu0
        %v5929 = vadd.f32 %v5646, %v5928
        %5930 = vmatmul.f32.gmra.mxu0 %v5768
        %v5931 = vpop.f32.mrf.mxu0
        %v5932 = vadd.f32 %v5646, %v5931
        %5933 = vmatmul.f32.gmra.mxu0 %v5771
        %v5934 = vpop.f32.mrf.mxu0
        %v5935 = vadd.f32 %v5646, %v5934
        %5936 = vmatmul.f32.gmra.mxu0 %v5774
        %v5937 = vpop.f32.mrf.mxu0
        %v5938 = vadd.f32 %v5646, %v5937
        %5939 = vmatmul.f32.gmra.mxu0 %v5777
        %v5940 = vpop.f32.mrf.mxu0
        %v5941 = vadd.f32 %v5646, %v5940
        %5942 = vmatmul.f32.gmra.mxu0 %v5780
        %v5943 = vpop.f32.mrf.mxu0
        %v5944 = vadd.f32 %v5646, %v5943
        %5945 = vmatmul.f32.gmra.mxu0 %v5783
        %v5946 = vpop.f32.mrf.mxu0
        %v5947 = vadd.f32 %v5646, %v5946
        %5948 = vmatmul.f32.gmra.mxu0 %v5786
        %v5949 = vpop.f32.mrf.mxu0
        %v5950 = vadd.f32 %v5646, %v5949
        %5951 = vmatmul.f32.gmra.mxu0 %v5789
        %v5952 = vpop.f32.mrf.mxu0
        %v5953 = vadd.f32 %v5646, %v5952
        %5954 = vdwg.mxu0
        %5955 = vmatpush.msra.mxu0 0.0
        %5956 = vmatpush.msra.mxu0 0.0
        %5957 = vmatpush.msra.mxu0 0.0
        %5958 = vmatpush.msra.mxu0 0.0
        %5959 = vmatpush.msra.mxu0 0.0
        %5960 = vmatpush.msra.mxu0 0.0
        %5961 = vmatpush.msra.mxu0 0.0
        %5962 = vmatpush.msra.mxu0 0.0
        %5963 = vmatpush.msra.mxu0 0.0
        %5964 = vmatpush.msra.mxu0 0.0
        %5965 = vmatpush.msra.mxu0 0.0
        %5966 = vmatpush.msra.mxu0 0.0
        %5967 = vmatpush.msra.mxu0 0.0
        %5968 = vmatpush.msra.mxu0 0.0
        %5969 = vmatpush.msra.mxu0 %v5795
        %5970 = vmatpush.msra.mxu0 %v5639
        %5971 = vmatmul.f32.gmra.mxu0 %v5654
        %v5972 = vpop.f32.mrf.mxu0
        %v5973 = vadd.f32 %v5647, %v5972
        %5974 = vmatmul.f32.gmra.mxu0 %v5657
        %v5975 = vpop.f32.mrf.mxu0
        %v5976 = vadd.f32 %v5647, %v5975
        %5977 = vmatmul.f32.gmra.mxu0 %v5660
        %v5978 = vpop.f32.mrf.mxu0
        %v5979 = vadd.f32 %v5647, %v5978
        %5980 = vmatmul.f32.gmra.mxu0 %v5663
        %v5981 = vpop.f32.mrf.mxu0
        %v5982 = vadd.f32 %v5647, %v5981
        %5983 = vmatmul.f32.gmra.mxu0 %v5666
        %v5984 = vpop.f32.mrf.mxu0
        %v5985 = vadd.f32 %v5647, %v5984
        %5986 = vmatmul.f32.gmra.mxu0 %v5669
        %v5987 = vpop.f32.mrf.mxu0
        %v5988 = vadd.f32 %v5647, %v5987
        %5989 = vmatmul.f32.gmra.mxu0 %v5672
        %v5990 = vpop.f32.mrf.mxu0
        %v5991 = vadd.f32 %v5647, %v5990
        %5992 = vmatmul.f32.gmra.mxu0 %v5675
        %v5993 = vpop.f32.mrf.mxu0
        %v5994 = vadd.f32 %v5647, %v5993
        %5995 = vmatmul.f32.gmra.mxu0 %v5678
        %v5996 = vpop.f32.mrf.mxu0
        %v5997 = vadd.f32 %v5647, %v5996
        %5998 = vmatmul.f32.gmra.mxu0 %v5681
        %v5999 = vpop.f32.mrf.mxu0
        %v6000 = vadd.f32 %v5647, %v5999
        %6001 = vmatmul.f32.gmra.mxu0 %v5684
        %v6002 = vpop.f32.mrf.mxu0
        %v6003 = vadd.f32 %v5647, %v6002
        %6004 = vmatmul.f32.gmra.mxu0 %v5687
        %v6005 = vpop.f32.mrf.mxu0
        %v6006 = vadd.f32 %v5647, %v6005
        %6007 = vmatmul.f32.gmra.mxu0 %v5690
        %v6008 = vpop.f32.mrf.mxu0
        %v6009 = vadd.f32 %v5647, %v6008
        %6010 = vmatmul.f32.gmra.mxu0 %v5693
        %v6011 = vpop.f32.mrf.mxu0
        %v6012 = vadd.f32 %v5647, %v6011
        %6013 = vmatmul.f32.gmra.mxu0 %v5696
        %v6014 = vpop.f32.mrf.mxu0
        %v6015 = vadd.f32 %v5647, %v6014
        %6016 = vmatmul.f32.gmra.mxu0 %v5699
        %v6017 = vpop.f32.mrf.mxu0
        %v6018 = vadd.f32 %v5647, %v6017
        %6019 = vmatmul.f32.gmra.mxu0 %v5702
        %v6020 = vpop.f32.mrf.mxu0
        %v6021 = vadd.f32 %v5647, %v6020
        %6022 = vmatmul.f32.gmra.mxu0 %v5705
        %v6023 = vpop.f32.mrf.mxu0
        %v6024 = vadd.f32 %v5647, %v6023
        %6025 = vmatmul.f32.gmra.mxu0 %v5708
        %v6026 = vpop.f32.mrf.mxu0
        %v6027 = vadd.f32 %v5647, %v6026
        %6028 = vmatmul.f32.gmra.mxu0 %v5711
        %v6029 = vpop.f32.mrf.mxu0
        %v6030 = vadd.f32 %v5647, %v6029
        %6031 = vmatmul.f32.gmra.mxu0 %v5714
        %v6032 = vpop.f32.mrf.mxu0
        %v6033 = vadd.f32 %v5647, %v6032
        %6034 = vmatmul.f32.gmra.mxu0 %v5717
        %v6035 = vpop.f32.mrf.mxu0
        %v6036 = vadd.f32 %v5647, %v6035
        %6037 = vmatmul.f32.gmra.mxu0 %v5720
        %v6038 = vpop.f32.mrf.mxu0
        %v6039 = vadd.f32 %v5647, %v6038
        %6040 = vmatmul.f32.gmra.mxu0 %v5723
        %v6041 = vpop.f32.mrf.mxu0
        %v6042 = vadd.f32 %v5647, %v6041
        %6043 = vmatmul.f32.gmra.mxu0 %v5726
        %v6044 = vpop.f32.mrf.mxu0
        %v6045 = vadd.f32 %v5647, %v6044
        %6046 = vmatmul.f32.gmra.mxu0 %v5729
        %v6047 = vpop.f32.mrf.mxu0
        %v6048 = vadd.f32 %v5647, %v6047
        %6049 = vmatmul.f32.gmra.mxu0 %v5732
        %v6050 = vpop.f32.mrf.mxu0
        %v6051 = vadd.f32 %v5647, %v6050
        %6052 = vmatmul.f32.gmra.mxu0 %v5735
        %v6053 = vpop.f32.mrf.mxu0
        %v6054 = vadd.f32 %v5647, %v6053
        %6055 = vmatmul.f32.gmra.mxu0 %v5738
        %v6056 = vpop.f32.mrf.mxu0
        %v6057 = vadd.f32 %v5647, %v6056
        %6058 = vmatmul.f32.gmra.mxu0 %v5741
        %v6059 = vpop.f32.mrf.mxu0
        %v6060 = vadd.f32 %v5647, %v6059
        %6061 = vmatmul.f32.gmra.mxu0 %v5744
        %v6062 = vpop.f32.mrf.mxu0
        %v6063 = vadd.f32 %v5647, %v6062
        %6064 = vmatmul.f32.gmra.mxu0 %v5747
        %v6065 = vpop.f32.mrf.mxu0
        %v6066 = vadd.f32 %v5647, %v6065
        %6067 = vmatmul.f32.gmra.mxu0 %v5750
        %v6068 = vpop.f32.mrf.mxu0
        %v6069 = vadd.f32 %v5647, %v6068
        %6070 = vmatmul.f32.gmra.mxu0 %v5753
        %v6071 = vpop.f32.mrf.mxu0
        %v6072 = vadd.f32 %v5647, %v6071
        %6073 = vmatmul.f32.gmra.mxu0 %v5756
        %v6074 = vpop.f32.mrf.mxu0
        %v6075 = vadd.f32 %v5647, %v6074
        %6076 = vmatmul.f32.gmra.mxu0 %v5759
        %v6077 = vpop.f32.mrf.mxu0
        %v6078 = vadd.f32 %v5647, %v6077
        %6079 = vmatmul.f32.gmra.mxu0 %v5762
        %v6080 = vpop.f32.mrf.mxu0
        %v6081 = vadd.f32 %v5647, %v6080
        %6082 = vmatmul.f32.gmra.mxu0 %v5765
        %v6083 = vpop.f32.mrf.mxu0
        %v6084 = vadd.f32 %v5647, %v6083
        %6085 = vmatmul.f32.gmra.mxu0 %v5768
        %v6086 = vpop.f32.mrf.mxu0
        %v6087 = vadd.f32 %v5647, %v6086
        %6088 = vmatmul.f32.gmra.mxu0 %v5771
        %v6089 = vpop.f32.mrf.mxu0
        %v6090 = vadd.f32 %v5647, %v6089
        %6091 = vmatmul.f32.gmra.mxu0 %v5774
        %v6092 = vpop.f32.mrf.mxu0
        %v6093 = vadd.f32 %v5647, %v6092
        %6094 = vmatmul.f32.gmra.mxu0 %v5777
        %v6095 = vpop.f32.mrf.mxu0
        %v6096 = vadd.f32 %v5647, %v6095
        %6097 = vmatmul.f32.gmra.mxu0 %v5780
        %v6098 = vpop.f32.mrf.mxu0
        %v6099 = vadd.f32 %v5647, %v6098
        %6100 = vmatmul.f32.gmra.mxu0 %v5783
        %v6101 = vpop.f32.mrf.mxu0
        %v6102 = vadd.f32 %v5647, %v6101
        %6103 = vmatmul.f32.gmra.mxu0 %v5786
        %v6104 = vpop.f32.mrf.mxu0
        %v6105 = vadd.f32 %v5647, %v6104
        %6106 = vmatmul.f32.gmra.mxu0 %v5789
        %v6107 = vpop.f32.mrf.mxu0
        %v6108 = vadd.f32 %v5647, %v6107
        %6109 = vdwg.mxu0
        %6110 = vmatpush.msra.mxu0 0.0
        %6111 = vmatpush.msra.mxu0 0.0
        %6112 = vmatpush.msra.mxu0 0.0
        %6113 = vmatpush.msra.mxu0 0.0
        %6114 = vmatpush.msra.mxu0 0.0
        %6115 = vmatpush.msra.mxu0 0.0
        %6116 = vmatpush.msra.mxu0 0.0
        %6117 = vmatpush.msra.mxu0 0.0
        %6118 = vmatpush.msra.mxu0 0.0
        %6119 = vmatpush.msra.mxu0 0.0
        %6120 = vmatpush.msra.mxu0 0.0
        %6121 = vmatpush.msra.mxu0 0.0
        %6122 = vmatpush.msra.mxu0 0.0
        %6123 = vmatpush.msra.mxu0 0.0
        %6124 = vmatpush.msra.mxu0 %v5798
        %6125 = vmatpush.msra.mxu0 %v5640
        %6126 = vmatmul.f32.gmra.mxu0 %v5654
        %v6127 = vpop.f32.mrf.mxu0
        %v6128 = vadd.f32 %v5648, %v6127
        %6129 = vmatmul.f32.gmra.mxu0 %v5657
        %v6130 = vpop.f32.mrf.mxu0
        %v6131 = vadd.f32 %v5648, %v6130
        %6132 = vmatmul.f32.gmra.mxu0 %v5660
        %v6133 = vpop.f32.mrf.mxu0
        %v6134 = vadd.f32 %v5648, %v6133
        %6135 = vmatmul.f32.gmra.mxu0 %v5663
        %v6136 = vpop.f32.mrf.mxu0
        %v6137 = vadd.f32 %v5648, %v6136
        %6138 = vmatmul.f32.gmra.mxu0 %v5666
        %v6139 = vpop.f32.mrf.mxu0
        %v6140 = vadd.f32 %v5648, %v6139
        %6141 = vmatmul.f32.gmra.mxu0 %v5669
        %v6142 = vpop.f32.mrf.mxu0
        %v6143 = vadd.f32 %v5648, %v6142
        %6144 = vmatmul.f32.gmra.mxu0 %v5672
        %v6145 = vpop.f32.mrf.mxu0
        %v6146 = vadd.f32 %v5648, %v6145
        %6147 = vmatmul.f32.gmra.mxu0 %v5675
        %v6148 = vpop.f32.mrf.mxu0
        %v6149 = vadd.f32 %v5648, %v6148
        %6150 = vmatmul.f32.gmra.mxu0 %v5678
        %v6151 = vpop.f32.mrf.mxu0
        %v6152 = vadd.f32 %v5648, %v6151
        %6153 = vmatmul.f32.gmra.mxu0 %v5681
        %v6154 = vpop.f32.mrf.mxu0
        %v6155 = vadd.f32 %v5648, %v6154
        %6156 = vmatmul.f32.gmra.mxu0 %v5684
        %v6157 = vpop.f32.mrf.mxu0
        %v6158 = vadd.f32 %v5648, %v6157
        %6159 = vmatmul.f32.gmra.mxu0 %v5687
        %v6160 = vpop.f32.mrf.mxu0
        %v6161 = vadd.f32 %v5648, %v6160
        %6162 = vmatmul.f32.gmra.mxu0 %v5690
        %v6163 = vpop.f32.mrf.mxu0
        %v6164 = vadd.f32 %v5648, %v6163
        %6165 = vmatmul.f32.gmra.mxu0 %v5693
        %v6166 = vpop.f32.mrf.mxu0
        %v6167 = vadd.f32 %v5648, %v6166
        %6168 = vmatmul.f32.gmra.mxu0 %v5696
        %v6169 = vpop.f32.mrf.mxu0
        %v6170 = vadd.f32 %v5648, %v6169
        %6171 = vmatmul.f32.gmra.mxu0 %v5699
        %v6172 = vpop.f32.mrf.mxu0
        %v6173 = vadd.f32 %v5648, %v6172
        %6174 = vmatmul.f32.gmra.mxu0 %v5702
        %v6175 = vpop.f32.mrf.mxu0
        %v6176 = vadd.f32 %v5648, %v6175
        %6177 = vmatmul.f32.gmra.mxu0 %v5705
        %v6178 = vpop.f32.mrf.mxu0
        %v6179 = vadd.f32 %v5648, %v6178
        %6180 = vmatmul.f32.gmra.mxu0 %v5708
        %v6181 = vpop.f32.mrf.mxu0
        %v6182 = vadd.f32 %v5648, %v6181
        %6183 = vmatmul.f32.gmra.mxu0 %v5711
        %v6184 = vpop.f32.mrf.mxu0
        %v6185 = vadd.f32 %v5648, %v6184
        %6186 = vmatmul.f32.gmra.mxu0 %v5714
        %v6187 = vpop.f32.mrf.mxu0
        %v6188 = vadd.f32 %v5648, %v6187
        %6189 = vmatmul.f32.gmra.mxu0 %v5717
        %v6190 = vpop.f32.mrf.mxu0
        %v6191 = vadd.f32 %v5648, %v6190
        %6192 = vmatmul.f32.gmra.mxu0 %v5720
        %v6193 = vpop.f32.mrf.mxu0
        %v6194 = vadd.f32 %v5648, %v6193
        %6195 = vmatmul.f32.gmra.mxu0 %v5723
        %v6196 = vpop.f32.mrf.mxu0
        %v6197 = vadd.f32 %v5648, %v6196
        %6198 = vmatmul.f32.gmra.mxu0 %v5726
        %v6199 = vpop.f32.mrf.mxu0
        %v6200 = vadd.f32 %v5648, %v6199
        %6201 = vmatmul.f32.gmra.mxu0 %v5729
        %v6202 = vpop.f32.mrf.mxu0
        %v6203 = vadd.f32 %v5648, %v6202
        %6204 = vmatmul.f32.gmra.mxu0 %v5732
        %v6205 = vpop.f32.mrf.mxu0
        %v6206 = vadd.f32 %v5648, %v6205
        %6207 = vmatmul.f32.gmra.mxu0 %v5735
        %v6208 = vpop.f32.mrf.mxu0
        %v6209 = vadd.f32 %v5648, %v6208
        %6210 = vmatmul.f32.gmra.mxu0 %v5738
        %v6211 = vpop.f32.mrf.mxu0
        %v6212 = vadd.f32 %v5648, %v6211
        %6213 = vmatmul.f32.gmra.mxu0 %v5741
        %v6214 = vpop.f32.mrf.mxu0
        %v6215 = vadd.f32 %v5648, %v6214
        %6216 = vmatmul.f32.gmra.mxu0 %v5744
        %v6217 = vpop.f32.mrf.mxu0
        %v6218 = vadd.f32 %v5648, %v6217
        %6219 = vmatmul.f32.gmra.mxu0 %v5747
        %v6220 = vpop.f32.mrf.mxu0
        %v6221 = vadd.f32 %v5648, %v6220
        %6222 = vmatmul.f32.gmra.mxu0 %v5750
        %v6223 = vpop.f32.mrf.mxu0
        %v6224 = vadd.f32 %v5648, %v6223
        %6225 = vmatmul.f32.gmra.mxu0 %v5753
        %v6226 = vpop.f32.mrf.mxu0
        %v6227 = vadd.f32 %v5648, %v6226
        %6228 = vmatmul.f32.gmra.mxu0 %v5756
        %v6229 = vpop.f32.mrf.mxu0
        %v6230 = vadd.f32 %v5648, %v6229
        %6231 = vmatmul.f32.gmra.mxu0 %v5759
        %v6232 = vpop.f32.mrf.mxu0
        %v6233 = vadd.f32 %v5648, %v6232
        %6234 = vmatmul.f32.gmra.mxu0 %v5762
        %v6235 = vpop.f32.mrf.mxu0
        %v6236 = vadd.f32 %v5648, %v6235
        %6237 = vmatmul.f32.gmra.mxu0 %v5765
        %v6238 = vpop.f32.mrf.mxu0
        %v6239 = vadd.f32 %v5648, %v6238
        %6240 = vmatmul.f32.gmra.mxu0 %v5768
        %v6241 = vpop.f32.mrf.mxu0
        %v6242 = vadd.f32 %v5648, %v6241
        %6243 = vmatmul.f32.gmra.mxu0 %v5771
        %v6244 = vpop.f32.mrf.mxu0
        %v6245 = vadd.f32 %v5648, %v6244
        %6246 = vmatmul.f32.gmra.mxu0 %v5774
        %v6247 = vpop.f32.mrf.mxu0
        %v6248 = vadd.f32 %v5648, %v6247
        %6249 = vmatmul.f32.gmra.mxu0 %v5777
        %v6250 = vpop.f32.mrf.mxu0
        %v6251 = vadd.f32 %v5648, %v6250
        %6252 = vmatmul.f32.gmra.mxu0 %v5780
        %v6253 = vpop.f32.mrf.mxu0
        %v6254 = vadd.f32 %v5648, %v6253
        %6255 = vmatmul.f32.gmra.mxu0 %v5783
        %v6256 = vpop.f32.mrf.mxu0
        %v6257 = vadd.f32 %v5648, %v6256
        %6258 = vmatmul.f32.gmra.mxu0 %v5786
        %v6259 = vpop.f32.mrf.mxu0
        %v6260 = vadd.f32 %v5648, %v6259
        %6261 = vmatmul.f32.gmra.mxu0 %v5789
        %v6262 = vpop.f32.mrf.mxu0
        %v6263 = vadd.f32 %v5648, %v6262
        %6264 = vdwg.mxu0
        %v6265 = vsub.f32 0.0, %v5818
        %v6266 = vsub.f32 0.0, %v5973
        %v6267 = vsub.f32 0.0, %v6128
        %v6268 = vsub.f32 0.0, %v5821
        %v6269 = vsub.f32 0.0, %v5976
        %v6270 = vsub.f32 0.0, %v6131
        %v6271 = vsub.f32 0.0, %v5824
        %v6272 = vsub.f32 0.0, %v5979
        %v6273 = vsub.f32 0.0, %v6134
        %v6274 = vsub.f32 0.0, %v5827
        %v6275 = vsub.f32 0.0, %v5982
        %v6276 = vsub.f32 0.0, %v6137
        %v6277 = vsub.f32 0.0, %v5830
        %v6278 = vsub.f32 0.0, %v5985
        %v6279 = vsub.f32 0.0, %v6140
        %v6280 = vsub.f32 0.0, %v5833
        %v6281 = vsub.f32 0.0, %v5988
        %v6282 = vsub.f32 0.0, %v6143
        %v6283 = vsub.f32 0.0, %v5836
        %v6284 = vsub.f32 0.0, %v5991
        %v6285 = vsub.f32 0.0, %v6146
        %v6286 = vsub.f32 0.0, %v5839
        %v6287 = vsub.f32 0.0, %v5994
        %v6288 = vsub.f32 0.0, %v6149
        %v6289 = vsub.f32 0.0, %v5842
        %v6290 = vsub.f32 0.0, %v5997
        %v6291 = vsub.f32 0.0, %v6152
        %v6292 = vsub.f32 0.0, %v5845
        %v6293 = vsub.f32 0.0, %v6000
        %v6294 = vsub.f32 0.0, %v6155
        %v6295 = vsub.f32 0.0, %v5848
        %v6296 = vsub.f32 0.0, %v6003
        %v6297 = vsub.f32 0.0, %v6158
        %v6298 = vsub.f32 0.0, %v5851
        %v6299 = vsub.f32 0.0, %v6006
        %v6300 = vsub.f32 0.0, %v6161
        %v6301 = vsub.f32 0.0, %v5854
        %v6302 = vsub.f32 0.0, %v6009
        %v6303 = vsub.f32 0.0, %v6164
        %v6304 = vsub.f32 0.0, %v5857
        %v6305 = vsub.f32 0.0, %v6012
        %v6306 = vsub.f32 0.0, %v6167
        %v6307 = vsub.f32 0.0, %v5860
        %v6308 = vsub.f32 0.0, %v6015
        %v6309 = vsub.f32 0.0, %v6170
        %v6310 = vsub.f32 0.0, %v5863
        %v6311 = vsub.f32 0.0, %v6018
        %v6312 = vsub.f32 0.0, %v6173
        %v6313 = vsub.f32 0.0, %v5866
        %v6314 = vsub.f32 0.0, %v6021
        %v6315 = vsub.f32 0.0, %v6176
        %v6316 = vsub.f32 0.0, %v5869
        %v6317 = vsub.f32 0.0, %v6024
        %v6318 = vsub.f32 0.0, %v6179
        %v6319 = vsub.f32 0.0, %v5872
        %v6320 = vsub.f32 0.0, %v6027
        %v6321 = vsub.f32 0.0, %v6182
        %v6322 = vsub.f32 0.0, %v5875
        %v6323 = vsub.f32 0.0, %v6030
        %v6324 = vsub.f32 0.0, %v6185
        %v6325 = vsub.f32 0.0, %v5878
        %v6326 = vsub.f32 0.0, %v6033
        %v6327 = vsub.f32 0.0, %v6188
        %v6328 = vsub.f32 0.0, %v5881
        %v6329 = vsub.f32 0.0, %v6036
        %v6330 = vsub.f32 0.0, %v6191
        %v6331 = vsub.f32 0.0, %v5884
        %v6332 = vsub.f32 0.0, %v6039
        %v6333 = vsub.f32 0.0, %v6194
        %v6334 = vsub.f32 0.0, %v5887
        %v6335 = vsub.f32 0.0, %v6042
        %v6336 = vsub.f32 0.0, %v6197
        %v6337 = vsub.f32 0.0, %v5890
        %v6338 = vsub.f32 0.0, %v6045
        %v6339 = vsub.f32 0.0, %v6200
        %v6340 = vsub.f32 0.0, %v5893
        %v6341 = vsub.f32 0.0, %v6048
        %v6342 = vsub.f32 0.0, %v6203
        %v6343 = vsub.f32 0.0, %v5896
        %v6344 = vsub.f32 0.0, %v6051
        %v6345 = vsub.f32 0.0, %v6206
        %v6346 = vsub.f32 0.0, %v5899
        %v6347 = vsub.f32 0.0, %v6054
        %v6348 = vsub.f32 0.0, %v6209
        %v6349 = vsub.f32 0.0, %v5902
        %v6350 = vsub.f32 0.0, %v6057
        %v6351 = vsub.f32 0.0, %v6212
        %v6352 = vsub.f32 0.0, %v5905
        %v6353 = vsub.f32 0.0, %v6060
        %v6354 = vsub.f32 0.0, %v6215
        %v6355 = vsub.f32 0.0, %v5908
        %v6356 = vsub.f32 0.0, %v6063
        %v6357 = vsub.f32 0.0, %v6218
        %v6358 = vsub.f32 0.0, %v5911
        %v6359 = vsub.f32 0.0, %v6066
        %v6360 = vsub.f32 0.0, %v6221
        %v6361 = vsub.f32 0.0, %v5914
        %v6362 = vsub.f32 0.0, %v6069
        %v6363 = vsub.f32 0.0, %v6224
        %v6364 = vsub.f32 0.0, %v5917
        %v6365 = vsub.f32 0.0, %v6072
        %v6366 = vsub.f32 0.0, %v6227
        %v6367 = vsub.f32 0.0, %v5920
        %v6368 = vsub.f32 0.0, %v6075
        %v6369 = vsub.f32 0.0, %v6230
        %v6370 = vsub.f32 0.0, %v5923
        %v6371 = vsub.f32 0.0, %v6078
        %v6372 = vsub.f32 0.0, %v6233
        %v6373 = vsub.f32 0.0, %v5926
        %v6374 = vsub.f32 0.0, %v6081
        %v6375 = vsub.f32 0.0, %v6236
        %v6376 = vsub.f32 0.0, %v5929
        %v6377 = vsub.f32 0.0, %v6084
        %v6378 = vsub.f32 0.0, %v6239
        %v6379 = vsub.f32 0.0, %v5932
        %v6380 = vsub.f32 0.0, %v6087
        %v6381 = vsub.f32 0.0, %v6242
        %v6382 = vsub.f32 0.0, %v5935
        %v6383 = vsub.f32 0.0, %v6090
        %v6384 = vsub.f32 0.0, %v6245
        %v6385 = vsub.f32 0.0, %v5938
        %v6386 = vsub.f32 0.0, %v6093
        %v6387 = vsub.f32 0.0, %v6248
        %v6388 = vsub.f32 0.0, %v5941
        %v6389 = vsub.f32 0.0, %v6096
        %v6390 = vsub.f32 0.0, %v6251
        %v6391 = vsub.f32 0.0, %v5944
        %v6392 = vsub.f32 0.0, %v6099
        %v6393 = vsub.f32 0.0, %v6254
        %v6394 = vsub.f32 0.0, %v5947
        %v6395 = vsub.f32 0.0, %v6102
        %v6396 = vsub.f32 0.0, %v6257
        %v6397 = vsub.f32 0.0, %v5950
        %v6398 = vsub.f32 0.0, %v6105
        %v6399 = vsub.f32 0.0, %v6260
        %v6400 = vsub.f32 0.0, %v5953
        %v6401 = vsub.f32 0.0, %v6108
        %v6402 = vsub.f32 0.0, %v6263
        %v6403 = vmul.f32 %v6265, 1.442695
        %v6404 = vpow.pop %v6403
        %v6405 = vmul.f32 %v6266, 1.442695
        %v6406 = vpow.pop %v6405
        %v6407 = vmul.f32 %v6267, 1.442695
        %v6408 = vpow.pop %v6407
        %v6409 = vmul.f32 %v6268, 1.442695
        %v6410 = vpow.pop %v6409
        %v6411 = vmul.f32 %v6269, 1.442695
        %v6412 = vpow.pop %v6411
        %v6413 = vmul.f32 %v6270, 1.442695
        %v6414 = vpow.pop %v6413
        %v6415 = vmul.f32 %v6271, 1.442695
        %v6416 = vpow.pop %v6415
        %v6417 = vmul.f32 %v6272, 1.442695
        %v6418 = vpow.pop %v6417
        %v6419 = vmul.f32 %v6273, 1.442695
        %v6420 = vpow.pop %v6419
        %v6421 = vmul.f32 %v6274, 1.442695
        %v6422 = vpow.pop %v6421
        %v6423 = vmul.f32 %v6275, 1.442695
        %v6424 = vpow.pop %v6423
        %v6425 = vmul.f32 %v6276, 1.442695
        %v6426 = vpow.pop %v6425
        %v6427 = vmul.f32 %v6277, 1.442695
        %v6428 = vpow.pop %v6427
        %v6429 = vmul.f32 %v6278, 1.442695
        %v6430 = vpow.pop %v6429
        %v6431 = vmul.f32 %v6279, 1.442695
        %v6432 = vpow.pop %v6431
        %v6433 = vmul.f32 %v6280, 1.442695
        %v6434 = vpow.pop %v6433
        %v6435 = vmul.f32 %v6281, 1.442695
        %v6436 = vpow.pop %v6435
        %v6437 = vmul.f32 %v6282, 1.442695
        %v6438 = vpow.pop %v6437
        %v6439 = vmul.f32 %v6283, 1.442695
        %v6440 = vpow.pop %v6439
        %v6441 = vmul.f32 %v6284, 1.442695
        %v6442 = vpow.pop %v6441
        %v6443 = vmul.f32 %v6285, 1.442695
        %v6444 = vpow.pop %v6443
        %v6445 = vmul.f32 %v6286, 1.442695
        %v6446 = vpow.pop %v6445
        %v6447 = vmul.f32 %v6287, 1.442695
        %v6448 = vpow.pop %v6447
        %v6449 = vmul.f32 %v6288, 1.442695
        %v6450 = vpow.pop %v6449
        %v6451 = vmul.f32 %v6289, 1.442695
        %v6452 = vpow.pop %v6451
        %v6453 = vmul.f32 %v6290, 1.442695
        %v6454 = vpow.pop %v6453
        %v6455 = vmul.f32 %v6291, 1.442695
        %v6456 = vpow.pop %v6455
        %v6457 = vmul.f32 %v6292, 1.442695
        %v6458 = vpow.pop %v6457
        %v6459 = vmul.f32 %v6293, 1.442695
        %v6460 = vpow.pop %v6459
        %v6461 = vmul.f32 %v6294, 1.442695
        %v6462 = vpow.pop %v6461
        %v6463 = vmul.f32 %v6295, 1.442695
        %v6464 = vpow.pop %v6463
        %v6465 = vmul.f32 %v6296, 1.442695
        %v6466 = vpow.pop %v6465
        %v6467 = vmul.f32 %v6297, 1.442695
        %v6468 = vpow.pop %v6467
        %v6469 = vmul.f32 %v6298, 1.442695
        %v6470 = vpow.pop %v6469
        %v6471 = vmul.f32 %v6299, 1.442695
        %v6472 = vpow.pop %v6471
        %v6473 = vmul.f32 %v6300, 1.442695
        %v6474 = vpow.pop %v6473
        %v6475 = vmul.f32 %v6301, 1.442695
        %v6476 = vpow.pop %v6475
        %v6477 = vmul.f32 %v6302, 1.442695
        %v6478 = vpow.pop %v6477
        %v6479 = vmul.f32 %v6303, 1.442695
        %v6480 = vpow.pop %v6479
        %v6481 = vmul.f32 %v6304, 1.442695
        %v6482 = vpow.pop %v6481
        %v6483 = vmul.f32 %v6305, 1.442695
        %v6484 = vpow.pop %v6483
        %v6485 = vmul.f32 %v6306, 1.442695
        %v6486 = vpow.pop %v6485
        %v6487 = vmul.f32 %v6307, 1.442695
        %v6488 = vpow.pop %v6487
        %v6489 = vmul.f32 %v6308, 1.442695
        %v6490 = vpow.pop %v6489
        %v6491 = vmul.f32 %v6309, 1.442695
        %v6492 = vpow.pop %v6491
        %v6493 = vmul.f32 %v6310, 1.442695
        %v6494 = vpow.pop %v6493
        %v6495 = vmul.f32 %v6311, 1.442695
        %v6496 = vpow.pop %v6495
        %v6497 = vmul.f32 %v6312, 1.442695
        %v6498 = vpow.pop %v6497
        %v6499 = vmul.f32 %v6313, 1.442695
        %v6500 = vpow.pop %v6499
        %v6501 = vmul.f32 %v6314, 1.442695
        %v6502 = vpow.pop %v6501
        %v6503 = vmul.f32 %v6315, 1.442695
        %v6504 = vpow.pop %v6503
        %v6505 = vmul.f32 %v6316, 1.442695
        %v6506 = vpow.pop %v6505
        %v6507 = vmul.f32 %v6317, 1.442695
        %v6508 = vpow.pop %v6507
        %v6509 = vmul.f32 %v6318, 1.442695
        %v6510 = vpow.pop %v6509
        %v6511 = vmul.f32 %v6319, 1.442695
        %v6512 = vpow.pop %v6511
        %v6513 = vmul.f32 %v6320, 1.442695
        %v6514 = vpow.pop %v6513
        %v6515 = vmul.f32 %v6321, 1.442695
        %v6516 = vpow.pop %v6515
        %v6517 = vmul.f32 %v6322, 1.442695
        %v6518 = vpow.pop %v6517
        %v6519 = vmul.f32 %v6323, 1.442695
        %v6520 = vpow.pop %v6519
        %v6521 = vmul.f32 %v6324, 1.442695
        %v6522 = vpow.pop %v6521
        %v6523 = vmul.f32 %v6325, 1.442695
        %v6524 = vpow.pop %v6523
        %v6525 = vmul.f32 %v6326, 1.442695
        %v6526 = vpow.pop %v6525
        %v6527 = vmul.f32 %v6327, 1.442695
        %v6528 = vpow.pop %v6527
        %v6529 = vmul.f32 %v6328, 1.442695
        %v6530 = vpow.pop %v6529
        %v6531 = vmul.f32 %v6329, 1.442695
        %v6532 = vpow.pop %v6531
        %v6533 = vmul.f32 %v6330, 1.442695
        %v6534 = vpow.pop %v6533
        %v6535 = vmul.f32 %v6331, 1.442695
        %v6536 = vpow.pop %v6535
        %v6537 = vmul.f32 %v6332, 1.442695
        %v6538 = vpow.pop %v6537
        %v6539 = vmul.f32 %v6333, 1.442695
        %v6540 = vpow.pop %v6539
        %v6541 = vmul.f32 %v6334, 1.442695
        %v6542 = vpow.pop %v6541
        %v6543 = vmul.f32 %v6335, 1.442695
        %v6544 = vpow.pop %v6543
        %v6545 = vmul.f32 %v6336, 1.442695
        %v6546 = vpow.pop %v6545
        %v6547 = vmul.f32 %v6337, 1.442695
        %v6548 = vpow.pop %v6547
        %v6549 = vmul.f32 %v6338, 1.442695
        %v6550 = vpow.pop %v6549
        %v6551 = vmul.f32 %v6339, 1.442695
        %v6552 = vpow.pop %v6551
        %v6553 = vmul.f32 %v6340, 1.442695
        %v6554 = vpow.pop %v6553
        %v6555 = vmul.f32 %v6341, 1.442695
        %v6556 = vpow.pop %v6555
        %v6557 = vmul.f32 %v6342, 1.442695
        %v6558 = vpow.pop %v6557
        %v6559 = vmul.f32 %v6343, 1.442695
        %v6560 = vpow.pop %v6559
        %v6561 = vmul.f32 %v6344, 1.442695
        %v6562 = vpow.pop %v6561
        %v6563 = vmul.f32 %v6345, 1.442695
        %v6564 = vpow.pop %v6563
        %v6565 = vmul.f32 %v6346, 1.442695
        %v6566 = vpow.pop %v6565
        %v6567 = vmul.f32 %v6347, 1.442695
        %v6568 = vpow.pop %v6567
        %v6569 = vmul.f32 %v6348, 1.442695
        %v6570 = vpow.pop %v6569
        %v6571 = vmul.f32 %v6349, 1.442695
        %v6572 = vpow.pop %v6571
        %v6573 = vmul.f32 %v6350, 1.442695
        %v6574 = vpow.pop %v6573
        %v6575 = vmul.f32 %v6351, 1.442695
        %v6576 = vpow.pop %v6575
        %v6577 = vmul.f32 %v6352, 1.442695
        %v6578 = vpow.pop %v6577
        %v6579 = vmul.f32 %v6353, 1.442695
        %v6580 = vpow.pop %v6579
        %v6581 = vmul.f32 %v6354, 1.442695
        %v6582 = vpow.pop %v6581
        %v6583 = vmul.f32 %v6355, 1.442695
        %v6584 = vpow.pop %v6583
        %v6585 = vmul.f32 %v6356, 1.442695
        %v6586 = vpow.pop %v6585
        %v6587 = vmul.f32 %v6357, 1.442695
        %v6588 = vpow.pop %v6587
        %v6589 = vmul.f32 %v6358, 1.442695
        %v6590 = vpow.pop %v6589
        %v6591 = vmul.f32 %v6359, 1.442695
        %v6592 = vpow.pop %v6591
        %v6593 = vmul.f32 %v6360, 1.442695
        %v6594 = vpow.pop %v6593
        %v6595 = vmul.f32 %v6361, 1.442695
        %v6596 = vpow.pop %v6595
        %v6597 = vmul.f32 %v6362, 1.442695
        %v6598 = vpow.pop %v6597
        %v6599 = vmul.f32 %v6363, 1.442695
        %v6600 = vpow.pop %v6599
        %v6601 = vmul.f32 %v6364, 1.442695
        %v6602 = vpow.pop %v6601
        %v6603 = vmul.f32 %v6365, 1.442695
        %v6604 = vpow.pop %v6603
        %v6605 = vmul.f32 %v6366, 1.442695
        %v6606 = vpow.pop %v6605
        %v6607 = vmul.f32 %v6367, 1.442695
        %v6608 = vpow.pop %v6607
        %v6609 = vmul.f32 %v6368, 1.442695
        %v6610 = vpow.pop %v6609
        %v6611 = vmul.f32 %v6369, 1.442695
        %v6612 = vpow.pop %v6611
        %v6613 = vmul.f32 %v6370, 1.442695
        %v6614 = vpow.pop %v6613
        %v6615 = vmul.f32 %v6371, 1.442695
        %v6616 = vpow.pop %v6615
        %v6617 = vmul.f32 %v6372, 1.442695
        %v6618 = vpow.pop %v6617
        %v6619 = vmul.f32 %v6373, 1.442695
        %v6620 = vpow.pop %v6619
        %v6621 = vmul.f32 %v6374, 1.442695
        %v6622 = vpow.pop %v6621
        %v6623 = vmul.f32 %v6375, 1.442695
        %v6624 = vpow.pop %v6623
        %v6625 = vmul.f32 %v6376, 1.442695
        %v6626 = vpow.pop %v6625
        %v6627 = vmul.f32 %v6377, 1.442695
        %v6628 = vpow.pop %v6627
        %v6629 = vmul.f32 %v6378, 1.442695
        %v6630 = vpow.pop %v6629
        %v6631 = vmul.f32 %v6379, 1.442695
        %v6632 = vpow.pop %v6631
        %v6633 = vmul.f32 %v6380, 1.442695
        %v6634 = vpow.pop %v6633
        %v6635 = vmul.f32 %v6381, 1.442695
        %v6636 = vpow.pop %v6635
        %v6637 = vmul.f32 %v6382, 1.442695
        %v6638 = vpow.pop %v6637
        %v6639 = vmul.f32 %v6383, 1.442695
        %v6640 = vpow.pop %v6639
        %v6641 = vmul.f32 %v6384, 1.442695
        %v6642 = vpow.pop %v6641
        %v6643 = vmul.f32 %v6385, 1.442695
        %v6644 = vpow.pop %v6643
        %v6645 = vmul.f32 %v6386, 1.442695
        %v6646 = vpow.pop %v6645
        %v6647 = vmul.f32 %v6387, 1.442695
        %v6648 = vpow.pop %v6647
        %v6649 = vmul.f32 %v6388, 1.442695
        %v6650 = vpow.pop %v6649
        %v6651 = vmul.f32 %v6389, 1.442695
        %v6652 = vpow.pop %v6651
        %v6653 = vmul.f32 %v6390, 1.442695
        %v6654 = vpow.pop %v6653
        %v6655 = vmul.f32 %v6391, 1.442695
        %v6656 = vpow.pop %v6655
        %v6657 = vmul.f32 %v6392, 1.442695
        %v6658 = vpow.pop %v6657
        %v6659 = vmul.f32 %v6393, 1.442695
        %v6660 = vpow.pop %v6659
        %v6661 = vmul.f32 %v6394, 1.442695
        %v6662 = vpow.pop %v6661
        %v6663 = vmul.f32 %v6395, 1.442695
        %v6664 = vpow.pop %v6663
        %v6665 = vmul.f32 %v6396, 1.442695
        %v6666 = vpow.pop %v6665
        %v6667 = vmul.f32 %v6397, 1.442695
        %v6668 = vpow.pop %v6667
        %v6669 = vmul.f32 %v6398, 1.442695
        %v6670 = vpow.pop %v6669
        %v6671 = vmul.f32 %v6399, 1.442695
        %v6672 = vpow.pop %v6671
        %v6673 = vmul.f32 %v6400, 1.442695
        %v6674 = vpow.pop %v6673
        %v6675 = vmul.f32 %v6401, 1.442695
        %v6676 = vpow.pop %v6675
        %v6677 = vmul.f32 %v6402, 1.442695
        %v6678 = vpow.pop %v6677
        %v6679 = vadd.f32 %v6404, 1.0
        %v6680 = vadd.f32 %v6406, 1.0
        %v6681 = vadd.f32 %v6408, 1.0
        %v6682 = vadd.f32 %v6410, 1.0
        %v6683 = vadd.f32 %v6412, 1.0
        %v6684 = vadd.f32 %v6414, 1.0
        %v6685 = vadd.f32 %v6416, 1.0
        %v6686 = vadd.f32 %v6418, 1.0
        %v6687 = vadd.f32 %v6420, 1.0
        %v6688 = vadd.f32 %v6422, 1.0
        %v6689 = vadd.f32 %v6424, 1.0
        %v6690 = vadd.f32 %v6426, 1.0
        %v6691 = vadd.f32 %v6428, 1.0
        %v6692 = vadd.f32 %v6430, 1.0
        %v6693 = vadd.f32 %v6432, 1.0
        %v6694 = vadd.f32 %v6434, 1.0
        %v6695 = vadd.f32 %v6436, 1.0
        %v6696 = vadd.f32 %v6438, 1.0
        %v6697 = vadd.f32 %v6440, 1.0
        %v6698 = vadd.f32 %v6442, 1.0
        %v6699 = vadd.f32 %v6444, 1.0
        %v6700 = vadd.f32 %v6446, 1.0
        %v6701 = vadd.f32 %v6448, 1.0
        %v6702 = vadd.f32 %v6450, 1.0
        %v6703 = vadd.f32 %v6452, 1.0
        %v6704 = vadd.f32 %v6454, 1.0
        %v6705 = vadd.f32 %v6456, 1.0
        %v6706 = vadd.f32 %v6458, 1.0
        %v6707 = vadd.f32 %v6460, 1.0
        %v6708 = vadd.f32 %v6462, 1.0
        %v6709 = vadd.f32 %v6464, 1.0
        %v6710 = vadd.f32 %v6466, 1.0
        %v6711 = vadd.f32 %v6468, 1.0
        %v6712 = vadd.f32 %v6470, 1.0
        %v6713 = vadd.f32 %v6472, 1.0
        %v6714 = vadd.f32 %v6474, 1.0
        %v6715 = vadd.f32 %v6476, 1.0
        %v6716 = vadd.f32 %v6478, 1.0
        %v6717 = vadd.f32 %v6480, 1.0
        %v6718 = vadd.f32 %v6482, 1.0
        %v6719 = vadd.f32 %v6484, 1.0
        %v6720 = vadd.f32 %v6486, 1.0
        %v6721 = vadd.f32 %v6488, 1.0
        %v6722 = vadd.f32 %v6490, 1.0
        %v6723 = vadd.f32 %v6492, 1.0
        %v6724 = vadd.f32 %v6494, 1.0
        %v6725 = vadd.f32 %v6496, 1.0
        %v6726 = vadd.f32 %v6498, 1.0
        %v6727 = vadd.f32 %v6500, 1.0
        %v6728 = vadd.f32 %v6502, 1.0
        %v6729 = vadd.f32 %v6504, 1.0
        %v6730 = vadd.f32 %v6506, 1.0
        %v6731 = vadd.f32 %v6508, 1.0
        %v6732 = vadd.f32 %v6510, 1.0
        %v6733 = vadd.f32 %v6512, 1.0
        %v6734 = vadd.f32 %v6514, 1.0
        %v6735 = vadd.f32 %v6516, 1.0
        %v6736 = vadd.f32 %v6518, 1.0
        %v6737 = vadd.f32 %v6520, 1.0
        %v6738 = vadd.f32 %v6522, 1.0
        %v6739 = vadd.f32 %v6524, 1.0
        %v6740 = vadd.f32 %v6526, 1.0
        %v6741 = vadd.f32 %v6528, 1.0
        %v6742 = vadd.f32 %v6530, 1.0
        %v6743 = vadd.f32 %v6532, 1.0
        %v6744 = vadd.f32 %v6534, 1.0
        %v6745 = vadd.f32 %v6536, 1.0
        %v6746 = vadd.f32 %v6538, 1.0
        %v6747 = vadd.f32 %v6540, 1.0
        %v6748 = vadd.f32 %v6542, 1.0
        %v6749 = vadd.f32 %v6544, 1.0
        %v6750 = vadd.f32 %v6546, 1.0
        %v6751 = vadd.f32 %v6548, 1.0
        %v6752 = vadd.f32 %v6550, 1.0
        %v6753 = vadd.f32 %v6552, 1.0
        %v6754 = vadd.f32 %v6554, 1.0
        %v6755 = vadd.f32 %v6556, 1.0
        %v6756 = vadd.f32 %v6558, 1.0
        %v6757 = vadd.f32 %v6560, 1.0
        %v6758 = vadd.f32 %v6562, 1.0
        %v6759 = vadd.f32 %v6564, 1.0
        %v6760 = vadd.f32 %v6566, 1.0
        %v6761 = vadd.f32 %v6568, 1.0
        %v6762 = vadd.f32 %v6570, 1.0
        %v6763 = vadd.f32 %v6572, 1.0
        %v6764 = vadd.f32 %v6574, 1.0
        %v6765 = vadd.f32 %v6576, 1.0
        %v6766 = vadd.f32 %v6578, 1.0
        %v6767 = vadd.f32 %v6580, 1.0
        %v6768 = vadd.f32 %v6582, 1.0
        %v6769 = vadd.f32 %v6584, 1.0
        %v6770 = vadd.f32 %v6586, 1.0
        %v6771 = vadd.f32 %v6588, 1.0
        %v6772 = vadd.f32 %v6590, 1.0
        %v6773 = vadd.f32 %v6592, 1.0
        %v6774 = vadd.f32 %v6594, 1.0
        %v6775 = vadd.f32 %v6596, 1.0
        %v6776 = vadd.f32 %v6598, 1.0
        %v6777 = vadd.f32 %v6600, 1.0
        %v6778 = vadd.f32 %v6602, 1.0
        %v6779 = vadd.f32 %v6604, 1.0
        %v6780 = vadd.f32 %v6606, 1.0
        %v6781 = vadd.f32 %v6608, 1.0
        %v6782 = vadd.f32 %v6610, 1.0
        %v6783 = vadd.f32 %v6612, 1.0
        %v6784 = vadd.f32 %v6614, 1.0
        %v6785 = vadd.f32 %v6616, 1.0
        %v6786 = vadd.f32 %v6618, 1.0
        %v6787 = vadd.f32 %v6620, 1.0
        %v6788 = vadd.f32 %v6622, 1.0
        %v6789 = vadd.f32 %v6624, 1.0
        %v6790 = vadd.f32 %v6626, 1.0
        %v6791 = vadd.f32 %v6628, 1.0
        %v6792 = vadd.f32 %v6630, 1.0
        %v6793 = vadd.f32 %v6632, 1.0
        %v6794 = vadd.f32 %v6634, 1.0
        %v6795 = vadd.f32 %v6636, 1.0
        %v6796 = vadd.f32 %v6638, 1.0
        %v6797 = vadd.f32 %v6640, 1.0
        %v6798 = vadd.f32 %v6642, 1.0
        %v6799 = vadd.f32 %v6644, 1.0
        %v6800 = vadd.f32 %v6646, 1.0
        %v6801 = vadd.f32 %v6648, 1.0
        %v6802 = vadd.f32 %v6650, 1.0
        %v6803 = vadd.f32 %v6652, 1.0
        %v6804 = vadd.f32 %v6654, 1.0
        %v6805 = vadd.f32 %v6656, 1.0
        %v6806 = vadd.f32 %v6658, 1.0
        %v6807 = vadd.f32 %v6660, 1.0
        %v6808 = vadd.f32 %v6662, 1.0
        %v6809 = vadd.f32 %v6664, 1.0
        %v6810 = vadd.f32 %v6666, 1.0
        %v6811 = vadd.f32 %v6668, 1.0
        %v6812 = vadd.f32 %v6670, 1.0
        %v6813 = vadd.f32 %v6672, 1.0
        %v6814 = vadd.f32 %v6674, 1.0
        %v6815 = vadd.f32 %v6676, 1.0
        %v6816 = vadd.f32 %v6678, 1.0
        %v6817 = vrcp.pop %v6679
        %v6818 = vmul.f32 %v6679, %v6817
        %v6819 = vsub.f32 1.0, %v6818
        %v6820 = vmul.f32 %v6817, %v6819
        %v6821 = vadd.f32 %v6817, %v6820
        %vm6822 = vweird.f32 %v6679
        %vm6823 = vweird.f32 %v6817
        %vm6824 = vmor %vm6822, %vm6823
        %v6825 = vsel %vm6824, %v6817, %v6821
        %v6826 = vand.u32 2147483647, %v6679
        %vm6827 = vcmp.eq.f32.partialorder %v6826, 8.507059e+37
        %v6828 = vand.u32 %v6679, 2147483648
        %v6829 = vor.u32 1.1754944e-38, %v6828
        %v6830 = vsel %vm6827, %v6829, %v6825
        %v6831 = vmul.f32 1.0, %v6830
        %v6832 = vrcp.pop %v6680
        %v6833 = vmul.f32 %v6680, %v6832
        %v6834 = vsub.f32 1.0, %v6833
        %v6835 = vmul.f32 %v6832, %v6834
        %v6836 = vadd.f32 %v6832, %v6835
        %vm6837 = vweird.f32 %v6680
        %vm6838 = vweird.f32 %v6832
        %vm6839 = vmor %vm6837, %vm6838
        %v6840 = vsel %vm6839, %v6832, %v6836
        %v6841 = vand.u32 2147483647, %v6680
        %vm6842 = vcmp.eq.f32.partialorder %v6841, 8.507059e+37
        %v6843 = vand.u32 %v6680, 2147483648
        %v6844 = vor.u32 1.1754944e-38, %v6843
        %v6845 = vsel %vm6842, %v6844, %v6840
        %v6846 = vmul.f32 1.0, %v6845
        %v6847 = vrcp.pop %v6681
        %v6848 = vmul.f32 %v6681, %v6847
        %v6849 = vsub.f32 1.0, %v6848
        %v6850 = vmul.f32 %v6847, %v6849
        %v6851 = vadd.f32 %v6847, %v6850
        %vm6852 = vweird.f32 %v6681
        %vm6853 = vweird.f32 %v6847
        %vm6854 = vmor %vm6852, %vm6853
        %v6855 = vsel %vm6854, %v6847, %v6851
        %v6856 = vand.u32 2147483647, %v6681
        %vm6857 = vcmp.eq.f32.partialorder %v6856, 8.507059e+37
        %v6858 = vand.u32 %v6681, 2147483648
        %v6859 = vor.u32 1.1754944e-38, %v6858
        %v6860 = vsel %vm6857, %v6859, %v6855
        %v6861 = vmul.f32 1.0, %v6860
        %v6862 = vrcp.pop %v6682
        %v6863 = vmul.f32 %v6682, %v6862
        %v6864 = vsub.f32 1.0, %v6863
        %v6865 = vmul.f32 %v6862, %v6864
        %v6866 = vadd.f32 %v6862, %v6865
        %vm6867 = vweird.f32 %v6682
        %vm6868 = vweird.f32 %v6862
        %vm6869 = vmor %vm6867, %vm6868
        %v6870 = vsel %vm6869, %v6862, %v6866
        %v6871 = vand.u32 2147483647, %v6682
        %vm6872 = vcmp.eq.f32.partialorder %v6871, 8.507059e+37
        %v6873 = vand.u32 %v6682, 2147483648
        %v6874 = vor.u32 1.1754944e-38, %v6873
        %v6875 = vsel %vm6872, %v6874, %v6870
        %v6876 = vmul.f32 1.0, %v6875
        %v6877 = vrcp.pop %v6683
        %v6878 = vmul.f32 %v6683, %v6877
        %v6879 = vsub.f32 1.0, %v6878
        %v6880 = vmul.f32 %v6877, %v6879
        %v6881 = vadd.f32 %v6877, %v6880
        %vm6882 = vweird.f32 %v6683
        %vm6883 = vweird.f32 %v6877
        %vm6884 = vmor %vm6882, %vm6883
        %v6885 = vsel %vm6884, %v6877, %v6881
        %v6886 = vand.u32 2147483647, %v6683
        %vm6887 = vcmp.eq.f32.partialorder %v6886, 8.507059e+37
        %v6888 = vand.u32 %v6683, 2147483648
        %v6889 = vor.u32 1.1754944e-38, %v6888
        %v6890 = vsel %vm6887, %v6889, %v6885
        %v6891 = vmul.f32 1.0, %v6890
        %v6892 = vrcp.pop %v6684
        %v6893 = vmul.f32 %v6684, %v6892
        %v6894 = vsub.f32 1.0, %v6893
        %v6895 = vmul.f32 %v6892, %v6894
        %v6896 = vadd.f32 %v6892, %v6895
        %vm6897 = vweird.f32 %v6684
        %vm6898 = vweird.f32 %v6892
        %vm6899 = vmor %vm6897, %vm6898
        %v6900 = vsel %vm6899, %v6892, %v6896
        %v6901 = vand.u32 2147483647, %v6684
        %vm6902 = vcmp.eq.f32.partialorder %v6901, 8.507059e+37
        %v6903 = vand.u32 %v6684, 2147483648
        %v6904 = vor.u32 1.1754944e-38, %v6903
        %v6905 = vsel %vm6902, %v6904, %v6900
        %v6906 = vmul.f32 1.0, %v6905
        %v6907 = vrcp.pop %v6685
        %v6908 = vmul.f32 %v6685, %v6907
        %v6909 = vsub.f32 1.0, %v6908
        %v6910 = vmul.f32 %v6907, %v6909
        %v6911 = vadd.f32 %v6907, %v6910
        %vm6912 = vweird.f32 %v6685
        %vm6913 = vweird.f32 %v6907
        %vm6914 = vmor %vm6912, %vm6913
        %v6915 = vsel %vm6914, %v6907, %v6911
        %v6916 = vand.u32 2147483647, %v6685
        %vm6917 = vcmp.eq.f32.partialorder %v6916, 8.507059e+37
        %v6918 = vand.u32 %v6685, 2147483648
        %v6919 = vor.u32 1.1754944e-38, %v6918
        %v6920 = vsel %vm6917, %v6919, %v6915
        %v6921 = vmul.f32 1.0, %v6920
        %v6922 = vrcp.pop %v6686
        %v6923 = vmul.f32 %v6686, %v6922
        %v6924 = vsub.f32 1.0, %v6923
        %v6925 = vmul.f32 %v6922, %v6924
        %v6926 = vadd.f32 %v6922, %v6925
        %vm6927 = vweird.f32 %v6686
        %vm6928 = vweird.f32 %v6922
        %vm6929 = vmor %vm6927, %vm6928
        %v6930 = vsel %vm6929, %v6922, %v6926
        %v6931 = vand.u32 2147483647, %v6686
        %vm6932 = vcmp.eq.f32.partialorder %v6931, 8.507059e+37
        %v6933 = vand.u32 %v6686, 2147483648
        %v6934 = vor.u32 1.1754944e-38, %v6933
        %v6935 = vsel %vm6932, %v6934, %v6930
        %v6936 = vmul.f32 1.0, %v6935
        %v6937 = vrcp.pop %v6687
        %v6938 = vmul.f32 %v6687, %v6937
        %v6939 = vsub.f32 1.0, %v6938
        %v6940 = vmul.f32 %v6937, %v6939
        %v6941 = vadd.f32 %v6937, %v6940
        %vm6942 = vweird.f32 %v6687
        %vm6943 = vweird.f32 %v6937
        %vm6944 = vmor %vm6942, %vm6943
        %v6945 = vsel %vm6944, %v6937, %v6941
        %v6946 = vand.u32 2147483647, %v6687
        %vm6947 = vcmp.eq.f32.partialorder %v6946, 8.507059e+37
        %v6948 = vand.u32 %v6687, 2147483648
        %v6949 = vor.u32 1.1754944e-38, %v6948
        %v6950 = vsel %vm6947, %v6949, %v6945
        %v6951 = vmul.f32 1.0, %v6950
        %v6952 = vrcp.pop %v6688
        %v6953 = vmul.f32 %v6688, %v6952
        %v6954 = vsub.f32 1.0, %v6953
        %v6955 = vmul.f32 %v6952, %v6954
        %v6956 = vadd.f32 %v6952, %v6955
        %vm6957 = vweird.f32 %v6688
        %vm6958 = vweird.f32 %v6952
        %vm6959 = vmor %vm6957, %vm6958
        %v6960 = vsel %vm6959, %v6952, %v6956
        %v6961 = vand.u32 2147483647, %v6688
        %vm6962 = vcmp.eq.f32.partialorder %v6961, 8.507059e+37
        %v6963 = vand.u32 %v6688, 2147483648
        %v6964 = vor.u32 1.1754944e-38, %v6963
        %v6965 = vsel %vm6962, %v6964, %v6960
        %v6966 = vmul.f32 1.0, %v6965
        %v6967 = vrcp.pop %v6689
        %v6968 = vmul.f32 %v6689, %v6967
        %v6969 = vsub.f32 1.0, %v6968
        %v6970 = vmul.f32 %v6967, %v6969
        %v6971 = vadd.f32 %v6967, %v6970
        %vm6972 = vweird.f32 %v6689
        %vm6973 = vweird.f32 %v6967
        %vm6974 = vmor %vm6972, %vm6973
        %v6975 = vsel %vm6974, %v6967, %v6971
        %v6976 = vand.u32 2147483647, %v6689
        %vm6977 = vcmp.eq.f32.partialorder %v6976, 8.507059e+37
        %v6978 = vand.u32 %v6689, 2147483648
        %v6979 = vor.u32 1.1754944e-38, %v6978
        %v6980 = vsel %vm6977, %v6979, %v6975
        %v6981 = vmul.f32 1.0, %v6980
        %v6982 = vrcp.pop %v6690
        %v6983 = vmul.f32 %v6690, %v6982
        %v6984 = vsub.f32 1.0, %v6983
        %v6985 = vmul.f32 %v6982, %v6984
        %v6986 = vadd.f32 %v6982, %v6985
        %vm6987 = vweird.f32 %v6690
        %vm6988 = vweird.f32 %v6982
        %vm6989 = vmor %vm6987, %vm6988
        %v6990 = vsel %vm6989, %v6982, %v6986
        %v6991 = vand.u32 2147483647, %v6690
        %vm6992 = vcmp.eq.f32.partialorder %v6991, 8.507059e+37
        %v6993 = vand.u32 %v6690, 2147483648
        %v6994 = vor.u32 1.1754944e-38, %v6993
        %v6995 = vsel %vm6992, %v6994, %v6990
        %v6996 = vmul.f32 1.0, %v6995
        %v6997 = vrcp.pop %v6691
        %v6998 = vmul.f32 %v6691, %v6997
        %v6999 = vsub.f32 1.0, %v6998
        %v7000 = vmul.f32 %v6997, %v6999
        %v7001 = vadd.f32 %v6997, %v7000
        %vm7002 = vweird.f32 %v6691
        %vm7003 = vweird.f32 %v6997
        %vm7004 = vmor %vm7002, %vm7003
        %v7005 = vsel %vm7004, %v6997, %v7001
        %v7006 = vand.u32 2147483647, %v6691
        %vm7007 = vcmp.eq.f32.partialorder %v7006, 8.507059e+37
        %v7008 = vand.u32 %v6691, 2147483648
        %v7009 = vor.u32 1.1754944e-38, %v7008
        %v7010 = vsel %vm7007, %v7009, %v7005
        %v7011 = vmul.f32 1.0, %v7010
        %v7012 = vrcp.pop %v6692
        %v7013 = vmul.f32 %v6692, %v7012
        %v7014 = vsub.f32 1.0, %v7013
        %v7015 = vmul.f32 %v7012, %v7014
        %v7016 = vadd.f32 %v7012, %v7015
        %vm7017 = vweird.f32 %v6692
        %vm7018 = vweird.f32 %v7012
        %vm7019 = vmor %vm7017, %vm7018
        %v7020 = vsel %vm7019, %v7012, %v7016
        %v7021 = vand.u32 2147483647, %v6692
        %vm7022 = vcmp.eq.f32.partialorder %v7021, 8.507059e+37
        %v7023 = vand.u32 %v6692, 2147483648
        %v7024 = vor.u32 1.1754944e-38, %v7023
        %v7025 = vsel %vm7022, %v7024, %v7020
        %v7026 = vmul.f32 1.0, %v7025
        %v7027 = vrcp.pop %v6693
        %v7028 = vmul.f32 %v6693, %v7027
        %v7029 = vsub.f32 1.0, %v7028
        %v7030 = vmul.f32 %v7027, %v7029
        %v7031 = vadd.f32 %v7027, %v7030
        %vm7032 = vweird.f32 %v6693
        %vm7033 = vweird.f32 %v7027
        %vm7034 = vmor %vm7032, %vm7033
        %v7035 = vsel %vm7034, %v7027, %v7031
        %v7036 = vand.u32 2147483647, %v6693
        %vm7037 = vcmp.eq.f32.partialorder %v7036, 8.507059e+37
        %v7038 = vand.u32 %v6693, 2147483648
        %v7039 = vor.u32 1.1754944e-38, %v7038
        %v7040 = vsel %vm7037, %v7039, %v7035
        %v7041 = vmul.f32 1.0, %v7040
        %v7042 = vrcp.pop %v6694
        %v7043 = vmul.f32 %v6694, %v7042
        %v7044 = vsub.f32 1.0, %v7043
        %v7045 = vmul.f32 %v7042, %v7044
        %v7046 = vadd.f32 %v7042, %v7045
        %vm7047 = vweird.f32 %v6694
        %vm7048 = vweird.f32 %v7042
        %vm7049 = vmor %vm7047, %vm7048
        %v7050 = vsel %vm7049, %v7042, %v7046
        %v7051 = vand.u32 2147483647, %v6694
        %vm7052 = vcmp.eq.f32.partialorder %v7051, 8.507059e+37
        %v7053 = vand.u32 %v6694, 2147483648
        %v7054 = vor.u32 1.1754944e-38, %v7053
        %v7055 = vsel %vm7052, %v7054, %v7050
        %v7056 = vmul.f32 1.0, %v7055
        %v7057 = vrcp.pop %v6695
        %v7058 = vmul.f32 %v6695, %v7057
        %v7059 = vsub.f32 1.0, %v7058
        %v7060 = vmul.f32 %v7057, %v7059
        %v7061 = vadd.f32 %v7057, %v7060
        %vm7062 = vweird.f32 %v6695
        %vm7063 = vweird.f32 %v7057
        %vm7064 = vmor %vm7062, %vm7063
        %v7065 = vsel %vm7064, %v7057, %v7061
        %v7066 = vand.u32 2147483647, %v6695
        %vm7067 = vcmp.eq.f32.partialorder %v7066, 8.507059e+37
        %v7068 = vand.u32 %v6695, 2147483648
        %v7069 = vor.u32 1.1754944e-38, %v7068
        %v7070 = vsel %vm7067, %v7069, %v7065
        %v7071 = vmul.f32 1.0, %v7070
        %v7072 = vrcp.pop %v6696
        %v7073 = vmul.f32 %v6696, %v7072
        %v7074 = vsub.f32 1.0, %v7073
        %v7075 = vmul.f32 %v7072, %v7074
        %v7076 = vadd.f32 %v7072, %v7075
        %vm7077 = vweird.f32 %v6696
        %vm7078 = vweird.f32 %v7072
        %vm7079 = vmor %vm7077, %vm7078
        %v7080 = vsel %vm7079, %v7072, %v7076
        %v7081 = vand.u32 2147483647, %v6696
        %vm7082 = vcmp.eq.f32.partialorder %v7081, 8.507059e+37
        %v7083 = vand.u32 %v6696, 2147483648
        %v7084 = vor.u32 1.1754944e-38, %v7083
        %v7085 = vsel %vm7082, %v7084, %v7080
        %v7086 = vmul.f32 1.0, %v7085
        %v7087 = vrcp.pop %v6697
        %v7088 = vmul.f32 %v6697, %v7087
        %v7089 = vsub.f32 1.0, %v7088
        %v7090 = vmul.f32 %v7087, %v7089
        %v7091 = vadd.f32 %v7087, %v7090
        %vm7092 = vweird.f32 %v6697
        %vm7093 = vweird.f32 %v7087
        %vm7094 = vmor %vm7092, %vm7093
        %v7095 = vsel %vm7094, %v7087, %v7091
        %v7096 = vand.u32 2147483647, %v6697
        %vm7097 = vcmp.eq.f32.partialorder %v7096, 8.507059e+37
        %v7098 = vand.u32 %v6697, 2147483648
        %v7099 = vor.u32 1.1754944e-38, %v7098
        %v7100 = vsel %vm7097, %v7099, %v7095
        %v7101 = vmul.f32 1.0, %v7100
        %v7102 = vrcp.pop %v6698
        %v7103 = vmul.f32 %v6698, %v7102
        %v7104 = vsub.f32 1.0, %v7103
        %v7105 = vmul.f32 %v7102, %v7104
        %v7106 = vadd.f32 %v7102, %v7105
        %vm7107 = vweird.f32 %v6698
        %vm7108 = vweird.f32 %v7102
        %vm7109 = vmor %vm7107, %vm7108
        %v7110 = vsel %vm7109, %v7102, %v7106
        %v7111 = vand.u32 2147483647, %v6698
        %vm7112 = vcmp.eq.f32.partialorder %v7111, 8.507059e+37
        %v7113 = vand.u32 %v6698, 2147483648
        %v7114 = vor.u32 1.1754944e-38, %v7113
        %v7115 = vsel %vm7112, %v7114, %v7110
        %v7116 = vmul.f32 1.0, %v7115
        %v7117 = vrcp.pop %v6699
        %v7118 = vmul.f32 %v6699, %v7117
        %v7119 = vsub.f32 1.0, %v7118
        %v7120 = vmul.f32 %v7117, %v7119
        %v7121 = vadd.f32 %v7117, %v7120
        %vm7122 = vweird.f32 %v6699
        %vm7123 = vweird.f32 %v7117
        %vm7124 = vmor %vm7122, %vm7123
        %v7125 = vsel %vm7124, %v7117, %v7121
        %v7126 = vand.u32 2147483647, %v6699
        %vm7127 = vcmp.eq.f32.partialorder %v7126, 8.507059e+37
        %v7128 = vand.u32 %v6699, 2147483648
        %v7129 = vor.u32 1.1754944e-38, %v7128
        %v7130 = vsel %vm7127, %v7129, %v7125
        %v7131 = vmul.f32 1.0, %v7130
        %v7132 = vrcp.pop %v6700
        %v7133 = vmul.f32 %v6700, %v7132
        %v7134 = vsub.f32 1.0, %v7133
        %v7135 = vmul.f32 %v7132, %v7134
        %v7136 = vadd.f32 %v7132, %v7135
        %vm7137 = vweird.f32 %v6700
        %vm7138 = vweird.f32 %v7132
        %vm7139 = vmor %vm7137, %vm7138
        %v7140 = vsel %vm7139, %v7132, %v7136
        %v7141 = vand.u32 2147483647, %v6700
        %vm7142 = vcmp.eq.f32.partialorder %v7141, 8.507059e+37
        %v7143 = vand.u32 %v6700, 2147483648
        %v7144 = vor.u32 1.1754944e-38, %v7143
        %v7145 = vsel %vm7142, %v7144, %v7140
        %v7146 = vmul.f32 1.0, %v7145
        %v7147 = vrcp.pop %v6701
        %v7148 = vmul.f32 %v6701, %v7147
        %v7149 = vsub.f32 1.0, %v7148
        %v7150 = vmul.f32 %v7147, %v7149
        %v7151 = vadd.f32 %v7147, %v7150
        %vm7152 = vweird.f32 %v6701
        %vm7153 = vweird.f32 %v7147
        %vm7154 = vmor %vm7152, %vm7153
        %v7155 = vsel %vm7154, %v7147, %v7151
        %v7156 = vand.u32 2147483647, %v6701
        %vm7157 = vcmp.eq.f32.partialorder %v7156, 8.507059e+37
        %v7158 = vand.u32 %v6701, 2147483648
        %v7159 = vor.u32 1.1754944e-38, %v7158
        %v7160 = vsel %vm7157, %v7159, %v7155
        %v7161 = vmul.f32 1.0, %v7160
        %v7162 = vrcp.pop %v6702
        %v7163 = vmul.f32 %v6702, %v7162
        %v7164 = vsub.f32 1.0, %v7163
        %v7165 = vmul.f32 %v7162, %v7164
        %v7166 = vadd.f32 %v7162, %v7165
        %vm7167 = vweird.f32 %v6702
        %vm7168 = vweird.f32 %v7162
        %vm7169 = vmor %vm7167, %vm7168
        %v7170 = vsel %vm7169, %v7162, %v7166
        %v7171 = vand.u32 2147483647, %v6702
        %vm7172 = vcmp.eq.f32.partialorder %v7171, 8.507059e+37
        %v7173 = vand.u32 %v6702, 2147483648
        %v7174 = vor.u32 1.1754944e-38, %v7173
        %v7175 = vsel %vm7172, %v7174, %v7170
        %v7176 = vmul.f32 1.0, %v7175
        %v7177 = vrcp.pop %v6703
        %v7178 = vmul.f32 %v6703, %v7177
        %v7179 = vsub.f32 1.0, %v7178
        %v7180 = vmul.f32 %v7177, %v7179
        %v7181 = vadd.f32 %v7177, %v7180
        %vm7182 = vweird.f32 %v6703
        %vm7183 = vweird.f32 %v7177
        %vm7184 = vmor %vm7182, %vm7183
        %v7185 = vsel %vm7184, %v7177, %v7181
        %v7186 = vand.u32 2147483647, %v6703
        %vm7187 = vcmp.eq.f32.partialorder %v7186, 8.507059e+37
        %v7188 = vand.u32 %v6703, 2147483648
        %v7189 = vor.u32 1.1754944e-38, %v7188
        %v7190 = vsel %vm7187, %v7189, %v7185
        %v7191 = vmul.f32 1.0, %v7190
        %v7192 = vrcp.pop %v6704
        %v7193 = vmul.f32 %v6704, %v7192
        %v7194 = vsub.f32 1.0, %v7193
        %v7195 = vmul.f32 %v7192, %v7194
        %v7196 = vadd.f32 %v7192, %v7195
        %vm7197 = vweird.f32 %v6704
        %vm7198 = vweird.f32 %v7192
        %vm7199 = vmor %vm7197, %vm7198
        %v7200 = vsel %vm7199, %v7192, %v7196
        %v7201 = vand.u32 2147483647, %v6704
        %vm7202 = vcmp.eq.f32.partialorder %v7201, 8.507059e+37
        %v7203 = vand.u32 %v6704, 2147483648
        %v7204 = vor.u32 1.1754944e-38, %v7203
        %v7205 = vsel %vm7202, %v7204, %v7200
        %v7206 = vmul.f32 1.0, %v7205
        %v7207 = vrcp.pop %v6705
        %v7208 = vmul.f32 %v6705, %v7207
        %v7209 = vsub.f32 1.0, %v7208
        %v7210 = vmul.f32 %v7207, %v7209
        %v7211 = vadd.f32 %v7207, %v7210
        %vm7212 = vweird.f32 %v6705
        %vm7213 = vweird.f32 %v7207
        %vm7214 = vmor %vm7212, %vm7213
        %v7215 = vsel %vm7214, %v7207, %v7211
        %v7216 = vand.u32 2147483647, %v6705
        %vm7217 = vcmp.eq.f32.partialorder %v7216, 8.507059e+37
        %v7218 = vand.u32 %v6705, 2147483648
        %v7219 = vor.u32 1.1754944e-38, %v7218
        %v7220 = vsel %vm7217, %v7219, %v7215
        %v7221 = vmul.f32 1.0, %v7220
        %v7222 = vrcp.pop %v6706
        %v7223 = vmul.f32 %v6706, %v7222
        %v7224 = vsub.f32 1.0, %v7223
        %v7225 = vmul.f32 %v7222, %v7224
        %v7226 = vadd.f32 %v7222, %v7225
        %vm7227 = vweird.f32 %v6706
        %vm7228 = vweird.f32 %v7222
        %vm7229 = vmor %vm7227, %vm7228
        %v7230 = vsel %vm7229, %v7222, %v7226
        %v7231 = vand.u32 2147483647, %v6706
        %vm7232 = vcmp.eq.f32.partialorder %v7231, 8.507059e+37
        %v7233 = vand.u32 %v6706, 2147483648
        %v7234 = vor.u32 1.1754944e-38, %v7233
        %v7235 = vsel %vm7232, %v7234, %v7230
        %v7236 = vmul.f32 1.0, %v7235
        %v7237 = vrcp.pop %v6707
        %v7238 = vmul.f32 %v6707, %v7237
        %v7239 = vsub.f32 1.0, %v7238
        %v7240 = vmul.f32 %v7237, %v7239
        %v7241 = vadd.f32 %v7237, %v7240
        %vm7242 = vweird.f32 %v6707
        %vm7243 = vweird.f32 %v7237
        %vm7244 = vmor %vm7242, %vm7243
        %v7245 = vsel %vm7244, %v7237, %v7241
        %v7246 = vand.u32 2147483647, %v6707
        %vm7247 = vcmp.eq.f32.partialorder %v7246, 8.507059e+37
        %v7248 = vand.u32 %v6707, 2147483648
        %v7249 = vor.u32 1.1754944e-38, %v7248
        %v7250 = vsel %vm7247, %v7249, %v7245
        %v7251 = vmul.f32 1.0, %v7250
        %v7252 = vrcp.pop %v6708
        %v7253 = vmul.f32 %v6708, %v7252
        %v7254 = vsub.f32 1.0, %v7253
        %v7255 = vmul.f32 %v7252, %v7254
        %v7256 = vadd.f32 %v7252, %v7255
        %vm7257 = vweird.f32 %v6708
        %vm7258 = vweird.f32 %v7252
        %vm7259 = vmor %vm7257, %vm7258
        %v7260 = vsel %vm7259, %v7252, %v7256
        %v7261 = vand.u32 2147483647, %v6708
        %vm7262 = vcmp.eq.f32.partialorder %v7261, 8.507059e+37
        %v7263 = vand.u32 %v6708, 2147483648
        %v7264 = vor.u32 1.1754944e-38, %v7263
        %v7265 = vsel %vm7262, %v7264, %v7260
        %v7266 = vmul.f32 1.0, %v7265
        %v7267 = vrcp.pop %v6709
        %v7268 = vmul.f32 %v6709, %v7267
        %v7269 = vsub.f32 1.0, %v7268
        %v7270 = vmul.f32 %v7267, %v7269
        %v7271 = vadd.f32 %v7267, %v7270
        %vm7272 = vweird.f32 %v6709
        %vm7273 = vweird.f32 %v7267
        %vm7274 = vmor %vm7272, %vm7273
        %v7275 = vsel %vm7274, %v7267, %v7271
        %v7276 = vand.u32 2147483647, %v6709
        %vm7277 = vcmp.eq.f32.partialorder %v7276, 8.507059e+37
        %v7278 = vand.u32 %v6709, 2147483648
        %v7279 = vor.u32 1.1754944e-38, %v7278
        %v7280 = vsel %vm7277, %v7279, %v7275
        %v7281 = vmul.f32 1.0, %v7280
        %v7282 = vrcp.pop %v6710
        %v7283 = vmul.f32 %v6710, %v7282
        %v7284 = vsub.f32 1.0, %v7283
        %v7285 = vmul.f32 %v7282, %v7284
        %v7286 = vadd.f32 %v7282, %v7285
        %vm7287 = vweird.f32 %v6710
        %vm7288 = vweird.f32 %v7282
        %vm7289 = vmor %vm7287, %vm7288
        %v7290 = vsel %vm7289, %v7282, %v7286
        %v7291 = vand.u32 2147483647, %v6710
        %vm7292 = vcmp.eq.f32.partialorder %v7291, 8.507059e+37
        %v7293 = vand.u32 %v6710, 2147483648
        %v7294 = vor.u32 1.1754944e-38, %v7293
        %v7295 = vsel %vm7292, %v7294, %v7290
        %v7296 = vmul.f32 1.0, %v7295
        %v7297 = vrcp.pop %v6711
        %v7298 = vmul.f32 %v6711, %v7297
        %v7299 = vsub.f32 1.0, %v7298
        %v7300 = vmul.f32 %v7297, %v7299
        %v7301 = vadd.f32 %v7297, %v7300
        %vm7302 = vweird.f32 %v6711
        %vm7303 = vweird.f32 %v7297
        %vm7304 = vmor %vm7302, %vm7303
        %v7305 = vsel %vm7304, %v7297, %v7301
        %v7306 = vand.u32 2147483647, %v6711
        %vm7307 = vcmp.eq.f32.partialorder %v7306, 8.507059e+37
        %v7308 = vand.u32 %v6711, 2147483648
        %v7309 = vor.u32 1.1754944e-38, %v7308
        %v7310 = vsel %vm7307, %v7309, %v7305
        %v7311 = vmul.f32 1.0, %v7310
        %v7312 = vrcp.pop %v6712
        %v7313 = vmul.f32 %v6712, %v7312
        %v7314 = vsub.f32 1.0, %v7313
        %v7315 = vmul.f32 %v7312, %v7314
        %v7316 = vadd.f32 %v7312, %v7315
        %vm7317 = vweird.f32 %v6712
        %vm7318 = vweird.f32 %v7312
        %vm7319 = vmor %vm7317, %vm7318
        %v7320 = vsel %vm7319, %v7312, %v7316
        %v7321 = vand.u32 2147483647, %v6712
        %vm7322 = vcmp.eq.f32.partialorder %v7321, 8.507059e+37
        %v7323 = vand.u32 %v6712, 2147483648
        %v7324 = vor.u32 1.1754944e-38, %v7323
        %v7325 = vsel %vm7322, %v7324, %v7320
        %v7326 = vmul.f32 1.0, %v7325
        %v7327 = vrcp.pop %v6713
        %v7328 = vmul.f32 %v6713, %v7327
        %v7329 = vsub.f32 1.0, %v7328
        %v7330 = vmul.f32 %v7327, %v7329
        %v7331 = vadd.f32 %v7327, %v7330
        %vm7332 = vweird.f32 %v6713
        %vm7333 = vweird.f32 %v7327
        %vm7334 = vmor %vm7332, %vm7333
        %v7335 = vsel %vm7334, %v7327, %v7331
        %v7336 = vand.u32 2147483647, %v6713
        %vm7337 = vcmp.eq.f32.partialorder %v7336, 8.507059e+37
        %v7338 = vand.u32 %v6713, 2147483648
        %v7339 = vor.u32 1.1754944e-38, %v7338
        %v7340 = vsel %vm7337, %v7339, %v7335
        %v7341 = vmul.f32 1.0, %v7340
        %v7342 = vrcp.pop %v6714
        %v7343 = vmul.f32 %v6714, %v7342
        %v7344 = vsub.f32 1.0, %v7343
        %v7345 = vmul.f32 %v7342, %v7344
        %v7346 = vadd.f32 %v7342, %v7345
        %vm7347 = vweird.f32 %v6714
        %vm7348 = vweird.f32 %v7342
        %vm7349 = vmor %vm7347, %vm7348
        %v7350 = vsel %vm7349, %v7342, %v7346
        %v7351 = vand.u32 2147483647, %v6714
        %vm7352 = vcmp.eq.f32.partialorder %v7351, 8.507059e+37
        %v7353 = vand.u32 %v6714, 2147483648
        %v7354 = vor.u32 1.1754944e-38, %v7353
        %v7355 = vsel %vm7352, %v7354, %v7350
        %v7356 = vmul.f32 1.0, %v7355
        %v7357 = vrcp.pop %v6715
        %v7358 = vmul.f32 %v6715, %v7357
        %v7359 = vsub.f32 1.0, %v7358
        %v7360 = vmul.f32 %v7357, %v7359
        %v7361 = vadd.f32 %v7357, %v7360
        %vm7362 = vweird.f32 %v6715
        %vm7363 = vweird.f32 %v7357
        %vm7364 = vmor %vm7362, %vm7363
        %v7365 = vsel %vm7364, %v7357, %v7361
        %v7366 = vand.u32 2147483647, %v6715
        %vm7367 = vcmp.eq.f32.partialorder %v7366, 8.507059e+37
        %v7368 = vand.u32 %v6715, 2147483648
        %v7369 = vor.u32 1.1754944e-38, %v7368
        %v7370 = vsel %vm7367, %v7369, %v7365
        %v7371 = vmul.f32 1.0, %v7370
        %v7372 = vrcp.pop %v6716
        %v7373 = vmul.f32 %v6716, %v7372
        %v7374 = vsub.f32 1.0, %v7373
        %v7375 = vmul.f32 %v7372, %v7374
        %v7376 = vadd.f32 %v7372, %v7375
        %vm7377 = vweird.f32 %v6716
        %vm7378 = vweird.f32 %v7372
        %vm7379 = vmor %vm7377, %vm7378
        %v7380 = vsel %vm7379, %v7372, %v7376
        %v7381 = vand.u32 2147483647, %v6716
        %vm7382 = vcmp.eq.f32.partialorder %v7381, 8.507059e+37
        %v7383 = vand.u32 %v6716, 2147483648
        %v7384 = vor.u32 1.1754944e-38, %v7383
        %v7385 = vsel %vm7382, %v7384, %v7380
        %v7386 = vmul.f32 1.0, %v7385
        %v7387 = vrcp.pop %v6717
        %v7388 = vmul.f32 %v6717, %v7387
        %v7389 = vsub.f32 1.0, %v7388
        %v7390 = vmul.f32 %v7387, %v7389
        %v7391 = vadd.f32 %v7387, %v7390
        %vm7392 = vweird.f32 %v6717
        %vm7393 = vweird.f32 %v7387
        %vm7394 = vmor %vm7392, %vm7393
        %v7395 = vsel %vm7394, %v7387, %v7391
        %v7396 = vand.u32 2147483647, %v6717
        %vm7397 = vcmp.eq.f32.partialorder %v7396, 8.507059e+37
        %v7398 = vand.u32 %v6717, 2147483648
        %v7399 = vor.u32 1.1754944e-38, %v7398
        %v7400 = vsel %vm7397, %v7399, %v7395
        %v7401 = vmul.f32 1.0, %v7400
        %v7402 = vrcp.pop %v6718
        %v7403 = vmul.f32 %v6718, %v7402
        %v7404 = vsub.f32 1.0, %v7403
        %v7405 = vmul.f32 %v7402, %v7404
        %v7406 = vadd.f32 %v7402, %v7405
        %vm7407 = vweird.f32 %v6718
        %vm7408 = vweird.f32 %v7402
        %vm7409 = vmor %vm7407, %vm7408
        %v7410 = vsel %vm7409, %v7402, %v7406
        %v7411 = vand.u32 2147483647, %v6718
        %vm7412 = vcmp.eq.f32.partialorder %v7411, 8.507059e+37
        %v7413 = vand.u32 %v6718, 2147483648
        %v7414 = vor.u32 1.1754944e-38, %v7413
        %v7415 = vsel %vm7412, %v7414, %v7410
        %v7416 = vmul.f32 1.0, %v7415
        %v7417 = vrcp.pop %v6719
        %v7418 = vmul.f32 %v6719, %v7417
        %v7419 = vsub.f32 1.0, %v7418
        %v7420 = vmul.f32 %v7417, %v7419
        %v7421 = vadd.f32 %v7417, %v7420
        %vm7422 = vweird.f32 %v6719
        %vm7423 = vweird.f32 %v7417
        %vm7424 = vmor %vm7422, %vm7423
        %v7425 = vsel %vm7424, %v7417, %v7421
        %v7426 = vand.u32 2147483647, %v6719
        %vm7427 = vcmp.eq.f32.partialorder %v7426, 8.507059e+37
        %v7428 = vand.u32 %v6719, 2147483648
        %v7429 = vor.u32 1.1754944e-38, %v7428
        %v7430 = vsel %vm7427, %v7429, %v7425
        %v7431 = vmul.f32 1.0, %v7430
        %v7432 = vrcp.pop %v6720
        %v7433 = vmul.f32 %v6720, %v7432
        %v7434 = vsub.f32 1.0, %v7433
        %v7435 = vmul.f32 %v7432, %v7434
        %v7436 = vadd.f32 %v7432, %v7435
        %vm7437 = vweird.f32 %v6720
        %vm7438 = vweird.f32 %v7432
        %vm7439 = vmor %vm7437, %vm7438
        %v7440 = vsel %vm7439, %v7432, %v7436
        %v7441 = vand.u32 2147483647, %v6720
        %vm7442 = vcmp.eq.f32.partialorder %v7441, 8.507059e+37
        %v7443 = vand.u32 %v6720, 2147483648
        %v7444 = vor.u32 1.1754944e-38, %v7443
        %v7445 = vsel %vm7442, %v7444, %v7440
        %v7446 = vmul.f32 1.0, %v7445
        %v7447 = vrcp.pop %v6721
        %v7448 = vmul.f32 %v6721, %v7447
        %v7449 = vsub.f32 1.0, %v7448
        %v7450 = vmul.f32 %v7447, %v7449
        %v7451 = vadd.f32 %v7447, %v7450
        %vm7452 = vweird.f32 %v6721
        %vm7453 = vweird.f32 %v7447
        %vm7454 = vmor %vm7452, %vm7453
        %v7455 = vsel %vm7454, %v7447, %v7451
        %v7456 = vand.u32 2147483647, %v6721
        %vm7457 = vcmp.eq.f32.partialorder %v7456, 8.507059e+37
        %v7458 = vand.u32 %v6721, 2147483648
        %v7459 = vor.u32 1.1754944e-38, %v7458
        %v7460 = vsel %vm7457, %v7459, %v7455
        %v7461 = vmul.f32 1.0, %v7460
        %v7462 = vrcp.pop %v6722
        %v7463 = vmul.f32 %v6722, %v7462
        %v7464 = vsub.f32 1.0, %v7463
        %v7465 = vmul.f32 %v7462, %v7464
        %v7466 = vadd.f32 %v7462, %v7465
        %vm7467 = vweird.f32 %v6722
        %vm7468 = vweird.f32 %v7462
        %vm7469 = vmor %vm7467, %vm7468
        %v7470 = vsel %vm7469, %v7462, %v7466
        %v7471 = vand.u32 2147483647, %v6722
        %vm7472 = vcmp.eq.f32.partialorder %v7471, 8.507059e+37
        %v7473 = vand.u32 %v6722, 2147483648
        %v7474 = vor.u32 1.1754944e-38, %v7473
        %v7475 = vsel %vm7472, %v7474, %v7470
        %v7476 = vmul.f32 1.0, %v7475
        %v7477 = vrcp.pop %v6723
        %v7478 = vmul.f32 %v6723, %v7477
        %v7479 = vsub.f32 1.0, %v7478
        %v7480 = vmul.f32 %v7477, %v7479
        %v7481 = vadd.f32 %v7477, %v7480
        %vm7482 = vweird.f32 %v6723
        %vm7483 = vweird.f32 %v7477
        %vm7484 = vmor %vm7482, %vm7483
        %v7485 = vsel %vm7484, %v7477, %v7481
        %v7486 = vand.u32 2147483647, %v6723
        %vm7487 = vcmp.eq.f32.partialorder %v7486, 8.507059e+37
        %v7488 = vand.u32 %v6723, 2147483648
        %v7489 = vor.u32 1.1754944e-38, %v7488
        %v7490 = vsel %vm7487, %v7489, %v7485
        %v7491 = vmul.f32 1.0, %v7490
        %v7492 = vrcp.pop %v6724
        %v7493 = vmul.f32 %v6724, %v7492
        %v7494 = vsub.f32 1.0, %v7493
        %v7495 = vmul.f32 %v7492, %v7494
        %v7496 = vadd.f32 %v7492, %v7495
        %vm7497 = vweird.f32 %v6724
        %vm7498 = vweird.f32 %v7492
        %vm7499 = vmor %vm7497, %vm7498
        %v7500 = vsel %vm7499, %v7492, %v7496
        %v7501 = vand.u32 2147483647, %v6724
        %vm7502 = vcmp.eq.f32.partialorder %v7501, 8.507059e+37
        %v7503 = vand.u32 %v6724, 2147483648
        %v7504 = vor.u32 1.1754944e-38, %v7503
        %v7505 = vsel %vm7502, %v7504, %v7500
        %v7506 = vmul.f32 1.0, %v7505
        %v7507 = vrcp.pop %v6725
        %v7508 = vmul.f32 %v6725, %v7507
        %v7509 = vsub.f32 1.0, %v7508
        %v7510 = vmul.f32 %v7507, %v7509
        %v7511 = vadd.f32 %v7507, %v7510
        %vm7512 = vweird.f32 %v6725
        %vm7513 = vweird.f32 %v7507
        %vm7514 = vmor %vm7512, %vm7513
        %v7515 = vsel %vm7514, %v7507, %v7511
        %v7516 = vand.u32 2147483647, %v6725
        %vm7517 = vcmp.eq.f32.partialorder %v7516, 8.507059e+37
        %v7518 = vand.u32 %v6725, 2147483648
        %v7519 = vor.u32 1.1754944e-38, %v7518
        %v7520 = vsel %vm7517, %v7519, %v7515
        %v7521 = vmul.f32 1.0, %v7520
        %v7522 = vrcp.pop %v6726
        %v7523 = vmul.f32 %v6726, %v7522
        %v7524 = vsub.f32 1.0, %v7523
        %v7525 = vmul.f32 %v7522, %v7524
        %v7526 = vadd.f32 %v7522, %v7525
        %vm7527 = vweird.f32 %v6726
        %vm7528 = vweird.f32 %v7522
        %vm7529 = vmor %vm7527, %vm7528
        %v7530 = vsel %vm7529, %v7522, %v7526
        %v7531 = vand.u32 2147483647, %v6726
        %vm7532 = vcmp.eq.f32.partialorder %v7531, 8.507059e+37
        %v7533 = vand.u32 %v6726, 2147483648
        %v7534 = vor.u32 1.1754944e-38, %v7533
        %v7535 = vsel %vm7532, %v7534, %v7530
        %v7536 = vmul.f32 1.0, %v7535
        %v7537 = vrcp.pop %v6727
        %v7538 = vmul.f32 %v6727, %v7537
        %v7539 = vsub.f32 1.0, %v7538
        %v7540 = vmul.f32 %v7537, %v7539
        %v7541 = vadd.f32 %v7537, %v7540
        %vm7542 = vweird.f32 %v6727
        %vm7543 = vweird.f32 %v7537
        %vm7544 = vmor %vm7542, %vm7543
        %v7545 = vsel %vm7544, %v7537, %v7541
        %v7546 = vand.u32 2147483647, %v6727
        %vm7547 = vcmp.eq.f32.partialorder %v7546, 8.507059e+37
        %v7548 = vand.u32 %v6727, 2147483648
        %v7549 = vor.u32 1.1754944e-38, %v7548
        %v7550 = vsel %vm7547, %v7549, %v7545
        %v7551 = vmul.f32 1.0, %v7550
        %v7552 = vrcp.pop %v6728
        %v7553 = vmul.f32 %v6728, %v7552
        %v7554 = vsub.f32 1.0, %v7553
        %v7555 = vmul.f32 %v7552, %v7554
        %v7556 = vadd.f32 %v7552, %v7555
        %vm7557 = vweird.f32 %v6728
        %vm7558 = vweird.f32 %v7552
        %vm7559 = vmor %vm7557, %vm7558
        %v7560 = vsel %vm7559, %v7552, %v7556
        %v7561 = vand.u32 2147483647, %v6728
        %vm7562 = vcmp.eq.f32.partialorder %v7561, 8.507059e+37
        %v7563 = vand.u32 %v6728, 2147483648
        %v7564 = vor.u32 1.1754944e-38, %v7563
        %v7565 = vsel %vm7562, %v7564, %v7560
        %v7566 = vmul.f32 1.0, %v7565
        %v7567 = vrcp.pop %v6729
        %v7568 = vmul.f32 %v6729, %v7567
        %v7569 = vsub.f32 1.0, %v7568
        %v7570 = vmul.f32 %v7567, %v7569
        %v7571 = vadd.f32 %v7567, %v7570
        %vm7572 = vweird.f32 %v6729
        %vm7573 = vweird.f32 %v7567
        %vm7574 = vmor %vm7572, %vm7573
        %v7575 = vsel %vm7574, %v7567, %v7571
        %v7576 = vand.u32 2147483647, %v6729
        %vm7577 = vcmp.eq.f32.partialorder %v7576, 8.507059e+37
        %v7578 = vand.u32 %v6729, 2147483648
        %v7579 = vor.u32 1.1754944e-38, %v7578
        %v7580 = vsel %vm7577, %v7579, %v7575
        %v7581 = vmul.f32 1.0, %v7580
        %v7582 = vrcp.pop %v6730
        %v7583 = vmul.f32 %v6730, %v7582
        %v7584 = vsub.f32 1.0, %v7583
        %v7585 = vmul.f32 %v7582, %v7584
        %v7586 = vadd.f32 %v7582, %v7585
        %vm7587 = vweird.f32 %v6730
        %vm7588 = vweird.f32 %v7582
        %vm7589 = vmor %vm7587, %vm7588
        %v7590 = vsel %vm7589, %v7582, %v7586
        %v7591 = vand.u32 2147483647, %v6730
        %vm7592 = vcmp.eq.f32.partialorder %v7591, 8.507059e+37
        %v7593 = vand.u32 %v6730, 2147483648
        %v7594 = vor.u32 1.1754944e-38, %v7593
        %v7595 = vsel %vm7592, %v7594, %v7590
        %v7596 = vmul.f32 1.0, %v7595
        %v7597 = vrcp.pop %v6731
        %v7598 = vmul.f32 %v6731, %v7597
        %v7599 = vsub.f32 1.0, %v7598
        %v7600 = vmul.f32 %v7597, %v7599
        %v7601 = vadd.f32 %v7597, %v7600
        %vm7602 = vweird.f32 %v6731
        %vm7603 = vweird.f32 %v7597
        %vm7604 = vmor %vm7602, %vm7603
        %v7605 = vsel %vm7604, %v7597, %v7601
        %v7606 = vand.u32 2147483647, %v6731
        %vm7607 = vcmp.eq.f32.partialorder %v7606, 8.507059e+37
        %v7608 = vand.u32 %v6731, 2147483648
        %v7609 = vor.u32 1.1754944e-38, %v7608
        %v7610 = vsel %vm7607, %v7609, %v7605
        %v7611 = vmul.f32 1.0, %v7610
        %v7612 = vrcp.pop %v6732
        %v7613 = vmul.f32 %v6732, %v7612
        %v7614 = vsub.f32 1.0, %v7613
        %v7615 = vmul.f32 %v7612, %v7614
        %v7616 = vadd.f32 %v7612, %v7615
        %vm7617 = vweird.f32 %v6732
        %vm7618 = vweird.f32 %v7612
        %vm7619 = vmor %vm7617, %vm7618
        %v7620 = vsel %vm7619, %v7612, %v7616
        %v7621 = vand.u32 2147483647, %v6732
        %vm7622 = vcmp.eq.f32.partialorder %v7621, 8.507059e+37
        %v7623 = vand.u32 %v6732, 2147483648
        %v7624 = vor.u32 1.1754944e-38, %v7623
        %v7625 = vsel %vm7622, %v7624, %v7620
        %v7626 = vmul.f32 1.0, %v7625
        %v7627 = vrcp.pop %v6733
        %v7628 = vmul.f32 %v6733, %v7627
        %v7629 = vsub.f32 1.0, %v7628
        %v7630 = vmul.f32 %v7627, %v7629
        %v7631 = vadd.f32 %v7627, %v7630
        %vm7632 = vweird.f32 %v6733
        %vm7633 = vweird.f32 %v7627
        %vm7634 = vmor %vm7632, %vm7633
        %v7635 = vsel %vm7634, %v7627, %v7631
        %v7636 = vand.u32 2147483647, %v6733
        %vm7637 = vcmp.eq.f32.partialorder %v7636, 8.507059e+37
        %v7638 = vand.u32 %v6733, 2147483648
        %v7639 = vor.u32 1.1754944e-38, %v7638
        %v7640 = vsel %vm7637, %v7639, %v7635
        %v7641 = vmul.f32 1.0, %v7640
        %v7642 = vrcp.pop %v6734
        %v7643 = vmul.f32 %v6734, %v7642
        %v7644 = vsub.f32 1.0, %v7643
        %v7645 = vmul.f32 %v7642, %v7644
        %v7646 = vadd.f32 %v7642, %v7645
        %vm7647 = vweird.f32 %v6734
        %vm7648 = vweird.f32 %v7642
        %vm7649 = vmor %vm7647, %vm7648
        %v7650 = vsel %vm7649, %v7642, %v7646
        %v7651 = vand.u32 2147483647, %v6734
        %vm7652 = vcmp.eq.f32.partialorder %v7651, 8.507059e+37
        %v7653 = vand.u32 %v6734, 2147483648
        %v7654 = vor.u32 1.1754944e-38, %v7653
        %v7655 = vsel %vm7652, %v7654, %v7650
        %v7656 = vmul.f32 1.0, %v7655
        %v7657 = vrcp.pop %v6735
        %v7658 = vmul.f32 %v6735, %v7657
        %v7659 = vsub.f32 1.0, %v7658
        %v7660 = vmul.f32 %v7657, %v7659
        %v7661 = vadd.f32 %v7657, %v7660
        %vm7662 = vweird.f32 %v6735
        %vm7663 = vweird.f32 %v7657
        %vm7664 = vmor %vm7662, %vm7663
        %v7665 = vsel %vm7664, %v7657, %v7661
        %v7666 = vand.u32 2147483647, %v6735
        %vm7667 = vcmp.eq.f32.partialorder %v7666, 8.507059e+37
        %v7668 = vand.u32 %v6735, 2147483648
        %v7669 = vor.u32 1.1754944e-38, %v7668
        %v7670 = vsel %vm7667, %v7669, %v7665
        %v7671 = vmul.f32 1.0, %v7670
        %v7672 = vrcp.pop %v6736
        %v7673 = vmul.f32 %v6736, %v7672
        %v7674 = vsub.f32 1.0, %v7673
        %v7675 = vmul.f32 %v7672, %v7674
        %v7676 = vadd.f32 %v7672, %v7675
        %vm7677 = vweird.f32 %v6736
        %vm7678 = vweird.f32 %v7672
        %vm7679 = vmor %vm7677, %vm7678
        %v7680 = vsel %vm7679, %v7672, %v7676
        %v7681 = vand.u32 2147483647, %v6736
        %vm7682 = vcmp.eq.f32.partialorder %v7681, 8.507059e+37
        %v7683 = vand.u32 %v6736, 2147483648
        %v7684 = vor.u32 1.1754944e-38, %v7683
        %v7685 = vsel %vm7682, %v7684, %v7680
        %v7686 = vmul.f32 1.0, %v7685
        %v7687 = vrcp.pop %v6737
        %v7688 = vmul.f32 %v6737, %v7687
        %v7689 = vsub.f32 1.0, %v7688
        %v7690 = vmul.f32 %v7687, %v7689
        %v7691 = vadd.f32 %v7687, %v7690
        %vm7692 = vweird.f32 %v6737
        %vm7693 = vweird.f32 %v7687
        %vm7694 = vmor %vm7692, %vm7693
        %v7695 = vsel %vm7694, %v7687, %v7691
        %v7696 = vand.u32 2147483647, %v6737
        %vm7697 = vcmp.eq.f32.partialorder %v7696, 8.507059e+37
        %v7698 = vand.u32 %v6737, 2147483648
        %v7699 = vor.u32 1.1754944e-38, %v7698
        %v7700 = vsel %vm7697, %v7699, %v7695
        %v7701 = vmul.f32 1.0, %v7700
        %v7702 = vrcp.pop %v6738
        %v7703 = vmul.f32 %v6738, %v7702
        %v7704 = vsub.f32 1.0, %v7703
        %v7705 = vmul.f32 %v7702, %v7704
        %v7706 = vadd.f32 %v7702, %v7705
        %vm7707 = vweird.f32 %v6738
        %vm7708 = vweird.f32 %v7702
        %vm7709 = vmor %vm7707, %vm7708
        %v7710 = vsel %vm7709, %v7702, %v7706
        %v7711 = vand.u32 2147483647, %v6738
        %vm7712 = vcmp.eq.f32.partialorder %v7711, 8.507059e+37
        %v7713 = vand.u32 %v6738, 2147483648
        %v7714 = vor.u32 1.1754944e-38, %v7713
        %v7715 = vsel %vm7712, %v7714, %v7710
        %v7716 = vmul.f32 1.0, %v7715
        %v7717 = vrcp.pop %v6739
        %v7718 = vmul.f32 %v6739, %v7717
        %v7719 = vsub.f32 1.0, %v7718
        %v7720 = vmul.f32 %v7717, %v7719
        %v7721 = vadd.f32 %v7717, %v7720
        %vm7722 = vweird.f32 %v6739
        %vm7723 = vweird.f32 %v7717
        %vm7724 = vmor %vm7722, %vm7723
        %v7725 = vsel %vm7724, %v7717, %v7721
        %v7726 = vand.u32 2147483647, %v6739
        %vm7727 = vcmp.eq.f32.partialorder %v7726, 8.507059e+37
        %v7728 = vand.u32 %v6739, 2147483648
        %v7729 = vor.u32 1.1754944e-38, %v7728
        %v7730 = vsel %vm7727, %v7729, %v7725
        %v7731 = vmul.f32 1.0, %v7730
        %v7732 = vrcp.pop %v6740
        %v7733 = vmul.f32 %v6740, %v7732
        %v7734 = vsub.f32 1.0, %v7733
        %v7735 = vmul.f32 %v7732, %v7734
        %v7736 = vadd.f32 %v7732, %v7735
        %vm7737 = vweird.f32 %v6740
        %vm7738 = vweird.f32 %v7732
        %vm7739 = vmor %vm7737, %vm7738
        %v7740 = vsel %vm7739, %v7732, %v7736
        %v7741 = vand.u32 2147483647, %v6740
        %vm7742 = vcmp.eq.f32.partialorder %v7741, 8.507059e+37
        %v7743 = vand.u32 %v6740, 2147483648
        %v7744 = vor.u32 1.1754944e-38, %v7743
        %v7745 = vsel %vm7742, %v7744, %v7740
        %v7746 = vmul.f32 1.0, %v7745
        %v7747 = vrcp.pop %v6741
        %v7748 = vmul.f32 %v6741, %v7747
        %v7749 = vsub.f32 1.0, %v7748
        %v7750 = vmul.f32 %v7747, %v7749
        %v7751 = vadd.f32 %v7747, %v7750
        %vm7752 = vweird.f32 %v6741
        %vm7753 = vweird.f32 %v7747
        %vm7754 = vmor %vm7752, %vm7753
        %v7755 = vsel %vm7754, %v7747, %v7751
        %v7756 = vand.u32 2147483647, %v6741
        %vm7757 = vcmp.eq.f32.partialorder %v7756, 8.507059e+37
        %v7758 = vand.u32 %v6741, 2147483648
        %v7759 = vor.u32 1.1754944e-38, %v7758
        %v7760 = vsel %vm7757, %v7759, %v7755
        %v7761 = vmul.f32 1.0, %v7760
        %v7762 = vrcp.pop %v6742
        %v7763 = vmul.f32 %v6742, %v7762
        %v7764 = vsub.f32 1.0, %v7763
        %v7765 = vmul.f32 %v7762, %v7764
        %v7766 = vadd.f32 %v7762, %v7765
        %vm7767 = vweird.f32 %v6742
        %vm7768 = vweird.f32 %v7762
        %vm7769 = vmor %vm7767, %vm7768
        %v7770 = vsel %vm7769, %v7762, %v7766
        %v7771 = vand.u32 2147483647, %v6742
        %vm7772 = vcmp.eq.f32.partialorder %v7771, 8.507059e+37
        %v7773 = vand.u32 %v6742, 2147483648
        %v7774 = vor.u32 1.1754944e-38, %v7773
        %v7775 = vsel %vm7772, %v7774, %v7770
        %v7776 = vmul.f32 1.0, %v7775
        %v7777 = vrcp.pop %v6743
        %v7778 = vmul.f32 %v6743, %v7777
        %v7779 = vsub.f32 1.0, %v7778
        %v7780 = vmul.f32 %v7777, %v7779
        %v7781 = vadd.f32 %v7777, %v7780
        %vm7782 = vweird.f32 %v6743
        %vm7783 = vweird.f32 %v7777
        %vm7784 = vmor %vm7782, %vm7783
        %v7785 = vsel %vm7784, %v7777, %v7781
        %v7786 = vand.u32 2147483647, %v6743
        %vm7787 = vcmp.eq.f32.partialorder %v7786, 8.507059e+37
        %v7788 = vand.u32 %v6743, 2147483648
        %v7789 = vor.u32 1.1754944e-38, %v7788
        %v7790 = vsel %vm7787, %v7789, %v7785
        %v7791 = vmul.f32 1.0, %v7790
        %v7792 = vrcp.pop %v6744
        %v7793 = vmul.f32 %v6744, %v7792
        %v7794 = vsub.f32 1.0, %v7793
        %v7795 = vmul.f32 %v7792, %v7794
        %v7796 = vadd.f32 %v7792, %v7795
        %vm7797 = vweird.f32 %v6744
        %vm7798 = vweird.f32 %v7792
        %vm7799 = vmor %vm7797, %vm7798
        %v7800 = vsel %vm7799, %v7792, %v7796
        %v7801 = vand.u32 2147483647, %v6744
        %vm7802 = vcmp.eq.f32.partialorder %v7801, 8.507059e+37
        %v7803 = vand.u32 %v6744, 2147483648
        %v7804 = vor.u32 1.1754944e-38, %v7803
        %v7805 = vsel %vm7802, %v7804, %v7800
        %v7806 = vmul.f32 1.0, %v7805
        %v7807 = vrcp.pop %v6745
        %v7808 = vmul.f32 %v6745, %v7807
        %v7809 = vsub.f32 1.0, %v7808
        %v7810 = vmul.f32 %v7807, %v7809
        %v7811 = vadd.f32 %v7807, %v7810
        %vm7812 = vweird.f32 %v6745
        %vm7813 = vweird.f32 %v7807
        %vm7814 = vmor %vm7812, %vm7813
        %v7815 = vsel %vm7814, %v7807, %v7811
        %v7816 = vand.u32 2147483647, %v6745
        %vm7817 = vcmp.eq.f32.partialorder %v7816, 8.507059e+37
        %v7818 = vand.u32 %v6745, 2147483648
        %v7819 = vor.u32 1.1754944e-38, %v7818
        %v7820 = vsel %vm7817, %v7819, %v7815
        %v7821 = vmul.f32 1.0, %v7820
        %v7822 = vrcp.pop %v6746
        %v7823 = vmul.f32 %v6746, %v7822
        %v7824 = vsub.f32 1.0, %v7823
        %v7825 = vmul.f32 %v7822, %v7824
        %v7826 = vadd.f32 %v7822, %v7825
        %vm7827 = vweird.f32 %v6746
        %vm7828 = vweird.f32 %v7822
        %vm7829 = vmor %vm7827, %vm7828
        %v7830 = vsel %vm7829, %v7822, %v7826
        %v7831 = vand.u32 2147483647, %v6746
        %vm7832 = vcmp.eq.f32.partialorder %v7831, 8.507059e+37
        %v7833 = vand.u32 %v6746, 2147483648
        %v7834 = vor.u32 1.1754944e-38, %v7833
        %v7835 = vsel %vm7832, %v7834, %v7830
        %v7836 = vmul.f32 1.0, %v7835
        %v7837 = vrcp.pop %v6747
        %v7838 = vmul.f32 %v6747, %v7837
        %v7839 = vsub.f32 1.0, %v7838
        %v7840 = vmul.f32 %v7837, %v7839
        %v7841 = vadd.f32 %v7837, %v7840
        %vm7842 = vweird.f32 %v6747
        %vm7843 = vweird.f32 %v7837
        %vm7844 = vmor %vm7842, %vm7843
        %v7845 = vsel %vm7844, %v7837, %v7841
        %v7846 = vand.u32 2147483647, %v6747
        %vm7847 = vcmp.eq.f32.partialorder %v7846, 8.507059e+37
        %v7848 = vand.u32 %v6747, 2147483648
        %v7849 = vor.u32 1.1754944e-38, %v7848
        %v7850 = vsel %vm7847, %v7849, %v7845
        %v7851 = vmul.f32 1.0, %v7850
        %v7852 = vrcp.pop %v6748
        %v7853 = vmul.f32 %v6748, %v7852
        %v7854 = vsub.f32 1.0, %v7853
        %v7855 = vmul.f32 %v7852, %v7854
        %v7856 = vadd.f32 %v7852, %v7855
        %vm7857 = vweird.f32 %v6748
        %vm7858 = vweird.f32 %v7852
        %vm7859 = vmor %vm7857, %vm7858
        %v7860 = vsel %vm7859, %v7852, %v7856
        %v7861 = vand.u32 2147483647, %v6748
        %vm7862 = vcmp.eq.f32.partialorder %v7861, 8.507059e+37
        %v7863 = vand.u32 %v6748, 2147483648
        %v7864 = vor.u32 1.1754944e-38, %v7863
        %v7865 = vsel %vm7862, %v7864, %v7860
        %v7866 = vmul.f32 1.0, %v7865
        %v7867 = vrcp.pop %v6749
        %v7868 = vmul.f32 %v6749, %v7867
        %v7869 = vsub.f32 1.0, %v7868
        %v7870 = vmul.f32 %v7867, %v7869
        %v7871 = vadd.f32 %v7867, %v7870
        %vm7872 = vweird.f32 %v6749
        %vm7873 = vweird.f32 %v7867
        %vm7874 = vmor %vm7872, %vm7873
        %v7875 = vsel %vm7874, %v7867, %v7871
        %v7876 = vand.u32 2147483647, %v6749
        %vm7877 = vcmp.eq.f32.partialorder %v7876, 8.507059e+37
        %v7878 = vand.u32 %v6749, 2147483648
        %v7879 = vor.u32 1.1754944e-38, %v7878
        %v7880 = vsel %vm7877, %v7879, %v7875
        %v7881 = vmul.f32 1.0, %v7880
        %v7882 = vrcp.pop %v6750
        %v7883 = vmul.f32 %v6750, %v7882
        %v7884 = vsub.f32 1.0, %v7883
        %v7885 = vmul.f32 %v7882, %v7884
        %v7886 = vadd.f32 %v7882, %v7885
        %vm7887 = vweird.f32 %v6750
        %vm7888 = vweird.f32 %v7882
        %vm7889 = vmor %vm7887, %vm7888
        %v7890 = vsel %vm7889, %v7882, %v7886
        %v7891 = vand.u32 2147483647, %v6750
        %vm7892 = vcmp.eq.f32.partialorder %v7891, 8.507059e+37
        %v7893 = vand.u32 %v6750, 2147483648
        %v7894 = vor.u32 1.1754944e-38, %v7893
        %v7895 = vsel %vm7892, %v7894, %v7890
        %v7896 = vmul.f32 1.0, %v7895
        %v7897 = vrcp.pop %v6751
        %v7898 = vmul.f32 %v6751, %v7897
        %v7899 = vsub.f32 1.0, %v7898
        %v7900 = vmul.f32 %v7897, %v7899
        %v7901 = vadd.f32 %v7897, %v7900
        %vm7902 = vweird.f32 %v6751
        %vm7903 = vweird.f32 %v7897
        %vm7904 = vmor %vm7902, %vm7903
        %v7905 = vsel %vm7904, %v7897, %v7901
        %v7906 = vand.u32 2147483647, %v6751
        %vm7907 = vcmp.eq.f32.partialorder %v7906, 8.507059e+37
        %v7908 = vand.u32 %v6751, 2147483648
        %v7909 = vor.u32 1.1754944e-38, %v7908
        %v7910 = vsel %vm7907, %v7909, %v7905
        %v7911 = vmul.f32 1.0, %v7910
        %v7912 = vrcp.pop %v6752
        %v7913 = vmul.f32 %v6752, %v7912
        %v7914 = vsub.f32 1.0, %v7913
        %v7915 = vmul.f32 %v7912, %v7914
        %v7916 = vadd.f32 %v7912, %v7915
        %vm7917 = vweird.f32 %v6752
        %vm7918 = vweird.f32 %v7912
        %vm7919 = vmor %vm7917, %vm7918
        %v7920 = vsel %vm7919, %v7912, %v7916
        %v7921 = vand.u32 2147483647, %v6752
        %vm7922 = vcmp.eq.f32.partialorder %v7921, 8.507059e+37
        %v7923 = vand.u32 %v6752, 2147483648
        %v7924 = vor.u32 1.1754944e-38, %v7923
        %v7925 = vsel %vm7922, %v7924, %v7920
        %v7926 = vmul.f32 1.0, %v7925
        %v7927 = vrcp.pop %v6753
        %v7928 = vmul.f32 %v6753, %v7927
        %v7929 = vsub.f32 1.0, %v7928
        %v7930 = vmul.f32 %v7927, %v7929
        %v7931 = vadd.f32 %v7927, %v7930
        %vm7932 = vweird.f32 %v6753
        %vm7933 = vweird.f32 %v7927
        %vm7934 = vmor %vm7932, %vm7933
        %v7935 = vsel %vm7934, %v7927, %v7931
        %v7936 = vand.u32 2147483647, %v6753
        %vm7937 = vcmp.eq.f32.partialorder %v7936, 8.507059e+37
        %v7938 = vand.u32 %v6753, 2147483648
        %v7939 = vor.u32 1.1754944e-38, %v7938
        %v7940 = vsel %vm7937, %v7939, %v7935
        %v7941 = vmul.f32 1.0, %v7940
        %v7942 = vrcp.pop %v6754
        %v7943 = vmul.f32 %v6754, %v7942
        %v7944 = vsub.f32 1.0, %v7943
        %v7945 = vmul.f32 %v7942, %v7944
        %v7946 = vadd.f32 %v7942, %v7945
        %vm7947 = vweird.f32 %v6754
        %vm7948 = vweird.f32 %v7942
        %vm7949 = vmor %vm7947, %vm7948
        %v7950 = vsel %vm7949, %v7942, %v7946
        %v7951 = vand.u32 2147483647, %v6754
        %vm7952 = vcmp.eq.f32.partialorder %v7951, 8.507059e+37
        %v7953 = vand.u32 %v6754, 2147483648
        %v7954 = vor.u32 1.1754944e-38, %v7953
        %v7955 = vsel %vm7952, %v7954, %v7950
        %v7956 = vmul.f32 1.0, %v7955
        %v7957 = vrcp.pop %v6755
        %v7958 = vmul.f32 %v6755, %v7957
        %v7959 = vsub.f32 1.0, %v7958
        %v7960 = vmul.f32 %v7957, %v7959
        %v7961 = vadd.f32 %v7957, %v7960
        %vm7962 = vweird.f32 %v6755
        %vm7963 = vweird.f32 %v7957
        %vm7964 = vmor %vm7962, %vm7963
        %v7965 = vsel %vm7964, %v7957, %v7961
        %v7966 = vand.u32 2147483647, %v6755
        %vm7967 = vcmp.eq.f32.partialorder %v7966, 8.507059e+37
        %v7968 = vand.u32 %v6755, 2147483648
        %v7969 = vor.u32 1.1754944e-38, %v7968
        %v7970 = vsel %vm7967, %v7969, %v7965
        %v7971 = vmul.f32 1.0, %v7970
        %v7972 = vrcp.pop %v6756
        %v7973 = vmul.f32 %v6756, %v7972
        %v7974 = vsub.f32 1.0, %v7973
        %v7975 = vmul.f32 %v7972, %v7974
        %v7976 = vadd.f32 %v7972, %v7975
        %vm7977 = vweird.f32 %v6756
        %vm7978 = vweird.f32 %v7972
        %vm7979 = vmor %vm7977, %vm7978
        %v7980 = vsel %vm7979, %v7972, %v7976
        %v7981 = vand.u32 2147483647, %v6756
        %vm7982 = vcmp.eq.f32.partialorder %v7981, 8.507059e+37
        %v7983 = vand.u32 %v6756, 2147483648
        %v7984 = vor.u32 1.1754944e-38, %v7983
        %v7985 = vsel %vm7982, %v7984, %v7980
        %v7986 = vmul.f32 1.0, %v7985
        %v7987 = vrcp.pop %v6757
        %v7988 = vmul.f32 %v6757, %v7987
        %v7989 = vsub.f32 1.0, %v7988
        %v7990 = vmul.f32 %v7987, %v7989
        %v7991 = vadd.f32 %v7987, %v7990
        %vm7992 = vweird.f32 %v6757
        %vm7993 = vweird.f32 %v7987
        %vm7994 = vmor %vm7992, %vm7993
        %v7995 = vsel %vm7994, %v7987, %v7991
        %v7996 = vand.u32 2147483647, %v6757
        %vm7997 = vcmp.eq.f32.partialorder %v7996, 8.507059e+37
        %v7998 = vand.u32 %v6757, 2147483648
        %v7999 = vor.u32 1.1754944e-38, %v7998
        %v8000 = vsel %vm7997, %v7999, %v7995
        %v8001 = vmul.f32 1.0, %v8000
        %v8002 = vrcp.pop %v6758
        %v8003 = vmul.f32 %v6758, %v8002
        %v8004 = vsub.f32 1.0, %v8003
        %v8005 = vmul.f32 %v8002, %v8004
        %v8006 = vadd.f32 %v8002, %v8005
        %vm8007 = vweird.f32 %v6758
        %vm8008 = vweird.f32 %v8002
        %vm8009 = vmor %vm8007, %vm8008
        %v8010 = vsel %vm8009, %v8002, %v8006
        %v8011 = vand.u32 2147483647, %v6758
        %vm8012 = vcmp.eq.f32.partialorder %v8011, 8.507059e+37
        %v8013 = vand.u32 %v6758, 2147483648
        %v8014 = vor.u32 1.1754944e-38, %v8013
        %v8015 = vsel %vm8012, %v8014, %v8010
        %v8016 = vmul.f32 1.0, %v8015
        %v8017 = vrcp.pop %v6759
        %v8018 = vmul.f32 %v6759, %v8017
        %v8019 = vsub.f32 1.0, %v8018
        %v8020 = vmul.f32 %v8017, %v8019
        %v8021 = vadd.f32 %v8017, %v8020
        %vm8022 = vweird.f32 %v6759
        %vm8023 = vweird.f32 %v8017
        %vm8024 = vmor %vm8022, %vm8023
        %v8025 = vsel %vm8024, %v8017, %v8021
        %v8026 = vand.u32 2147483647, %v6759
        %vm8027 = vcmp.eq.f32.partialorder %v8026, 8.507059e+37
        %v8028 = vand.u32 %v6759, 2147483648
        %v8029 = vor.u32 1.1754944e-38, %v8028
        %v8030 = vsel %vm8027, %v8029, %v8025
        %v8031 = vmul.f32 1.0, %v8030
        %v8032 = vrcp.pop %v6760
        %v8033 = vmul.f32 %v6760, %v8032
        %v8034 = vsub.f32 1.0, %v8033
        %v8035 = vmul.f32 %v8032, %v8034
        %v8036 = vadd.f32 %v8032, %v8035
        %vm8037 = vweird.f32 %v6760
        %vm8038 = vweird.f32 %v8032
        %vm8039 = vmor %vm8037, %vm8038
        %v8040 = vsel %vm8039, %v8032, %v8036
        %v8041 = vand.u32 2147483647, %v6760
        %vm8042 = vcmp.eq.f32.partialorder %v8041, 8.507059e+37
        %v8043 = vand.u32 %v6760, 2147483648
        %v8044 = vor.u32 1.1754944e-38, %v8043
        %v8045 = vsel %vm8042, %v8044, %v8040
        %v8046 = vmul.f32 1.0, %v8045
        %v8047 = vrcp.pop %v6761
        %v8048 = vmul.f32 %v6761, %v8047
        %v8049 = vsub.f32 1.0, %v8048
        %v8050 = vmul.f32 %v8047, %v8049
        %v8051 = vadd.f32 %v8047, %v8050
        %vm8052 = vweird.f32 %v6761
        %vm8053 = vweird.f32 %v8047
        %vm8054 = vmor %vm8052, %vm8053
        %v8055 = vsel %vm8054, %v8047, %v8051
        %v8056 = vand.u32 2147483647, %v6761
        %vm8057 = vcmp.eq.f32.partialorder %v8056, 8.507059e+37
        %v8058 = vand.u32 %v6761, 2147483648
        %v8059 = vor.u32 1.1754944e-38, %v8058
        %v8060 = vsel %vm8057, %v8059, %v8055
        %v8061 = vmul.f32 1.0, %v8060
        %v8062 = vrcp.pop %v6762
        %v8063 = vmul.f32 %v6762, %v8062
        %v8064 = vsub.f32 1.0, %v8063
        %v8065 = vmul.f32 %v8062, %v8064
        %v8066 = vadd.f32 %v8062, %v8065
        %vm8067 = vweird.f32 %v6762
        %vm8068 = vweird.f32 %v8062
        %vm8069 = vmor %vm8067, %vm8068
        %v8070 = vsel %vm8069, %v8062, %v8066
        %v8071 = vand.u32 2147483647, %v6762
        %vm8072 = vcmp.eq.f32.partialorder %v8071, 8.507059e+37
        %v8073 = vand.u32 %v6762, 2147483648
        %v8074 = vor.u32 1.1754944e-38, %v8073
        %v8075 = vsel %vm8072, %v8074, %v8070
        %v8076 = vmul.f32 1.0, %v8075
        %v8077 = vrcp.pop %v6763
        %v8078 = vmul.f32 %v6763, %v8077
        %v8079 = vsub.f32 1.0, %v8078
        %v8080 = vmul.f32 %v8077, %v8079
        %v8081 = vadd.f32 %v8077, %v8080
        %vm8082 = vweird.f32 %v6763
        %vm8083 = vweird.f32 %v8077
        %vm8084 = vmor %vm8082, %vm8083
        %v8085 = vsel %vm8084, %v8077, %v8081
        %v8086 = vand.u32 2147483647, %v6763
        %vm8087 = vcmp.eq.f32.partialorder %v8086, 8.507059e+37
        %v8088 = vand.u32 %v6763, 2147483648
        %v8089 = vor.u32 1.1754944e-38, %v8088
        %v8090 = vsel %vm8087, %v8089, %v8085
        %v8091 = vmul.f32 1.0, %v8090
        %v8092 = vrcp.pop %v6764
        %v8093 = vmul.f32 %v6764, %v8092
        %v8094 = vsub.f32 1.0, %v8093
        %v8095 = vmul.f32 %v8092, %v8094
        %v8096 = vadd.f32 %v8092, %v8095
        %vm8097 = vweird.f32 %v6764
        %vm8098 = vweird.f32 %v8092
        %vm8099 = vmor %vm8097, %vm8098
        %v8100 = vsel %vm8099, %v8092, %v8096
        %v8101 = vand.u32 2147483647, %v6764
        %vm8102 = vcmp.eq.f32.partialorder %v8101, 8.507059e+37
        %v8103 = vand.u32 %v6764, 2147483648
        %v8104 = vor.u32 1.1754944e-38, %v8103
        %v8105 = vsel %vm8102, %v8104, %v8100
        %v8106 = vmul.f32 1.0, %v8105
        %v8107 = vrcp.pop %v6765
        %v8108 = vmul.f32 %v6765, %v8107
        %v8109 = vsub.f32 1.0, %v8108
        %v8110 = vmul.f32 %v8107, %v8109
        %v8111 = vadd.f32 %v8107, %v8110
        %vm8112 = vweird.f32 %v6765
        %vm8113 = vweird.f32 %v8107
        %vm8114 = vmor %vm8112, %vm8113
        %v8115 = vsel %vm8114, %v8107, %v8111
        %v8116 = vand.u32 2147483647, %v6765
        %vm8117 = vcmp.eq.f32.partialorder %v8116, 8.507059e+37
        %v8118 = vand.u32 %v6765, 2147483648
        %v8119 = vor.u32 1.1754944e-38, %v8118
        %v8120 = vsel %vm8117, %v8119, %v8115
        %v8121 = vmul.f32 1.0, %v8120
        %v8122 = vrcp.pop %v6766
        %v8123 = vmul.f32 %v6766, %v8122
        %v8124 = vsub.f32 1.0, %v8123
        %v8125 = vmul.f32 %v8122, %v8124
        %v8126 = vadd.f32 %v8122, %v8125
        %vm8127 = vweird.f32 %v6766
        %vm8128 = vweird.f32 %v8122
        %vm8129 = vmor %vm8127, %vm8128
        %v8130 = vsel %vm8129, %v8122, %v8126
        %v8131 = vand.u32 2147483647, %v6766
        %vm8132 = vcmp.eq.f32.partialorder %v8131, 8.507059e+37
        %v8133 = vand.u32 %v6766, 2147483648
        %v8134 = vor.u32 1.1754944e-38, %v8133
        %v8135 = vsel %vm8132, %v8134, %v8130
        %v8136 = vmul.f32 1.0, %v8135
        %v8137 = vrcp.pop %v6767
        %v8138 = vmul.f32 %v6767, %v8137
        %v8139 = vsub.f32 1.0, %v8138
        %v8140 = vmul.f32 %v8137, %v8139
        %v8141 = vadd.f32 %v8137, %v8140
        %vm8142 = vweird.f32 %v6767
        %vm8143 = vweird.f32 %v8137
        %vm8144 = vmor %vm8142, %vm8143
        %v8145 = vsel %vm8144, %v8137, %v8141
        %v8146 = vand.u32 2147483647, %v6767
        %vm8147 = vcmp.eq.f32.partialorder %v8146, 8.507059e+37
        %v8148 = vand.u32 %v6767, 2147483648
        %v8149 = vor.u32 1.1754944e-38, %v8148
        %v8150 = vsel %vm8147, %v8149, %v8145
        %v8151 = vmul.f32 1.0, %v8150
        %v8152 = vrcp.pop %v6768
        %v8153 = vmul.f32 %v6768, %v8152
        %v8154 = vsub.f32 1.0, %v8153
        %v8155 = vmul.f32 %v8152, %v8154
        %v8156 = vadd.f32 %v8152, %v8155
        %vm8157 = vweird.f32 %v6768
        %vm8158 = vweird.f32 %v8152
        %vm8159 = vmor %vm8157, %vm8158
        %v8160 = vsel %vm8159, %v8152, %v8156
        %v8161 = vand.u32 2147483647, %v6768
        %vm8162 = vcmp.eq.f32.partialorder %v8161, 8.507059e+37
        %v8163 = vand.u32 %v6768, 2147483648
        %v8164 = vor.u32 1.1754944e-38, %v8163
        %v8165 = vsel %vm8162, %v8164, %v8160
        %v8166 = vmul.f32 1.0, %v8165
        %v8167 = vrcp.pop %v6769
        %v8168 = vmul.f32 %v6769, %v8167
        %v8169 = vsub.f32 1.0, %v8168
        %v8170 = vmul.f32 %v8167, %v8169
        %v8171 = vadd.f32 %v8167, %v8170
        %vm8172 = vweird.f32 %v6769
        %vm8173 = vweird.f32 %v8167
        %vm8174 = vmor %vm8172, %vm8173
        %v8175 = vsel %vm8174, %v8167, %v8171
        %v8176 = vand.u32 2147483647, %v6769
        %vm8177 = vcmp.eq.f32.partialorder %v8176, 8.507059e+37
        %v8178 = vand.u32 %v6769, 2147483648
        %v8179 = vor.u32 1.1754944e-38, %v8178
        %v8180 = vsel %vm8177, %v8179, %v8175
        %v8181 = vmul.f32 1.0, %v8180
        %v8182 = vrcp.pop %v6770
        %v8183 = vmul.f32 %v6770, %v8182
        %v8184 = vsub.f32 1.0, %v8183
        %v8185 = vmul.f32 %v8182, %v8184
        %v8186 = vadd.f32 %v8182, %v8185
        %vm8187 = vweird.f32 %v6770
        %vm8188 = vweird.f32 %v8182
        %vm8189 = vmor %vm8187, %vm8188
        %v8190 = vsel %vm8189, %v8182, %v8186
        %v8191 = vand.u32 2147483647, %v6770
        %vm8192 = vcmp.eq.f32.partialorder %v8191, 8.507059e+37
        %v8193 = vand.u32 %v6770, 2147483648
        %v8194 = vor.u32 1.1754944e-38, %v8193
        %v8195 = vsel %vm8192, %v8194, %v8190
        %v8196 = vmul.f32 1.0, %v8195
        %v8197 = vrcp.pop %v6771
        %v8198 = vmul.f32 %v6771, %v8197
        %v8199 = vsub.f32 1.0, %v8198
        %v8200 = vmul.f32 %v8197, %v8199
        %v8201 = vadd.f32 %v8197, %v8200
        %vm8202 = vweird.f32 %v6771
        %vm8203 = vweird.f32 %v8197
        %vm8204 = vmor %vm8202, %vm8203
        %v8205 = vsel %vm8204, %v8197, %v8201
        %v8206 = vand.u32 2147483647, %v6771
        %vm8207 = vcmp.eq.f32.partialorder %v8206, 8.507059e+37
        %v8208 = vand.u32 %v6771, 2147483648
        %v8209 = vor.u32 1.1754944e-38, %v8208
        %v8210 = vsel %vm8207, %v8209, %v8205
        %v8211 = vmul.f32 1.0, %v8210
        %v8212 = vrcp.pop %v6772
        %v8213 = vmul.f32 %v6772, %v8212
        %v8214 = vsub.f32 1.0, %v8213
        %v8215 = vmul.f32 %v8212, %v8214
        %v8216 = vadd.f32 %v8212, %v8215
        %vm8217 = vweird.f32 %v6772
        %vm8218 = vweird.f32 %v8212
        %vm8219 = vmor %vm8217, %vm8218
        %v8220 = vsel %vm8219, %v8212, %v8216
        %v8221 = vand.u32 2147483647, %v6772
        %vm8222 = vcmp.eq.f32.partialorder %v8221, 8.507059e+37
        %v8223 = vand.u32 %v6772, 2147483648
        %v8224 = vor.u32 1.1754944e-38, %v8223
        %v8225 = vsel %vm8222, %v8224, %v8220
        %v8226 = vmul.f32 1.0, %v8225
        %v8227 = vrcp.pop %v6773
        %v8228 = vmul.f32 %v6773, %v8227
        %v8229 = vsub.f32 1.0, %v8228
        %v8230 = vmul.f32 %v8227, %v8229
        %v8231 = vadd.f32 %v8227, %v8230
        %vm8232 = vweird.f32 %v6773
        %vm8233 = vweird.f32 %v8227
        %vm8234 = vmor %vm8232, %vm8233
        %v8235 = vsel %vm8234, %v8227, %v8231
        %v8236 = vand.u32 2147483647, %v6773
        %vm8237 = vcmp.eq.f32.partialorder %v8236, 8.507059e+37
        %v8238 = vand.u32 %v6773, 2147483648
        %v8239 = vor.u32 1.1754944e-38, %v8238
        %v8240 = vsel %vm8237, %v8239, %v8235
        %v8241 = vmul.f32 1.0, %v8240
        %v8242 = vrcp.pop %v6774
        %v8243 = vmul.f32 %v6774, %v8242
        %v8244 = vsub.f32 1.0, %v8243
        %v8245 = vmul.f32 %v8242, %v8244
        %v8246 = vadd.f32 %v8242, %v8245
        %vm8247 = vweird.f32 %v6774
        %vm8248 = vweird.f32 %v8242
        %vm8249 = vmor %vm8247, %vm8248
        %v8250 = vsel %vm8249, %v8242, %v8246
        %v8251 = vand.u32 2147483647, %v6774
        %vm8252 = vcmp.eq.f32.partialorder %v8251, 8.507059e+37
        %v8253 = vand.u32 %v6774, 2147483648
        %v8254 = vor.u32 1.1754944e-38, %v8253
        %v8255 = vsel %vm8252, %v8254, %v8250
        %v8256 = vmul.f32 1.0, %v8255
        %v8257 = vrcp.pop %v6775
        %v8258 = vmul.f32 %v6775, %v8257
        %v8259 = vsub.f32 1.0, %v8258
        %v8260 = vmul.f32 %v8257, %v8259
        %v8261 = vadd.f32 %v8257, %v8260
        %vm8262 = vweird.f32 %v6775
        %vm8263 = vweird.f32 %v8257
        %vm8264 = vmor %vm8262, %vm8263
        %v8265 = vsel %vm8264, %v8257, %v8261
        %v8266 = vand.u32 2147483647, %v6775
        %vm8267 = vcmp.eq.f32.partialorder %v8266, 8.507059e+37
        %v8268 = vand.u32 %v6775, 2147483648
        %v8269 = vor.u32 1.1754944e-38, %v8268
        %v8270 = vsel %vm8267, %v8269, %v8265
        %v8271 = vmul.f32 1.0, %v8270
        %v8272 = vrcp.pop %v6776
        %v8273 = vmul.f32 %v6776, %v8272
        %v8274 = vsub.f32 1.0, %v8273
        %v8275 = vmul.f32 %v8272, %v8274
        %v8276 = vadd.f32 %v8272, %v8275
        %vm8277 = vweird.f32 %v6776
        %vm8278 = vweird.f32 %v8272
        %vm8279 = vmor %vm8277, %vm8278
        %v8280 = vsel %vm8279, %v8272, %v8276
        %v8281 = vand.u32 2147483647, %v6776
        %vm8282 = vcmp.eq.f32.partialorder %v8281, 8.507059e+37
        %v8283 = vand.u32 %v6776, 2147483648
        %v8284 = vor.u32 1.1754944e-38, %v8283
        %v8285 = vsel %vm8282, %v8284, %v8280
        %v8286 = vmul.f32 1.0, %v8285
        %v8287 = vrcp.pop %v6777
        %v8288 = vmul.f32 %v6777, %v8287
        %v8289 = vsub.f32 1.0, %v8288
        %v8290 = vmul.f32 %v8287, %v8289
        %v8291 = vadd.f32 %v8287, %v8290
        %vm8292 = vweird.f32 %v6777
        %vm8293 = vweird.f32 %v8287
        %vm8294 = vmor %vm8292, %vm8293
        %v8295 = vsel %vm8294, %v8287, %v8291
        %v8296 = vand.u32 2147483647, %v6777
        %vm8297 = vcmp.eq.f32.partialorder %v8296, 8.507059e+37
        %v8298 = vand.u32 %v6777, 2147483648
        %v8299 = vor.u32 1.1754944e-38, %v8298
        %v8300 = vsel %vm8297, %v8299, %v8295
        %v8301 = vmul.f32 1.0, %v8300
        %v8302 = vrcp.pop %v6778
        %v8303 = vmul.f32 %v6778, %v8302
        %v8304 = vsub.f32 1.0, %v8303
        %v8305 = vmul.f32 %v8302, %v8304
        %v8306 = vadd.f32 %v8302, %v8305
        %vm8307 = vweird.f32 %v6778
        %vm8308 = vweird.f32 %v8302
        %vm8309 = vmor %vm8307, %vm8308
        %v8310 = vsel %vm8309, %v8302, %v8306
        %v8311 = vand.u32 2147483647, %v6778
        %vm8312 = vcmp.eq.f32.partialorder %v8311, 8.507059e+37
        %v8313 = vand.u32 %v6778, 2147483648
        %v8314 = vor.u32 1.1754944e-38, %v8313
        %v8315 = vsel %vm8312, %v8314, %v8310
        %v8316 = vmul.f32 1.0, %v8315
        %v8317 = vrcp.pop %v6779
        %v8318 = vmul.f32 %v6779, %v8317
        %v8319 = vsub.f32 1.0, %v8318
        %v8320 = vmul.f32 %v8317, %v8319
        %v8321 = vadd.f32 %v8317, %v8320
        %vm8322 = vweird.f32 %v6779
        %vm8323 = vweird.f32 %v8317
        %vm8324 = vmor %vm8322, %vm8323
        %v8325 = vsel %vm8324, %v8317, %v8321
        %v8326 = vand.u32 2147483647, %v6779
        %vm8327 = vcmp.eq.f32.partialorder %v8326, 8.507059e+37
        %v8328 = vand.u32 %v6779, 2147483648
        %v8329 = vor.u32 1.1754944e-38, %v8328
        %v8330 = vsel %vm8327, %v8329, %v8325
        %v8331 = vmul.f32 1.0, %v8330
        %v8332 = vrcp.pop %v6780
        %v8333 = vmul.f32 %v6780, %v8332
        %v8334 = vsub.f32 1.0, %v8333
        %v8335 = vmul.f32 %v8332, %v8334
        %v8336 = vadd.f32 %v8332, %v8335
        %vm8337 = vweird.f32 %v6780
        %vm8338 = vweird.f32 %v8332
        %vm8339 = vmor %vm8337, %vm8338
        %v8340 = vsel %vm8339, %v8332, %v8336
        %v8341 = vand.u32 2147483647, %v6780
        %vm8342 = vcmp.eq.f32.partialorder %v8341, 8.507059e+37
        %v8343 = vand.u32 %v6780, 2147483648
        %v8344 = vor.u32 1.1754944e-38, %v8343
        %v8345 = vsel %vm8342, %v8344, %v8340
        %v8346 = vmul.f32 1.0, %v8345
        %v8347 = vrcp.pop %v6781
        %v8348 = vmul.f32 %v6781, %v8347
        %v8349 = vsub.f32 1.0, %v8348
        %v8350 = vmul.f32 %v8347, %v8349
        %v8351 = vadd.f32 %v8347, %v8350
        %vm8352 = vweird.f32 %v6781
        %vm8353 = vweird.f32 %v8347
        %vm8354 = vmor %vm8352, %vm8353
        %v8355 = vsel %vm8354, %v8347, %v8351
        %v8356 = vand.u32 2147483647, %v6781
        %vm8357 = vcmp.eq.f32.partialorder %v8356, 8.507059e+37
        %v8358 = vand.u32 %v6781, 2147483648
        %v8359 = vor.u32 1.1754944e-38, %v8358
        %v8360 = vsel %vm8357, %v8359, %v8355
        %v8361 = vmul.f32 1.0, %v8360
        %v8362 = vrcp.pop %v6782
        %v8363 = vmul.f32 %v6782, %v8362
        %v8364 = vsub.f32 1.0, %v8363
        %v8365 = vmul.f32 %v8362, %v8364
        %v8366 = vadd.f32 %v8362, %v8365
        %vm8367 = vweird.f32 %v6782
        %vm8368 = vweird.f32 %v8362
        %vm8369 = vmor %vm8367, %vm8368
        %v8370 = vsel %vm8369, %v8362, %v8366
        %v8371 = vand.u32 2147483647, %v6782
        %vm8372 = vcmp.eq.f32.partialorder %v8371, 8.507059e+37
        %v8373 = vand.u32 %v6782, 2147483648
        %v8374 = vor.u32 1.1754944e-38, %v8373
        %v8375 = vsel %vm8372, %v8374, %v8370
        %v8376 = vmul.f32 1.0, %v8375
        %v8377 = vrcp.pop %v6783
        %v8378 = vmul.f32 %v6783, %v8377
        %v8379 = vsub.f32 1.0, %v8378
        %v8380 = vmul.f32 %v8377, %v8379
        %v8381 = vadd.f32 %v8377, %v8380
        %vm8382 = vweird.f32 %v6783
        %vm8383 = vweird.f32 %v8377
        %vm8384 = vmor %vm8382, %vm8383
        %v8385 = vsel %vm8384, %v8377, %v8381
        %v8386 = vand.u32 2147483647, %v6783
        %vm8387 = vcmp.eq.f32.partialorder %v8386, 8.507059e+37
        %v8388 = vand.u32 %v6783, 2147483648
        %v8389 = vor.u32 1.1754944e-38, %v8388
        %v8390 = vsel %vm8387, %v8389, %v8385
        %v8391 = vmul.f32 1.0, %v8390
        %v8392 = vrcp.pop %v6784
        %v8393 = vmul.f32 %v6784, %v8392
        %v8394 = vsub.f32 1.0, %v8393
        %v8395 = vmul.f32 %v8392, %v8394
        %v8396 = vadd.f32 %v8392, %v8395
        %vm8397 = vweird.f32 %v6784
        %vm8398 = vweird.f32 %v8392
        %vm8399 = vmor %vm8397, %vm8398
        %v8400 = vsel %vm8399, %v8392, %v8396
        %v8401 = vand.u32 2147483647, %v6784
        %vm8402 = vcmp.eq.f32.partialorder %v8401, 8.507059e+37
        %v8403 = vand.u32 %v6784, 2147483648
        %v8404 = vor.u32 1.1754944e-38, %v8403
        %v8405 = vsel %vm8402, %v8404, %v8400
        %v8406 = vmul.f32 1.0, %v8405
        %v8407 = vrcp.pop %v6785
        %v8408 = vmul.f32 %v6785, %v8407
        %v8409 = vsub.f32 1.0, %v8408
        %v8410 = vmul.f32 %v8407, %v8409
        %v8411 = vadd.f32 %v8407, %v8410
        %vm8412 = vweird.f32 %v6785
        %vm8413 = vweird.f32 %v8407
        %vm8414 = vmor %vm8412, %vm8413
        %v8415 = vsel %vm8414, %v8407, %v8411
        %v8416 = vand.u32 2147483647, %v6785
        %vm8417 = vcmp.eq.f32.partialorder %v8416, 8.507059e+37
        %v8418 = vand.u32 %v6785, 2147483648
        %v8419 = vor.u32 1.1754944e-38, %v8418
        %v8420 = vsel %vm8417, %v8419, %v8415
        %v8421 = vmul.f32 1.0, %v8420
        %v8422 = vrcp.pop %v6786
        %v8423 = vmul.f32 %v6786, %v8422
        %v8424 = vsub.f32 1.0, %v8423
        %v8425 = vmul.f32 %v8422, %v8424
        %v8426 = vadd.f32 %v8422, %v8425
        %vm8427 = vweird.f32 %v6786
        %vm8428 = vweird.f32 %v8422
        %vm8429 = vmor %vm8427, %vm8428
        %v8430 = vsel %vm8429, %v8422, %v8426
        %v8431 = vand.u32 2147483647, %v6786
        %vm8432 = vcmp.eq.f32.partialorder %v8431, 8.507059e+37
        %v8433 = vand.u32 %v6786, 2147483648
        %v8434 = vor.u32 1.1754944e-38, %v8433
        %v8435 = vsel %vm8432, %v8434, %v8430
        %v8436 = vmul.f32 1.0, %v8435
        %v8437 = vrcp.pop %v6787
        %v8438 = vmul.f32 %v6787, %v8437
        %v8439 = vsub.f32 1.0, %v8438
        %v8440 = vmul.f32 %v8437, %v8439
        %v8441 = vadd.f32 %v8437, %v8440
        %vm8442 = vweird.f32 %v6787
        %vm8443 = vweird.f32 %v8437
        %vm8444 = vmor %vm8442, %vm8443
        %v8445 = vsel %vm8444, %v8437, %v8441
        %v8446 = vand.u32 2147483647, %v6787
        %vm8447 = vcmp.eq.f32.partialorder %v8446, 8.507059e+37
        %v8448 = vand.u32 %v6787, 2147483648
        %v8449 = vor.u32 1.1754944e-38, %v8448
        %v8450 = vsel %vm8447, %v8449, %v8445
        %v8451 = vmul.f32 1.0, %v8450
        %v8452 = vrcp.pop %v6788
        %v8453 = vmul.f32 %v6788, %v8452
        %v8454 = vsub.f32 1.0, %v8453
        %v8455 = vmul.f32 %v8452, %v8454
        %v8456 = vadd.f32 %v8452, %v8455
        %vm8457 = vweird.f32 %v6788
        %vm8458 = vweird.f32 %v8452
        %vm8459 = vmor %vm8457, %vm8458
        %v8460 = vsel %vm8459, %v8452, %v8456
        %v8461 = vand.u32 2147483647, %v6788
        %vm8462 = vcmp.eq.f32.partialorder %v8461, 8.507059e+37
        %v8463 = vand.u32 %v6788, 2147483648
        %v8464 = vor.u32 1.1754944e-38, %v8463
        %v8465 = vsel %vm8462, %v8464, %v8460
        %v8466 = vmul.f32 1.0, %v8465
        %v8467 = vrcp.pop %v6789
        %v8468 = vmul.f32 %v6789, %v8467
        %v8469 = vsub.f32 1.0, %v8468
        %v8470 = vmul.f32 %v8467, %v8469
        %v8471 = vadd.f32 %v8467, %v8470
        %vm8472 = vweird.f32 %v6789
        %vm8473 = vweird.f32 %v8467
        %vm8474 = vmor %vm8472, %vm8473
        %v8475 = vsel %vm8474, %v8467, %v8471
        %v8476 = vand.u32 2147483647, %v6789
        %vm8477 = vcmp.eq.f32.partialorder %v8476, 8.507059e+37
        %v8478 = vand.u32 %v6789, 2147483648
        %v8479 = vor.u32 1.1754944e-38, %v8478
        %v8480 = vsel %vm8477, %v8479, %v8475
        %v8481 = vmul.f32 1.0, %v8480
        %v8482 = vrcp.pop %v6790
        %v8483 = vmul.f32 %v6790, %v8482
        %v8484 = vsub.f32 1.0, %v8483
        %v8485 = vmul.f32 %v8482, %v8484
        %v8486 = vadd.f32 %v8482, %v8485
        %vm8487 = vweird.f32 %v6790
        %vm8488 = vweird.f32 %v8482
        %vm8489 = vmor %vm8487, %vm8488
        %v8490 = vsel %vm8489, %v8482, %v8486
        %v8491 = vand.u32 2147483647, %v6790
        %vm8492 = vcmp.eq.f32.partialorder %v8491, 8.507059e+37
        %v8493 = vand.u32 %v6790, 2147483648
        %v8494 = vor.u32 1.1754944e-38, %v8493
        %v8495 = vsel %vm8492, %v8494, %v8490
        %v8496 = vmul.f32 1.0, %v8495
        %v8497 = vrcp.pop %v6791
        %v8498 = vmul.f32 %v6791, %v8497
        %v8499 = vsub.f32 1.0, %v8498
        %v8500 = vmul.f32 %v8497, %v8499
        %v8501 = vadd.f32 %v8497, %v8500
        %vm8502 = vweird.f32 %v6791
        %vm8503 = vweird.f32 %v8497
        %vm8504 = vmor %vm8502, %vm8503
        %v8505 = vsel %vm8504, %v8497, %v8501
        %v8506 = vand.u32 2147483647, %v6791
        %vm8507 = vcmp.eq.f32.partialorder %v8506, 8.507059e+37
        %v8508 = vand.u32 %v6791, 2147483648
        %v8509 = vor.u32 1.1754944e-38, %v8508
        %v8510 = vsel %vm8507, %v8509, %v8505
        %v8511 = vmul.f32 1.0, %v8510
        %v8512 = vrcp.pop %v6792
        %v8513 = vmul.f32 %v6792, %v8512
        %v8514 = vsub.f32 1.0, %v8513
        %v8515 = vmul.f32 %v8512, %v8514
        %v8516 = vadd.f32 %v8512, %v8515
        %vm8517 = vweird.f32 %v6792
        %vm8518 = vweird.f32 %v8512
        %vm8519 = vmor %vm8517, %vm8518
        %v8520 = vsel %vm8519, %v8512, %v8516
        %v8521 = vand.u32 2147483647, %v6792
        %vm8522 = vcmp.eq.f32.partialorder %v8521, 8.507059e+37
        %v8523 = vand.u32 %v6792, 2147483648
        %v8524 = vor.u32 1.1754944e-38, %v8523
        %v8525 = vsel %vm8522, %v8524, %v8520
        %v8526 = vmul.f32 1.0, %v8525
        %v8527 = vrcp.pop %v6793
        %v8528 = vmul.f32 %v6793, %v8527
        %v8529 = vsub.f32 1.0, %v8528
        %v8530 = vmul.f32 %v8527, %v8529
        %v8531 = vadd.f32 %v8527, %v8530
        %vm8532 = vweird.f32 %v6793
        %vm8533 = vweird.f32 %v8527
        %vm8534 = vmor %vm8532, %vm8533
        %v8535 = vsel %vm8534, %v8527, %v8531
        %v8536 = vand.u32 2147483647, %v6793
        %vm8537 = vcmp.eq.f32.partialorder %v8536, 8.507059e+37
        %v8538 = vand.u32 %v6793, 2147483648
        %v8539 = vor.u32 1.1754944e-38, %v8538
        %v8540 = vsel %vm8537, %v8539, %v8535
        %v8541 = vmul.f32 1.0, %v8540
        %v8542 = vrcp.pop %v6794
        %v8543 = vmul.f32 %v6794, %v8542
        %v8544 = vsub.f32 1.0, %v8543
        %v8545 = vmul.f32 %v8542, %v8544
        %v8546 = vadd.f32 %v8542, %v8545
        %vm8547 = vweird.f32 %v6794
        %vm8548 = vweird.f32 %v8542
        %vm8549 = vmor %vm8547, %vm8548
        %v8550 = vsel %vm8549, %v8542, %v8546
        %v8551 = vand.u32 2147483647, %v6794
        %vm8552 = vcmp.eq.f32.partialorder %v8551, 8.507059e+37
        %v8553 = vand.u32 %v6794, 2147483648
        %v8554 = vor.u32 1.1754944e-38, %v8553
        %v8555 = vsel %vm8552, %v8554, %v8550
        %v8556 = vmul.f32 1.0, %v8555
        %v8557 = vrcp.pop %v6795
        %v8558 = vmul.f32 %v6795, %v8557
        %v8559 = vsub.f32 1.0, %v8558
        %v8560 = vmul.f32 %v8557, %v8559
        %v8561 = vadd.f32 %v8557, %v8560
        %vm8562 = vweird.f32 %v6795
        %vm8563 = vweird.f32 %v8557
        %vm8564 = vmor %vm8562, %vm8563
        %v8565 = vsel %vm8564, %v8557, %v8561
        %v8566 = vand.u32 2147483647, %v6795
        %vm8567 = vcmp.eq.f32.partialorder %v8566, 8.507059e+37
        %v8568 = vand.u32 %v6795, 2147483648
        %v8569 = vor.u32 1.1754944e-38, %v8568
        %v8570 = vsel %vm8567, %v8569, %v8565
        %v8571 = vmul.f32 1.0, %v8570
        %v8572 = vrcp.pop %v6796
        %v8573 = vmul.f32 %v6796, %v8572
        %v8574 = vsub.f32 1.0, %v8573
        %v8575 = vmul.f32 %v8572, %v8574
        %v8576 = vadd.f32 %v8572, %v8575
        %vm8577 = vweird.f32 %v6796
        %vm8578 = vweird.f32 %v8572
        %vm8579 = vmor %vm8577, %vm8578
        %v8580 = vsel %vm8579, %v8572, %v8576
        %v8581 = vand.u32 2147483647, %v6796
        %vm8582 = vcmp.eq.f32.partialorder %v8581, 8.507059e+37
        %v8583 = vand.u32 %v6796, 2147483648
        %v8584 = vor.u32 1.1754944e-38, %v8583
        %v8585 = vsel %vm8582, %v8584, %v8580
        %v8586 = vmul.f32 1.0, %v8585
        %v8587 = vrcp.pop %v6797
        %v8588 = vmul.f32 %v6797, %v8587
        %v8589 = vsub.f32 1.0, %v8588
        %v8590 = vmul.f32 %v8587, %v8589
        %v8591 = vadd.f32 %v8587, %v8590
        %vm8592 = vweird.f32 %v6797
        %vm8593 = vweird.f32 %v8587
        %vm8594 = vmor %vm8592, %vm8593
        %v8595 = vsel %vm8594, %v8587, %v8591
        %v8596 = vand.u32 2147483647, %v6797
        %vm8597 = vcmp.eq.f32.partialorder %v8596, 8.507059e+37
        %v8598 = vand.u32 %v6797, 2147483648
        %v8599 = vor.u32 1.1754944e-38, %v8598
        %v8600 = vsel %vm8597, %v8599, %v8595
        %v8601 = vmul.f32 1.0, %v8600
        %v8602 = vrcp.pop %v6798
        %v8603 = vmul.f32 %v6798, %v8602
        %v8604 = vsub.f32 1.0, %v8603
        %v8605 = vmul.f32 %v8602, %v8604
        %v8606 = vadd.f32 %v8602, %v8605
        %vm8607 = vweird.f32 %v6798
        %vm8608 = vweird.f32 %v8602
        %vm8609 = vmor %vm8607, %vm8608
        %v8610 = vsel %vm8609, %v8602, %v8606
        %v8611 = vand.u32 2147483647, %v6798
        %vm8612 = vcmp.eq.f32.partialorder %v8611, 8.507059e+37
        %v8613 = vand.u32 %v6798, 2147483648
        %v8614 = vor.u32 1.1754944e-38, %v8613
        %v8615 = vsel %vm8612, %v8614, %v8610
        %v8616 = vmul.f32 1.0, %v8615
        %v8617 = vrcp.pop %v6799
        %v8618 = vmul.f32 %v6799, %v8617
        %v8619 = vsub.f32 1.0, %v8618
        %v8620 = vmul.f32 %v8617, %v8619
        %v8621 = vadd.f32 %v8617, %v8620
        %vm8622 = vweird.f32 %v6799
        %vm8623 = vweird.f32 %v8617
        %vm8624 = vmor %vm8622, %vm8623
        %v8625 = vsel %vm8624, %v8617, %v8621
        %v8626 = vand.u32 2147483647, %v6799
        %vm8627 = vcmp.eq.f32.partialorder %v8626, 8.507059e+37
        %v8628 = vand.u32 %v6799, 2147483648
        %v8629 = vor.u32 1.1754944e-38, %v8628
        %v8630 = vsel %vm8627, %v8629, %v8625
        %v8631 = vmul.f32 1.0, %v8630
        %v8632 = vrcp.pop %v6800
        %v8633 = vmul.f32 %v6800, %v8632
        %v8634 = vsub.f32 1.0, %v8633
        %v8635 = vmul.f32 %v8632, %v8634
        %v8636 = vadd.f32 %v8632, %v8635
        %vm8637 = vweird.f32 %v6800
        %vm8638 = vweird.f32 %v8632
        %vm8639 = vmor %vm8637, %vm8638
        %v8640 = vsel %vm8639, %v8632, %v8636
        %v8641 = vand.u32 2147483647, %v6800
        %vm8642 = vcmp.eq.f32.partialorder %v8641, 8.507059e+37
        %v8643 = vand.u32 %v6800, 2147483648
        %v8644 = vor.u32 1.1754944e-38, %v8643
        %v8645 = vsel %vm8642, %v8644, %v8640
        %v8646 = vmul.f32 1.0, %v8645
        %v8647 = vrcp.pop %v6801
        %v8648 = vmul.f32 %v6801, %v8647
        %v8649 = vsub.f32 1.0, %v8648
        %v8650 = vmul.f32 %v8647, %v8649
        %v8651 = vadd.f32 %v8647, %v8650
        %vm8652 = vweird.f32 %v6801
        %vm8653 = vweird.f32 %v8647
        %vm8654 = vmor %vm8652, %vm8653
        %v8655 = vsel %vm8654, %v8647, %v8651
        %v8656 = vand.u32 2147483647, %v6801
        %vm8657 = vcmp.eq.f32.partialorder %v8656, 8.507059e+37
        %v8658 = vand.u32 %v6801, 2147483648
        %v8659 = vor.u32 1.1754944e-38, %v8658
        %v8660 = vsel %vm8657, %v8659, %v8655
        %v8661 = vmul.f32 1.0, %v8660
        %v8662 = vrcp.pop %v6802
        %v8663 = vmul.f32 %v6802, %v8662
        %v8664 = vsub.f32 1.0, %v8663
        %v8665 = vmul.f32 %v8662, %v8664
        %v8666 = vadd.f32 %v8662, %v8665
        %vm8667 = vweird.f32 %v6802
        %vm8668 = vweird.f32 %v8662
        %vm8669 = vmor %vm8667, %vm8668
        %v8670 = vsel %vm8669, %v8662, %v8666
        %v8671 = vand.u32 2147483647, %v6802
        %vm8672 = vcmp.eq.f32.partialorder %v8671, 8.507059e+37
        %v8673 = vand.u32 %v6802, 2147483648
        %v8674 = vor.u32 1.1754944e-38, %v8673
        %v8675 = vsel %vm8672, %v8674, %v8670
        %v8676 = vmul.f32 1.0, %v8675
        %v8677 = vrcp.pop %v6803
        %v8678 = vmul.f32 %v6803, %v8677
        %v8679 = vsub.f32 1.0, %v8678
        %v8680 = vmul.f32 %v8677, %v8679
        %v8681 = vadd.f32 %v8677, %v8680
        %vm8682 = vweird.f32 %v6803
        %vm8683 = vweird.f32 %v8677
        %vm8684 = vmor %vm8682, %vm8683
        %v8685 = vsel %vm8684, %v8677, %v8681
        %v8686 = vand.u32 2147483647, %v6803
        %vm8687 = vcmp.eq.f32.partialorder %v8686, 8.507059e+37
        %v8688 = vand.u32 %v6803, 2147483648
        %v8689 = vor.u32 1.1754944e-38, %v8688
        %v8690 = vsel %vm8687, %v8689, %v8685
        %v8691 = vmul.f32 1.0, %v8690
        %v8692 = vrcp.pop %v6804
        %v8693 = vmul.f32 %v6804, %v8692
        %v8694 = vsub.f32 1.0, %v8693
        %v8695 = vmul.f32 %v8692, %v8694
        %v8696 = vadd.f32 %v8692, %v8695
        %vm8697 = vweird.f32 %v6804
        %vm8698 = vweird.f32 %v8692
        %vm8699 = vmor %vm8697, %vm8698
        %v8700 = vsel %vm8699, %v8692, %v8696
        %v8701 = vand.u32 2147483647, %v6804
        %vm8702 = vcmp.eq.f32.partialorder %v8701, 8.507059e+37
        %v8703 = vand.u32 %v6804, 2147483648
        %v8704 = vor.u32 1.1754944e-38, %v8703
        %v8705 = vsel %vm8702, %v8704, %v8700
        %v8706 = vmul.f32 1.0, %v8705
        %v8707 = vrcp.pop %v6805
        %v8708 = vmul.f32 %v6805, %v8707
        %v8709 = vsub.f32 1.0, %v8708
        %v8710 = vmul.f32 %v8707, %v8709
        %v8711 = vadd.f32 %v8707, %v8710
        %vm8712 = vweird.f32 %v6805
        %vm8713 = vweird.f32 %v8707
        %vm8714 = vmor %vm8712, %vm8713
        %v8715 = vsel %vm8714, %v8707, %v8711
        %v8716 = vand.u32 2147483647, %v6805
        %vm8717 = vcmp.eq.f32.partialorder %v8716, 8.507059e+37
        %v8718 = vand.u32 %v6805, 2147483648
        %v8719 = vor.u32 1.1754944e-38, %v8718
        %v8720 = vsel %vm8717, %v8719, %v8715
        %v8721 = vmul.f32 1.0, %v8720
        %v8722 = vrcp.pop %v6806
        %v8723 = vmul.f32 %v6806, %v8722
        %v8724 = vsub.f32 1.0, %v8723
        %v8725 = vmul.f32 %v8722, %v8724
        %v8726 = vadd.f32 %v8722, %v8725
        %vm8727 = vweird.f32 %v6806
        %vm8728 = vweird.f32 %v8722
        %vm8729 = vmor %vm8727, %vm8728
        %v8730 = vsel %vm8729, %v8722, %v8726
        %v8731 = vand.u32 2147483647, %v6806
        %vm8732 = vcmp.eq.f32.partialorder %v8731, 8.507059e+37
        %v8733 = vand.u32 %v6806, 2147483648
        %v8734 = vor.u32 1.1754944e-38, %v8733
        %v8735 = vsel %vm8732, %v8734, %v8730
        %v8736 = vmul.f32 1.0, %v8735
        %v8737 = vrcp.pop %v6807
        %v8738 = vmul.f32 %v6807, %v8737
        %v8739 = vsub.f32 1.0, %v8738
        %v8740 = vmul.f32 %v8737, %v8739
        %v8741 = vadd.f32 %v8737, %v8740
        %vm8742 = vweird.f32 %v6807
        %vm8743 = vweird.f32 %v8737
        %vm8744 = vmor %vm8742, %vm8743
        %v8745 = vsel %vm8744, %v8737, %v8741
        %v8746 = vand.u32 2147483647, %v6807
        %vm8747 = vcmp.eq.f32.partialorder %v8746, 8.507059e+37
        %v8748 = vand.u32 %v6807, 2147483648
        %v8749 = vor.u32 1.1754944e-38, %v8748
        %v8750 = vsel %vm8747, %v8749, %v8745
        %v8751 = vmul.f32 1.0, %v8750
        %v8752 = vrcp.pop %v6808
        %v8753 = vmul.f32 %v6808, %v8752
        %v8754 = vsub.f32 1.0, %v8753
        %v8755 = vmul.f32 %v8752, %v8754
        %v8756 = vadd.f32 %v8752, %v8755
        %vm8757 = vweird.f32 %v6808
        %vm8758 = vweird.f32 %v8752
        %vm8759 = vmor %vm8757, %vm8758
        %v8760 = vsel %vm8759, %v8752, %v8756
        %v8761 = vand.u32 2147483647, %v6808
        %vm8762 = vcmp.eq.f32.partialorder %v8761, 8.507059e+37
        %v8763 = vand.u32 %v6808, 2147483648
        %v8764 = vor.u32 1.1754944e-38, %v8763
        %v8765 = vsel %vm8762, %v8764, %v8760
        %v8766 = vmul.f32 1.0, %v8765
        %v8767 = vrcp.pop %v6809
        %v8768 = vmul.f32 %v6809, %v8767
        %v8769 = vsub.f32 1.0, %v8768
        %v8770 = vmul.f32 %v8767, %v8769
        %v8771 = vadd.f32 %v8767, %v8770
        %vm8772 = vweird.f32 %v6809
        %vm8773 = vweird.f32 %v8767
        %vm8774 = vmor %vm8772, %vm8773
        %v8775 = vsel %vm8774, %v8767, %v8771
        %v8776 = vand.u32 2147483647, %v6809
        %vm8777 = vcmp.eq.f32.partialorder %v8776, 8.507059e+37
        %v8778 = vand.u32 %v6809, 2147483648
        %v8779 = vor.u32 1.1754944e-38, %v8778
        %v8780 = vsel %vm8777, %v8779, %v8775
        %v8781 = vmul.f32 1.0, %v8780
        %v8782 = vrcp.pop %v6810
        %v8783 = vmul.f32 %v6810, %v8782
        %v8784 = vsub.f32 1.0, %v8783
        %v8785 = vmul.f32 %v8782, %v8784
        %v8786 = vadd.f32 %v8782, %v8785
        %vm8787 = vweird.f32 %v6810
        %vm8788 = vweird.f32 %v8782
        %vm8789 = vmor %vm8787, %vm8788
        %v8790 = vsel %vm8789, %v8782, %v8786
        %v8791 = vand.u32 2147483647, %v6810
        %vm8792 = vcmp.eq.f32.partialorder %v8791, 8.507059e+37
        %v8793 = vand.u32 %v6810, 2147483648
        %v8794 = vor.u32 1.1754944e-38, %v8793
        %v8795 = vsel %vm8792, %v8794, %v8790
        %v8796 = vmul.f32 1.0, %v8795
        %v8797 = vrcp.pop %v6811
        %v8798 = vmul.f32 %v6811, %v8797
        %v8799 = vsub.f32 1.0, %v8798
        %v8800 = vmul.f32 %v8797, %v8799
        %v8801 = vadd.f32 %v8797, %v8800
        %vm8802 = vweird.f32 %v6811
        %vm8803 = vweird.f32 %v8797
        %vm8804 = vmor %vm8802, %vm8803
        %v8805 = vsel %vm8804, %v8797, %v8801
        %v8806 = vand.u32 2147483647, %v6811
        %vm8807 = vcmp.eq.f32.partialorder %v8806, 8.507059e+37
        %v8808 = vand.u32 %v6811, 2147483648
        %v8809 = vor.u32 1.1754944e-38, %v8808
        %v8810 = vsel %vm8807, %v8809, %v8805
        %v8811 = vmul.f32 1.0, %v8810
        %v8812 = vrcp.pop %v6812
        %v8813 = vmul.f32 %v6812, %v8812
        %v8814 = vsub.f32 1.0, %v8813
        %v8815 = vmul.f32 %v8812, %v8814
        %v8816 = vadd.f32 %v8812, %v8815
        %vm8817 = vweird.f32 %v6812
        %vm8818 = vweird.f32 %v8812
        %vm8819 = vmor %vm8817, %vm8818
        %v8820 = vsel %vm8819, %v8812, %v8816
        %v8821 = vand.u32 2147483647, %v6812
        %vm8822 = vcmp.eq.f32.partialorder %v8821, 8.507059e+37
        %v8823 = vand.u32 %v6812, 2147483648
        %v8824 = vor.u32 1.1754944e-38, %v8823
        %v8825 = vsel %vm8822, %v8824, %v8820
        %v8826 = vmul.f32 1.0, %v8825
        %v8827 = vrcp.pop %v6813
        %v8828 = vmul.f32 %v6813, %v8827
        %v8829 = vsub.f32 1.0, %v8828
        %v8830 = vmul.f32 %v8827, %v8829
        %v8831 = vadd.f32 %v8827, %v8830
        %vm8832 = vweird.f32 %v6813
        %vm8833 = vweird.f32 %v8827
        %vm8834 = vmor %vm8832, %vm8833
        %v8835 = vsel %vm8834, %v8827, %v8831
        %v8836 = vand.u32 2147483647, %v6813
        %vm8837 = vcmp.eq.f32.partialorder %v8836, 8.507059e+37
        %v8838 = vand.u32 %v6813, 2147483648
        %v8839 = vor.u32 1.1754944e-38, %v8838
        %v8840 = vsel %vm8837, %v8839, %v8835
        %v8841 = vmul.f32 1.0, %v8840
        %v8842 = vrcp.pop %v6814
        %v8843 = vmul.f32 %v6814, %v8842
        %v8844 = vsub.f32 1.0, %v8843
        %v8845 = vmul.f32 %v8842, %v8844
        %v8846 = vadd.f32 %v8842, %v8845
        %vm8847 = vweird.f32 %v6814
        %vm8848 = vweird.f32 %v8842
        %vm8849 = vmor %vm8847, %vm8848
        %v8850 = vsel %vm8849, %v8842, %v8846
        %v8851 = vand.u32 2147483647, %v6814
        %vm8852 = vcmp.eq.f32.partialorder %v8851, 8.507059e+37
        %v8853 = vand.u32 %v6814, 2147483648
        %v8854 = vor.u32 1.1754944e-38, %v8853
        %v8855 = vsel %vm8852, %v8854, %v8850
        %v8856 = vmul.f32 1.0, %v8855
        %v8857 = vrcp.pop %v6815
        %v8858 = vmul.f32 %v6815, %v8857
        %v8859 = vsub.f32 1.0, %v8858
        %v8860 = vmul.f32 %v8857, %v8859
        %v8861 = vadd.f32 %v8857, %v8860
        %vm8862 = vweird.f32 %v6815
        %vm8863 = vweird.f32 %v8857
        %vm8864 = vmor %vm8862, %vm8863
        %v8865 = vsel %vm8864, %v8857, %v8861
        %v8866 = vand.u32 2147483647, %v6815
        %vm8867 = vcmp.eq.f32.partialorder %v8866, 8.507059e+37
        %v8868 = vand.u32 %v6815, 2147483648
        %v8869 = vor.u32 1.1754944e-38, %v8868
        %v8870 = vsel %vm8867, %v8869, %v8865
        %v8871 = vmul.f32 1.0, %v8870
        %v8872 = vrcp.pop %v6816
        %v8873 = vmul.f32 %v6816, %v8872
        %v8874 = vsub.f32 1.0, %v8873
        %v8875 = vmul.f32 %v8872, %v8874
        %v8876 = vadd.f32 %v8872, %v8875
        %vm8877 = vweird.f32 %v6816
        %vm8878 = vweird.f32 %v8872
        %vm8879 = vmor %vm8877, %vm8878
        %v8880 = vsel %vm8879, %v8872, %v8876
        %v8881 = vand.u32 2147483647, %v6816
        %vm8882 = vcmp.eq.f32.partialorder %v8881, 8.507059e+37
        %v8883 = vand.u32 %v6816, 2147483648
        %v8884 = vor.u32 1.1754944e-38, %v8883
        %v8885 = vsel %vm8882, %v8884, %v8880
        %v8886 = vmul.f32 1.0, %v8885
        %v8887 = vmul.f32 %v5818, %v6831
        %v8888 = vmul.f32 %v5973, %v6846
        %v8889 = vmul.f32 %v6128, %v6861
        %v8890 = vmul.f32 %v5821, %v6876
        %v8891 = vmul.f32 %v5976, %v6891
        %v8892 = vmul.f32 %v6131, %v6906
        %v8893 = vmul.f32 %v5824, %v6921
        %v8894 = vmul.f32 %v5979, %v6936
        %v8895 = vmul.f32 %v6134, %v6951
        %v8896 = vmul.f32 %v5827, %v6966
        %v8897 = vmul.f32 %v5982, %v6981
        %v8898 = vmul.f32 %v6137, %v6996
        %v8899 = vmul.f32 %v5830, %v7011
        %v8900 = vmul.f32 %v5985, %v7026
        %v8901 = vmul.f32 %v6140, %v7041
        %v8902 = vmul.f32 %v5833, %v7056
        %v8903 = vmul.f32 %v5988, %v7071
        %v8904 = vmul.f32 %v6143, %v7086
        %v8905 = vmul.f32 %v5836, %v7101
        %v8906 = vmul.f32 %v5991, %v7116
        %v8907 = vmul.f32 %v6146, %v7131
        %v8908 = vmul.f32 %v5839, %v7146
        %v8909 = vmul.f32 %v5994, %v7161
        %v8910 = vmul.f32 %v6149, %v7176
        %v8911 = vmul.f32 %v5842, %v7191
        %v8912 = vmul.f32 %v5997, %v7206
        %v8913 = vmul.f32 %v6152, %v7221
        %v8914 = vmul.f32 %v5845, %v7236
        %v8915 = vmul.f32 %v6000, %v7251
        %v8916 = vmul.f32 %v6155, %v7266
        %v8917 = vmul.f32 %v5848, %v7281
        %v8918 = vmul.f32 %v6003, %v7296
        %v8919 = vmul.f32 %v6158, %v7311
        %v8920 = vmul.f32 %v5851, %v7326
        %v8921 = vmul.f32 %v6006, %v7341
        %v8922 = vmul.f32 %v6161, %v7356
        %v8923 = vmul.f32 %v5854, %v7371
        %v8924 = vmul.f32 %v6009, %v7386
        %v8925 = vmul.f32 %v6164, %v7401
        %v8926 = vmul.f32 %v5857, %v7416
        %v8927 = vmul.f32 %v6012, %v7431
        %v8928 = vmul.f32 %v6167, %v7446
        %v8929 = vmul.f32 %v5860, %v7461
        %v8930 = vmul.f32 %v6015, %v7476
        %v8931 = vmul.f32 %v6170, %v7491
        %v8932 = vmul.f32 %v5863, %v7506
        %v8933 = vmul.f32 %v6018, %v7521
        %v8934 = vmul.f32 %v6173, %v7536
        %v8935 = vmul.f32 %v5866, %v7551
        %v8936 = vmul.f32 %v6021, %v7566
        %v8937 = vmul.f32 %v6176, %v7581
        %v8938 = vmul.f32 %v5869, %v7596
        %v8939 = vmul.f32 %v6024, %v7611
        %v8940 = vmul.f32 %v6179, %v7626
        %v8941 = vmul.f32 %v5872, %v7641
        %v8942 = vmul.f32 %v6027, %v7656
        %v8943 = vmul.f32 %v6182, %v7671
        %v8944 = vmul.f32 %v5875, %v7686
        %v8945 = vmul.f32 %v6030, %v7701
        %v8946 = vmul.f32 %v6185, %v7716
        %v8947 = vmul.f32 %v5878, %v7731
        %v8948 = vmul.f32 %v6033, %v7746
        %v8949 = vmul.f32 %v6188, %v7761
        %v8950 = vmul.f32 %v5881, %v7776
        %v8951 = vmul.f32 %v6036, %v7791
        %v8952 = vmul.f32 %v6191, %v7806
        %v8953 = vmul.f32 %v5884, %v7821
        %v8954 = vmul.f32 %v6039, %v7836
        %v8955 = vmul.f32 %v6194, %v7851
        %v8956 = vmul.f32 %v5887, %v7866
        %v8957 = vmul.f32 %v6042, %v7881
        %v8958 = vmul.f32 %v6197, %v7896
        %v8959 = vmul.f32 %v5890, %v7911
        %v8960 = vmul.f32 %v6045, %v7926
        %v8961 = vmul.f32 %v6200, %v7941
        %v8962 = vmul.f32 %v5893, %v7956
        %v8963 = vmul.f32 %v6048, %v7971
        %v8964 = vmul.f32 %v6203, %v7986
        %v8965 = vmul.f32 %v5896, %v8001
        %v8966 = vmul.f32 %v6051, %v8016
        %v8967 = vmul.f32 %v6206, %v8031
        %v8968 = vmul.f32 %v5899, %v8046
        %v8969 = vmul.f32 %v6054, %v8061
        %v8970 = vmul.f32 %v6209, %v8076
        %v8971 = vmul.f32 %v5902, %v8091
        %v8972 = vmul.f32 %v6057, %v8106
        %v8973 = vmul.f32 %v6212, %v8121
        %v8974 = vmul.f32 %v5905, %v8136
        %v8975 = vmul.f32 %v6060, %v8151
        %v8976 = vmul.f32 %v6215, %v8166
        %v8977 = vmul.f32 %v5908, %v8181
        %v8978 = vmul.f32 %v6063, %v8196
        %v8979 = vmul.f32 %v6218, %v8211
        %v8980 = vmul.f32 %v5911, %v8226
        %v8981 = vmul.f32 %v6066, %v8241
        %v8982 = vmul.f32 %v6221, %v8256
        %v8983 = vmul.f32 %v5914, %v8271
        %v8984 = vmul.f32 %v6069, %v8286
        %v8985 = vmul.f32 %v6224, %v8301
        %v8986 = vmul.f32 %v5917, %v8316
        %v8987 = vmul.f32 %v6072, %v8331
        %v8988 = vmul.f32 %v6227, %v8346
        %v8989 = vmul.f32 %v5920, %v8361
        %v8990 = vmul.f32 %v6075, %v8376
        %v8991 = vmul.f32 %v6230, %v8391
        %v8992 = vmul.f32 %v5923, %v8406
        %v8993 = vmul.f32 %v6078, %v8421
        %v8994 = vmul.f32 %v6233, %v8436
        %v8995 = vmul.f32 %v5926, %v8451
        %v8996 = vmul.f32 %v6081, %v8466
        %v8997 = vmul.f32 %v6236, %v8481
        %v8998 = vmul.f32 %v5929, %v8496
        %v8999 = vmul.f32 %v6084, %v8511
        %v9000 = vmul.f32 %v6239, %v8526
        %v9001 = vmul.f32 %v5932, %v8541
        %v9002 = vmul.f32 %v6087, %v8556
        %v9003 = vmul.f32 %v6242, %v8571
        %v9004 = vmul.f32 %v5935, %v8586
        %v9005 = vmul.f32 %v6090, %v8601
        %v9006 = vmul.f32 %v6245, %v8616
        %v9007 = vmul.f32 %v5938, %v8631
        %v9008 = vmul.f32 %v6093, %v8646
        %v9009 = vmul.f32 %v6248, %v8661
        %v9010 = vmul.f32 %v5941, %v8676
        %v9011 = vmul.f32 %v6096, %v8691
        %v9012 = vmul.f32 %v6251, %v8706
        %v9013 = vmul.f32 %v5944, %v8721
        %v9014 = vmul.f32 %v6099, %v8736
        %v9015 = vmul.f32 %v6254, %v8751
        %v9016 = vmul.f32 %v5947, %v8766
        %v9017 = vmul.f32 %v6102, %v8781
        %v9018 = vmul.f32 %v6257, %v8796
        %v9019 = vmul.f32 %v5950, %v8811
        %v9020 = vmul.f32 %v6105, %v8826
        %v9021 = vmul.f32 %v6260, %v8841
        %v9022 = vmul.f32 %v5953, %v8856
        %v9023 = vmul.f32 %v6108, %v8871
        %v9024 = vmul.f32 %v6263, %v8886
        %9025 = vst [vmem:[%s532] sm:$0xff] %v8887
        %9026 = vst [vmem:[%s532 + $0x8] sm:$0xff] %v8888
        %9027 = vst [vmem:[%s532 + $0x10] sm:$0xff] %v8889
        %9028 = vst [vmem:[%s532 + $0x18] sm:$0xff] %v8890
        %9029 = vst [vmem:[%s532 + $0x20] sm:$0xff] %v8891
        %9030 = vst [vmem:[%s532 + $0x28] sm:$0xff] %v8892
        %9031 = vst [vmem:[%s532 + $0x30] sm:$0xff] %v8893
        %9032 = vst [vmem:[%s532 + $0x38] sm:$0xff] %v8894
        %9033 = vst [vmem:[%s532 + $0x40] sm:$0xff] %v8895
        %9034 = vst [vmem:[%s532 + $0x48] sm:$0xff] %v8896
        %9035 = vst [vmem:[%s532 + $0x50] sm:$0xff] %v8897
        %9036 = vst [vmem:[%s532 + $0x58] sm:$0xff] %v8898
        %9037 = vst [vmem:[%s532 + $0x60] sm:$0xff] %v8899
        %9038 = vst [vmem:[%s532 + $0x68] sm:$0xff] %v8900
        %9039 = vst [vmem:[%s532 + $0x70] sm:$0xff] %v8901
        %9040 = vst [vmem:[%s532 + $0x78] sm:$0xff] %v8902
        %9041 = vst [vmem:[%s532 + $0x80] sm:$0xff] %v8903
        %9042 = vst [vmem:[%s532 + $0x88] sm:$0xff] %v8904
        %9043 = vst [vmem:[%s532 + $0x90] sm:$0xff] %v8905
        %9044 = vst [vmem:[%s532 + $0x98] sm:$0xff] %v8906
        %9045 = vst [vmem:[%s532 + $0xa0] sm:$0xff] %v8907
        %9046 = vst [vmem:[%s532 + $0xa8] sm:$0xff] %v8908
        %9047 = vst [vmem:[%s532 + $0xb0] sm:$0xff] %v8909
        %9048 = vst [vmem:[%s532 + $0xb8] sm:$0xff] %v8910
        %9049 = vst [vmem:[%s532 + $0xc0] sm:$0xff] %v8911
        %9050 = vst [vmem:[%s532 + $0xc8] sm:$0xff] %v8912
        %9051 = vst [vmem:[%s532 + $0xd0] sm:$0xff] %v8913
        %9052 = vst [vmem:[%s532 + $0xd8] sm:$0xff] %v8914
        %9053 = vst [vmem:[%s532 + $0xe0] sm:$0xff] %v8915
        %9054 = vst [vmem:[%s532 + $0xe8] sm:$0xff] %v8916
        %9055 = vst [vmem:[%s532 + $0xf0] sm:$0xff] %v8917
        %9056 = vst [vmem:[%s532 + $0xf8] sm:$0xff] %v8918
        %9057 = vst [vmem:[%s532 + $0x100] sm:$0xff] %v8919
        %9058 = vst [vmem:[%s532 + $0x108] sm:$0xff] %v8920
        %9059 = vst [vmem:[%s532 + $0x110] sm:$0xff] %v8921
        %9060 = vst [vmem:[%s532 + $0x118] sm:$0xff] %v8922
        %9061 = vst [vmem:[%s532 + $0x120] sm:$0xff] %v8923
        %9062 = vst [vmem:[%s532 + $0x128] sm:$0xff] %v8924
        %9063 = vst [vmem:[%s532 + $0x130] sm:$0xff] %v8925
        %9064 = vst [vmem:[%s532 + $0x138] sm:$0xff] %v8926
        %9065 = vst [vmem:[%s532 + $0x140] sm:$0xff] %v8927
        %9066 = vst [vmem:[%s532 + $0x148] sm:$0xff] %v8928
        %9067 = vst [vmem:[%s532 + $0x150] sm:$0xff] %v8929
        %9068 = vst [vmem:[%s532 + $0x158] sm:$0xff] %v8930
        %9069 = vst [vmem:[%s532 + $0x160] sm:$0xff] %v8931
        %9070 = vst [vmem:[%s532 + $0x168] sm:$0xff] %v8932
        %9071 = vst [vmem:[%s532 + $0x170] sm:$0xff] %v8933
        %9072 = vst [vmem:[%s532 + $0x178] sm:$0xff] %v8934
        %9073 = vst [vmem:[%s532 + $0x180] sm:$0xff] %v8935
        %9074 = vst [vmem:[%s532 + $0x188] sm:$0xff] %v8936
        %9075 = vst [vmem:[%s532 + $0x190] sm:$0xff] %v8937
        %9076 = vst [vmem:[%s532 + $0x198] sm:$0xff] %v8938
        %9077 = vst [vmem:[%s532 + $0x1a0] sm:$0xff] %v8939
        %9078 = vst [vmem:[%s532 + $0x1a8] sm:$0xff] %v8940
        %9079 = vst [vmem:[%s532 + $0x1b0] sm:$0xff] %v8941
        %9080 = vst [vmem:[%s532 + $0x1b8] sm:$0xff] %v8942
        %9081 = vst [vmem:[%s532 + $0x1c0] sm:$0xff] %v8943
        %9082 = vst [vmem:[%s532 + $0x1c8] sm:$0xff] %v8944
        %9083 = vst [vmem:[%s532 + $0x1d0] sm:$0xff] %v8945
        %9084 = vst [vmem:[%s532 + $0x1d8] sm:$0xff] %v8946
        %9085 = vst [vmem:[%s532 + $0x1e0] sm:$0xff] %v8947
        %9086 = vst [vmem:[%s532 + $0x1e8] sm:$0xff] %v8948
        %9087 = vst [vmem:[%s532 + $0x1f0] sm:$0xff] %v8949
        %9088 = vst [vmem:[%s532 + $0x1f8] sm:$0xff] %v8950
        %9089 = vst [vmem:[%s532 + $0x200] sm:$0xff] %v8951
        %9090 = vst [vmem:[%s532 + $0x208] sm:$0xff] %v8952
        %9091 = vst [vmem:[%s532 + $0x210] sm:$0xff] %v8953
        %9092 = vst [vmem:[%s532 + $0x218] sm:$0xff] %v8954
        %9093 = vst [vmem:[%s532 + $0x220] sm:$0xff] %v8955
        %9094 = vst [vmem:[%s532 + $0x228] sm:$0xff] %v8956
        %9095 = vst [vmem:[%s532 + $0x230] sm:$0xff] %v8957
        %9096 = vst [vmem:[%s532 + $0x238] sm:$0xff] %v8958
        %9097 = vst [vmem:[%s532 + $0x240] sm:$0xff] %v8959
        %9098 = vst [vmem:[%s532 + $0x248] sm:$0xff] %v8960
        %9099 = vst [vmem:[%s532 + $0x250] sm:$0xff] %v8961
        %9100 = vst [vmem:[%s532 + $0x258] sm:$0xff] %v8962
        %9101 = vst [vmem:[%s532 + $0x260] sm:$0xff] %v8963
        %9102 = vst [vmem:[%s532 + $0x268] sm:$0xff] %v8964
        %9103 = vst [vmem:[%s532 + $0x270] sm:$0xff] %v8965
        %9104 = vst [vmem:[%s532 + $0x278] sm:$0xff] %v8966
        %9105 = vst [vmem:[%s532 + $0x280] sm:$0xff] %v8967
        %9106 = vst [vmem:[%s532 + $0x288] sm:$0xff] %v8968
        %9107 = vst [vmem:[%s532 + $0x290] sm:$0xff] %v8969
        %9108 = vst [vmem:[%s532 + $0x298] sm:$0xff] %v8970
        %9109 = vst [vmem:[%s532 + $0x2a0] sm:$0xff] %v8971
        %9110 = vst [vmem:[%s532 + $0x2a8] sm:$0xff] %v8972
        %9111 = vst [vmem:[%s532 + $0x2b0] sm:$0xff] %v8973
        %9112 = vst [vmem:[%s532 + $0x2b8] sm:$0xff] %v8974
        %9113 = vst [vmem:[%s532 + $0x2c0] sm:$0xff] %v8975
        %9114 = vst [vmem:[%s532 + $0x2c8] sm:$0xff] %v8976
        %9115 = vst [vmem:[%s532 + $0x2d0] sm:$0xff] %v8977
        %9116 = vst [vmem:[%s532 + $0x2d8] sm:$0xff] %v8978
        %9117 = vst [vmem:[%s532 + $0x2e0] sm:$0xff] %v8979
        %9118 = vst [vmem:[%s532 + $0x2e8] sm:$0xff] %v8980
        %9119 = vst [vmem:[%s532 + $0x2f0] sm:$0xff] %v8981
        %9120 = vst [vmem:[%s532 + $0x2f8] sm:$0xff] %v8982
        %9121 = vst [vmem:[%s532 + $0x300] sm:$0xff] %v8983
        %9122 = vst [vmem:[%s532 + $0x308] sm:$0xff] %v8984
        %9123 = vst [vmem:[%s532 + $0x310] sm:$0xff] %v8985
        %9124 = vst [vmem:[%s532 + $0x318] sm:$0xff] %v8986
        %9125 = vst [vmem:[%s532 + $0x320] sm:$0xff] %v8987
        %9126 = vst [vmem:[%s532 + $0x328] sm:$0xff] %v8988
        %9127 = vst [vmem:[%s532 + $0x330] sm:$0xff] %v8989
        %9128 = vst [vmem:[%s532 + $0x338] sm:$0xff] %v8990
        %9129 = vst [vmem:[%s532 + $0x340] sm:$0xff] %v8991
        %9130 = vst [vmem:[%s532 + $0x348] sm:$0xff] %v8992
        %9131 = vst [vmem:[%s532 + $0x350] sm:$0xff] %v8993
        %9132 = vst [vmem:[%s532 + $0x358] sm:$0xff] %v8994
        %9133 = vst [vmem:[%s532 + $0x360] sm:$0xff] %v8995
        %9134 = vst [vmem:[%s532 + $0x368] sm:$0xff] %v8996
        %9135 = vst [vmem:[%s532 + $0x370] sm:$0xff] %v8997
        %9136 = vst [vmem:[%s532 + $0x378] sm:$0xff] %v8998
        %9137 = vst [vmem:[%s532 + $0x380] sm:$0xff] %v8999
        %9138 = vst [vmem:[%s532 + $0x388] sm:$0xff] %v9000
        %9139 = vst [vmem:[%s532 + $0x390] sm:$0xff] %v9001
        %9140 = vst [vmem:[%s532 + $0x398] sm:$0xff] %v9002
        %9141 = vst [vmem:[%s532 + $0x3a0] sm:$0xff] %v9003
        %9142 = vst [vmem:[%s532 + $0x3a8] sm:$0xff] %v9004
        %9143 = vst [vmem:[%s532 + $0x3b0] sm:$0xff] %v9005
        %9144 = vst [vmem:[%s532 + $0x3b8] sm:$0xff] %v9006
        %9145 = vst [vmem:[%s532 + $0x3c0] sm:$0xff] %v9007
        %9146 = vst [vmem:[%s532 + $0x3c8] sm:$0xff] %v9008
        %9147 = vst [vmem:[%s532 + $0x3d0] sm:$0xff] %v9009
        %9148 = vst [vmem:[%s532 + $0x3d8] sm:$0xff] %v9010
        %9149 = vst [vmem:[%s532 + $0x3e0] sm:$0xff] %v9011
        %9150 = vst [vmem:[%s532 + $0x3e8] sm:$0xff] %v9012
        %9151 = vst [vmem:[%s532 + $0x3f0] sm:$0xff] %v9013
        %9152 = vst [vmem:[%s532 + $0x3f8] sm:$0xff] %v9014
        %9153 = vst [vmem:[%s532 + $0x400] sm:$0xff] %v9015
        %9154 = vst [vmem:[%s532 + $0x408] sm:$0xff] %v9016
        %9155 = vst [vmem:[%s532 + $0x410] sm:$0xff] %v9017
        %9156 = vst [vmem:[%s532 + $0x418] sm:$0xff] %v9018
        %9157 = vst [vmem:[%s532 + $0x420] sm:$0xff] %v9019
        %9158 = vst [vmem:[%s532 + $0x428] sm:$0xff] %v9020
        %9159 = vst [vmem:[%s532 + $0x430] sm:$0xff] %v9021
        %9160 = vst [vmem:[%s532 + $0x438] sm:$0xff] %v9022
        %9161 = vst [vmem:[%s532 + $0x440] sm:$0xff] %v9023
        %9162 = vst [vmem:[%s532 + $0x448] sm:$0xff] %v9024
        %s9163 = smul.u32 46, %s27
        %p9164 = scmp.lt.s32.totalorder %s9163, 91
        %s9165 = scalar_select %p9164, %s9163, 91
        %s9166 = smul.addr %s9165, 3
        %s9167 = smul.addr %s9166, 8
        %s9168 = scalar_lea.vmem %s9, %s9167
        // Predicated region
        $region93: #{forward.1} parent=55 // pred_check
          %p9169 = pneg %p244
        $region94: #{forward.1} parent=55 // pred_check_branch
          %9171 = sbr.rel (%p9169) target = $region96
        $region95: #{forward.1} parent=55 // pred_region
          %s9172 = smul.u32 46, %s27
        $region96: #{forward.1} parent=55 // pred_fallthru
          _
      $region56: #{forward.1} parent=5 // pred_fallthru
        _
      %p9173 = scmp.le.s32.totalorder 2, %s22
      // Predicated region
      $region97: #{forward.1} parent=5 // pred_check
        %p9174 = pneg %p9173
      $region98: #{forward.1} parent=5 // pred_check_branch
        %9176 = sbr.rel (%p9174) target = $region100
      $region99: #{forward.1} parent=5 // pred_region
        %s9177 = ssub.s32 %s22, 2
        // Predicated region
        $region101: #{forward.1} parent=99 // pred_check
          %p9178 = pneg %p250
        $region102: #{forward.1} parent=99 // pred_check_branch
          %9180 = sbr.rel (%p9178) target = $region104
        $region103: #{forward.1} parent=99 // pred_region
          %s9181 = smul.u32 46, %s28
          %p9182 = scmp.lt.s32.totalorder %s9181, 91
          %s9183 = scalar_select %p9182, %s9181, 91
          %s9184 = smul.addr %s9183, 3
          %s9185 = smul.addr %s9184, 8
          %s9186 = scalar_lea.vmem %s9, %s9185
        $region104: #{forward.1} parent=99 // pred_fallthru
          _
      $region100: #{forward.1} parent=5 // pred_fallthru
        _
    $region6: #{forward.1} parent=1 // loop_footer
      %s26 = sadd.s32 1, %s22
    $region7: #{forward.1} parent=1 // loop_footer_branch
      %21 = sbr.rel target = $region3
    $region8: #{forward.1} parent=1 // loop_exit
      _
    %9187 = vsyncpa [#allocation3], 1
    %s9188 = scalar_lea.sflag [#allocation3], 1
    %9189 = vsyncpa %s9188, 1
    %9190 = vsyncpa [#allocation5], 1
    %9191 = vsyncpa [#allocation8], 1
    %9192 = vsyncpa [#allocation11], 1
    %s9193 = scalar_lea.sflag [#allocation11], 1
    %9194 = vsyncpa %s9193, 1
    %9195 = vsyncpa [#allocation14], 1

</llo_original>
